<compile_context>
chip_gen: v5e
topology: v5e:2x2
jax: 0.10.0
libtpu: 0.0.40
codegen_flags: <defaults>
</compile_context>

<pallas_src>
import functools
import math

import jax
import jax.numpy as jnp
import numpy as np
from jax.experimental import pallas as pl
from jax.experimental.pallas import tpu as pltpu

GN_GROUPS = 32      # Normalize() == nn.GroupNorm(32, in_channels, eps=1e-6)
GN_EPS = 1e-6
LN_EPS = 1e-5       # nn.LayerNorm default eps
LANE = 128          # TPU lane width; channel dim padded to this for dense stores

# The PyTorch module zero-initializes proj_out (zero_module), which makes the
# whole forward collapse to `out == x`.  We keep that option available but
# default to a small non-zero init so the compute path actually affects the
# output (weights are synthetic either way).
PROJ_OUT_ZERO_INIT = False


def _layer_norm_hat(h):
    """LayerNorm without the affine part (gamma/beta applied by caller or folded)."""
    mu = jnp.mean(h, axis=-1, keepdims=True)
    d = h - mu
    var = jnp.mean(d * d, axis=-1, keepdims=True)
    return d * jax.lax.rsqrt(var + LN_EPS)


def _layer_norm(h, gamma, beta):
    return _layer_norm_hat(h) * gamma + beta


def _gelu_exact(x):
    # PyTorch F.gelu default (erf-based, approximate='none')
    return 0.5 * x * (1.0 + jax.lax.erf(x * 0.7071067811865476))


def _mm(a_f32, w_bf16, bias=None):
    """bf16 x bf16 MXU matmul with f32 accumulation."""
    out = jnp.dot(a_f32.astype(jnp.bfloat16), w_bf16,
                  preferred_element_type=jnp.float32)
    return out if bias is None else out + bias


def _attention(t, wq_h, wk_h, wv_h, wo_h, bo, n_heads):
    """Multi-head self-attention (context == t).

    t: (S, D) f32.  wq_h/wk_h/wv_h: (H, D, dh) bf16 (softmax scale already
    folded into wq_h).  wo_h: (H, dh, D) bf16.  All head handling is done
    with canonical batched dot_generals -- no lane slicing / concat.
    """
    S, D = t.shape
    tb = jnp.broadcast_to(t.astype(jnp.bfloat16), (n_heads, S, D))
    q = jnp.einsum('hsd,hde->hse', tb, wq_h, preferred_element_type=jnp.float32)
    k = jnp.einsum('hsd,hde->hse', tb, wk_h, preferred_element_type=jnp.float32)
    v = jnp.einsum('hsd,hde->hse', tb, wv_h, preferred_element_type=jnp.float32)

    # TODO(synk): for realistic HW (>= 1024), tile the KV axis with an online
    # softmax (flash pattern) instead of materializing the (H, S, S) matrix.
    sim = jnp.einsum('hqe,hke->hqk', q.astype(jnp.bfloat16),
                     k.astype(jnp.bfloat16),
                     preferred_element_type=jnp.float32)
    sim = sim - jnp.max(sim, axis=-1, keepdims=True)
    p = jnp.exp(sim)                                       # (H, S, S) f32
    denom = jnp.sum(p, axis=-1, keepdims=True)             # (H, S, 1)
    pv = jnp.einsum('hqk,hke->hqe', p.astype(jnp.bfloat16),
                    v.astype(jnp.bfloat16),
                    preferred_element_type=jnp.float32)    # (H, S, dh)
    # Deferred normalization: O(S*dh) multiplies instead of O(S^2); the
    # approximate reciprocal runs on the EUP slot (effectively free).
    o = pv * pl.reciprocal(denom, approx=True)
    out_h = jnp.einsum('hse,hed->hsd', o.astype(jnp.bfloat16), wo_h,
                       preferred_element_type=jnp.float32)  # (H, S, D)
    return jnp.sum(out_h, axis=0) + bo


def spatial_transformer_kernel(
        x_ref,
        gn_avg_ref,
        w_in_ref, b_in_ref,
        ln1_g_ref, ln1_b_ref, wq1_ref, wk1_ref, wv1_ref, wo1_ref, bo1_ref,
        ln2_g_ref, ln2_b_ref, wq2_ref, wk2_ref, wv2_ref, wo2_ref, bo2_ref,
        w_geglu_ref, b_geglu_ref, w_ffout_ref, b_ffout_ref,
        w_out_ref, b_out_ref,
        o_ref,
        *, n_heads):
    x = x_ref[...]                                          # (S, Cpad) f32

    # --- GroupNorm(32, C, eps=1e-6): two-pass (numerically stable) group
    #     statistics via a tiny (1, Cp) @ (Cp, Cp) group-averaging matmul.
    #     The affine gamma/beta is folded into proj_in's weight/bias.
    m_c = jnp.mean(x, axis=0, keepdims=True)                # per-channel E[x]
    mean = jnp.dot(m_c, gn_avg_ref[...], preferred_element_type=jnp.float32)
    d = x - mean
    v_c = jnp.mean(d * d, axis=0, keepdims=True)            # per-channel E[(x-mu)^2]
    var = jnp.dot(v_c, gn_avg_ref[...], preferred_element_type=jnp.float32)
    xhat = d * jax.lax.rsqrt(var + GN_EPS)                  # padded channels stay 0

    # --- proj_in: 1x1 conv == per-pixel linear (GN affine pre-folded)
    h = _mm(xhat, w_in_ref[...], b_in_ref[...])

    # --- BasicTransformerBlock (depth=1), context=None -> self-attention x2
    h1 = _layer_norm(h, ln1_g_ref[...], ln1_b_ref[...])
    h = h + _attention(h1, wq1_ref[...], wk1_ref[...], wv1_ref[...],
                       wo1_ref[...], bo1_ref[...], n_heads)
    h2 = _layer_norm(h, ln2_g_ref[...], ln2_b_ref[...])
    h = h + _attention(h2, wq2_ref[...], wk2_ref[...], wv2_ref[...],
                       wo2_ref[...], bo2_ref[...], n_heads)

    # --- LayerNorm3 (affine folded into GEGLU projection) + GEGLU feed-forward
    h3 = _layer_norm_hat(h)
    g = _mm(h3, w_geglu_ref[...], b_geglu_ref[...])
    d_ff = w_ffout_ref.shape[0]                             # 4 * inner_dim
    ff = g[:, :d_ff] * _gelu_exact(g[:, d_ff:])             # GEGLU (dropout p=0)
    h = h + _mm(ff, w_ffout_ref[...], b_ffout_ref[...])

    # --- proj_out (1x1 conv) + residual with the original (padded) input
    o_ref[...] = _mm(h, w_out_ref[...], b_out_ref[...]) + x


def init_params(key, in_channels, n_heads, d_head):
    """Deterministic synthetic parameters (PyTorch-like shapes, f32)."""
    C = in_channels
    D = n_heads * d_head              # inner_dim
    Dff = 4 * D                       # FeedForward inner dim (mult=4)
    keys = jax.random.split(key, 20)

    def lin_w(k, fan_in, fan_out):
        bound = 1.0 / math.sqrt(fan_in)
        return jax.random.uniform(k, (fan_in, fan_out), jnp.float32, -bound, bound)

    def lin_b(k, fan_in, fan_out):
        bound = 1.0 / math.sqrt(fan_in)
        return jax.random.uniform(k, (1, fan_out), jnp.float32, -bound, bound)

    p = dict(
        gn_g=jnp.ones((1, C), jnp.float32), gn_b=jnp.zeros((1, C), jnp.float32),
        w_in=lin_w(keys[0], C, D), b_in=lin_b(keys[1], C, D),
        ln1_g=jnp.ones((1, D), jnp.float32), ln1_b=jnp.zeros((1, D), jnp.float32),
        wq1=lin_w(keys[2], D, D), wk1=lin_w(keys[3], D, D), wv1=lin_w(keys[4], D, D),
        wo1=lin_w(keys[5], D, D), bo1=lin_b(keys[6], D, D),
        ln2_g=jnp.ones((1, D), jnp.float32), ln2_b=jnp.zeros((1, D), jnp.float32),
        wq2=lin_w(keys[7], D, D), wk2=lin_w(keys[8], D, D), wv2=lin_w(keys[9], D, D),
        wo2=lin_w(keys[10], D, D), bo2=lin_b(keys[11], D, D),
        ln3_g=jnp.ones((1, D), jnp.float32), ln3_b=jnp.zeros((1, D), jnp.float32),
        w_geglu=lin_w(keys[12], D, 2 * Dff), b_geglu=lin_b(keys[13], D, 2 * Dff),
        w_ffout=lin_w(keys[14], Dff, D), b_ffout=lin_b(keys[15], Dff, D),
    )
    if PROJ_OUT_ZERO_INIT:            # faithful to zero_module(proj_out)
        p['w_out'] = jnp.zeros((D, C), jnp.float32)
        p['b_out'] = jnp.zeros((1, C), jnp.float32)
    else:
        p['w_out'] = lin_w(keys[16], D, C) * 0.1
        p['b_out'] = lin_b(keys[17], D, C) * 0.1
    return p


def prepare_params(p, in_channels, n_heads, d_head, c_pad):
    """Kernel-layout params: channel dims padded to c_pad (lane-dense output),
    attention weights split per head, softmax scale folded into W_q, GroupNorm
    affine folded into proj_in, LayerNorm3 affine folded into the GEGLU
    projection, and all matmul weights stored as bf16 (MXU-native, half the
    weight DMA)."""
    C = in_channels
    D = n_heads * d_head
    bf16 = jnp.bfloat16

    def pad_last(a):
        return jnp.pad(a, [(0, 0)] * (a.ndim - 1) + [(0, c_pad - a.shape[-1])])

    def pad_first(a):
        return jnp.pad(a, [(0, c_pad - a.shape[0])] + [(0, 0)] * (a.ndim - 1))

    def heads_in(w):    # (D, D) -> (H, D, dh): head h uses columns h*dh:(h+1)*dh
        return jnp.transpose(w.reshape(D, n_heads, d_head), (1, 0, 2)).astype(bf16)

    def heads_out(w):   # (D, D) -> (H, dh, D): head h owns rows h*dh:(h+1)*dh
        return w.reshape(n_heads, d_head, D).astype(bf16)

    # Group-averaging matrix: gn_avg[i, j] = 1/group_size if channels i, j are
    # in the same GroupNorm group (real channels only; padded channels -> 0).
    cs = C // GN_GROUPS
    gids = np.arange(C) // cs
    gn_avg = np.zeros((c_pad, c_pad), np.float32)
    gn_avg[:C, :C] = (gids[:, None] == gids[None, :]).astype(np.float32) / cs

    # Fold GroupNorm affine into proj_in (exact):
    #   (xhat*g + b) @ W + bias == xhat @ (g[:,None]*W) + (b @ W + bias)
    w_in_f = p['gn_g'].reshape(C, 1) * p['w_in']                 # (C, D)
    b_in_f = p['gn_b'] @ p['w_in'] + p['b_in']                   # (1, D)

    # Fold LayerNorm3 affine into the GEGLU projection (exact, same algebra).
    w_geglu_f = p['ln3_g'].reshape(D, 1) * p['w_geglu']          # (D, 2*Dff)
    b_geglu_f = p['ln3_b'] @ p['w_geglu'] + p['b_geglu']         # (1, 2*Dff)

    scale = d_head ** -0.5
    return [
        jnp.asarray(gn_avg),
        pad_first(w_in_f).astype(bf16), b_in_f,
        p['ln1_g'], p['ln1_b'],
        heads_in(p['wq1'] * scale), heads_in(p['wk1']), heads_in(p['wv1']),
        heads_out(p['wo1']), p['bo1'],
        p['ln2_g'], p['ln2_b'],
        heads_in(p['wq2'] * scale), heads_in(p['wk2']), heads_in(p['wv2']),
        heads_out(p['wo2']), p['bo2'],
        w_geglu_f.astype(bf16), b_geglu_f,
        p['w_ffout'].astype(bf16), p['b_ffout'],
        pad_last(p['w_out']).astype(bf16), pad_last(p['b_out']),
    ]


def spatial_transformer(x_nchw, kparams, n_heads, c_pad):
    B, C, H, W = x_nchw.shape
    S = H * W
    x_seq = jnp.transpose(x_nchw.reshape(B, C, S), (0, 2, 1)).astype(jnp.float32)
    x_seq = jnp.pad(x_seq, ((0, 0), (0, 0), (0, c_pad - C)))   # lane-dense channels

    def full_spec(arr):
        nd = arr.ndim
        return pl.BlockSpec(arr.shape, lambda b, _nd=nd: (0,) * _nd)

    in_specs = [pl.BlockSpec((None, S, c_pad), lambda b: (b, 0, 0))]
    in_specs += [full_spec(w) for w in kparams]

    kernel = functools.partial(spatial_transformer_kernel, n_heads=n_heads)
    out_seq = pl.pallas_call(
        kernel,
        out_shape=jax.ShapeDtypeStruct((B, S, c_pad), jnp.float32),
        grid_spec=pltpu.PrefetchScalarGridSpec(
            num_scalar_prefetch=0,
            grid=(B,),
            in_specs=in_specs,
            out_specs=pl.BlockSpec((None, S, c_pad), lambda b: (b, 0, 0)),
        ),
        compiler_params=pltpu.CompilerParams(
            dimension_semantics=("parallel",)),   # batch is independent -> v7x 2-TC sharding
    )(x_seq, *kparams)

    out = out_seq[:, :, :C]                       # drop zero-padded channels
    return jnp.transpose(out, (0, 2, 1)).reshape(B, C, H, W)


def reference(x_nchw, p, n_heads, d_head):
    """Pure-JAX f32 reference with PyTorch-module semantics (for validation)."""
    B, C, H, W = x_nchw.shape
    S, D = H * W, n_heads * d_head
    Dff = p['w_ffout'].shape[0]
    x = x_nchw.astype(jnp.float32)

    # GroupNorm(32, C, eps=1e-6)
    cs = C // GN_GROUPS
    xg = x.reshape(B, GN_GROUPS, cs, H, W)
    mu = jnp.mean(xg, axis=(2, 3, 4), keepdims=True)
    var = jnp.mean((xg - mu) ** 2, axis=(2, 3, 4), keepdims=True)
    xn = ((xg - mu) * jax.lax.rsqrt(var + GN_EPS)).reshape(B, C, H, W)
    xn = xn * p['gn_g'].reshape(1, C, 1, 1) + p['gn_b'].reshape(1, C, 1, 1)

    h = jnp.einsum('bchw,cd->bhwd', xn, p['w_in']).reshape(B, S, D) + p['b_in']

    def ln(t, g, b):
        m = jnp.mean(t, axis=-1, keepdims=True)
        v = jnp.mean((t - m) ** 2, axis=-1, keepdims=True)
        return (t - m) * jax.lax.rsqrt(v + LN_EPS) * g + b

    def attn(t, wq, wk, wv, wo, bo):
        q, k, v = t @ wq, t @ wk, t @ wv
        qh = q.reshape(B, S, n_heads, d_head).transpose(0, 2, 1, 3)
        kh = k.reshape(B, S, n_heads, d_head).transpose(0, 2, 1, 3)
        vh = v.reshape(B, S, n_heads, d_head).transpose(0, 2, 1, 3)
        sim = jnp.einsum('bhqe,bhke->bhqk', qh, kh) * (d_head ** -0.5)
        pr = jax.nn.softmax(sim, axis=-1)
        o = jnp.einsum('bhqk,bhke->bhqe', pr, vh)
        o = o.transpose(0, 2, 1, 3).reshape(B, S, D)
        return o @ wo + bo

    h = h + attn(ln(h, p['ln1_g'], p['ln1_b']),
                 p['wq1'], p['wk1'], p['wv1'], p['wo1'], p['bo1'])
    h = h + attn(ln(h, p['ln2_g'], p['ln2_b']),
                 p['wq2'], p['wk2'], p['wv2'], p['wo2'], p['bo2'])
    t = ln(h, p['ln3_g'], p['ln3_b'])
    g = t @ p['w_geglu'] + p['b_geglu']
    ff = g[..., :Dff] * _gelu_exact(g[..., Dff:])
    h = h + ff @ p['w_ffout'] + p['b_ffout']

    out_seq = h @ p['w_out'] + p['b_out']
    out = jnp.transpose(out_seq, (0, 2, 1)).reshape(B, C, H, W)
    return out + x


if __name__ == "__main__":
    # SpatialTransformer(in_channels=64, n_heads=4, d_head=32, depth=1)
    B, C, H, W = 2, 64, 8, 8          # C must be divisible by GroupNorm's 32 groups
    n_heads, d_head = 4, 32           # inner_dim = 128
    C_PAD = max(LANE, ((C + LANE - 1) // LANE) * LANE)   # lane-dense channel padding

    key = jax.random.PRNGKey(0)
    kx, kp = jax.random.split(key)
    x = jax.random.normal(kx, (B, C, H, W), jnp.float32)

    params = init_params(kp, C, n_heads, d_head)              # PyTorch-like f32
    kparams = prepare_params(params, C, n_heads, d_head, C_PAD)  # kernel layout (bf16)

    out = jax.block_until_ready(spatial_transformer(x, kparams, n_heads, C_PAD))
    ref = jax.block_until_ready(reference(x, params, n_heads, d_head))

    assert out.shape == x.shape and out.dtype == jnp.float32
    # Tolerance relaxed vs. the f32 reference because the kernel runs all
    # matmuls in bf16 (f32 accumulation) and uses the approximate reciprocal.
    np.testing.assert_allclose(np.asarray(out), np.asarray(ref), rtol=5e-2, atol=5e-2)
    print("KERNEL_OK")
</pallas_src>

<mosaic_0001>
module attributes {stable_mosaic.version = 11 : i64} {
  func.func @spatial_transformer_kernel(%arg0: i32, %arg1: memref<1x64x128xf32, #tpu.memory_space<vmem>>, %arg2: memref<128x128xf32, #tpu.memory_space<vmem>>, %arg3: memref<128x128xbf16, #tpu.memory_space<vmem>>, %arg4: memref<1x128xf32, #tpu.memory_space<vmem>>, %arg5: memref<1x128xf32, #tpu.memory_space<vmem>>, %arg6: memref<1x128xf32, #tpu.memory_space<vmem>>, %arg7: memref<4x128x32xbf16, #tpu.memory_space<vmem>>, %arg8: memref<4x128x32xbf16, #tpu.memory_space<vmem>>, %arg9: memref<4x128x32xbf16, #tpu.memory_space<vmem>>, %arg10: memref<4x32x128xbf16, #tpu.memory_space<vmem>>, %arg11: memref<1x128xf32, #tpu.memory_space<vmem>>, %arg12: memref<1x128xf32, #tpu.memory_space<vmem>>, %arg13: memref<1x128xf32, #tpu.memory_space<vmem>>, %arg14: memref<4x128x32xbf16, #tpu.memory_space<vmem>>, %arg15: memref<4x128x32xbf16, #tpu.memory_space<vmem>>, %arg16: memref<4x128x32xbf16, #tpu.memory_space<vmem>>, %arg17: memref<4x32x128xbf16, #tpu.memory_space<vmem>>, %arg18: memref<1x128xf32, #tpu.memory_space<vmem>>, %arg19: memref<128x1024xbf16, #tpu.memory_space<vmem>>, %arg20: memref<1x1024xf32, #tpu.memory_space<vmem>>, %arg21: memref<512x128xbf16, #tpu.memory_space<vmem>>, %arg22: memref<1x128xf32, #tpu.memory_space<vmem>>, %arg23: memref<128x128xbf16, #tpu.memory_space<vmem>>, %arg24: memref<1x128xf32, #tpu.memory_space<vmem>>, %arg25: memref<1x64x128xf32, #tpu.memory_space<vmem>>) attributes {dimension_semantics = [#tpu.dimension_semantics<parallel>], iteration_bounds = array<i64: 2>, scalar_prefetch = 0 : i64, scratch_operands = 0 : i64, tpu.core_type = #tpu.core_type<tc>, window_params = [{transform_indices = @transform_0, window_bounds = array<i64: 1, 64, 128>}, {pipeline_mode = #tpu.pipeline_mode<synchronous>, transform_indices = @transform_1, window_bounds = array<i64: 128, 128>}, {pipeline_mode = #tpu.pipeline_mode<synchronous>, transform_indices = @transform_2, window_bounds = array<i64: 128, 128>}, {pipeline_mode = #tpu.pipeline_mode<synchronous>, transform_indices = @transform_3, window_bounds = array<i64: 1, 128>}, {pipeline_mode = #tpu.pipeline_mode<synchronous>, transform_indices = @transform_4, window_bounds = array<i64: 1, 128>}, {pipeline_mode = #tpu.pipeline_mode<synchronous>, transform_indices = @transform_5, window_bounds = array<i64: 1, 128>}, {pipeline_mode = #tpu.pipeline_mode<synchronous>, transform_indices = @transform_6, window_bounds = array<i64: 4, 128, 32>}, {pipeline_mode = #tpu.pipeline_mode<synchronous>, transform_indices = @transform_7, window_bounds = array<i64: 4, 128, 32>}, {pipeline_mode = #tpu.pipeline_mode<synchronous>, transform_indices = @transform_8, window_bounds = array<i64: 4, 128, 32>}, {pipeline_mode = #tpu.pipeline_mode<synchronous>, transform_indices = @transform_9, window_bounds = array<i64: 4, 32, 128>}, {pipeline_mode = #tpu.pipeline_mode<synchronous>, transform_indices = @transform_10, window_bounds = array<i64: 1, 128>}, {pipeline_mode = #tpu.pipeline_mode<synchronous>, transform_indices = @transform_11, window_bounds = array<i64: 1, 128>}, {pipeline_mode = #tpu.pipeline_mode<synchronous>, transform_indices = @transform_12, window_bounds = array<i64: 1, 128>}, {pipeline_mode = #tpu.pipeline_mode<synchronous>, transform_indices = @transform_13, window_bounds = array<i64: 4, 128, 32>}, {pipeline_mode = #tpu.pipeline_mode<synchronous>, transform_indices = @transform_14, window_bounds = array<i64: 4, 128, 32>}, {pipeline_mode = #tpu.pipeline_mode<synchronous>, transform_indices = @transform_15, window_bounds = array<i64: 4, 128, 32>}, {pipeline_mode = #tpu.pipeline_mode<synchronous>, transform_indices = @transform_16, window_bounds = array<i64: 4, 32, 128>}, {pipeline_mode = #tpu.pipeline_mode<synchronous>, transform_indices = @transform_17, window_bounds = array<i64: 1, 128>}, {pipeline_mode = #tpu.pipeline_mode<synchronous>, transform_indices = @transform_18, window_bounds = array<i64: 128, 1024>}, {pipeline_mode = #tpu.pipeline_mode<synchronous>, transform_indices = @transform_19, window_bounds = array<i64: 1, 1024>}, {pipeline_mode = #tpu.pipeline_mode<synchronous>, transform_indices = @transform_20, window_bounds = array<i64: 512, 128>}, {pipeline_mode = #tpu.pipeline_mode<synchronous>, transform_indices = @transform_21, window_bounds = array<i64: 1, 128>}, {pipeline_mode = #tpu.pipeline_mode<synchronous>, transform_indices = @transform_22, window_bounds = array<i64: 128, 128>}, {pipeline_mode = #tpu.pipeline_mode<synchronous>, transform_indices = @transform_23, window_bounds = array<i64: 1, 128>}, {transform_indices = @transform_24, window_bounds = array<i64: 1, 64, 128>}]} {
    %c0 = arith.constant 0 : index
    %c0_0 = arith.constant 0 : index
    %c0_1 = arith.constant 0 : index
    %0 = vector.load %arg1[%c0, %c0_0, %c0_1] : memref<1x64x128xf32, #tpu.memory_space<vmem>>, vector<1x64x128xf32>
    %1 = vector.shape_cast %0 : vector<1x64x128xf32> to vector<64x128xf32>
    %cst = arith.constant dense<0.000000e+00> : vector<128xf32>
    %2 = vector.multi_reduction <add>, %1, %cst [0] : vector<64x128xf32> to vector<128xf32>
    %3 = vector.shape_cast %2 : vector<128xf32> to vector<1x128xf32>
    %cst_2 = arith.constant 6.400000e+01 : f32
    %4 = vector.broadcast %cst_2 : f32 to vector<1x128xf32>
    %5 = arith.divf %3, %4 : vector<1x128xf32>
    %c0_3 = arith.constant 0 : index
    %c0_4 = arith.constant 0 : index
    %6 = vector.load %arg2[%c0_3, %c0_4] : memref<128x128xf32, #tpu.memory_space<vmem>>, vector<128x128xf32>
    %cst_5 = arith.constant dense<0.000000e+00> : vector<1x128xf32>
    %7 = tpu.matmul %5, %6, %cst_5 {dimension_numbers = #tpu.dot_dimension_numbers<[1], [0], [0], [1], [0, 0, 1, 1], [], []>} : vector<1x128xf32>, vector<128x128xf32>, vector<1x128xf32> -> vector<1x128xf32>
    %8 = vector.broadcast %7 : vector<1x128xf32> to vector<64x128xf32>
    %9 = arith.subf %1, %8 : vector<64x128xf32>
    %10 = arith.mulf %9, %9 : vector<64x128xf32>
    %cst_6 = arith.constant dense<0.000000e+00> : vector<128xf32>
    %11 = vector.multi_reduction <add>, %10, %cst_6 [0] : vector<64x128xf32> to vector<128xf32>
    %12 = vector.shape_cast %11 : vector<128xf32> to vector<1x128xf32>
    %cst_7 = arith.constant 6.400000e+01 : f32
    %13 = vector.broadcast %cst_7 : f32 to vector<1x128xf32>
    %14 = arith.divf %12, %13 : vector<1x128xf32>
    %c0_8 = arith.constant 0 : index
    %c0_9 = arith.constant 0 : index
    %15 = vector.load %arg2[%c0_8, %c0_9] : memref<128x128xf32, #tpu.memory_space<vmem>>, vector<128x128xf32>
    %cst_10 = arith.constant dense<0.000000e+00> : vector<1x128xf32>
    %16 = tpu.matmul %14, %15, %cst_10 {dimension_numbers = #tpu.dot_dimension_numbers<[1], [0], [0], [1], [0, 0, 1, 1], [], []>} : vector<1x128xf32>, vector<128x128xf32>, vector<1x128xf32> -> vector<1x128xf32>
    %cst_11 = arith.constant 9.99999997E-7 : f32
    %17 = vector.broadcast %cst_11 : f32 to vector<1x128xf32>
    %18 = arith.addf %16, %17 : vector<1x128xf32>
    %19 = math.rsqrt %18 : vector<1x128xf32>
    %20 = vector.broadcast %19 : vector<1x128xf32> to vector<64x128xf32>
    %21 = arith.mulf %9, %20 : vector<64x128xf32>
    %c0_12 = arith.constant 0 : index
    %c0_13 = arith.constant 0 : index
    %22 = vector.load %arg3[%c0_12, %c0_13] : memref<128x128xbf16, #tpu.memory_space<vmem>>, vector<128x128xbf16>
    %c0_14 = arith.constant 0 : index
    %c0_15 = arith.constant 0 : index
    %23 = vector.load %arg4[%c0_14, %c0_15] : memref<1x128xf32, #tpu.memory_space<vmem>>, vector<1x128xf32>
    %24 = arith.truncf %21 : vector<64x128xf32> to vector<64x128xbf16>
    %cst_16 = arith.constant dense<0.000000e+00> : vector<64x128xf32>
    %25 = tpu.matmul %24, %22, %cst_16 {dimension_numbers = #tpu.dot_dimension_numbers<[1], [0], [0], [1], [0, 0, 1, 1], [], []>} : vector<64x128xbf16>, vector<128x128xbf16>, vector<64x128xf32> -> vector<64x128xf32>
    %26 = vector.broadcast %23 : vector<1x128xf32> to vector<64x128xf32>
    %27 = arith.addf %25, %26 : vector<64x128xf32>
    %c0_17 = arith.constant 0 : index
    %c0_18 = arith.constant 0 : index
    %28 = vector.load %arg5[%c0_17, %c0_18] : memref<1x128xf32, #tpu.memory_space<vmem>>, vector<1x128xf32>
    %c0_19 = arith.constant 0 : index
    %c0_20 = arith.constant 0 : index
    %29 = vector.load %arg6[%c0_19, %c0_20] : memref<1x128xf32, #tpu.memory_space<vmem>>, vector<1x128xf32>
    %cst_21 = arith.constant dense<0.000000e+00> : vector<64xf32>
    %30 = vector.multi_reduction <add>, %27, %cst_21 [1] : vector<64x128xf32> to vector<64xf32>
    %31 = vector.shape_cast %30 : vector<64xf32> to vector<64x1xf32>
    %cst_22 = arith.constant 1.280000e+02 : f32
    %32 = vector.broadcast %cst_22 : f32 to vector<64x1xf32>
    %33 = arith.divf %31, %32 : vector<64x1xf32>
    %34 = vector.broadcast %33 : vector<64x1xf32> to vector<64x128xf32>
    %35 = arith.subf %27, %34 : vector<64x128xf32>
    %36 = arith.mulf %35, %35 : vector<64x128xf32>
    %cst_23 = arith.constant dense<0.000000e+00> : vector<64xf32>
    %37 = vector.multi_reduction <add>, %36, %cst_23 [1] : vector<64x128xf32> to vector<64xf32>
    %38 = vector.shape_cast %37 : vector<64xf32> to vector<64x1xf32>
    %cst_24 = arith.constant 1.280000e+02 : f32
    %39 = vector.broadcast %cst_24 : f32 to vector<64x1xf32>
    %40 = arith.divf %38, %39 : vector<64x1xf32>
    %cst_25 = arith.constant 9.99999974E-6 : f32
    %41 = vector.broadcast %cst_25 : f32 to vector<64x1xf32>
    %42 = arith.addf %40, %41 : vector<64x1xf32>
    %43 = math.rsqrt %42 : vector<64x1xf32>
    %44 = vector.broadcast %43 : vector<64x1xf32> to vector<64x128xf32>
    %45 = arith.mulf %35, %44 : vector<64x128xf32>
    %46 = vector.broadcast %28 : vector<1x128xf32> to vector<64x128xf32>
    %47 = arith.mulf %45, %46 : vector<64x128xf32>
    %48 = vector.broadcast %29 : vector<1x128xf32> to vector<64x128xf32>
    %49 = arith.addf %47, %48 : vector<64x128xf32>
    %c0_26 = arith.constant 0 : index
    %c0_27 = arith.constant 0 : index
    %c0_28 = arith.constant 0 : index
    %50 = vector.load %arg7[%c0_26, %c0_27, %c0_28] : memref<4x128x32xbf16, #tpu.memory_space<vmem>>, vector<4x128x32xbf16>
    %c0_29 = arith.constant 0 : index
    %c0_30 = arith.constant 0 : index
    %c0_31 = arith.constant 0 : index
    %51 = vector.load %arg8[%c0_29, %c0_30, %c0_31] : memref<4x128x32xbf16, #tpu.memory_space<vmem>>, vector<4x128x32xbf16>
    %c0_32 = arith.constant 0 : index
    %c0_33 = arith.constant 0 : index
    %c0_34 = arith.constant 0 : index
    %52 = vector.load %arg9[%c0_32, %c0_33, %c0_34] : memref<4x128x32xbf16, #tpu.memory_space<vmem>>, vector<4x128x32xbf16>
    %c0_35 = arith.constant 0 : index
    %c0_36 = arith.constant 0 : index
    %c0_37 = arith.constant 0 : index
    %53 = vector.load %arg10[%c0_35, %c0_36, %c0_37] : memref<4x32x128xbf16, #tpu.memory_space<vmem>>, vector<4x32x128xbf16>
    %c0_38 = arith.constant 0 : index
    %c0_39 = arith.constant 0 : index
    %54 = vector.load %arg11[%c0_38, %c0_39] : memref<1x128xf32, #tpu.memory_space<vmem>>, vector<1x128xf32>
    %55 = arith.truncf %49 : vector<64x128xf32> to vector<64x128xbf16>
    %56 = vector.shape_cast %55 : vector<64x128xbf16> to vector<1x64x128xbf16>
    %57 = vector.broadcast %56 : vector<1x64x128xbf16> to vector<4x64x128xbf16>
    "tpu.trace_start"() <{level = 10 : i32, message = "hsd,hde->hse"}> : () -> ()
    %cst_40 = arith.constant dense<0.000000e+00> : vector<4x64x32xf32>
    %58 = tpu.matmul %57, %50, %cst_40 {dimension_numbers = #tpu.dot_dimension_numbers<[2], [1], [1], [2], [0, 0, 0, 1, 1, 2], [0], [0]>} : vector<4x64x128xbf16>, vector<4x128x32xbf16>, vector<4x64x32xf32> -> vector<4x64x32xf32>
    %cst_41 = arith.constant dense<0.000000e+00> : vector<4x64x32xf32>
    %59 = tpu.matmul %57, %51, %cst_41 {dimension_numbers = #tpu.dot_dimension_numbers<[2], [1], [1], [2], [0, 0, 0, 1, 1, 2], [0], [0]>} : vector<4x64x128xbf16>, vector<4x128x32xbf16>, vector<4x64x32xf32> -> vector<4x64x32xf32>
    %cst_42 = arith.constant dense<0.000000e+00> : vector<4x64x32xf32>
    %60 = tpu.matmul %57, %52, %cst_42 {dimension_numbers = #tpu.dot_dimension_numbers<[2], [1], [1], [2], [0, 0, 0, 1, 1, 2], [0], [0]>} : vector<4x64x128xbf16>, vector<4x128x32xbf16>, vector<4x64x32xf32> -> vector<4x64x32xf32>
    "tpu.trace_stop"() : () -> ()
    %61 = arith.truncf %58 : vector<4x64x32xf32> to vector<4x64x32xbf16>
    %62 = arith.truncf %59 : vector<4x64x32xf32> to vector<4x64x32xbf16>
    "tpu.trace_start"() <{level = 10 : i32, message = "hqe,hke->hqk"}> : () -> ()
    %cst_43 = arith.constant dense<0.000000e+00> : vector<4x64x64xf32>
    %63 = tpu.matmul %61, %62, %cst_43 {dimension_numbers = #tpu.dot_dimension_numbers<[2], [2], [1], [1], [0, 0, 0, 1, 1, 1], [0], [0]>} : vector<4x64x32xbf16>, vector<4x64x32xbf16>, vector<4x64x64xf32> -> vector<4x64x64xf32>
    "tpu.trace_stop"() : () -> ()
    %cst_44 = arith.constant dense<0xFF800000> : vector<4x64xf32>
    %64 = vector.multi_reduction <maximumf>, %63, %cst_44 [2] : vector<4x64x64xf32> to vector<4x64xf32>
    %65 = vector.shape_cast %64 : vector<4x64xf32> to vector<4x64x1xf32>
    %66 = vector.broadcast %65 : vector<4x64x1xf32> to vector<4x64x64xf32>
    %67 = arith.subf %63, %66 : vector<4x64x64xf32>
    %68 = math.exp %67 : vector<4x64x64xf32>
    %cst_45 = arith.constant dense<0.000000e+00> : vector<4x64xf32>
    %69 = vector.multi_reduction <add>, %68, %cst_45 [2] : vector<4x64x64xf32> to vector<4x64xf32>
    %70 = vector.shape_cast %69 : vector<4x64xf32> to vector<4x64x1xf32>
    %71 = arith.truncf %68 : vector<4x64x64xf32> to vector<4x64x64xbf16>
    %72 = arith.truncf %60 : vector<4x64x32xf32> to vector<4x64x32xbf16>
    "tpu.trace_start"() <{level = 10 : i32, message = "hqk,hke->hqe"}> : () -> ()
    %cst_46 = arith.constant dense<0.000000e+00> : vector<4x64x32xf32>
    %73 = tpu.matmul %71, %72, %cst_46 {dimension_numbers = #tpu.dot_dimension_numbers<[2], [1], [1], [2], [0, 0, 0, 1, 1, 2], [0], [0]>} : vector<4x64x64xbf16>, vector<4x64x32xbf16>, vector<4x64x32xf32> -> vector<4x64x32xf32>
    "tpu.trace_stop"() : () -> ()
    %74 = tpu.reciprocal %70 {approx = true} : vector<4x64x1xf32> -> vector<4x64x1xf32>
    %75 = vector.broadcast %74 : vector<4x64x1xf32> to vector<4x64x32xf32>
    %76 = arith.mulf %73, %75 : vector<4x64x32xf32>
    %77 = arith.truncf %76 : vector<4x64x32xf32> to vector<4x64x32xbf16>
    "tpu.trace_start"() <{level = 10 : i32, message = "hse,hed->hsd"}> : () -> ()
    %cst_47 = arith.constant dense<0.000000e+00> : vector<4x64x128xf32>
    %78 = tpu.matmul %77, %53, %cst_47 {dimension_numbers = #tpu.dot_dimension_numbers<[2], [1], [1], [2], [0, 0, 0, 1, 1, 2], [0], [0]>} : vector<4x64x32xbf16>, vector<4x32x128xbf16>, vector<4x64x128xf32> -> vector<4x64x128xf32>
    "tpu.trace_stop"() : () -> ()
    %cst_48 = arith.constant dense<0.000000e+00> : vector<64x128xf32>
    %79 = vector.multi_reduction <add>, %78, %cst_48 [0] : vector<4x64x128xf32> to vector<64x128xf32>
    %80 = vector.broadcast %54 : vector<1x128xf32> to vector<64x128xf32>
    %81 = arith.addf %79, %80 : vector<64x128xf32>
    %82 = arith.addf %27, %81 : vector<64x128xf32>
    %c0_49 = arith.constant 0 : index
    %c0_50 = arith.constant 0 : index
    %83 = vector.load %arg12[%c0_49, %c0_50] : memref<1x128xf32, #tpu.memory_space<vmem>>, vector<1x128xf32>
    %c0_51 = arith.constant 0 : index
    %c0_52 = arith.constant 0 : index
    %84 = vector.load %arg13[%c0_51, %c0_52] : memref<1x128xf32, #tpu.memory_space<vmem>>, vector<1x128xf32>
    %cst_53 = arith.constant dense<0.000000e+00> : vector<64xf32>
    %85 = vector.multi_reduction <add>, %82, %cst_53 [1] : vector<64x128xf32> to vector<64xf32>
    %86 = vector.shape_cast %85 : vector<64xf32> to vector<64x1xf32>
    %cst_54 = arith.constant 1.280000e+02 : f32
    %87 = vector.broadcast %cst_54 : f32 to vector<64x1xf32>
    %88 = arith.divf %86, %87 : vector<64x1xf32>
    %89 = vector.broadcast %88 : vector<64x1xf32> to vector<64x128xf32>
    %90 = arith.subf %82, %89 : vector<64x128xf32>
    %91 = arith.mulf %90, %90 : vector<64x128xf32>
    %cst_55 = arith.constant dense<0.000000e+00> : vector<64xf32>
    %92 = vector.multi_reduction <add>, %91, %cst_55 [1] : vector<64x128xf32> to vector<64xf32>
    %93 = vector.shape_cast %92 : vector<64xf32> to vector<64x1xf32>
    %cst_56 = arith.constant 1.280000e+02 : f32
    %94 = vector.broadcast %cst_56 : f32 to vector<64x1xf32>
    %95 = arith.divf %93, %94 : vector<64x1xf32>
    %cst_57 = arith.constant 9.99999974E-6 : f32
    %96 = vector.broadcast %cst_57 : f32 to vector<64x1xf32>
    %97 = arith.addf %95, %96 : vector<64x1xf32>
    %98 = math.rsqrt %97 : vector<64x1xf32>
    %99 = vector.broadcast %98 : vector<64x1xf32> to vector<64x128xf32>
    %100 = arith.mulf %90, %99 : vector<64x128xf32>
    %101 = vector.broadcast %83 : vector<1x128xf32> to vector<64x128xf32>
    %102 = arith.mulf %100, %101 : vector<64x128xf32>
    %103 = vector.broadcast %84 : vector<1x128xf32> to vector<64x128xf32>
    %104 = arith.addf %102, %103 : vector<64x128xf32>
    %c0_58 = arith.constant 0 : index
    %c0_59 = arith.constant 0 : index
    %c0_60 = arith.constant 0 : index
    %105 = vector.load %arg14[%c0_58, %c0_59, %c0_60] : memref<4x128x32xbf16, #tpu.memory_space<vmem>>, vector<4x128x32xbf16>
    %c0_61 = arith.constant 0 : index
    %c0_62 = arith.constant 0 : index
    %c0_63 = arith.constant 0 : index
    %106 = vector.load %arg15[%c0_61, %c0_62, %c0_63] : memref<4x128x32xbf16, #tpu.memory_space<vmem>>, vector<4x128x32xbf16>
    %c0_64 = arith.constant 0 : index
    %c0_65 = arith.constant 0 : index
    %c0_66 = arith.constant 0 : index
    %107 = vector.load %arg16[%c0_64, %c0_65, %c0_66] : memref<4x128x32xbf16, #tpu.memory_space<vmem>>, vector<4x128x32xbf16>
    %c0_67 = arith.constant 0 : index
    %c0_68 = arith.constant 0 : index
    %c0_69 = arith.constant 0 : index
    %108 = vector.load %arg17[%c0_67, %c0_68, %c0_69] : memref<4x32x128xbf16, #tpu.memory_space<vmem>>, vector<4x32x128xbf16>
    %c0_70 = arith.constant 0 : index
    %c0_71 = arith.constant 0 : index
    %109 = vector.load %arg18[%c0_70, %c0_71] : memref<1x128xf32, #tpu.memory_space<vmem>>, vector<1x128xf32>
    %110 = arith.truncf %104 : vector<64x128xf32> to vector<64x128xbf16>
    %111 = vector.shape_cast %110 : vector<64x128xbf16> to vector<1x64x128xbf16>
    %112 = vector.broadcast %111 : vector<1x64x128xbf16> to vector<4x64x128xbf16>
    "tpu.trace_start"() <{level = 10 : i32, message = "hsd,hde->hse"}> : () -> ()
    %cst_72 = arith.constant dense<0.000000e+00> : vector<4x64x32xf32>
    %113 = tpu.matmul %112, %105, %cst_72 {dimension_numbers = #tpu.dot_dimension_numbers<[2], [1], [1], [2], [0, 0, 0, 1, 1, 2], [0], [0]>} : vector<4x64x128xbf16>, vector<4x128x32xbf16>, vector<4x64x32xf32> -> vector<4x64x32xf32>
    %cst_73 = arith.constant dense<0.000000e+00> : vector<4x64x32xf32>
    %114 = tpu.matmul %112, %106, %cst_73 {dimension_numbers = #tpu.dot_dimension_numbers<[2], [1], [1], [2], [0, 0, 0, 1, 1, 2], [0], [0]>} : vector<4x64x128xbf16>, vector<4x128x32xbf16>, vector<4x64x32xf32> -> vector<4x64x32xf32>
    %cst_74 = arith.constant dense<0.000000e+00> : vector<4x64x32xf32>
    %115 = tpu.matmul %112, %107, %cst_74 {dimension_numbers = #tpu.dot_dimension_numbers<[2], [1], [1], [2], [0, 0, 0, 1, 1, 2], [0], [0]>} : vector<4x64x128xbf16>, vector<4x128x32xbf16>, vector<4x64x32xf32> -> vector<4x64x32xf32>
    "tpu.trace_stop"() : () -> ()
    %116 = arith.truncf %113 : vector<4x64x32xf32> to vector<4x64x32xbf16>
    %117 = arith.truncf %114 : vector<4x64x32xf32> to vector<4x64x32xbf16>
    "tpu.trace_start"() <{level = 10 : i32, message = "hqe,hke->hqk"}> : () -> ()
    %cst_75 = arith.constant dense<0.000000e+00> : vector<4x64x64xf32>
    %118 = tpu.matmul %116, %117, %cst_75 {dimension_numbers = #tpu.dot_dimension_numbers<[2], [2], [1], [1], [0, 0, 0, 1, 1, 1], [0], [0]>} : vector<4x64x32xbf16>, vector<4x64x32xbf16>, vector<4x64x64xf32> -> vector<4x64x64xf32>
    "tpu.trace_stop"() : () -> ()
    %cst_76 = arith.constant dense<0xFF800000> : vector<4x64xf32>
    %119 = vector.multi_reduction <maximumf>, %118, %cst_76 [2] : vector<4x64x64xf32> to vector<4x64xf32>
    %120 = vector.shape_cast %119 : vector<4x64xf32> to vector<4x64x1xf32>
    %121 = vector.broadcast %120 : vector<4x64x1xf32> to vector<4x64x64xf32>
    %122 = arith.subf %118, %121 : vector<4x64x64xf32>
    %123 = math.exp %122 : vector<4x64x64xf32>
    %cst_77 = arith.constant dense<0.000000e+00> : vector<4x64xf32>
    %124 = vector.multi_reduction <add>, %123, %cst_77 [2] : vector<4x64x64xf32> to vector<4x64xf32>
    %125 = vector.shape_cast %124 : vector<4x64xf32> to vector<4x64x1xf32>
    %126 = arith.truncf %123 : vector<4x64x64xf32> to vector<4x64x64xbf16>
    %127 = arith.truncf %115 : vector<4x64x32xf32> to vector<4x64x32xbf16>
    "tpu.trace_start"() <{level = 10 : i32, message = "hqk,hke->hqe"}> : () -> ()
    %cst_78 = arith.constant dense<0.000000e+00> : vector<4x64x32xf32>
    %128 = tpu.matmul %126, %127, %cst_78 {dimension_numbers = #tpu.dot_dimension_numbers<[2], [1], [1], [2], [0, 0, 0, 1, 1, 2], [0], [0]>} : vector<4x64x64xbf16>, vector<4x64x32xbf16>, vector<4x64x32xf32> -> vector<4x64x32xf32>
    "tpu.trace_stop"() : () -> ()
    %129 = tpu.reciprocal %125 {approx = true} : vector<4x64x1xf32> -> vector<4x64x1xf32>
    %130 = vector.broadcast %129 : vector<4x64x1xf32> to vector<4x64x32xf32>
    %131 = arith.mulf %128, %130 : vector<4x64x32xf32>
    %132 = arith.truncf %131 : vector<4x64x32xf32> to vector<4x64x32xbf16>
    "tpu.trace_start"() <{level = 10 : i32, message = "hse,hed->hsd"}> : () -> ()
    %cst_79 = arith.constant dense<0.000000e+00> : vector<4x64x128xf32>
    %133 = tpu.matmul %132, %108, %cst_79 {dimension_numbers = #tpu.dot_dimension_numbers<[2], [1], [1], [2], [0, 0, 0, 1, 1, 2], [0], [0]>} : vector<4x64x32xbf16>, vector<4x32x128xbf16>, vector<4x64x128xf32> -> vector<4x64x128xf32>
    "tpu.trace_stop"() : () -> ()
    %cst_80 = arith.constant dense<0.000000e+00> : vector<64x128xf32>
    %134 = vector.multi_reduction <add>, %133, %cst_80 [0] : vector<4x64x128xf32> to vector<64x128xf32>
    %135 = vector.broadcast %109 : vector<1x128xf32> to vector<64x128xf32>
    %136 = arith.addf %134, %135 : vector<64x128xf32>
    %137 = arith.addf %82, %136 : vector<64x128xf32>
    %cst_81 = arith.constant dense<0.000000e+00> : vector<64xf32>
    %138 = vector.multi_reduction <add>, %137, %cst_81 [1] : vector<64x128xf32> to vector<64xf32>
    %139 = vector.shape_cast %138 : vector<64xf32> to vector<64x1xf32>
    %cst_82 = arith.constant 1.280000e+02 : f32
    %140 = vector.broadcast %cst_82 : f32 to vector<64x1xf32>
    %141 = arith.divf %139, %140 : vector<64x1xf32>
    %142 = vector.broadcast %141 : vector<64x1xf32> to vector<64x128xf32>
    %143 = arith.subf %137, %142 : vector<64x128xf32>
    %144 = arith.mulf %143, %143 : vector<64x128xf32>
    %cst_83 = arith.constant dense<0.000000e+00> : vector<64xf32>
    %145 = vector.multi_reduction <add>, %144, %cst_83 [1] : vector<64x128xf32> to vector<64xf32>
    %146 = vector.shape_cast %145 : vector<64xf32> to vector<64x1xf32>
    %cst_84 = arith.constant 1.280000e+02 : f32
    %147 = vector.broadcast %cst_84 : f32 to vector<64x1xf32>
    %148 = arith.divf %146, %147 : vector<64x1xf32>
    %cst_85 = arith.constant 9.99999974E-6 : f32
    %149 = vector.broadcast %cst_85 : f32 to vector<64x1xf32>
    %150 = arith.addf %148, %149 : vector<64x1xf32>
    %151 = math.rsqrt %150 : vector<64x1xf32>
    %152 = vector.broadcast %151 : vector<64x1xf32> to vector<64x128xf32>
    %153 = arith.mulf %143, %152 : vector<64x128xf32>
    %c0_86 = arith.constant 0 : index
    %c0_87 = arith.constant 0 : index
    %154 = vector.load %arg19[%c0_86, %c0_87] : memref<128x1024xbf16, #tpu.memory_space<vmem>>, vector<128x1024xbf16>
    %c0_88 = arith.constant 0 : index
    %c0_89 = arith.constant 0 : index
    %155 = vector.load %arg20[%c0_88, %c0_89] : memref<1x1024xf32, #tpu.memory_space<vmem>>, vector<1x1024xf32>
    %156 = arith.truncf %153 : vector<64x128xf32> to vector<64x128xbf16>
    %cst_90 = arith.constant dense<0.000000e+00> : vector<64x1024xf32>
    %157 = tpu.matmul %156, %154, %cst_90 {dimension_numbers = #tpu.dot_dimension_numbers<[1], [0], [0], [1], [0, 0, 1, 1], [], []>} : vector<64x128xbf16>, vector<128x1024xbf16>, vector<64x1024xf32> -> vector<64x1024xf32>
    %158 = vector.broadcast %155 : vector<1x1024xf32> to vector<64x1024xf32>
    %159 = arith.addf %157, %158 : vector<64x1024xf32>
    %160 = vector.extract_strided_slice %159 {offsets = [0, 0], sizes = [64, 512], strides = [1, 1]} : vector<64x1024xf32> to vector<64x512xf32>
    %161 = vector.extract_strided_slice %159 {offsets = [0, 512], sizes = [64, 512], strides = [1, 1]} : vector<64x1024xf32> to vector<64x512xf32>
    %cst_91 = arith.constant 5.000000e-01 : f32
    %162 = vector.broadcast %cst_91 : f32 to vector<64x512xf32>
    %163 = arith.mulf %162, %161 : vector<64x512xf32>
    %cst_92 = arith.constant 0.707106769 : f32
    %164 = vector.broadcast %cst_92 : f32 to vector<64x512xf32>
    %165 = arith.mulf %161, %164 : vector<64x512xf32>
    %166 = math.erf %165 : vector<64x512xf32>
    %cst_93 = arith.constant 1.000000e+00 : f32
    %167 = vector.broadcast %cst_93 : f32 to vector<64x512xf32>
    %168 = arith.addf %167, %166 : vector<64x512xf32>
    %169 = arith.mulf %163, %168 : vector<64x512xf32>
    %170 = arith.mulf %160, %169 : vector<64x512xf32>
    %c0_94 = arith.constant 0 : index
    %c0_95 = arith.constant 0 : index
    %171 = vector.load %arg21[%c0_94, %c0_95] : memref<512x128xbf16, #tpu.memory_space<vmem>>, vector<512x128xbf16>
    %c0_96 = arith.constant 0 : index
    %c0_97 = arith.constant 0 : index
    %172 = vector.load %arg22[%c0_96, %c0_97] : memref<1x128xf32, #tpu.memory_space<vmem>>, vector<1x128xf32>
    %173 = arith.truncf %170 : vector<64x512xf32> to vector<64x512xbf16>
    %cst_98 = arith.constant dense<0.000000e+00> : vector<64x128xf32>
    %174 = tpu.matmul %173, %171, %cst_98 {dimension_numbers = #tpu.dot_dimension_numbers<[1], [0], [0], [1], [0, 0, 1, 1], [], []>} : vector<64x512xbf16>, vector<512x128xbf16>, vector<64x128xf32> -> vector<64x128xf32>
    %175 = vector.broadcast %172 : vector<1x128xf32> to vector<64x128xf32>
    %176 = arith.addf %174, %175 : vector<64x128xf32>
    %177 = arith.addf %137, %176 : vector<64x128xf32>
    %c0_99 = arith.constant 0 : index
    %c0_100 = arith.constant 0 : index
    %178 = vector.load %arg23[%c0_99, %c0_100] : memref<128x128xbf16, #tpu.memory_space<vmem>>, vector<128x128xbf16>
    %c0_101 = arith.constant 0 : index
    %c0_102 = arith.constant 0 : index
    %179 = vector.load %arg24[%c0_101, %c0_102] : memref<1x128xf32, #tpu.memory_space<vmem>>, vector<1x128xf32>
    %180 = arith.truncf %177 : vector<64x128xf32> to vector<64x128xbf16>
    %cst_103 = arith.constant dense<0.000000e+00> : vector<64x128xf32>
    %181 = tpu.matmul %180, %178, %cst_103 {dimension_numbers = #tpu.dot_dimension_numbers<[1], [0], [0], [1], [0, 0, 1, 1], [], []>} : vector<64x128xbf16>, vector<128x128xbf16>, vector<64x128xf32> -> vector<64x128xf32>
    %182 = vector.broadcast %179 : vector<1x128xf32> to vector<64x128xf32>
    %183 = arith.addf %181, %182 : vector<64x128xf32>
    %184 = arith.addf %183, %1 : vector<64x128xf32>
    %c0_104 = arith.constant 0 : index
    %c0_105 = arith.constant 0 : index
    %c0_106 = arith.constant 0 : index
    %185 = vector.load %arg25[%c0_104, %c0_105, %c0_106] : memref<1x64x128xf32, #tpu.memory_space<vmem>>, vector<1x64x128xf32>
    %186 = vector.shape_cast %185 : vector<1x64x128xf32> to vector<64x128xf32>
    %187 = vector.shape_cast %184 : vector<64x128xf32> to vector<1x64x128xf32>
    tpu.vector_store %arg25[%c0_104, %c0_105, %c0_106], %187 {strides = array<i32>} : memref<1x64x128xf32, #tpu.memory_space<vmem>>, vector<1x64x128xf32>,
    return
  }
  func.func @transform_0(%arg0: i32) -> (i32, i32, i32) {
    %c0_i32 = arith.constant 0 : i32
    %c0_i32_0 = arith.constant 0 : i32
    %c0_i32_1 = arith.constant 0 : i32
    return %arg0, %c0_i32, %c0_i32_0 : i32, i32, i32
  }
  func.func @transform_1(%arg0: i32) -> (i32, i32) {
    %c0_i32 = arith.constant 0 : i32
    %c0_i32_0 = arith.constant 0 : i32
    %c0_i32_1 = arith.constant 0 : i32
    return %c0_i32, %c0_i32_0 : i32, i32
  }
  func.func @transform_2(%arg0: i32) -> (i32, i32) {
    %c0_i32 = arith.constant 0 : i32
    %c0_i32_0 = arith.constant 0 : i32
    %c0_i32_1 = arith.constant 0 : i32
    return %c0_i32, %c0_i32_0 : i32, i32
  }
  func.func @transform_3(%arg0: i32) -> (i32, i32) {
    %c0_i32 = arith.constant 0 : i32
    %c0_i32_0 = arith.constant 0 : i32
    %c0_i32_1 = arith.constant 0 : i32
    return %c0_i32, %c0_i32_0 : i32, i32
  }
  func.func @transform_4(%arg0: i32) -> (i32, i32) {
    %c0_i32 = arith.constant 0 : i32
    %c0_i32_0 = arith.constant 0 : i32
    %c0_i32_1 = arith.constant 0 : i32
    return %c0_i32, %c0_i32_0 : i32, i32
  }
  func.func @transform_5(%arg0: i32) -> (i32, i32) {
    %c0_i32 = arith.constant 0 : i32
    %c0_i32_0 = arith.constant 0 : i32
    %c0_i32_1 = arith.constant 0 : i32
    return %c0_i32, %c0_i32_0 : i32, i32
  }
  func.func @transform_6(%arg0: i32) -> (i32, i32, i32) {
    %c0_i32 = arith.constant 0 : i32
    %c0_i32_0 = arith.constant 0 : i32
    %c0_i32_1 = arith.constant 0 : i32
    %c0_i32_2 = arith.constant 0 : i32
    return %c0_i32, %c0_i32_0, %c0_i32_1 : i32, i32, i32
  }
  func.func @transform_7(%arg0: i32) -> (i32, i32, i32) {
    %c0_i32 = arith.constant 0 : i32
    %c0_i32_0 = arith.constant 0 : i32
    %c0_i32_1 = arith.constant 0 : i32
    %c0_i32_2 = arith.constant 0 : i32
    return %c0_i32, %c0_i32_0, %c0_i32_1 : i32, i32, i32
  }
  func.func @transform_8(%arg0: i32) -> (i32, i32, i32) {
    %c0_i32 = arith.constant 0 : i32
    %c0_i32_0 = arith.constant 0 : i32
    %c0_i32_1 = arith.constant 0 : i32
    %c0_i32_2 = arith.constant 0 : i32
    return %c0_i32, %c0_i32_0, %c0_i32_1 : i32, i32, i32
  }
  func.func @transform_9(%arg0: i32) -> (i32, i32, i32) {
    %c0_i32 = arith.constant 0 : i32
    %c0_i32_0 = arith.constant 0 : i32
    %c0_i32_1 = arith.constant 0 : i32
    %c0_i32_2 = arith.constant 0 : i32
    return %c0_i32, %c0_i32_0, %c0_i32_1 : i32, i32, i32
  }
  func.func @transform_10(%arg0: i32) -> (i32, i32) {
    %c0_i32 = arith.constant 0 : i32
    %c0_i32_0 = arith.constant 0 : i32
    %c0_i32_1 = arith.constant 0 : i32
    return %c0_i32, %c0_i32_0 : i32, i32
  }
  func.func @transform_11(%arg0: i32) -> (i32, i32) {
    %c0_i32 = arith.constant 0 : i32
    %c0_i32_0 = arith.constant 0 : i32
    %c0_i32_1 = arith.constant 0 : i32
    return %c0_i32, %c0_i32_0 : i32, i32
  }
  func.func @transform_12(%arg0: i32) -> (i32, i32) {
    %c0_i32 = arith.constant 0 : i32
    %c0_i32_0 = arith.constant 0 : i32
    %c0_i32_1 = arith.constant 0 : i32
    return %c0_i32, %c0_i32_0 : i32, i32
  }
  func.func @transform_13(%arg0: i32) -> (i32, i32, i32) {
    %c0_i32 = arith.constant 0 : i32
    %c0_i32_0 = arith.constant 0 : i32
    %c0_i32_1 = arith.constant 0 : i32
    %c0_i32_2 = arith.constant 0 : i32
    return %c0_i32, %c0_i32_0, %c0_i32_1 : i32, i32, i32
  }
  func.func @transform_14(%arg0: i32) -> (i32, i32, i32) {
    %c0_i32 = arith.constant 0 : i32
    %c0_i32_0 = arith.constant 0 : i32
    %c0_i32_1 = arith.constant 0 : i32
    %c0_i32_2 = arith.constant 0 : i32
    return %c0_i32, %c0_i32_0, %c0_i32_1 : i32, i32, i32
  }
  func.func @transform_15(%arg0: i32) -> (i32, i32, i32) {
    %c0_i32 = arith.constant 0 : i32
    %c0_i32_0 = arith.constant 0 : i32
    %c0_i32_1 = arith.constant 0 : i32
    %c0_i32_2 = arith.constant 0 : i32
    return %c0_i32, %c0_i32_0, %c0_i32_1 : i32, i32, i32
  }
  func.func @transform_16(%arg0: i32) -> (i32, i32, i32) {
    %c0_i32 = arith.constant 0 : i32
    %c0_i32_0 = arith.constant 0 : i32
    %c0_i32_1 = arith.constant 0 : i32
    %c0_i32_2 = arith.constant 0 : i32
    return %c0_i32, %c0_i32_0, %c0_i32_1 : i32, i32, i32
  }
  func.func @transform_17(%arg0: i32) -> (i32, i32) {
    %c0_i32 = arith.constant 0 : i32
    %c0_i32_0 = arith.constant 0 : i32
    %c0_i32_1 = arith.constant 0 : i32
    return %c0_i32, %c0_i32_0 : i32, i32
  }
  func.func @transform_18(%arg0: i32) -> (i32, i32) {
    %c0_i32 = arith.constant 0 : i32
    %c0_i32_0 = arith.constant 0 : i32
    %c0_i32_1 = arith.constant 0 : i32
    return %c0_i32, %c0_i32_0 : i32, i32
  }
  func.func @transform_19(%arg0: i32) -> (i32, i32) {
    %c0_i32 = arith.constant 0 : i32
    %c0_i32_0 = arith.constant 0 : i32
    %c0_i32_1 = arith.constant 0 : i32
    return %c0_i32, %c0_i32_0 : i32, i32
  }
  func.func @transform_20(%arg0: i32) -> (i32, i32) {
    %c0_i32 = arith.constant 0 : i32
    %c0_i32_0 = arith.constant 0 : i32
    %c0_i32_1 = arith.constant 0 : i32
    return %c0_i32, %c0_i32_0 : i32, i32
  }
  func.func @transform_21(%arg0: i32) -> (i32, i32) {
    %c0_i32 = arith.constant 0 : i32
    %c0_i32_0 = arith.constant 0 : i32
    %c0_i32_1 = arith.constant 0 : i32
    return %c0_i32, %c0_i32_0 : i32, i32
  }
  func.func @transform_22(%arg0: i32) -> (i32, i32) {
    %c0_i32 = arith.constant 0 : i32
    %c0_i32_0 = arith.constant 0 : i32
    %c0_i32_1 = arith.constant 0 : i32
    return %c0_i32, %c0_i32_0 : i32, i32
  }
  func.func @transform_23(%arg0: i32) -> (i32, i32) {
    %c0_i32 = arith.constant 0 : i32
    %c0_i32_0 = arith.constant 0 : i32
    %c0_i32_1 = arith.constant 0 : i32
    return %c0_i32, %c0_i32_0 : i32, i32
  }
  func.func @transform_24(%arg0: i32) -> (i32, i32, i32) {
    %c0_i32 = arith.constant 0 : i32
    %c0_i32_0 = arith.constant 0 : i32
    %c0_i32_1 = arith.constant 0 : i32
    return %arg0, %c0_i32, %c0_i32_0 : i32, i32, i32
  }
}

</mosaic_0001>

<llo_original>
// kernel: tpu_custom_call.1
$region0: #{tpu_custom_call.1}
  #allocation0 [shape = 'u32[]', space=smem, size = 0x4, offset = 0x4, fixed_abs, tag = 'smem constant byte address 0x4 - core index']
  #allocation1 [shape = 'u32[72,128]{1,0:T(1,128)}', space=vmem, size = 0x9000, scoped, tag = 'internal scratch']
  %s0 = inlined_call_operand.vmem [shape: f32[2,64,128], index: 0, kind: input, shape index: {}]
  %s1 = inlined_call_operand.vmem [shape: f32[128,128], index: 1, kind: input, shape index: {}]
  %s2 = inlined_call_operand.vmem [shape: bf16[128,128], index: 2, kind: input, shape index: {}]
  %s3 = inlined_call_operand.vmem [shape: f32[1,128], index: 3, kind: input, shape index: {}]
  %s4 = inlined_call_operand.vmem [shape: f32[1,128], index: 4, kind: input, shape index: {}]
  %s5 = inlined_call_operand.vmem [shape: f32[1,128], index: 5, kind: input, shape index: {}]
  %s6 = inlined_call_operand.vmem [shape: bf16[4,128,32], index: 6, kind: input, shape index: {}]
  %s7 = inlined_call_operand.vmem [shape: bf16[4,128,32], index: 7, kind: input, shape index: {}]
  %s8 = inlined_call_operand.vmem [shape: bf16[4,128,32], index: 8, kind: input, shape index: {}]
  %s9 = inlined_call_operand.vmem [shape: bf16[4,32,128], index: 9, kind: input, shape index: {}]
  %s10 = inlined_call_operand.vmem [shape: f32[1,128], index: 10, kind: input, shape index: {}]
  %s11 = inlined_call_operand.vmem [shape: f32[1,128], index: 11, kind: input, shape index: {}]
  %s12 = inlined_call_operand.vmem [shape: f32[1,128], index: 12, kind: input, shape index: {}]
  %s13 = inlined_call_operand.vmem [shape: bf16[4,128,32], index: 13, kind: input, shape index: {}]
  %s14 = inlined_call_operand.vmem [shape: bf16[4,128,32], index: 14, kind: input, shape index: {}]
  %s15 = inlined_call_operand.vmem [shape: bf16[4,128,32], index: 15, kind: input, shape index: {}]
  %s16 = inlined_call_operand.vmem [shape: bf16[4,32,128], index: 16, kind: input, shape index: {}]
  %s17 = inlined_call_operand.vmem [shape: f32[1,128], index: 17, kind: input, shape index: {}]
  %s18 = inlined_call_operand.vmem [shape: bf16[128,1024], index: 18, kind: input, shape index: {}]
  %s19 = inlined_call_operand.vmem [shape: f32[1,1024], index: 19, kind: input, shape index: {}]
  %s20 = inlined_call_operand.vmem [shape: bf16[512,128], index: 20, kind: input, shape index: {}]
  %s21 = inlined_call_operand.vmem [shape: f32[1,128], index: 21, kind: input, shape index: {}]
  %s22 = inlined_call_operand.vmem [shape: bf16[128,128], index: 22, kind: input, shape index: {}]
  %s23 = inlined_call_operand.vmem [shape: f32[1,128], index: 23, kind: input, shape index: {}]
  %s24 = inlined_call_operand.hbm [shape: f32[2,64,128], index: 24, kind: output, shape index: {}]
  %s25 = sld [smem:[#allocation0]]
  $region129: #{tpu_custom_call.1} parent=0
    _
  %s27 = ssub.s32 1, %s25
  %s28 = scalar_select 0, %s27, %s25
  $region1: #{tpu_custom_call.1} parent=0
    #allocation2 [shape = 'u8[65536]{0}', space=vmem, size = 0x10000, scoped, tag = 'output window, operand 0']
    #allocation3 [shape = 's32[2]{0}', space=sflag, size = 0x8, scoped, tag = 'scoped memory for tpu_custom_call.1']
    %29 = vsyncpa [#allocation3], 0
    %s30 = scalar_lea.sflag [#allocation3], 1
    %31 = vsyncpa %s30, 0
    loop: start=0, step=1, limit=4
    $region2: #{tpu_custom_call.1} parent=1 // loop_pre_header
      _
    $region3: #{tpu_custom_call.1} parent=1 // loop_header
      %s33 = sphi 0, %s37
      %p34 = scmp.ge.s32.totalorder %s33, 4
      %s43 = sphi 0, %s45
      %s46 = sphi 0, %s43
      %s47 = sphi 0, %s46
      %s63 = sphi 0, %s47
      %s67 = sphi 0, %s67
      %s69 = sphi 0, %s67
      %s70 = sphi 0, %s69
      %s84 = sphi 0, %s70
      %s88 = sphi 0, %s88
      %s90 = sphi 0, %s88
      %s91 = sphi 0, %s90
      %s105 = sphi 0, %s91
      %s109 = sphi 0, %s109
      %s111 = sphi 0, %s109
      %s112 = sphi 0, %s111
      %s126 = sphi 0, %s112
      %s130 = sphi 0, %s130
      %s132 = sphi 0, %s130
      %s133 = sphi 0, %s132
      %s147 = sphi 0, %s133
      %s151 = sphi 0, %s151
      %s153 = sphi 0, %s151
      %s154 = sphi 0, %s153
      %s168 = sphi 0, %s154
      %s172 = sphi 0, %s172
      %s174 = sphi 0, %s172
      %s175 = sphi 0, %s174
      %s189 = sphi 0, %s175
      %s193 = sphi 0, %s193
      %s195 = sphi 0, %s193
      %s196 = sphi 0, %s195
      %s210 = sphi 0, %s196
      %s214 = sphi 0, %s214
      %s216 = sphi 0, %s214
      %s217 = sphi 0, %s216
      %s231 = sphi 0, %s217
      %s235 = sphi 0, %s235
      %s237 = sphi 0, %s235
      %s238 = sphi 0, %s237
      %s252 = sphi 0, %s238
      %s256 = sphi 0, %s256
      %s258 = sphi 0, %s256
      %s259 = sphi 0, %s258
      %s273 = sphi 0, %s259
      %s277 = sphi 0, %s277
      %s279 = sphi 0, %s277
      %s280 = sphi 0, %s279
      %s294 = sphi 0, %s280
      %s298 = sphi 0, %s298
      %s300 = sphi 0, %s298
      %s301 = sphi 0, %s300
      %s315 = sphi 0, %s301
      %s319 = sphi 0, %s319
      %s321 = sphi 0, %s319
      %s322 = sphi 0, %s321
      %s336 = sphi 0, %s322
      %s340 = sphi 0, %s340
      %s342 = sphi 0, %s340
      %s343 = sphi 0, %s342
      %s357 = sphi 0, %s343
      %s361 = sphi 0, %s361
      %s363 = sphi 0, %s361
      %s364 = sphi 0, %s363
      %s378 = sphi 0, %s364
      %s382 = sphi 0, %s382
      %s384 = sphi 0, %s382
      %s385 = sphi 0, %s384
      %s399 = sphi 0, %s385
      %s403 = sphi 0, %s403
      %s405 = sphi 0, %s403
      %s406 = sphi 0, %s405
      %s420 = sphi 0, %s406
      %s424 = sphi 0, %s424
      %s426 = sphi 0, %s424
      %s427 = sphi 0, %s426
      %s441 = sphi 0, %s427
      %s445 = sphi 0, %s445
      %s447 = sphi 0, %s445
      %s448 = sphi 0, %s447
      %s462 = sphi 0, %s448
      %s466 = sphi 0, %s466
      %s468 = sphi 0, %s466
      %s469 = sphi 0, %s468
      %s483 = sphi 0, %s469
      %s487 = sphi 0, %s487
      %s489 = sphi 0, %s487
      %s490 = sphi 0, %s489
      %s504 = sphi 0, %s490
      %s508 = sphi 0, %s508
      %s510 = sphi 0, %s508
      %s511 = sphi 0, %s510
      %s525 = sphi 0, %s511
      %s529 = sphi 0, %s529
      %s531 = sphi 0, %s529
      %s532 = sphi 0, %s531
      %s546 = sphi 0, %s532
      %s552 = sphi 0, %s554
      %s555 = sphi 0, %s552
      %s556 = sphi 0, %s555
      %s572 = sphi 0, %s556
    $region4: #{tpu_custom_call.1} parent=1 // loop_header_branch
      %36 = sbr.rel (%p34) target = $region8
    $region5: #{tpu_custom_call.1} parent=1 // loop_body
      %s38 = ssub.s32 %s33, 1
      %s39 = ssub.s32 %s33, 2
      %s40 = sadd.s32 %s33, 1
      %s41 = ssub.s32 %s33, %s40
      %p42 = scmp.eq.s32.totalorder %s41, 0
      %s44 = sadd.s32 %s43, 1
      %s45 = scalar_select %p42, %s43, %s44
      %p48 = pneg %p42
      %p49 = scmp.eq.s32.totalorder %s33, 1
      %p50 = por %p48, %p49
      %p51 = scmp.ne.s32.totalorder %s43, %s46
      %p52 = scmp.eq.s32.totalorder %s33, 0
      %p53 = por %p51, %p52
      %p54 = scmp.ne.s32.totalorder %s43, %s46
      %p55 = scmp.eq.s32.totalorder %s38, 1
      %p56 = por %p54, %p55
      %p57 = scmp.ne.s32.totalorder %s46, %s47
      %p58 = scmp.eq.s32.totalorder %s38, 0
      %p59 = por %p57, %p58
      %p60 = scmp.ne.s32.totalorder %s46, %s47
      %p61 = scmp.eq.s32.totalorder %s39, 1
      %p62 = por %p60, %p61
      %p64 = scmp.ne.s32.totalorder %s47, %s63
      %p65 = scmp.eq.s32.totalorder %s39, 0
      %p66 = por %p64, %p65
      %s68 = sadd.s32 %s67, 1
      %p71 = scmp.eq.s32.totalorder %s33, 1
      %p72 = scmp.ne.s32.totalorder %s67, %s69
      %p73 = scmp.eq.s32.totalorder %s33, 0
      %p74 = por %p72, %p73
      %p75 = scmp.ne.s32.totalorder %s67, %s69
      %p76 = scmp.eq.s32.totalorder %s38, 1
      %p77 = por %p75, %p76
      %p78 = scmp.ne.s32.totalorder %s69, %s70
      %p79 = scmp.eq.s32.totalorder %s38, 0
      %p80 = por %p78, %p79
      %p81 = scmp.ne.s32.totalorder %s69, %s70
      %p82 = scmp.eq.s32.totalorder %s39, 1
      %p83 = por %p81, %p82
      %p85 = scmp.ne.s32.totalorder %s70, %s84
      %p86 = scmp.eq.s32.totalorder %s39, 0
      %p87 = por %p85, %p86
      %s89 = sadd.s32 %s88, 1
      %p92 = scmp.eq.s32.totalorder %s33, 1
      %p93 = scmp.ne.s32.totalorder %s88, %s90
      %p94 = scmp.eq.s32.totalorder %s33, 0
      %p95 = por %p93, %p94
      %p96 = scmp.ne.s32.totalorder %s88, %s90
      %p97 = scmp.eq.s32.totalorder %s38, 1
      %p98 = por %p96, %p97
      %p99 = scmp.ne.s32.totalorder %s90, %s91
      %p100 = scmp.eq.s32.totalorder %s38, 0
      %p101 = por %p99, %p100
      %p102 = scmp.ne.s32.totalorder %s90, %s91
      %p103 = scmp.eq.s32.totalorder %s39, 1
      %p104 = por %p102, %p103
      %p106 = scmp.ne.s32.totalorder %s91, %s105
      %p107 = scmp.eq.s32.totalorder %s39, 0
      %p108 = por %p106, %p107
      %s110 = sadd.s32 %s109, 1
      %p113 = scmp.eq.s32.totalorder %s33, 1
      %p114 = scmp.ne.s32.totalorder %s109, %s111
      %p115 = scmp.eq.s32.totalorder %s33, 0
      %p116 = por %p114, %p115
      %p117 = scmp.ne.s32.totalorder %s109, %s111
      %p118 = scmp.eq.s32.totalorder %s38, 1
      %p119 = por %p117, %p118
      %p120 = scmp.ne.s32.totalorder %s111, %s112
      %p121 = scmp.eq.s32.totalorder %s38, 0
      %p122 = por %p120, %p121
      %p123 = scmp.ne.s32.totalorder %s111, %s112
      %p124 = scmp.eq.s32.totalorder %s39, 1
      %p125 = por %p123, %p124
      %p127 = scmp.ne.s32.totalorder %s112, %s126
      %p128 = scmp.eq.s32.totalorder %s39, 0
      %p129 = por %p127, %p128
      %s131 = sadd.s32 %s130, 1
      %p134 = scmp.eq.s32.totalorder %s33, 1
      %p135 = scmp.ne.s32.totalorder %s130, %s132
      %p136 = scmp.eq.s32.totalorder %s33, 0
      %p137 = por %p135, %p136
      %p138 = scmp.ne.s32.totalorder %s130, %s132
      %p139 = scmp.eq.s32.totalorder %s38, 1
      %p140 = por %p138, %p139
      %p141 = scmp.ne.s32.totalorder %s132, %s133
      %p142 = scmp.eq.s32.totalorder %s38, 0
      %p143 = por %p141, %p142
      %p144 = scmp.ne.s32.totalorder %s132, %s133
      %p145 = scmp.eq.s32.totalorder %s39, 1
      %p146 = por %p144, %p145
      %p148 = scmp.ne.s32.totalorder %s133, %s147
      %p149 = scmp.eq.s32.totalorder %s39, 0
      %p150 = por %p148, %p149
      %s152 = sadd.s32 %s151, 1
      %p155 = scmp.eq.s32.totalorder %s33, 1
      %p156 = scmp.ne.s32.totalorder %s151, %s153
      %p157 = scmp.eq.s32.totalorder %s33, 0
      %p158 = por %p156, %p157
      %p159 = scmp.ne.s32.totalorder %s151, %s153
      %p160 = scmp.eq.s32.totalorder %s38, 1
      %p161 = por %p159, %p160
      %p162 = scmp.ne.s32.totalorder %s153, %s154
      %p163 = scmp.eq.s32.totalorder %s38, 0
      %p164 = por %p162, %p163
      %p165 = scmp.ne.s32.totalorder %s153, %s154
      %p166 = scmp.eq.s32.totalorder %s39, 1
      %p167 = por %p165, %p166
      %p169 = scmp.ne.s32.totalorder %s154, %s168
      %p170 = scmp.eq.s32.totalorder %s39, 0
      %p171 = por %p169, %p170
      %s173 = sadd.s32 %s172, 1
      %p176 = scmp.eq.s32.totalorder %s33, 1
      %p177 = scmp.ne.s32.totalorder %s172, %s174
      %p178 = scmp.eq.s32.totalorder %s33, 0
      %p179 = por %p177, %p178
      %p180 = scmp.ne.s32.totalorder %s172, %s174
      %p181 = scmp.eq.s32.totalorder %s38, 1
      %p182 = por %p180, %p181
      %p183 = scmp.ne.s32.totalorder %s174, %s175
      %p184 = scmp.eq.s32.totalorder %s38, 0
      %p185 = por %p183, %p184
      %p186 = scmp.ne.s32.totalorder %s174, %s175
      %p187 = scmp.eq.s32.totalorder %s39, 1
      %p188 = por %p186, %p187
      %p190 = scmp.ne.s32.totalorder %s175, %s189
      %p191 = scmp.eq.s32.totalorder %s39, 0
      %p192 = por %p190, %p191
      %s194 = sadd.s32 %s193, 1
      %p197 = scmp.eq.s32.totalorder %s33, 1
      %p198 = scmp.ne.s32.totalorder %s193, %s195
      %p199 = scmp.eq.s32.totalorder %s33, 0
      %p200 = por %p198, %p199
      %p201 = scmp.ne.s32.totalorder %s193, %s195
      %p202 = scmp.eq.s32.totalorder %s38, 1
      %p203 = por %p201, %p202
      %p204 = scmp.ne.s32.totalorder %s195, %s196
      %p205 = scmp.eq.s32.totalorder %s38, 0
      %p206 = por %p204, %p205
      %p207 = scmp.ne.s32.totalorder %s195, %s196
      %p208 = scmp.eq.s32.totalorder %s39, 1
      %p209 = por %p207, %p208
      %p211 = scmp.ne.s32.totalorder %s196, %s210
      %p212 = scmp.eq.s32.totalorder %s39, 0
      %p213 = por %p211, %p212
      %s215 = sadd.s32 %s214, 1
      %p218 = scmp.eq.s32.totalorder %s33, 1
      %p219 = scmp.ne.s32.totalorder %s214, %s216
      %p220 = scmp.eq.s32.totalorder %s33, 0
      %p221 = por %p219, %p220
      %p222 = scmp.ne.s32.totalorder %s214, %s216
      %p223 = scmp.eq.s32.totalorder %s38, 1
      %p224 = por %p222, %p223
      %p225 = scmp.ne.s32.totalorder %s216, %s217
      %p226 = scmp.eq.s32.totalorder %s38, 0
      %p227 = por %p225, %p226
      %p228 = scmp.ne.s32.totalorder %s216, %s217
      %p229 = scmp.eq.s32.totalorder %s39, 1
      %p230 = por %p228, %p229
      %p232 = scmp.ne.s32.totalorder %s217, %s231
      %p233 = scmp.eq.s32.totalorder %s39, 0
      %p234 = por %p232, %p233
      %s236 = sadd.s32 %s235, 1
      %p239 = scmp.eq.s32.totalorder %s33, 1
      %p240 = scmp.ne.s32.totalorder %s235, %s237
      %p241 = scmp.eq.s32.totalorder %s33, 0
      %p242 = por %p240, %p241
      %p243 = scmp.ne.s32.totalorder %s235, %s237
      %p244 = scmp.eq.s32.totalorder %s38, 1
      %p245 = por %p243, %p244
      %p246 = scmp.ne.s32.totalorder %s237, %s238
      %p247 = scmp.eq.s32.totalorder %s38, 0
      %p248 = por %p246, %p247
      %p249 = scmp.ne.s32.totalorder %s237, %s238
      %p250 = scmp.eq.s32.totalorder %s39, 1
      %p251 = por %p249, %p250
      %p253 = scmp.ne.s32.totalorder %s238, %s252
      %p254 = scmp.eq.s32.totalorder %s39, 0
      %p255 = por %p253, %p254
      %s257 = sadd.s32 %s256, 1
      %p260 = scmp.eq.s32.totalorder %s33, 1
      %p261 = scmp.ne.s32.totalorder %s256, %s258
      %p262 = scmp.eq.s32.totalorder %s33, 0
      %p263 = por %p261, %p262
      %p264 = scmp.ne.s32.totalorder %s256, %s258
      %p265 = scmp.eq.s32.totalorder %s38, 1
      %p266 = por %p264, %p265
      %p267 = scmp.ne.s32.totalorder %s258, %s259
      %p268 = scmp.eq.s32.totalorder %s38, 0
      %p269 = por %p267, %p268
      %p270 = scmp.ne.s32.totalorder %s258, %s259
      %p271 = scmp.eq.s32.totalorder %s39, 1
      %p272 = por %p270, %p271
      %p274 = scmp.ne.s32.totalorder %s259, %s273
      %p275 = scmp.eq.s32.totalorder %s39, 0
      %p276 = por %p274, %p275
      %s278 = sadd.s32 %s277, 1
      %p281 = scmp.eq.s32.totalorder %s33, 1
      %p282 = scmp.ne.s32.totalorder %s277, %s279
      %p283 = scmp.eq.s32.totalorder %s33, 0
      %p284 = por %p282, %p283
      %p285 = scmp.ne.s32.totalorder %s277, %s279
      %p286 = scmp.eq.s32.totalorder %s38, 1
      %p287 = por %p285, %p286
      %p288 = scmp.ne.s32.totalorder %s279, %s280
      %p289 = scmp.eq.s32.totalorder %s38, 0
      %p290 = por %p288, %p289
      %p291 = scmp.ne.s32.totalorder %s279, %s280
      %p292 = scmp.eq.s32.totalorder %s39, 1
      %p293 = por %p291, %p292
      %p295 = scmp.ne.s32.totalorder %s280, %s294
      %p296 = scmp.eq.s32.totalorder %s39, 0
      %p297 = por %p295, %p296
      %s299 = sadd.s32 %s298, 1
      %p302 = scmp.eq.s32.totalorder %s33, 1
      %p303 = scmp.ne.s32.totalorder %s298, %s300
      %p304 = scmp.eq.s32.totalorder %s33, 0
      %p305 = por %p303, %p304
      %p306 = scmp.ne.s32.totalorder %s298, %s300
      %p307 = scmp.eq.s32.totalorder %s38, 1
      %p308 = por %p306, %p307
      %p309 = scmp.ne.s32.totalorder %s300, %s301
      %p310 = scmp.eq.s32.totalorder %s38, 0
      %p311 = por %p309, %p310
      %p312 = scmp.ne.s32.totalorder %s300, %s301
      %p313 = scmp.eq.s32.totalorder %s39, 1
      %p314 = por %p312, %p313
      %p316 = scmp.ne.s32.totalorder %s301, %s315
      %p317 = scmp.eq.s32.totalorder %s39, 0
      %p318 = por %p316, %p317
      %s320 = sadd.s32 %s319, 1
      %p323 = scmp.eq.s32.totalorder %s33, 1
      %p324 = scmp.ne.s32.totalorder %s319, %s321
      %p325 = scmp.eq.s32.totalorder %s33, 0
      %p326 = por %p324, %p325
      %p327 = scmp.ne.s32.totalorder %s319, %s321
      %p328 = scmp.eq.s32.totalorder %s38, 1
      %p329 = por %p327, %p328
      %p330 = scmp.ne.s32.totalorder %s321, %s322
      %p331 = scmp.eq.s32.totalorder %s38, 0
      %p332 = por %p330, %p331
      %p333 = scmp.ne.s32.totalorder %s321, %s322
      %p334 = scmp.eq.s32.totalorder %s39, 1
      %p335 = por %p333, %p334
      %p337 = scmp.ne.s32.totalorder %s322, %s336
      %p338 = scmp.eq.s32.totalorder %s39, 0
      %p339 = por %p337, %p338
      %s341 = sadd.s32 %s340, 1
      %p344 = scmp.eq.s32.totalorder %s33, 1
      %p345 = scmp.ne.s32.totalorder %s340, %s342
      %p346 = scmp.eq.s32.totalorder %s33, 0
      %p347 = por %p345, %p346
      %p348 = scmp.ne.s32.totalorder %s340, %s342
      %p349 = scmp.eq.s32.totalorder %s38, 1
      %p350 = por %p348, %p349
      %p351 = scmp.ne.s32.totalorder %s342, %s343
      %p352 = scmp.eq.s32.totalorder %s38, 0
      %p353 = por %p351, %p352
      %p354 = scmp.ne.s32.totalorder %s342, %s343
      %p355 = scmp.eq.s32.totalorder %s39, 1
      %p356 = por %p354, %p355
      %p358 = scmp.ne.s32.totalorder %s343, %s357
      %p359 = scmp.eq.s32.totalorder %s39, 0
      %p360 = por %p358, %p359
      %s362 = sadd.s32 %s361, 1
      %p365 = scmp.eq.s32.totalorder %s33, 1
      %p366 = scmp.ne.s32.totalorder %s361, %s363
      %p367 = scmp.eq.s32.totalorder %s33, 0
      %p368 = por %p366, %p367
      %p369 = scmp.ne.s32.totalorder %s361, %s363
      %p370 = scmp.eq.s32.totalorder %s38, 1
      %p371 = por %p369, %p370
      %p372 = scmp.ne.s32.totalorder %s363, %s364
      %p373 = scmp.eq.s32.totalorder %s38, 0
      %p374 = por %p372, %p373
      %p375 = scmp.ne.s32.totalorder %s363, %s364
      %p376 = scmp.eq.s32.totalorder %s39, 1
      %p377 = por %p375, %p376
      %p379 = scmp.ne.s32.totalorder %s364, %s378
      %p380 = scmp.eq.s32.totalorder %s39, 0
      %p381 = por %p379, %p380
      %s383 = sadd.s32 %s382, 1
      %p386 = scmp.eq.s32.totalorder %s33, 1
      %p387 = scmp.ne.s32.totalorder %s382, %s384
      %p388 = scmp.eq.s32.totalorder %s33, 0
      %p389 = por %p387, %p388
      %p390 = scmp.ne.s32.totalorder %s382, %s384
      %p391 = scmp.eq.s32.totalorder %s38, 1
      %p392 = por %p390, %p391
      %p393 = scmp.ne.s32.totalorder %s384, %s385
      %p394 = scmp.eq.s32.totalorder %s38, 0
      %p395 = por %p393, %p394
      %p396 = scmp.ne.s32.totalorder %s384, %s385
      %p397 = scmp.eq.s32.totalorder %s39, 1
      %p398 = por %p396, %p397
      %p400 = scmp.ne.s32.totalorder %s385, %s399
      %p401 = scmp.eq.s32.totalorder %s39, 0
      %p402 = por %p400, %p401
      %s404 = sadd.s32 %s403, 1
      %p407 = scmp.eq.s32.totalorder %s33, 1
      %p408 = scmp.ne.s32.totalorder %s403, %s405
      %p409 = scmp.eq.s32.totalorder %s33, 0
      %p410 = por %p408, %p409
      %p411 = scmp.ne.s32.totalorder %s403, %s405
      %p412 = scmp.eq.s32.totalorder %s38, 1
      %p413 = por %p411, %p412
      %p414 = scmp.ne.s32.totalorder %s405, %s406
      %p415 = scmp.eq.s32.totalorder %s38, 0
      %p416 = por %p414, %p415
      %p417 = scmp.ne.s32.totalorder %s405, %s406
      %p418 = scmp.eq.s32.totalorder %s39, 1
      %p419 = por %p417, %p418
      %p421 = scmp.ne.s32.totalorder %s406, %s420
      %p422 = scmp.eq.s32.totalorder %s39, 0
      %p423 = por %p421, %p422
      %s425 = sadd.s32 %s424, 1
      %p428 = scmp.eq.s32.totalorder %s33, 1
      %p429 = scmp.ne.s32.totalorder %s424, %s426
      %p430 = scmp.eq.s32.totalorder %s33, 0
      %p431 = por %p429, %p430
      %p432 = scmp.ne.s32.totalorder %s424, %s426
      %p433 = scmp.eq.s32.totalorder %s38, 1
      %p434 = por %p432, %p433
      %p435 = scmp.ne.s32.totalorder %s426, %s427
      %p436 = scmp.eq.s32.totalorder %s38, 0
      %p437 = por %p435, %p436
      %p438 = scmp.ne.s32.totalorder %s426, %s427
      %p439 = scmp.eq.s32.totalorder %s39, 1
      %p440 = por %p438, %p439
      %p442 = scmp.ne.s32.totalorder %s427, %s441
      %p443 = scmp.eq.s32.totalorder %s39, 0
      %p444 = por %p442, %p443
      %s446 = sadd.s32 %s445, 1
      %p449 = scmp.eq.s32.totalorder %s33, 1
      %p450 = scmp.ne.s32.totalorder %s445, %s447
      %p451 = scmp.eq.s32.totalorder %s33, 0
      %p452 = por %p450, %p451
      %p453 = scmp.ne.s32.totalorder %s445, %s447
      %p454 = scmp.eq.s32.totalorder %s38, 1
      %p455 = por %p453, %p454
      %p456 = scmp.ne.s32.totalorder %s447, %s448
      %p457 = scmp.eq.s32.totalorder %s38, 0
      %p458 = por %p456, %p457
      %p459 = scmp.ne.s32.totalorder %s447, %s448
      %p460 = scmp.eq.s32.totalorder %s39, 1
      %p461 = por %p459, %p460
      %p463 = scmp.ne.s32.totalorder %s448, %s462
      %p464 = scmp.eq.s32.totalorder %s39, 0
      %p465 = por %p463, %p464
      %s467 = sadd.s32 %s466, 1
      %p470 = scmp.eq.s32.totalorder %s33, 1
      %p471 = scmp.ne.s32.totalorder %s466, %s468
      %p472 = scmp.eq.s32.totalorder %s33, 0
      %p473 = por %p471, %p472
      %p474 = scmp.ne.s32.totalorder %s466, %s468
      %p475 = scmp.eq.s32.totalorder %s38, 1
      %p476 = por %p474, %p475
      %p477 = scmp.ne.s32.totalorder %s468, %s469
      %p478 = scmp.eq.s32.totalorder %s38, 0
      %p479 = por %p477, %p478
      %p480 = scmp.ne.s32.totalorder %s468, %s469
      %p481 = scmp.eq.s32.totalorder %s39, 1
      %p482 = por %p480, %p481
      %p484 = scmp.ne.s32.totalorder %s469, %s483
      %p485 = scmp.eq.s32.totalorder %s39, 0
      %p486 = por %p484, %p485
      %s488 = sadd.s32 %s487, 1
      %p491 = scmp.eq.s32.totalorder %s33, 1
      %p492 = scmp.ne.s32.totalorder %s487, %s489
      %p493 = scmp.eq.s32.totalorder %s33, 0
      %p494 = por %p492, %p493
      %p495 = scmp.ne.s32.totalorder %s487, %s489
      %p496 = scmp.eq.s32.totalorder %s38, 1
      %p497 = por %p495, %p496
      %p498 = scmp.ne.s32.totalorder %s489, %s490
      %p499 = scmp.eq.s32.totalorder %s38, 0
      %p500 = por %p498, %p499
      %p501 = scmp.ne.s32.totalorder %s489, %s490
      %p502 = scmp.eq.s32.totalorder %s39, 1
      %p503 = por %p501, %p502
      %p505 = scmp.ne.s32.totalorder %s490, %s504
      %p506 = scmp.eq.s32.totalorder %s39, 0
      %p507 = por %p505, %p506
      %s509 = sadd.s32 %s508, 1
      %p512 = scmp.eq.s32.totalorder %s33, 1
      %p513 = scmp.ne.s32.totalorder %s508, %s510
      %p514 = scmp.eq.s32.totalorder %s33, 0
      %p515 = por %p513, %p514
      %p516 = scmp.ne.s32.totalorder %s508, %s510
      %p517 = scmp.eq.s32.totalorder %s38, 1
      %p518 = por %p516, %p517
      %p519 = scmp.ne.s32.totalorder %s510, %s511
      %p520 = scmp.eq.s32.totalorder %s38, 0
      %p521 = por %p519, %p520
      %p522 = scmp.ne.s32.totalorder %s510, %s511
      %p523 = scmp.eq.s32.totalorder %s39, 1
      %p524 = por %p522, %p523
      %p526 = scmp.ne.s32.totalorder %s511, %s525
      %p527 = scmp.eq.s32.totalorder %s39, 0
      %p528 = por %p526, %p527
      %s530 = sadd.s32 %s529, 1
      %p533 = scmp.eq.s32.totalorder %s33, 1
      %p534 = scmp.ne.s32.totalorder %s529, %s531
      %p535 = scmp.eq.s32.totalorder %s33, 0
      %p536 = por %p534, %p535
      %p537 = scmp.ne.s32.totalorder %s529, %s531
      %p538 = scmp.eq.s32.totalorder %s38, 1
      %p539 = por %p537, %p538
      %p540 = scmp.ne.s32.totalorder %s531, %s532
      %p541 = scmp.eq.s32.totalorder %s38, 0
      %p542 = por %p540, %p541
      %p543 = scmp.ne.s32.totalorder %s531, %s532
      %p544 = scmp.eq.s32.totalorder %s39, 1
      %p545 = por %p543, %p544
      %p547 = scmp.ne.s32.totalorder %s532, %s546
      %p548 = scmp.eq.s32.totalorder %s39, 0
      %p549 = por %p547, %p548
      %s550 = ssub.s32 %s33, %s40
      %p551 = scmp.eq.s32.totalorder %s550, 0
      %s553 = sadd.s32 %s552, 1
      %s554 = scalar_select %p551, %s552, %s553
      %p557 = pneg %p551
      %p558 = scmp.eq.s32.totalorder %s33, 1
      %p559 = por %p557, %p558
      %p560 = scmp.ne.s32.totalorder %s552, %s555
      %p561 = scmp.eq.s32.totalorder %s33, 0
      %p562 = por %p560, %p561
      %p563 = scmp.ne.s32.totalorder %s552, %s555
      %p564 = scmp.eq.s32.totalorder %s38, 1
      %p565 = por %p563, %p564
      %p566 = scmp.ne.s32.totalorder %s555, %s556
      %p567 = scmp.eq.s32.totalorder %s38, 0
      %p568 = por %p566, %p567
      %p569 = scmp.ne.s32.totalorder %s555, %s556
      %p570 = scmp.eq.s32.totalorder %s39, 1
      %p571 = por %p569, %p570
      %p573 = scmp.ne.s32.totalorder %s556, %s572
      %p574 = scmp.eq.s32.totalorder %s39, 0
      %p575 = por %p573, %p574
      %p576 = scmp.le.s32.totalorder 1, %s33
      %p577 = scmp.lt.s32.totalorder %s33, 3
      %p578 = pnand %p576, %p577
      %p579 = pneg %p578
      // Predicated region
      $region9: #{tpu_custom_call.1} parent=5 // pred_check
        _
      $region10: #{tpu_custom_call.1} parent=5 // pred_check_branch
        %581 = sbr.rel (%p578) target = $region12
      $region11: #{tpu_custom_call.1} parent=5 // pred_region
        %s582 = ssub.s32 %s33, 1
        // Predicated region
        $region13: #{tpu_custom_call.1} parent=11 // pred_check
          %p583 = pneg %p80
        $region14: #{tpu_custom_call.1} parent=11 // pred_check_branch
          %585 = sbr.rel (%p583) target = $region16
        $region15: #{tpu_custom_call.1} parent=11 // pred_region
          _
        $region16: #{tpu_custom_call.1} parent=11 // pred_fallthru
          _
        // Predicated region
        $region17: #{tpu_custom_call.1} parent=11 // pred_check
          %p586 = pneg %p101
        $region18: #{tpu_custom_call.1} parent=11 // pred_check_branch
          %588 = sbr.rel (%p586) target = $region20
        $region19: #{tpu_custom_call.1} parent=11 // pred_region
          _
        $region20: #{tpu_custom_call.1} parent=11 // pred_fallthru
          _
        // Predicated region
        $region21: #{tpu_custom_call.1} parent=11 // pred_check
          %p589 = pneg %p122
        $region22: #{tpu_custom_call.1} parent=11 // pred_check_branch
          %591 = sbr.rel (%p589) target = $region24
        $region23: #{tpu_custom_call.1} parent=11 // pred_region
          _
        $region24: #{tpu_custom_call.1} parent=11 // pred_fallthru
          _
        // Predicated region
        $region25: #{tpu_custom_call.1} parent=11 // pred_check
          %p592 = pneg %p143
        $region26: #{tpu_custom_call.1} parent=11 // pred_check_branch
          %594 = sbr.rel (%p592) target = $region28
        $region27: #{tpu_custom_call.1} parent=11 // pred_region
          _
        $region28: #{tpu_custom_call.1} parent=11 // pred_fallthru
          _
        // Predicated region
        $region29: #{tpu_custom_call.1} parent=11 // pred_check
          %p595 = pneg %p164
        $region30: #{tpu_custom_call.1} parent=11 // pred_check_branch
          %597 = sbr.rel (%p595) target = $region32
        $region31: #{tpu_custom_call.1} parent=11 // pred_region
          _
        $region32: #{tpu_custom_call.1} parent=11 // pred_fallthru
          _
        // Predicated region
        $region33: #{tpu_custom_call.1} parent=11 // pred_check
          %p598 = pneg %p185
        $region34: #{tpu_custom_call.1} parent=11 // pred_check_branch
          %600 = sbr.rel (%p598) target = $region36
        $region35: #{tpu_custom_call.1} parent=11 // pred_region
          _
        $region36: #{tpu_custom_call.1} parent=11 // pred_fallthru
          _
        // Predicated region
        $region37: #{tpu_custom_call.1} parent=11 // pred_check
          %p601 = pneg %p206
        $region38: #{tpu_custom_call.1} parent=11 // pred_check_branch
          %603 = sbr.rel (%p601) target = $region40
        $region39: #{tpu_custom_call.1} parent=11 // pred_region
          _
        $region40: #{tpu_custom_call.1} parent=11 // pred_fallthru
          _
        // Predicated region
        $region41: #{tpu_custom_call.1} parent=11 // pred_check
          %p604 = pneg %p227
        $region42: #{tpu_custom_call.1} parent=11 // pred_check_branch
          %606 = sbr.rel (%p604) target = $region44
        $region43: #{tpu_custom_call.1} parent=11 // pred_region
          _
        $region44: #{tpu_custom_call.1} parent=11 // pred_fallthru
          _
        // Predicated region
        $region45: #{tpu_custom_call.1} parent=11 // pred_check
          %p607 = pneg %p248
        $region46: #{tpu_custom_call.1} parent=11 // pred_check_branch
          %609 = sbr.rel (%p607) target = $region48
        $region47: #{tpu_custom_call.1} parent=11 // pred_region
          _
        $region48: #{tpu_custom_call.1} parent=11 // pred_fallthru
          _
        // Predicated region
        $region49: #{tpu_custom_call.1} parent=11 // pred_check
          %p610 = pneg %p269
        $region50: #{tpu_custom_call.1} parent=11 // pred_check_branch
          %612 = sbr.rel (%p610) target = $region52
        $region51: #{tpu_custom_call.1} parent=11 // pred_region
          _
        $region52: #{tpu_custom_call.1} parent=11 // pred_fallthru
          _
        // Predicated region
        $region53: #{tpu_custom_call.1} parent=11 // pred_check
          %p613 = pneg %p290
        $region54: #{tpu_custom_call.1} parent=11 // pred_check_branch
          %615 = sbr.rel (%p613) target = $region56
        $region55: #{tpu_custom_call.1} parent=11 // pred_region
          _
        $region56: #{tpu_custom_call.1} parent=11 // pred_fallthru
          _
        // Predicated region
        $region57: #{tpu_custom_call.1} parent=11 // pred_check
          %p616 = pneg %p311
        $region58: #{tpu_custom_call.1} parent=11 // pred_check_branch
          %618 = sbr.rel (%p616) target = $region60
        $region59: #{tpu_custom_call.1} parent=11 // pred_region
          _
        $region60: #{tpu_custom_call.1} parent=11 // pred_fallthru
          _
        // Predicated region
        $region61: #{tpu_custom_call.1} parent=11 // pred_check
          %p619 = pneg %p332
        $region62: #{tpu_custom_call.1} parent=11 // pred_check_branch
          %621 = sbr.rel (%p619) target = $region64
        $region63: #{tpu_custom_call.1} parent=11 // pred_region
          _
        $region64: #{tpu_custom_call.1} parent=11 // pred_fallthru
          _
        // Predicated region
        $region65: #{tpu_custom_call.1} parent=11 // pred_check
          %p622 = pneg %p353
        $region66: #{tpu_custom_call.1} parent=11 // pred_check_branch
          %624 = sbr.rel (%p622) target = $region68
        $region67: #{tpu_custom_call.1} parent=11 // pred_region
          _
        $region68: #{tpu_custom_call.1} parent=11 // pred_fallthru
          _
        // Predicated region
        $region69: #{tpu_custom_call.1} parent=11 // pred_check
          %p625 = pneg %p374
        $region70: #{tpu_custom_call.1} parent=11 // pred_check_branch
          %627 = sbr.rel (%p625) target = $region72
        $region71: #{tpu_custom_call.1} parent=11 // pred_region
          _
        $region72: #{tpu_custom_call.1} parent=11 // pred_fallthru
          _
        // Predicated region
        $region73: #{tpu_custom_call.1} parent=11 // pred_check
          %p628 = pneg %p395
        $region74: #{tpu_custom_call.1} parent=11 // pred_check_branch
          %630 = sbr.rel (%p628) target = $region76
        $region75: #{tpu_custom_call.1} parent=11 // pred_region
          _
        $region76: #{tpu_custom_call.1} parent=11 // pred_fallthru
          _
        // Predicated region
        $region77: #{tpu_custom_call.1} parent=11 // pred_check
          %p631 = pneg %p416
        $region78: #{tpu_custom_call.1} parent=11 // pred_check_branch
          %633 = sbr.rel (%p631) target = $region80
        $region79: #{tpu_custom_call.1} parent=11 // pred_region
          _
        $region80: #{tpu_custom_call.1} parent=11 // pred_fallthru
          _
        // Predicated region
        $region81: #{tpu_custom_call.1} parent=11 // pred_check
          %p634 = pneg %p437
        $region82: #{tpu_custom_call.1} parent=11 // pred_check_branch
          %636 = sbr.rel (%p634) target = $region84
        $region83: #{tpu_custom_call.1} parent=11 // pred_region
          _
        $region84: #{tpu_custom_call.1} parent=11 // pred_fallthru
          _
        // Predicated region
        $region85: #{tpu_custom_call.1} parent=11 // pred_check
          %p637 = pneg %p458
        $region86: #{tpu_custom_call.1} parent=11 // pred_check_branch
          %639 = sbr.rel (%p637) target = $region88
        $region87: #{tpu_custom_call.1} parent=11 // pred_region
          _
        $region88: #{tpu_custom_call.1} parent=11 // pred_fallthru
          _
        // Predicated region
        $region89: #{tpu_custom_call.1} parent=11 // pred_check
          %p640 = pneg %p479
        $region90: #{tpu_custom_call.1} parent=11 // pred_check_branch
          %642 = sbr.rel (%p640) target = $region92
        $region91: #{tpu_custom_call.1} parent=11 // pred_region
          _
        $region92: #{tpu_custom_call.1} parent=11 // pred_fallthru
          _
        // Predicated region
        $region93: #{tpu_custom_call.1} parent=11 // pred_check
          %p643 = pneg %p500
        $region94: #{tpu_custom_call.1} parent=11 // pred_check_branch
          %645 = sbr.rel (%p643) target = $region96
        $region95: #{tpu_custom_call.1} parent=11 // pred_region
          _
        $region96: #{tpu_custom_call.1} parent=11 // pred_fallthru
          _
        // Predicated region
        $region97: #{tpu_custom_call.1} parent=11 // pred_check
          %p646 = pneg %p521
        $region98: #{tpu_custom_call.1} parent=11 // pred_check_branch
          %648 = sbr.rel (%p646) target = $region100
        $region99: #{tpu_custom_call.1} parent=11 // pred_region
          _
        $region100: #{tpu_custom_call.1} parent=11 // pred_fallthru
          _
        // Predicated region
        $region101: #{tpu_custom_call.1} parent=11 // pred_check
          %p649 = pneg %p542
        $region102: #{tpu_custom_call.1} parent=11 // pred_check_branch
          %651 = sbr.rel (%p649) target = $region104
        $region103: #{tpu_custom_call.1} parent=11 // pred_region
          _
        $region104: #{tpu_custom_call.1} parent=11 // pred_fallthru
          _
      $region12: #{tpu_custom_call.1} parent=5 // pred_fallthru
        _
      %p652 = scmp.lt.s32.totalorder %s33, 2
      // Predicated region
      $region105: #{tpu_custom_call.1} parent=5 // pred_check
        %p653 = pneg %p652
      $region106: #{tpu_custom_call.1} parent=5 // pred_check_branch
        %655 = sbr.rel (%p653) target = $region108
      $region107: #{tpu_custom_call.1} parent=5 // pred_region
        // Predicated region
        $region109: #{tpu_custom_call.1} parent=107 // pred_check
          %p656 = pneg %p53
        $region110: #{tpu_custom_call.1} parent=107 // pred_check_branch
          %658 = sbr.rel (%p656) target = $region112
        $region111: #{tpu_custom_call.1} parent=107 // pred_region
          %p659 = scmp.lt.s32.totalorder %s33, 1
          %s660 = scalar_select %p659, %s33, 1
          %s661 = smul.addr %s660, 8
          %s662 = smul.addr %s661, 8
          %s663 = scalar_lea.vmem %s0, %s662
        $region112: #{tpu_custom_call.1} parent=107 // pred_fallthru
          _
      $region108: #{tpu_custom_call.1} parent=5 // pred_fallthru
        _
      %p664 = scmp.le.s32.totalorder 1, %s33
      %p665 = scmp.lt.s32.totalorder %s33, 3
      %p666 = pnand %p664, %p665
      %p667 = pneg %p666
      // Predicated region
      $region113: #{tpu_custom_call.1} parent=5 // pred_check
        _
      $region114: #{tpu_custom_call.1} parent=5 // pred_check_branch
        %669 = sbr.rel (%p666) target = $region116
      $region115: #{tpu_custom_call.1} parent=5 // pred_region
        %s670 = ssub.s32 %s33, 1
        %p671 = scmp.lt.s32.totalorder %s38, 1
        %s672 = scalar_select %p671, %s38, 1
        %s673 = smul.addr %s672, 8
        %s674 = smul.addr %s673, 8
        %s675 = scalar_lea.vmem %s0, %s674
        %p676 = pneg %p59
        %p677 = pneg %p56
        %p678 = pneg %p80
        %p679 = pneg %p77
        %p680 = pneg %p101
        %p681 = pneg %p98
        %p682 = pneg %p122
        %p683 = pneg %p119
        %p684 = pneg %p143
        %p685 = pneg %p140
        %p686 = pneg %p164
        %p687 = pneg %p161
        %p688 = pneg %p185
        %p689 = pneg %p182
        %p690 = pneg %p206
        %p691 = pneg %p203
        %p692 = pneg %p227
        %p693 = pneg %p224
        %p694 = pneg %p248
        %p695 = pneg %p245
        %p696 = pneg %p269
        %p697 = pneg %p266
        %p698 = pneg %p290
        %p699 = pneg %p287
        %p700 = pneg %p311
        %p701 = pneg %p308
        %p702 = pneg %p332
        %p703 = pneg %p329
        %p704 = pneg %p353
        %p705 = pneg %p350
        %p706 = pneg %p374
        %p707 = pneg %p371
        %p708 = pneg %p395
        %p709 = pneg %p392
        %p710 = pneg %p416
        %p711 = pneg %p413
        %p712 = pneg %p437
        %p713 = pneg %p434
        %p714 = pneg %p458
        %p715 = pneg %p455
        %p716 = pneg %p479
        %p717 = pneg %p476
        %p718 = pneg %p500
        %p719 = pneg %p497
        %p720 = pneg %p521
        %p721 = pneg %p518
        %p722 = pneg %p542
        %p723 = pneg %p539
        %p724 = pneg %p568
        %p725 = pneg %p565
        %s726 = sand.u32 %s555, 1
        %s727 = scalar_lea.sflag [#allocation3], %s726
        %s728 = sand.u32 %s555, 1
        %s729 = smul.addr %s728, 64
        %s730 = scalar_lea.vmem [#allocation2], %s729
        %p731 = scmp.lt.s32.totalorder %s38, 1
        %s732 = scalar_select %p731, %s38, 1
        %s733 = smul.addr %s732, 8
        %s734 = smul.addr %s733, 8
        %s735 = scalar_lea.vmem %s0, %s734
        %v737 = vld [vmem:[%s735] sm:$0xff]
        %v738 = vld [vmem:[%s735 + $0x8] sm:$0xff]
        %v739 = vld [vmem:[%s735 + $0x10] sm:$0xff]
        %v740 = vld [vmem:[%s735 + $0x18] sm:$0xff]
        %v741 = vld [vmem:[%s735 + $0x20] sm:$0xff]
        %v742 = vld [vmem:[%s735 + $0x28] sm:$0xff]
        %v743 = vld [vmem:[%s735 + $0x30] sm:$0xff]
        %v744 = vld [vmem:[%s735 + $0x38] sm:$0xff]
        %v745 = vadd.f32 %v737, %v738
        %v746 = vadd.f32 %v745, %v739
        %v747 = vadd.f32 %v746, %v740
        %v748 = vadd.f32 %v747, %v741
        %v749 = vadd.f32 %v748, %v742
        %v750 = vadd.f32 %v749, %v743
        %v751 = vadd.f32 %v750, %v744
        %v752 = vrot.slane %v751, 4
        %v753 = vadd.f32 %v751, %v752
        %v754 = vrot.slane %v753, 2
        %v755 = vadd.f32 %v753, %v754
        %v756 = vrot.slane %v755, 1
        %v757 = vadd.f32 %v755, %v756
        %v758 = vrcp.pop 64.0
        %v759 = vmul.f32 64.0, %v758
        %v760 = vsub.f32 1.0, %v759
        %v761 = vmul.f32 %v758, %v760
        %v762 = vadd.f32 %v758, %v761
        %vm763 = vweird.f32 %v758
        %v764 = vsel %vm763, %v758, %v762
        %v765 = vmul.f32 %v757, %v764
        %v766 = vld [vmem:[%s1] sm:$0xff]
        %v767 = vld [vmem:[%s1 + $0x8] sm:$0xff]
        %v768 = vld [vmem:[%s1 + $0x10] sm:$0xff]
        %v769 = vld [vmem:[%s1 + $0x18] sm:$0xff]
        %v770 = vld [vmem:[%s1 + $0x20] sm:$0xff]
        %v771 = vld [vmem:[%s1 + $0x28] sm:$0xff]
        %v772 = vld [vmem:[%s1 + $0x30] sm:$0xff]
        %v773 = vld [vmem:[%s1 + $0x38] sm:$0xff]
        %v774 = vld [vmem:[%s1 + $0x40] sm:$0xff]
        %v775 = vld [vmem:[%s1 + $0x48] sm:$0xff]
        %v776 = vld [vmem:[%s1 + $0x50] sm:$0xff]
        %v777 = vld [vmem:[%s1 + $0x58] sm:$0xff]
        %v778 = vld [vmem:[%s1 + $0x60] sm:$0xff]
        %v779 = vld [vmem:[%s1 + $0x68] sm:$0xff]
        %v780 = vld [vmem:[%s1 + $0x70] sm:$0xff]
        %v781 = vld [vmem:[%s1 + $0x78] sm:$0xff]
        %782 = vmatpush.msra.mxu0 %v781
        %783 = vmatpush.msra.mxu0 %v780
        %784 = vmatpush.msra.mxu0 %v779
        %785 = vmatpush.msra.mxu0 %v778
        %786 = vmatpush.msra.mxu0 %v777
        %787 = vmatpush.msra.mxu0 %v776
        %788 = vmatpush.msra.mxu0 %v775
        %789 = vmatpush.msra.mxu0 %v774
        %790 = vmatpush.msra.mxu0 %v773
        %791 = vmatpush.msra.mxu0 %v772
        %792 = vmatpush.msra.mxu0 %v771
        %793 = vmatpush.msra.mxu0 %v770
        %794 = vmatpush.msra.mxu0 %v769
        %795 = vmatpush.msra.mxu0 %v768
        %796 = vmatpush.msra.mxu0 %v767
        %797 = vmatpush.msra.mxu0 %v766
        %798 = vmatmul.f32.gmra.mxu0 %v765
        %v799 = vpop.f32.mrf.mxu0
        %v800 = vadd.f32 0.0, %v799
        %801 = vdwg.mxu0
        %v802 = vperm.slane %v800, 0
        %v803 = vsub.f32 %v737, %v802
        %v804 = vsub.f32 %v738, %v802
        %v805 = vsub.f32 %v739, %v802
        %v806 = vsub.f32 %v740, %v802
        %v807 = vsub.f32 %v741, %v802
        %v808 = vsub.f32 %v742, %v802
        %v809 = vsub.f32 %v743, %v802
        %v810 = vsub.f32 %v744, %v802
        %v811 = vmul.f32 %v803, %v803
        %v812 = vmul.f32 %v804, %v804
        %v813 = vmul.f32 %v805, %v805
        %v814 = vmul.f32 %v806, %v806
        %v815 = vmul.f32 %v807, %v807
        %v816 = vmul.f32 %v808, %v808
        %v817 = vmul.f32 %v809, %v809
        %v818 = vmul.f32 %v810, %v810
        %v819 = vadd.f32 %v811, %v812
        %v820 = vadd.f32 %v819, %v813
        %v821 = vadd.f32 %v820, %v814
        %v822 = vadd.f32 %v821, %v815
        %v823 = vadd.f32 %v822, %v816
        %v824 = vadd.f32 %v823, %v817
        %v825 = vadd.f32 %v824, %v818
        %v826 = vrot.slane %v825, 4
        %v827 = vadd.f32 %v825, %v826
        %v828 = vrot.slane %v827, 2
        %v829 = vadd.f32 %v827, %v828
        %v830 = vrot.slane %v829, 1
        %v831 = vadd.f32 %v829, %v830
        %v832 = vmul.f32 %v831, %v764
        %833 = vmatpush.msra.mxu0 %v781
        %834 = vmatpush.msra.mxu0 %v780
        %835 = vmatpush.msra.mxu0 %v779
        %836 = vmatpush.msra.mxu0 %v778
        %837 = vmatpush.msra.mxu0 %v777
        %838 = vmatpush.msra.mxu0 %v776
        %839 = vmatpush.msra.mxu0 %v775
        %840 = vmatpush.msra.mxu0 %v774
        %841 = vmatpush.msra.mxu0 %v773
        %842 = vmatpush.msra.mxu0 %v772
        %843 = vmatpush.msra.mxu0 %v771
        %844 = vmatpush.msra.mxu0 %v770
        %845 = vmatpush.msra.mxu0 %v769
        %846 = vmatpush.msra.mxu0 %v768
        %847 = vmatpush.msra.mxu0 %v767
        %848 = vmatpush.msra.mxu0 %v766
        %849 = vmatmul.f32.gmra.mxu0 %v832
        %v850 = vpop.f32.mrf.mxu0
        %v851 = vadd.f32 1e-06, %v850
        %852 = vdwg.mxu0
        %v853 = vrsqrt.pop %v851
        %v854 = vmul.f32 %v853, %v851
        %v855 = vmul.f32 %v854, %v853
        %v856 = vmul.f32 0.5, %v855
        %v857 = vsub.f32 1.5, %v856
        %v858 = vmul.f32 %v853, %v857
        %vm859 = vweird.f32 %v851
        %vm860 = vweird.f32 %v853
        %vm861 = vmor %vm859, %vm860
        %v862 = vsel %vm861, %v853, %v858
        %v863 = vperm.slane %v862, 0
        %v864 = vmul.f32 %v803, %v863
        %v865 = vmul.f32 %v804, %v863
        %v866 = vmul.f32 %v805, %v863
        %v867 = vmul.f32 %v806, %v863
        %v868 = vmul.f32 %v807, %v863
        %v869 = vmul.f32 %v808, %v863
        %v870 = vmul.f32 %v809, %v863
        %v871 = vmul.f32 %v810, %v863
        %v872 = vld [vmem:[%s2] sm:$0xf]
        %v873 = vld [vmem:[%s2 + $0x4] sm:$0xf]
        %v874 = vld [vmem:[%s2 + $0x8] sm:$0xf]
        %v875 = vld [vmem:[%s2 + $0xc] sm:$0xf]
        %v876 = vld [vmem:[%s2 + $0x10] sm:$0xf]
        %v877 = vld [vmem:[%s2 + $0x14] sm:$0xf]
        %v878 = vld [vmem:[%s2 + $0x18] sm:$0xf]
        %v879 = vld [vmem:[%s2 + $0x1c] sm:$0xf]
        %v880 = vld [vmem:[%s2 + $0x20] sm:$0xf]
        %v881 = vld [vmem:[%s2 + $0x24] sm:$0xf]
        %v882 = vld [vmem:[%s2 + $0x28] sm:$0xf]
        %v883 = vld [vmem:[%s2 + $0x2c] sm:$0xf]
        %v884 = vld [vmem:[%s2 + $0x30] sm:$0xf]
        %v885 = vld [vmem:[%s2 + $0x34] sm:$0xf]
        %v886 = vld [vmem:[%s2 + $0x38] sm:$0xf]
        %v887 = vld [vmem:[%s2 + $0x3c] sm:$0xf]
        %v888 = vld [vmem:[%s3] sm:$0x1]
        %v889 = vpack.c.bf16 %v865, %v864
        %v890 = vpack.c.bf16 %v867, %v866
        %v891 = vpack.c.bf16 %v869, %v868
        %v892 = vpack.c.bf16 %v871, %v870
        %v894 = vperm.slane %v888, 0
        %v912 = vunpack.c.l.b16 %v872
        %v913 = vunpack.c.l.b16 %v873
        %v914 = vunpack.c.l.b16 %v874
        %v915 = vunpack.c.l.b16 %v875
        %v916 = vunpack.c.l.b16 %v876
        %v917 = vunpack.c.l.b16 %v877
        %v918 = vunpack.c.l.b16 %v878
        %v919 = vunpack.c.l.b16 %v879
        %v920 = vunpack.c.l.b16 %v880
        %v921 = vunpack.c.l.b16 %v881
        %v922 = vunpack.c.l.b16 %v882
        %v923 = vunpack.c.l.b16 %v883
        %v924 = vunpack.c.l.b16 %v884
        %v925 = vunpack.c.l.b16 %v885
        %v926 = vunpack.c.l.b16 %v886
        %v927 = vunpack.c.l.b16 %v887
        %v928 = vpack.c.b16 %v913, %v912
        %v929 = vpack.c.b16 %v915, %v914
        %v930 = vpack.c.b16 %v917, %v916
        %v931 = vpack.c.b16 %v919, %v918
        %v932 = vpack.c.b16 %v921, %v920
        %v933 = vpack.c.b16 %v923, %v922
        %v934 = vpack.c.b16 %v925, %v924
        %v935 = vpack.c.b16 %v927, %v926
        %944 = vmatpush.bf16.msra.mxu0 %v935
        %945 = vmatpush.bf16.msra.mxu0 %v934
        %946 = vmatpush.bf16.msra.mxu0 %v933
        %947 = vmatpush.bf16.msra.mxu0 %v932
        %948 = vmatpush.bf16.msra.mxu0 %v931
        %949 = vmatpush.bf16.msra.mxu0 %v930
        %950 = vmatpush.bf16.msra.mxu0 %v929
        %951 = vmatpush.bf16.msra.mxu0 %v928
        %952 = vmatmul.bf16.gmra.mxu0 %v889
        %v953 = vpop.f32.mrf.mxu0
        %v954 = vadd.f32 %v894, %v953
        %v955 = vpop.f32.mrf.mxu0
        %v956 = vadd.f32 %v894, %v955
        %957 = vmatmul.bf16.gmra.mxu0 %v890
        %v958 = vpop.f32.mrf.mxu0
        %v959 = vadd.f32 %v894, %v958
        %v960 = vpop.f32.mrf.mxu0
        %v961 = vadd.f32 %v894, %v960
        %962 = vmatmul.bf16.gmra.mxu0 %v891
        %v963 = vpop.f32.mrf.mxu0
        %v964 = vadd.f32 %v894, %v963
        %v965 = vpop.f32.mrf.mxu0
        %v966 = vadd.f32 %v894, %v965
        %967 = vmatmul.bf16.gmra.mxu0 %v892
        %v968 = vpop.f32.mrf.mxu0
        %v969 = vadd.f32 %v894, %v968
        %v970 = vpop.f32.mrf.mxu0
        %v971 = vadd.f32 %v894, %v970
        %972 = vdwg.mxu0
        %v973 = vld [vmem:[%s4] sm:$0x1]
        %v974 = vld [vmem:[%s5] sm:$0x1]
        %975 = vadd.xlane.f32.xlu0 %v954
        %v976 = vpop.xlane.xlu0 %975
        %977 = vadd.xlane.f32.xlu0 %v956
        %v978 = vpop.xlane.xlu0 %977
        %979 = vadd.xlane.f32.xlu0 %v959
        %v980 = vpop.xlane.xlu0 %979
        %981 = vadd.xlane.f32.xlu0 %v961
        %v982 = vpop.xlane.xlu0 %981
        %983 = vadd.xlane.f32.xlu0 %v964
        %v984 = vpop.xlane.xlu0 %983
        %985 = vadd.xlane.f32.xlu0 %v966
        %v986 = vpop.xlane.xlu0 %985
        %987 = vadd.xlane.f32.xlu0 %v969
        %v988 = vpop.xlane.xlu0 %987
        %989 = vadd.xlane.f32.xlu0 %v971
        %v990 = vpop.xlane.xlu0 %989
        %v991 = vrcp.pop 128.0
        %v992 = vmul.f32 128.0, %v991
        %v993 = vsub.f32 1.0, %v992
        %v994 = vmul.f32 %v991, %v993
        %v995 = vadd.f32 %v991, %v994
        %vm996 = vweird.f32 %v991
        %v997 = vsel %vm996, %v991, %v995
        %v998 = vmul.f32 %v976, %v997
        %v999 = vmul.f32 %v978, %v997
        %v1000 = vmul.f32 %v980, %v997
        %v1001 = vmul.f32 %v982, %v997
        %v1002 = vmul.f32 %v984, %v997
        %v1003 = vmul.f32 %v986, %v997
        %v1004 = vmul.f32 %v988, %v997
        %v1005 = vmul.f32 %v990, %v997
        %v1006 = vsub.f32 %v954, %v998
        %v1007 = vsub.f32 %v956, %v999
        %v1008 = vsub.f32 %v959, %v1000
        %v1009 = vsub.f32 %v961, %v1001
        %v1010 = vsub.f32 %v964, %v1002
        %v1011 = vsub.f32 %v966, %v1003
        %v1012 = vsub.f32 %v969, %v1004
        %v1013 = vsub.f32 %v971, %v1005
        %v1014 = vmul.f32 %v1006, %v1006
        %v1015 = vmul.f32 %v1007, %v1007
        %v1016 = vmul.f32 %v1008, %v1008
        %v1017 = vmul.f32 %v1009, %v1009
        %v1018 = vmul.f32 %v1010, %v1010
        %v1019 = vmul.f32 %v1011, %v1011
        %v1020 = vmul.f32 %v1012, %v1012
        %v1021 = vmul.f32 %v1013, %v1013
        %1022 = vadd.xlane.f32.xlu0 %v1014
        %v1023 = vpop.xlane.xlu0 %1022
        %1024 = vadd.xlane.f32.xlu0 %v1015
        %v1025 = vpop.xlane.xlu0 %1024
        %1026 = vadd.xlane.f32.xlu0 %v1016
        %v1027 = vpop.xlane.xlu0 %1026
        %1028 = vadd.xlane.f32.xlu0 %v1017
        %v1029 = vpop.xlane.xlu0 %1028
        %1030 = vadd.xlane.f32.xlu0 %v1018
        %v1031 = vpop.xlane.xlu0 %1030
        %1032 = vadd.xlane.f32.xlu0 %v1019
        %v1033 = vpop.xlane.xlu0 %1032
        %1034 = vadd.xlane.f32.xlu0 %v1020
        %v1035 = vpop.xlane.xlu0 %1034
        %1036 = vadd.xlane.f32.xlu0 %v1021
        %v1037 = vpop.xlane.xlu0 %1036
        %v1038 = vmul.f32 %v1023, %v997
        %v1039 = vmul.f32 %v1025, %v997
        %v1040 = vmul.f32 %v1027, %v997
        %v1041 = vmul.f32 %v1029, %v997
        %v1042 = vmul.f32 %v1031, %v997
        %v1043 = vmul.f32 %v1033, %v997
        %v1044 = vmul.f32 %v1035, %v997
        %v1045 = vmul.f32 %v1037, %v997
        %v1046 = vadd.f32 %v1038, 1e-05
        %v1047 = vadd.f32 %v1039, 1e-05
        %v1048 = vadd.f32 %v1040, 1e-05
        %v1049 = vadd.f32 %v1041, 1e-05
        %v1050 = vadd.f32 %v1042, 1e-05
        %v1051 = vadd.f32 %v1043, 1e-05
        %v1052 = vadd.f32 %v1044, 1e-05
        %v1053 = vadd.f32 %v1045, 1e-05
        %v1054 = vrsqrt.pop %v1046
        %v1055 = vmul.f32 %v1054, %v1046
        %v1056 = vmul.f32 %v1055, %v1054
        %v1057 = vmul.f32 0.5, %v1056
        %v1058 = vsub.f32 1.5, %v1057
        %v1059 = vmul.f32 %v1054, %v1058
        %vm1060 = vweird.f32 %v1046
        %vm1061 = vweird.f32 %v1054
        %vm1062 = vmor %vm1060, %vm1061
        %v1063 = vsel %vm1062, %v1054, %v1059
        %v1064 = vrsqrt.pop %v1047
        %v1065 = vmul.f32 %v1064, %v1047
        %v1066 = vmul.f32 %v1065, %v1064
        %v1067 = vmul.f32 0.5, %v1066
        %v1068 = vsub.f32 1.5, %v1067
        %v1069 = vmul.f32 %v1064, %v1068
        %vm1070 = vweird.f32 %v1047
        %vm1071 = vweird.f32 %v1064
        %vm1072 = vmor %vm1070, %vm1071
        %v1073 = vsel %vm1072, %v1064, %v1069
        %v1074 = vrsqrt.pop %v1048
        %v1075 = vmul.f32 %v1074, %v1048
        %v1076 = vmul.f32 %v1075, %v1074
        %v1077 = vmul.f32 0.5, %v1076
        %v1078 = vsub.f32 1.5, %v1077
        %v1079 = vmul.f32 %v1074, %v1078
        %vm1080 = vweird.f32 %v1048
        %vm1081 = vweird.f32 %v1074
        %vm1082 = vmor %vm1080, %vm1081
        %v1083 = vsel %vm1082, %v1074, %v1079
        %v1084 = vrsqrt.pop %v1049
        %v1085 = vmul.f32 %v1084, %v1049
        %v1086 = vmul.f32 %v1085, %v1084
        %v1087 = vmul.f32 0.5, %v1086
        %v1088 = vsub.f32 1.5, %v1087
        %v1089 = vmul.f32 %v1084, %v1088
        %vm1090 = vweird.f32 %v1049
        %vm1091 = vweird.f32 %v1084
        %vm1092 = vmor %vm1090, %vm1091
        %v1093 = vsel %vm1092, %v1084, %v1089
        %v1094 = vrsqrt.pop %v1050
        %v1095 = vmul.f32 %v1094, %v1050
        %v1096 = vmul.f32 %v1095, %v1094
        %v1097 = vmul.f32 0.5, %v1096
        %v1098 = vsub.f32 1.5, %v1097
        %v1099 = vmul.f32 %v1094, %v1098
        %vm1100 = vweird.f32 %v1050
        %vm1101 = vweird.f32 %v1094
        %vm1102 = vmor %vm1100, %vm1101
        %v1103 = vsel %vm1102, %v1094, %v1099
        %v1104 = vrsqrt.pop %v1051
        %v1105 = vmul.f32 %v1104, %v1051
        %v1106 = vmul.f32 %v1105, %v1104
        %v1107 = vmul.f32 0.5, %v1106
        %v1108 = vsub.f32 1.5, %v1107
        %v1109 = vmul.f32 %v1104, %v1108
        %vm1110 = vweird.f32 %v1051
        %vm1111 = vweird.f32 %v1104
        %vm1112 = vmor %vm1110, %vm1111
        %v1113 = vsel %vm1112, %v1104, %v1109
        %v1114 = vrsqrt.pop %v1052
        %v1115 = vmul.f32 %v1114, %v1052
        %v1116 = vmul.f32 %v1115, %v1114
        %v1117 = vmul.f32 0.5, %v1116
        %v1118 = vsub.f32 1.5, %v1117
        %v1119 = vmul.f32 %v1114, %v1118
        %vm1120 = vweird.f32 %v1052
        %vm1121 = vweird.f32 %v1114
        %vm1122 = vmor %vm1120, %vm1121
        %v1123 = vsel %vm1122, %v1114, %v1119
        %v1124 = vrsqrt.pop %v1053
        %v1125 = vmul.f32 %v1124, %v1053
        %v1126 = vmul.f32 %v1125, %v1124
        %v1127 = vmul.f32 0.5, %v1126
        %v1128 = vsub.f32 1.5, %v1127
        %v1129 = vmul.f32 %v1124, %v1128
        %vm1130 = vweird.f32 %v1053
        %vm1131 = vweird.f32 %v1124
        %vm1132 = vmor %vm1130, %vm1131
        %v1133 = vsel %vm1132, %v1124, %v1129
        %v1134 = vmul.f32 %v1006, %v1063
        %v1135 = vmul.f32 %v1007, %v1073
        %v1136 = vmul.f32 %v1008, %v1083
        %v1137 = vmul.f32 %v1009, %v1093
        %v1138 = vmul.f32 %v1010, %v1103
        %v1139 = vmul.f32 %v1011, %v1113
        %v1140 = vmul.f32 %v1012, %v1123
        %v1141 = vmul.f32 %v1013, %v1133
        %v1143 = vperm.slane %v973, 0
        %v1145 = vmul.f32 %v1134, %v1143
        %v1146 = vmul.f32 %v1135, %v1143
        %v1147 = vmul.f32 %v1136, %v1143
        %v1148 = vmul.f32 %v1137, %v1143
        %v1149 = vmul.f32 %v1138, %v1143
        %v1150 = vmul.f32 %v1139, %v1143
        %v1151 = vmul.f32 %v1140, %v1143
        %v1152 = vmul.f32 %v1141, %v1143
        %v1154 = vperm.slane %v974, 0
        %v1156 = vadd.f32 %v1145, %v1154
        %v1157 = vadd.f32 %v1146, %v1154
        %v1158 = vadd.f32 %v1147, %v1154
        %v1159 = vadd.f32 %v1148, %v1154
        %v1160 = vadd.f32 %v1149, %v1154
        %v1161 = vadd.f32 %v1150, %v1154
        %v1162 = vadd.f32 %v1151, %v1154
        %v1163 = vadd.f32 %v1152, %v1154
        %v1164 = vld [vmem:[%s6] sm:$0xf]
        %v1165 = vld [vmem:[%s6 + $0x4] sm:$0xf]
        %v1166 = vld [vmem:[%s6 + $0x8] sm:$0xf]
        %v1167 = vld [vmem:[%s6 + $0xc] sm:$0xf]
        %v1168 = vld [vmem:[%s6 + $0x10] sm:$0xf]
        %v1169 = vld [vmem:[%s6 + $0x14] sm:$0xf]
        %v1170 = vld [vmem:[%s6 + $0x18] sm:$0xf]
        %v1171 = vld [vmem:[%s6 + $0x1c] sm:$0xf]
        %v1172 = vld [vmem:[%s6 + $0x20] sm:$0xf]
        %v1173 = vld [vmem:[%s6 + $0x24] sm:$0xf]
        %v1174 = vld [vmem:[%s6 + $0x28] sm:$0xf]
        %v1175 = vld [vmem:[%s6 + $0x2c] sm:$0xf]
        %v1176 = vld [vmem:[%s6 + $0x30] sm:$0xf]
        %v1177 = vld [vmem:[%s6 + $0x34] sm:$0xf]
        %v1178 = vld [vmem:[%s6 + $0x38] sm:$0xf]
        %v1179 = vld [vmem:[%s6 + $0x3c] sm:$0xf]
        %v1180 = vld [vmem:[%s6 + $0x40] sm:$0xf]
        %v1181 = vld [vmem:[%s6 + $0x44] sm:$0xf]
        %v1182 = vld [vmem:[%s6 + $0x48] sm:$0xf]
        %v1183 = vld [vmem:[%s6 + $0x4c] sm:$0xf]
        %v1184 = vld [vmem:[%s6 + $0x50] sm:$0xf]
        %v1185 = vld [vmem:[%s6 + $0x54] sm:$0xf]
        %v1186 = vld [vmem:[%s6 + $0x58] sm:$0xf]
        %v1187 = vld [vmem:[%s6 + $0x5c] sm:$0xf]
        %v1188 = vld [vmem:[%s6 + $0x60] sm:$0xf]
        %v1189 = vld [vmem:[%s6 + $0x64] sm:$0xf]
        %v1190 = vld [vmem:[%s6 + $0x68] sm:$0xf]
        %v1191 = vld [vmem:[%s6 + $0x6c] sm:$0xf]
        %v1192 = vld [vmem:[%s6 + $0x70] sm:$0xf]
        %v1193 = vld [vmem:[%s6 + $0x74] sm:$0xf]
        %v1194 = vld [vmem:[%s6 + $0x78] sm:$0xf]
        %v1195 = vld [vmem:[%s6 + $0x7c] sm:$0xf]
        %v1196 = vld [vmem:[%s6 + $0x80] sm:$0xf]
        %v1197 = vld [vmem:[%s6 + $0x84] sm:$0xf]
        %v1198 = vld [vmem:[%s6 + $0x88] sm:$0xf]
        %v1199 = vld [vmem:[%s6 + $0x8c] sm:$0xf]
        %v1200 = vld [vmem:[%s6 + $0x90] sm:$0xf]
        %v1201 = vld [vmem:[%s6 + $0x94] sm:$0xf]
        %v1202 = vld [vmem:[%s6 + $0x98] sm:$0xf]
        %v1203 = vld [vmem:[%s6 + $0x9c] sm:$0xf]
        %v1204 = vld [vmem:[%s6 + $0xa0] sm:$0xf]
        %v1205 = vld [vmem:[%s6 + $0xa4] sm:$0xf]
        %v1206 = vld [vmem:[%s6 + $0xa8] sm:$0xf]
        %v1207 = vld [vmem:[%s6 + $0xac] sm:$0xf]
        %v1208 = vld [vmem:[%s6 + $0xb0] sm:$0xf]
        %v1209 = vld [vmem:[%s6 + $0xb4] sm:$0xf]
        %v1210 = vld [vmem:[%s6 + $0xb8] sm:$0xf]
        %v1211 = vld [vmem:[%s6 + $0xbc] sm:$0xf]
        %v1212 = vld [vmem:[%s6 + $0xc0] sm:$0xf]
        %v1213 = vld [vmem:[%s6 + $0xc4] sm:$0xf]
        %v1214 = vld [vmem:[%s6 + $0xc8] sm:$0xf]
        %v1215 = vld [vmem:[%s6 + $0xcc] sm:$0xf]
        %v1216 = vld [vmem:[%s6 + $0xd0] sm:$0xf]
        %v1217 = vld [vmem:[%s6 + $0xd4] sm:$0xf]
        %v1218 = vld [vmem:[%s6 + $0xd8] sm:$0xf]
        %v1219 = vld [vmem:[%s6 + $0xdc] sm:$0xf]
        %v1220 = vld [vmem:[%s6 + $0xe0] sm:$0xf]
        %v1221 = vld [vmem:[%s6 + $0xe4] sm:$0xf]
        %v1222 = vld [vmem:[%s6 + $0xe8] sm:$0xf]
        %v1223 = vld [vmem:[%s6 + $0xec] sm:$0xf]
        %v1224 = vld [vmem:[%s6 + $0xf0] sm:$0xf]
        %v1225 = vld [vmem:[%s6 + $0xf4] sm:$0xf]
        %v1226 = vld [vmem:[%s6 + $0xf8] sm:$0xf]
        %v1227 = vld [vmem:[%s6 + $0xfc] sm:$0xf]
        %v1228 = vld [vmem:[%s7] sm:$0xf]
        %v1229 = vld [vmem:[%s7 + $0x4] sm:$0xf]
        %v1230 = vld [vmem:[%s7 + $0x8] sm:$0xf]
        %v1231 = vld [vmem:[%s7 + $0xc] sm:$0xf]
        %v1232 = vld [vmem:[%s7 + $0x10] sm:$0xf]
        %v1233 = vld [vmem:[%s7 + $0x14] sm:$0xf]
        %v1234 = vld [vmem:[%s7 + $0x18] sm:$0xf]
        %v1235 = vld [vmem:[%s7 + $0x1c] sm:$0xf]
        %v1236 = vld [vmem:[%s7 + $0x20] sm:$0xf]
        %v1237 = vld [vmem:[%s7 + $0x24] sm:$0xf]
        %v1238 = vld [vmem:[%s7 + $0x28] sm:$0xf]
        %v1239 = vld [vmem:[%s7 + $0x2c] sm:$0xf]
        %v1240 = vld [vmem:[%s7 + $0x30] sm:$0xf]
        %v1241 = vld [vmem:[%s7 + $0x34] sm:$0xf]
        %v1242 = vld [vmem:[%s7 + $0x38] sm:$0xf]
        %v1243 = vld [vmem:[%s7 + $0x3c] sm:$0xf]
        %v1244 = vld [vmem:[%s7 + $0x40] sm:$0xf]
        %v1245 = vld [vmem:[%s7 + $0x44] sm:$0xf]
        %v1246 = vld [vmem:[%s7 + $0x48] sm:$0xf]
        %v1247 = vld [vmem:[%s7 + $0x4c] sm:$0xf]
        %v1248 = vld [vmem:[%s7 + $0x50] sm:$0xf]
        %v1249 = vld [vmem:[%s7 + $0x54] sm:$0xf]
        %v1250 = vld [vmem:[%s7 + $0x58] sm:$0xf]
        %v1251 = vld [vmem:[%s7 + $0x5c] sm:$0xf]
        %v1252 = vld [vmem:[%s7 + $0x60] sm:$0xf]
        %v1253 = vld [vmem:[%s7 + $0x64] sm:$0xf]
        %v1254 = vld [vmem:[%s7 + $0x68] sm:$0xf]
        %v1255 = vld [vmem:[%s7 + $0x6c] sm:$0xf]
        %v1256 = vld [vmem:[%s7 + $0x70] sm:$0xf]
        %v1257 = vld [vmem:[%s7 + $0x74] sm:$0xf]
        %v1258 = vld [vmem:[%s7 + $0x78] sm:$0xf]
        %v1259 = vld [vmem:[%s7 + $0x7c] sm:$0xf]
        %v1260 = vld [vmem:[%s7 + $0x80] sm:$0xf]
        %v1261 = vld [vmem:[%s7 + $0x84] sm:$0xf]
        %v1262 = vld [vmem:[%s7 + $0x88] sm:$0xf]
        %v1263 = vld [vmem:[%s7 + $0x8c] sm:$0xf]
        %v1264 = vld [vmem:[%s7 + $0x90] sm:$0xf]
        %v1265 = vld [vmem:[%s7 + $0x94] sm:$0xf]
        %v1266 = vld [vmem:[%s7 + $0x98] sm:$0xf]
        %v1267 = vld [vmem:[%s7 + $0x9c] sm:$0xf]
        %v1268 = vld [vmem:[%s7 + $0xa0] sm:$0xf]
        %v1269 = vld [vmem:[%s7 + $0xa4] sm:$0xf]
        %v1270 = vld [vmem:[%s7 + $0xa8] sm:$0xf]
        %v1271 = vld [vmem:[%s7 + $0xac] sm:$0xf]
        %v1272 = vld [vmem:[%s7 + $0xb0] sm:$0xf]
        %v1273 = vld [vmem:[%s7 + $0xb4] sm:$0xf]
        %v1274 = vld [vmem:[%s7 + $0xb8] sm:$0xf]
        %v1275 = vld [vmem:[%s7 + $0xbc] sm:$0xf]
        %v1276 = vld [vmem:[%s7 + $0xc0] sm:$0xf]
        %v1277 = vld [vmem:[%s7 + $0xc4] sm:$0xf]
        %v1278 = vld [vmem:[%s7 + $0xc8] sm:$0xf]
        %v1279 = vld [vmem:[%s7 + $0xcc] sm:$0xf]
        %v1280 = vld [vmem:[%s7 + $0xd0] sm:$0xf]
        %v1281 = vld [vmem:[%s7 + $0xd4] sm:$0xf]
        %v1282 = vld [vmem:[%s7 + $0xd8] sm:$0xf]
        %v1283 = vld [vmem:[%s7 + $0xdc] sm:$0xf]
        %v1284 = vld [vmem:[%s7 + $0xe0] sm:$0xf]
        %v1285 = vld [vmem:[%s7 + $0xe4] sm:$0xf]
        %v1286 = vld [vmem:[%s7 + $0xe8] sm:$0xf]
        %v1287 = vld [vmem:[%s7 + $0xec] sm:$0xf]
        %v1288 = vld [vmem:[%s7 + $0xf0] sm:$0xf]
        %v1289 = vld [vmem:[%s7 + $0xf4] sm:$0xf]
        %v1290 = vld [vmem:[%s7 + $0xf8] sm:$0xf]
        %v1291 = vld [vmem:[%s7 + $0xfc] sm:$0xf]
        %v1292 = vld [vmem:[%s8] sm:$0xf]
        %v1293 = vld [vmem:[%s8 + $0x4] sm:$0xf]
        %v1294 = vld [vmem:[%s8 + $0x8] sm:$0xf]
        %v1295 = vld [vmem:[%s8 + $0xc] sm:$0xf]
        %v1296 = vld [vmem:[%s8 + $0x10] sm:$0xf]
        %v1297 = vld [vmem:[%s8 + $0x14] sm:$0xf]
        %v1298 = vld [vmem:[%s8 + $0x18] sm:$0xf]
        %v1299 = vld [vmem:[%s8 + $0x1c] sm:$0xf]
        %v1300 = vld [vmem:[%s8 + $0x20] sm:$0xf]
        %v1301 = vld [vmem:[%s8 + $0x24] sm:$0xf]
        %v1302 = vld [vmem:[%s8 + $0x28] sm:$0xf]
        %v1303 = vld [vmem:[%s8 + $0x2c] sm:$0xf]
        %v1304 = vld [vmem:[%s8 + $0x30] sm:$0xf]
        %v1305 = vld [vmem:[%s8 + $0x34] sm:$0xf]
        %v1306 = vld [vmem:[%s8 + $0x38] sm:$0xf]
        %v1307 = vld [vmem:[%s8 + $0x3c] sm:$0xf]
        %v1308 = vld [vmem:[%s8 + $0x40] sm:$0xf]
        %v1309 = vld [vmem:[%s8 + $0x44] sm:$0xf]
        %v1310 = vld [vmem:[%s8 + $0x48] sm:$0xf]
        %v1311 = vld [vmem:[%s8 + $0x4c] sm:$0xf]
        %v1312 = vld [vmem:[%s8 + $0x50] sm:$0xf]
        %v1313 = vld [vmem:[%s8 + $0x54] sm:$0xf]
        %v1314 = vld [vmem:[%s8 + $0x58] sm:$0xf]
        %v1315 = vld [vmem:[%s8 + $0x5c] sm:$0xf]
        %v1316 = vld [vmem:[%s8 + $0x60] sm:$0xf]
        %v1317 = vld [vmem:[%s8 + $0x64] sm:$0xf]
        %v1318 = vld [vmem:[%s8 + $0x68] sm:$0xf]
        %v1319 = vld [vmem:[%s8 + $0x6c] sm:$0xf]
        %v1320 = vld [vmem:[%s8 + $0x70] sm:$0xf]
        %v1321 = vld [vmem:[%s8 + $0x74] sm:$0xf]
        %v1322 = vld [vmem:[%s8 + $0x78] sm:$0xf]
        %v1323 = vld [vmem:[%s8 + $0x7c] sm:$0xf]
        %v1324 = vld [vmem:[%s8 + $0x80] sm:$0xf]
        %v1325 = vld [vmem:[%s8 + $0x84] sm:$0xf]
        %v1326 = vld [vmem:[%s8 + $0x88] sm:$0xf]
        %v1327 = vld [vmem:[%s8 + $0x8c] sm:$0xf]
        %v1328 = vld [vmem:[%s8 + $0x90] sm:$0xf]
        %v1329 = vld [vmem:[%s8 + $0x94] sm:$0xf]
        %v1330 = vld [vmem:[%s8 + $0x98] sm:$0xf]
        %v1331 = vld [vmem:[%s8 + $0x9c] sm:$0xf]
        %v1332 = vld [vmem:[%s8 + $0xa0] sm:$0xf]
        %v1333 = vld [vmem:[%s8 + $0xa4] sm:$0xf]
        %v1334 = vld [vmem:[%s8 + $0xa8] sm:$0xf]
        %v1335 = vld [vmem:[%s8 + $0xac] sm:$0xf]
        %v1336 = vld [vmem:[%s8 + $0xb0] sm:$0xf]
        %v1337 = vld [vmem:[%s8 + $0xb4] sm:$0xf]
        %v1338 = vld [vmem:[%s8 + $0xb8] sm:$0xf]
        %v1339 = vld [vmem:[%s8 + $0xbc] sm:$0xf]
        %v1340 = vld [vmem:[%s8 + $0xc0] sm:$0xf]
        %v1341 = vld [vmem:[%s8 + $0xc4] sm:$0xf]
        %v1342 = vld [vmem:[%s8 + $0xc8] sm:$0xf]
        %v1343 = vld [vmem:[%s8 + $0xcc] sm:$0xf]
        %v1344 = vld [vmem:[%s8 + $0xd0] sm:$0xf]
        %v1345 = vld [vmem:[%s8 + $0xd4] sm:$0xf]
        %v1346 = vld [vmem:[%s8 + $0xd8] sm:$0xf]
        %v1347 = vld [vmem:[%s8 + $0xdc] sm:$0xf]
        %v1348 = vld [vmem:[%s8 + $0xe0] sm:$0xf]
        %v1349 = vld [vmem:[%s8 + $0xe4] sm:$0xf]
        %v1350 = vld [vmem:[%s8 + $0xe8] sm:$0xf]
        %v1351 = vld [vmem:[%s8 + $0xec] sm:$0xf]
        %v1352 = vld [vmem:[%s8 + $0xf0] sm:$0xf]
        %v1353 = vld [vmem:[%s8 + $0xf4] sm:$0xf]
        %v1354 = vld [vmem:[%s8 + $0xf8] sm:$0xf]
        %v1355 = vld [vmem:[%s8 + $0xfc] sm:$0xf]
        %v1356 = vld [vmem:[%s9] sm:$0xf]
        %v1357 = vld [vmem:[%s9 + $0x4] sm:$0xf]
        %v1358 = vld [vmem:[%s9 + $0x8] sm:$0xf]
        %v1359 = vld [vmem:[%s9 + $0xc] sm:$0xf]
        %v1360 = vld [vmem:[%s9 + $0x10] sm:$0xf]
        %v1361 = vld [vmem:[%s9 + $0x14] sm:$0xf]
        %v1362 = vld [vmem:[%s9 + $0x18] sm:$0xf]
        %v1363 = vld [vmem:[%s9 + $0x1c] sm:$0xf]
        %v1364 = vld [vmem:[%s9 + $0x20] sm:$0xf]
        %v1365 = vld [vmem:[%s9 + $0x24] sm:$0xf]
        %v1366 = vld [vmem:[%s9 + $0x28] sm:$0xf]
        %v1367 = vld [vmem:[%s9 + $0x2c] sm:$0xf]
        %v1368 = vld [vmem:[%s9 + $0x30] sm:$0xf]
        %v1369 = vld [vmem:[%s9 + $0x34] sm:$0xf]
        %v1370 = vld [vmem:[%s9 + $0x38] sm:$0xf]
        %v1371 = vld [vmem:[%s9 + $0x3c] sm:$0xf]
        %v1372 = vld [vmem:[%s10] sm:$0x1]
        %v1373 = vpack.c.bf16 %v1156, %v1156
        %v1374 = vpack.c.bf16 %v1157, %v1157
        %v1375 = vpack.c.bf16 %v1158, %v1158
        %v1376 = vpack.c.bf16 %v1159, %v1159
        %v1377 = vpack.c.bf16 %v1160, %v1160
        %v1378 = vpack.c.bf16 %v1161, %v1161
        %v1379 = vpack.c.bf16 %v1162, %v1162
        %v1380 = vpack.c.bf16 %v1163, %v1163
        %v1389 = vunpack.c.l.b16 %v1373
        %v1390 = vunpack.c.l.b16 %v1374
        %v1391 = vunpack.c.l.b16 %v1375
        %v1392 = vunpack.c.l.b16 %v1376
        %v1393 = vunpack.c.l.b16 %v1377
        %v1394 = vunpack.c.l.b16 %v1378
        %v1395 = vunpack.c.l.b16 %v1379
        %v1396 = vunpack.c.l.b16 %v1380
        %v1397 = vpack.c.b16 %v1390, %v1389
        %v1398 = vpack.c.b16 %v1392, %v1391
        %v1399 = vpack.c.b16 %v1394, %v1393
        %v1400 = vpack.c.b16 %v1396, %v1395
        %v1421 = vunpack.c.l.b16 %v1164
        %v1422 = vunpack.c.l.b16 %v1165
        %v1423 = vunpack.c.l.b16 %v1166
        %v1424 = vunpack.c.l.b16 %v1167
        %v1425 = vunpack.c.l.b16 %v1168
        %v1426 = vunpack.c.l.b16 %v1169
        %v1427 = vunpack.c.l.b16 %v1170
        %v1428 = vunpack.c.l.b16 %v1171
        %v1429 = vunpack.c.l.b16 %v1172
        %v1430 = vunpack.c.l.b16 %v1173
        %v1431 = vunpack.c.l.b16 %v1174
        %v1432 = vunpack.c.l.b16 %v1175
        %v1433 = vunpack.c.l.b16 %v1176
        %v1434 = vunpack.c.l.b16 %v1177
        %v1435 = vunpack.c.l.b16 %v1178
        %v1436 = vunpack.c.l.b16 %v1179
        %v1437 = vpack.c.b16 %v1422, %v1421
        %v1438 = vpack.c.b16 %v1424, %v1423
        %v1439 = vpack.c.b16 %v1426, %v1425
        %v1440 = vpack.c.b16 %v1428, %v1427
        %v1441 = vpack.c.b16 %v1430, %v1429
        %v1442 = vpack.c.b16 %v1432, %v1431
        %v1443 = vpack.c.b16 %v1434, %v1433
        %v1444 = vpack.c.b16 %v1436, %v1435
        %1453 = vmatpush.bf16.msra.mxu0 %v1444
        %1454 = vmatpush.bf16.msra.mxu0 %v1443
        %1455 = vmatpush.bf16.msra.mxu0 %v1442
        %1456 = vmatpush.bf16.msra.mxu0 %v1441
        %1457 = vmatpush.bf16.msra.mxu0 %v1440
        %1458 = vmatpush.bf16.msra.mxu0 %v1439
        %1459 = vmatpush.bf16.msra.mxu0 %v1438
        %1460 = vmatpush.bf16.msra.mxu0 %v1437
        %1461 = vmatmul.bf16.gmra.mxu0 %v1397
        %v1462 = vpop.f32.mrf.mxu0
        %v1463 = vadd.f32 0.0, %v1462
        %v1464 = vpop.f32.mrf.mxu0
        %v1465 = vadd.f32 0.0, %v1464
        %1466 = vmatmul.bf16.gmra.mxu0 %v1398
        %v1467 = vpop.f32.mrf.mxu0
        %v1468 = vadd.f32 0.0, %v1467
        %v1469 = vpop.f32.mrf.mxu0
        %v1470 = vadd.f32 0.0, %v1469
        %1471 = vmatmul.bf16.gmra.mxu0 %v1399
        %v1472 = vpop.f32.mrf.mxu0
        %v1473 = vadd.f32 0.0, %v1472
        %v1474 = vpop.f32.mrf.mxu0
        %v1475 = vadd.f32 0.0, %v1474
        %1476 = vmatmul.bf16.gmra.mxu0 %v1400
        %v1477 = vpop.f32.mrf.mxu0
        %v1478 = vadd.f32 0.0, %v1477
        %v1479 = vpop.f32.mrf.mxu0
        %v1480 = vadd.f32 0.0, %v1479
        %1481 = vdwg.mxu0
        %v1498 = vunpack.c.l.b16 %v1180
        %v1499 = vunpack.c.l.b16 %v1181
        %v1500 = vunpack.c.l.b16 %v1182
        %v1501 = vunpack.c.l.b16 %v1183
        %v1502 = vunpack.c.l.b16 %v1184
        %v1503 = vunpack.c.l.b16 %v1185
        %v1504 = vunpack.c.l.b16 %v1186
        %v1505 = vunpack.c.l.b16 %v1187
        %v1506 = vunpack.c.l.b16 %v1188
        %v1507 = vunpack.c.l.b16 %v1189
        %v1508 = vunpack.c.l.b16 %v1190
        %v1509 = vunpack.c.l.b16 %v1191
        %v1510 = vunpack.c.l.b16 %v1192
        %v1511 = vunpack.c.l.b16 %v1193
        %v1512 = vunpack.c.l.b16 %v1194
        %v1513 = vunpack.c.l.b16 %v1195
        %v1514 = vpack.c.b16 %v1499, %v1498
        %v1515 = vpack.c.b16 %v1501, %v1500
        %v1516 = vpack.c.b16 %v1503, %v1502
        %v1517 = vpack.c.b16 %v1505, %v1504
        %v1518 = vpack.c.b16 %v1507, %v1506
        %v1519 = vpack.c.b16 %v1509, %v1508
        %v1520 = vpack.c.b16 %v1511, %v1510
        %v1521 = vpack.c.b16 %v1513, %v1512
        %1530 = vmatpush.bf16.msra.mxu0 %v1521
        %1531 = vmatpush.bf16.msra.mxu0 %v1520
        %1532 = vmatpush.bf16.msra.mxu0 %v1519
        %1533 = vmatpush.bf16.msra.mxu0 %v1518
        %1534 = vmatpush.bf16.msra.mxu0 %v1517
        %1535 = vmatpush.bf16.msra.mxu0 %v1516
        %1536 = vmatpush.bf16.msra.mxu0 %v1515
        %1537 = vmatpush.bf16.msra.mxu0 %v1514
        %1538 = vmatmul.bf16.gmra.mxu0 %v1397
        %v1539 = vpop.f32.mrf.mxu0
        %v1540 = vadd.f32 0.0, %v1539
        %v1541 = vpop.f32.mrf.mxu0
        %v1542 = vadd.f32 0.0, %v1541
        %1543 = vmatmul.bf16.gmra.mxu0 %v1398
        %v1544 = vpop.f32.mrf.mxu0
        %v1545 = vadd.f32 0.0, %v1544
        %v1546 = vpop.f32.mrf.mxu0
        %v1547 = vadd.f32 0.0, %v1546
        %1548 = vmatmul.bf16.gmra.mxu0 %v1399
        %v1549 = vpop.f32.mrf.mxu0
        %v1550 = vadd.f32 0.0, %v1549
        %v1551 = vpop.f32.mrf.mxu0
        %v1552 = vadd.f32 0.0, %v1551
        %1553 = vmatmul.bf16.gmra.mxu0 %v1400
        %v1554 = vpop.f32.mrf.mxu0
        %v1555 = vadd.f32 0.0, %v1554
        %v1556 = vpop.f32.mrf.mxu0
        %v1557 = vadd.f32 0.0, %v1556
        %1558 = vdwg.mxu0
        %v1575 = vunpack.c.l.b16 %v1196
        %v1576 = vunpack.c.l.b16 %v1197
        %v1577 = vunpack.c.l.b16 %v1198
        %v1578 = vunpack.c.l.b16 %v1199
        %v1579 = vunpack.c.l.b16 %v1200
        %v1580 = vunpack.c.l.b16 %v1201
        %v1581 = vunpack.c.l.b16 %v1202
        %v1582 = vunpack.c.l.b16 %v1203
        %v1583 = vunpack.c.l.b16 %v1204
        %v1584 = vunpack.c.l.b16 %v1205
        %v1585 = vunpack.c.l.b16 %v1206
        %v1586 = vunpack.c.l.b16 %v1207
        %v1587 = vunpack.c.l.b16 %v1208
        %v1588 = vunpack.c.l.b16 %v1209
        %v1589 = vunpack.c.l.b16 %v1210
        %v1590 = vunpack.c.l.b16 %v1211
        %v1591 = vpack.c.b16 %v1576, %v1575
        %v1592 = vpack.c.b16 %v1578, %v1577
        %v1593 = vpack.c.b16 %v1580, %v1579
        %v1594 = vpack.c.b16 %v1582, %v1581
        %v1595 = vpack.c.b16 %v1584, %v1583
        %v1596 = vpack.c.b16 %v1586, %v1585
        %v1597 = vpack.c.b16 %v1588, %v1587
        %v1598 = vpack.c.b16 %v1590, %v1589
        %1607 = vmatpush.bf16.msra.mxu0 %v1598
        %1608 = vmatpush.bf16.msra.mxu0 %v1597
        %1609 = vmatpush.bf16.msra.mxu0 %v1596
        %1610 = vmatpush.bf16.msra.mxu0 %v1595
        %1611 = vmatpush.bf16.msra.mxu0 %v1594
        %1612 = vmatpush.bf16.msra.mxu0 %v1593
        %1613 = vmatpush.bf16.msra.mxu0 %v1592
        %1614 = vmatpush.bf16.msra.mxu0 %v1591
        %1615 = vmatmul.bf16.gmra.mxu0 %v1397
        %v1616 = vpop.f32.mrf.mxu0
        %v1617 = vadd.f32 0.0, %v1616
        %v1618 = vpop.f32.mrf.mxu0
        %v1619 = vadd.f32 0.0, %v1618
        %1620 = vmatmul.bf16.gmra.mxu0 %v1398
        %v1621 = vpop.f32.mrf.mxu0
        %v1622 = vadd.f32 0.0, %v1621
        %v1623 = vpop.f32.mrf.mxu0
        %v1624 = vadd.f32 0.0, %v1623
        %1625 = vmatmul.bf16.gmra.mxu0 %v1399
        %v1626 = vpop.f32.mrf.mxu0
        %v1627 = vadd.f32 0.0, %v1626
        %v1628 = vpop.f32.mrf.mxu0
        %v1629 = vadd.f32 0.0, %v1628
        %1630 = vmatmul.bf16.gmra.mxu0 %v1400
        %v1631 = vpop.f32.mrf.mxu0
        %v1632 = vadd.f32 0.0, %v1631
        %v1633 = vpop.f32.mrf.mxu0
        %v1634 = vadd.f32 0.0, %v1633
        %1635 = vdwg.mxu0
        %v1652 = vunpack.c.l.b16 %v1212
        %v1653 = vunpack.c.l.b16 %v1213
        %v1654 = vunpack.c.l.b16 %v1214
        %v1655 = vunpack.c.l.b16 %v1215
        %v1656 = vunpack.c.l.b16 %v1216
        %v1657 = vunpack.c.l.b16 %v1217
        %v1658 = vunpack.c.l.b16 %v1218
        %v1659 = vunpack.c.l.b16 %v1219
        %v1660 = vunpack.c.l.b16 %v1220
        %v1661 = vunpack.c.l.b16 %v1221
        %v1662 = vunpack.c.l.b16 %v1222
        %v1663 = vunpack.c.l.b16 %v1223
        %v1664 = vunpack.c.l.b16 %v1224
        %v1665 = vunpack.c.l.b16 %v1225
        %v1666 = vunpack.c.l.b16 %v1226
        %v1667 = vunpack.c.l.b16 %v1227
        %v1668 = vpack.c.b16 %v1653, %v1652
        %v1669 = vpack.c.b16 %v1655, %v1654
        %v1670 = vpack.c.b16 %v1657, %v1656
        %v1671 = vpack.c.b16 %v1659, %v1658
        %v1672 = vpack.c.b16 %v1661, %v1660
        %v1673 = vpack.c.b16 %v1663, %v1662
        %v1674 = vpack.c.b16 %v1665, %v1664
        %v1675 = vpack.c.b16 %v1667, %v1666
        %1684 = vmatpush.bf16.msra.mxu0 %v1675
        %1685 = vmatpush.bf16.msra.mxu0 %v1674
        %1686 = vmatpush.bf16.msra.mxu0 %v1673
        %1687 = vmatpush.bf16.msra.mxu0 %v1672
        %1688 = vmatpush.bf16.msra.mxu0 %v1671
        %1689 = vmatpush.bf16.msra.mxu0 %v1670
        %1690 = vmatpush.bf16.msra.mxu0 %v1669
        %1691 = vmatpush.bf16.msra.mxu0 %v1668
        %1692 = vmatmul.bf16.gmra.mxu0 %v1397
        %v1693 = vpop.f32.mrf.mxu0
        %v1694 = vadd.f32 0.0, %v1693
        %v1695 = vpop.f32.mrf.mxu0
        %v1696 = vadd.f32 0.0, %v1695
        %1697 = vmatmul.bf16.gmra.mxu0 %v1398
        %v1698 = vpop.f32.mrf.mxu0
        %v1699 = vadd.f32 0.0, %v1698
        %v1700 = vpop.f32.mrf.mxu0
        %v1701 = vadd.f32 0.0, %v1700
        %1702 = vmatmul.bf16.gmra.mxu0 %v1399
        %v1703 = vpop.f32.mrf.mxu0
        %v1704 = vadd.f32 0.0, %v1703
        %v1705 = vpop.f32.mrf.mxu0
        %v1706 = vadd.f32 0.0, %v1705
        %1707 = vmatmul.bf16.gmra.mxu0 %v1400
        %v1708 = vpop.f32.mrf.mxu0
        %v1709 = vadd.f32 0.0, %v1708
        %v1710 = vpop.f32.mrf.mxu0
        %v1711 = vadd.f32 0.0, %v1710
        %1712 = vdwg.mxu0
        %v1729 = vunpack.c.l.b16 %v1228
        %v1730 = vunpack.c.l.b16 %v1229
        %v1731 = vunpack.c.l.b16 %v1230
        %v1732 = vunpack.c.l.b16 %v1231
        %v1733 = vunpack.c.l.b16 %v1232
        %v1734 = vunpack.c.l.b16 %v1233
        %v1735 = vunpack.c.l.b16 %v1234
        %v1736 = vunpack.c.l.b16 %v1235
        %v1737 = vunpack.c.l.b16 %v1236
        %v1738 = vunpack.c.l.b16 %v1237
        %v1739 = vunpack.c.l.b16 %v1238
        %v1740 = vunpack.c.l.b16 %v1239
        %v1741 = vunpack.c.l.b16 %v1240
        %v1742 = vunpack.c.l.b16 %v1241
        %v1743 = vunpack.c.l.b16 %v1242
        %v1744 = vunpack.c.l.b16 %v1243
        %v1745 = vpack.c.b16 %v1730, %v1729
        %v1746 = vpack.c.b16 %v1732, %v1731
        %v1747 = vpack.c.b16 %v1734, %v1733
        %v1748 = vpack.c.b16 %v1736, %v1735
        %v1749 = vpack.c.b16 %v1738, %v1737
        %v1750 = vpack.c.b16 %v1740, %v1739
        %v1751 = vpack.c.b16 %v1742, %v1741
        %v1752 = vpack.c.b16 %v1744, %v1743
        %1761 = vmatpush.bf16.msra.mxu0 %v1752
        %1762 = vmatpush.bf16.msra.mxu0 %v1751
        %1763 = vmatpush.bf16.msra.mxu0 %v1750
        %1764 = vmatpush.bf16.msra.mxu0 %v1749
        %1765 = vmatpush.bf16.msra.mxu0 %v1748
        %1766 = vmatpush.bf16.msra.mxu0 %v1747
        %1767 = vmatpush.bf16.msra.mxu0 %v1746
        %1768 = vmatpush.bf16.msra.mxu0 %v1745
        %1769 = vmatmul.bf16.gmra.mxu0 %v1397
        %v1770 = vpop.f32.mrf.mxu0
        %v1771 = vadd.f32 0.0, %v1770
        %v1772 = vpop.f32.mrf.mxu0
        %v1773 = vadd.f32 0.0, %v1772
        %1774 = vmatmul.bf16.gmra.mxu0 %v1398
        %v1775 = vpop.f32.mrf.mxu0
        %v1776 = vadd.f32 0.0, %v1775
        %v1777 = vpop.f32.mrf.mxu0
        %v1778 = vadd.f32 0.0, %v1777
        %1779 = vmatmul.bf16.gmra.mxu0 %v1399
        %v1780 = vpop.f32.mrf.mxu0
        %v1781 = vadd.f32 0.0, %v1780
        %v1782 = vpop.f32.mrf.mxu0
        %v1783 = vadd.f32 0.0, %v1782
        %1784 = vmatmul.bf16.gmra.mxu0 %v1400
        %v1785 = vpop.f32.mrf.mxu0
        %v1786 = vadd.f32 0.0, %v1785
        %v1787 = vpop.f32.mrf.mxu0
        %v1788 = vadd.f32 0.0, %v1787
        %1789 = vdwg.mxu0
        %v1806 = vunpack.c.l.b16 %v1244
        %v1807 = vunpack.c.l.b16 %v1245
        %v1808 = vunpack.c.l.b16 %v1246
        %v1809 = vunpack.c.l.b16 %v1247
        %v1810 = vunpack.c.l.b16 %v1248
        %v1811 = vunpack.c.l.b16 %v1249
        %v1812 = vunpack.c.l.b16 %v1250
        %v1813 = vunpack.c.l.b16 %v1251
        %v1814 = vunpack.c.l.b16 %v1252
        %v1815 = vunpack.c.l.b16 %v1253
        %v1816 = vunpack.c.l.b16 %v1254
        %v1817 = vunpack.c.l.b16 %v1255
        %v1818 = vunpack.c.l.b16 %v1256
        %v1819 = vunpack.c.l.b16 %v1257
        %v1820 = vunpack.c.l.b16 %v1258
        %v1821 = vunpack.c.l.b16 %v1259
        %v1822 = vpack.c.b16 %v1807, %v1806
        %v1823 = vpack.c.b16 %v1809, %v1808
        %v1824 = vpack.c.b16 %v1811, %v1810
        %v1825 = vpack.c.b16 %v1813, %v1812
        %v1826 = vpack.c.b16 %v1815, %v1814
        %v1827 = vpack.c.b16 %v1817, %v1816
        %v1828 = vpack.c.b16 %v1819, %v1818
        %v1829 = vpack.c.b16 %v1821, %v1820
        %1838 = vmatpush.bf16.msra.mxu0 %v1829
        %1839 = vmatpush.bf16.msra.mxu0 %v1828
        %1840 = vmatpush.bf16.msra.mxu0 %v1827
        %1841 = vmatpush.bf16.msra.mxu0 %v1826
        %1842 = vmatpush.bf16.msra.mxu0 %v1825
        %1843 = vmatpush.bf16.msra.mxu0 %v1824
        %1844 = vmatpush.bf16.msra.mxu0 %v1823
        %1845 = vmatpush.bf16.msra.mxu0 %v1822
        %1846 = vmatmul.bf16.gmra.mxu0 %v1397
        %v1847 = vpop.f32.mrf.mxu0
        %v1848 = vadd.f32 0.0, %v1847
        %v1849 = vpop.f32.mrf.mxu0
        %v1850 = vadd.f32 0.0, %v1849
        %1851 = vmatmul.bf16.gmra.mxu0 %v1398
        %v1852 = vpop.f32.mrf.mxu0
        %v1853 = vadd.f32 0.0, %v1852
        %v1854 = vpop.f32.mrf.mxu0
        %v1855 = vadd.f32 0.0, %v1854
        %1856 = vmatmul.bf16.gmra.mxu0 %v1399
        %v1857 = vpop.f32.mrf.mxu0
        %v1858 = vadd.f32 0.0, %v1857
        %v1859 = vpop.f32.mrf.mxu0
        %v1860 = vadd.f32 0.0, %v1859
        %1861 = vmatmul.bf16.gmra.mxu0 %v1400
        %v1862 = vpop.f32.mrf.mxu0
        %v1863 = vadd.f32 0.0, %v1862
        %v1864 = vpop.f32.mrf.mxu0
        %v1865 = vadd.f32 0.0, %v1864
        %1866 = vdwg.mxu0
        %v1883 = vunpack.c.l.b16 %v1260
        %v1884 = vunpack.c.l.b16 %v1261
        %v1885 = vunpack.c.l.b16 %v1262
        %v1886 = vunpack.c.l.b16 %v1263
        %v1887 = vunpack.c.l.b16 %v1264
        %v1888 = vunpack.c.l.b16 %v1265
        %v1889 = vunpack.c.l.b16 %v1266
        %v1890 = vunpack.c.l.b16 %v1267
        %v1891 = vunpack.c.l.b16 %v1268
        %v1892 = vunpack.c.l.b16 %v1269
        %v1893 = vunpack.c.l.b16 %v1270
        %v1894 = vunpack.c.l.b16 %v1271
        %v1895 = vunpack.c.l.b16 %v1272
        %v1896 = vunpack.c.l.b16 %v1273
        %v1897 = vunpack.c.l.b16 %v1274
        %v1898 = vunpack.c.l.b16 %v1275
        %v1899 = vpack.c.b16 %v1884, %v1883
        %v1900 = vpack.c.b16 %v1886, %v1885
        %v1901 = vpack.c.b16 %v1888, %v1887
        %v1902 = vpack.c.b16 %v1890, %v1889
        %v1903 = vpack.c.b16 %v1892, %v1891
        %v1904 = vpack.c.b16 %v1894, %v1893
        %v1905 = vpack.c.b16 %v1896, %v1895
        %v1906 = vpack.c.b16 %v1898, %v1897
        %1915 = vmatpush.bf16.msra.mxu0 %v1906
        %1916 = vmatpush.bf16.msra.mxu0 %v1905
        %1917 = vmatpush.bf16.msra.mxu0 %v1904
        %1918 = vmatpush.bf16.msra.mxu0 %v1903
        %1919 = vmatpush.bf16.msra.mxu0 %v1902
        %1920 = vmatpush.bf16.msra.mxu0 %v1901
        %1921 = vmatpush.bf16.msra.mxu0 %v1900
        %1922 = vmatpush.bf16.msra.mxu0 %v1899
        %1923 = vmatmul.bf16.gmra.mxu0 %v1397
        %v1924 = vpop.f32.mrf.mxu0
        %v1925 = vadd.f32 0.0, %v1924
        %v1926 = vpop.f32.mrf.mxu0
        %v1927 = vadd.f32 0.0, %v1926
        %1928 = vmatmul.bf16.gmra.mxu0 %v1398
        %v1929 = vpop.f32.mrf.mxu0
        %v1930 = vadd.f32 0.0, %v1929
        %v1931 = vpop.f32.mrf.mxu0
        %v1932 = vadd.f32 0.0, %v1931
        %1933 = vmatmul.bf16.gmra.mxu0 %v1399
        %v1934 = vpop.f32.mrf.mxu0
        %v1935 = vadd.f32 0.0, %v1934
        %v1936 = vpop.f32.mrf.mxu0
        %v1937 = vadd.f32 0.0, %v1936
        %1938 = vmatmul.bf16.gmra.mxu0 %v1400
        %v1939 = vpop.f32.mrf.mxu0
        %v1940 = vadd.f32 0.0, %v1939
        %v1941 = vpop.f32.mrf.mxu0
        %v1942 = vadd.f32 0.0, %v1941
        %1943 = vdwg.mxu0
        %v1960 = vunpack.c.l.b16 %v1276
        %v1961 = vunpack.c.l.b16 %v1277
        %v1962 = vunpack.c.l.b16 %v1278
        %v1963 = vunpack.c.l.b16 %v1279
        %v1964 = vunpack.c.l.b16 %v1280
        %v1965 = vunpack.c.l.b16 %v1281
        %v1966 = vunpack.c.l.b16 %v1282
        %v1967 = vunpack.c.l.b16 %v1283
        %v1968 = vunpack.c.l.b16 %v1284
        %v1969 = vunpack.c.l.b16 %v1285
        %v1970 = vunpack.c.l.b16 %v1286
        %v1971 = vunpack.c.l.b16 %v1287
        %v1972 = vunpack.c.l.b16 %v1288
        %v1973 = vunpack.c.l.b16 %v1289
        %v1974 = vunpack.c.l.b16 %v1290
        %v1975 = vunpack.c.l.b16 %v1291
        %v1976 = vpack.c.b16 %v1961, %v1960
        %v1977 = vpack.c.b16 %v1963, %v1962
        %v1978 = vpack.c.b16 %v1965, %v1964
        %v1979 = vpack.c.b16 %v1967, %v1966
        %v1980 = vpack.c.b16 %v1969, %v1968
        %v1981 = vpack.c.b16 %v1971, %v1970
        %v1982 = vpack.c.b16 %v1973, %v1972
        %v1983 = vpack.c.b16 %v1975, %v1974
        %1992 = vmatpush.bf16.msra.mxu0 %v1983
        %1993 = vmatpush.bf16.msra.mxu0 %v1982
        %1994 = vmatpush.bf16.msra.mxu0 %v1981
        %1995 = vmatpush.bf16.msra.mxu0 %v1980
        %1996 = vmatpush.bf16.msra.mxu0 %v1979
        %1997 = vmatpush.bf16.msra.mxu0 %v1978
        %1998 = vmatpush.bf16.msra.mxu0 %v1977
        %1999 = vmatpush.bf16.msra.mxu0 %v1976
        %2000 = vmatmul.bf16.gmra.mxu0 %v1397
        %v2001 = vpop.f32.mrf.mxu0
        %v2002 = vadd.f32 0.0, %v2001
        %v2003 = vpop.f32.mrf.mxu0
        %v2004 = vadd.f32 0.0, %v2003
        %2005 = vmatmul.bf16.gmra.mxu0 %v1398
        %v2006 = vpop.f32.mrf.mxu0
        %v2007 = vadd.f32 0.0, %v2006
        %v2008 = vpop.f32.mrf.mxu0
        %v2009 = vadd.f32 0.0, %v2008
        %2010 = vmatmul.bf16.gmra.mxu0 %v1399
        %v2011 = vpop.f32.mrf.mxu0
        %v2012 = vadd.f32 0.0, %v2011
        %v2013 = vpop.f32.mrf.mxu0
        %v2014 = vadd.f32 0.0, %v2013
        %2015 = vmatmul.bf16.gmra.mxu0 %v1400
        %v2016 = vpop.f32.mrf.mxu0
        %v2017 = vadd.f32 0.0, %v2016
        %v2018 = vpop.f32.mrf.mxu0
        %v2019 = vadd.f32 0.0, %v2018
        %2020 = vdwg.mxu0
        %v2037 = vunpack.c.l.b16 %v1292
        %v2038 = vunpack.c.l.b16 %v1293
        %v2039 = vunpack.c.l.b16 %v1294
        %v2040 = vunpack.c.l.b16 %v1295
        %v2041 = vunpack.c.l.b16 %v1296
        %v2042 = vunpack.c.l.b16 %v1297
        %v2043 = vunpack.c.l.b16 %v1298
        %v2044 = vunpack.c.l.b16 %v1299
        %v2045 = vunpack.c.l.b16 %v1300
        %v2046 = vunpack.c.l.b16 %v1301
        %v2047 = vunpack.c.l.b16 %v1302
        %v2048 = vunpack.c.l.b16 %v1303
        %v2049 = vunpack.c.l.b16 %v1304
        %v2050 = vunpack.c.l.b16 %v1305
        %v2051 = vunpack.c.l.b16 %v1306
        %v2052 = vunpack.c.l.b16 %v1307
        %v2053 = vpack.c.b16 %v2038, %v2037
        %v2054 = vpack.c.b16 %v2040, %v2039
        %v2055 = vpack.c.b16 %v2042, %v2041
        %v2056 = vpack.c.b16 %v2044, %v2043
        %v2057 = vpack.c.b16 %v2046, %v2045
        %v2058 = vpack.c.b16 %v2048, %v2047
        %v2059 = vpack.c.b16 %v2050, %v2049
        %v2060 = vpack.c.b16 %v2052, %v2051
        %2069 = vmatpush.bf16.msra.mxu0 %v2060
        %2070 = vmatpush.bf16.msra.mxu0 %v2059
        %2071 = vmatpush.bf16.msra.mxu0 %v2058
        %2072 = vmatpush.bf16.msra.mxu0 %v2057
        %2073 = vmatpush.bf16.msra.mxu0 %v2056
        %2074 = vmatpush.bf16.msra.mxu0 %v2055
        %2075 = vmatpush.bf16.msra.mxu0 %v2054
        %2076 = vmatpush.bf16.msra.mxu0 %v2053
        %2077 = vmatmul.bf16.gmra.mxu0 %v1397
        %v2078 = vpop.f32.mrf.mxu0
        %v2079 = vadd.f32 0.0, %v2078
        %v2080 = vpop.f32.mrf.mxu0
        %v2081 = vadd.f32 0.0, %v2080
        %2082 = vmatmul.bf16.gmra.mxu0 %v1398
        %v2083 = vpop.f32.mrf.mxu0
        %v2084 = vadd.f32 0.0, %v2083
        %v2085 = vpop.f32.mrf.mxu0
        %v2086 = vadd.f32 0.0, %v2085
        %2087 = vmatmul.bf16.gmra.mxu0 %v1399
        %v2088 = vpop.f32.mrf.mxu0
        %v2089 = vadd.f32 0.0, %v2088
        %v2090 = vpop.f32.mrf.mxu0
        %v2091 = vadd.f32 0.0, %v2090
        %2092 = vmatmul.bf16.gmra.mxu0 %v1400
        %v2093 = vpop.f32.mrf.mxu0
        %v2094 = vadd.f32 0.0, %v2093
        %v2095 = vpop.f32.mrf.mxu0
        %v2096 = vadd.f32 0.0, %v2095
        %2097 = vdwg.mxu0
        %v2114 = vunpack.c.l.b16 %v1308
        %v2115 = vunpack.c.l.b16 %v1309
        %v2116 = vunpack.c.l.b16 %v1310
        %v2117 = vunpack.c.l.b16 %v1311
        %v2118 = vunpack.c.l.b16 %v1312
        %v2119 = vunpack.c.l.b16 %v1313
        %v2120 = vunpack.c.l.b16 %v1314
        %v2121 = vunpack.c.l.b16 %v1315
        %v2122 = vunpack.c.l.b16 %v1316
        %v2123 = vunpack.c.l.b16 %v1317
        %v2124 = vunpack.c.l.b16 %v1318
        %v2125 = vunpack.c.l.b16 %v1319
        %v2126 = vunpack.c.l.b16 %v1320
        %v2127 = vunpack.c.l.b16 %v1321
        %v2128 = vunpack.c.l.b16 %v1322
        %v2129 = vunpack.c.l.b16 %v1323
        %v2130 = vpack.c.b16 %v2115, %v2114
        %v2131 = vpack.c.b16 %v2117, %v2116
        %v2132 = vpack.c.b16 %v2119, %v2118
        %v2133 = vpack.c.b16 %v2121, %v2120
        %v2134 = vpack.c.b16 %v2123, %v2122
        %v2135 = vpack.c.b16 %v2125, %v2124
        %v2136 = vpack.c.b16 %v2127, %v2126
        %v2137 = vpack.c.b16 %v2129, %v2128
        %2146 = vmatpush.bf16.msra.mxu0 %v2137
        %2147 = vmatpush.bf16.msra.mxu0 %v2136
        %2148 = vmatpush.bf16.msra.mxu0 %v2135
        %2149 = vmatpush.bf16.msra.mxu0 %v2134
        %2150 = vmatpush.bf16.msra.mxu0 %v2133
        %2151 = vmatpush.bf16.msra.mxu0 %v2132
        %2152 = vmatpush.bf16.msra.mxu0 %v2131
        %2153 = vmatpush.bf16.msra.mxu0 %v2130
        %2154 = vmatmul.bf16.gmra.mxu0 %v1397
        %v2155 = vpop.f32.mrf.mxu0
        %v2156 = vadd.f32 0.0, %v2155
        %v2157 = vpop.f32.mrf.mxu0
        %v2158 = vadd.f32 0.0, %v2157
        %2159 = vmatmul.bf16.gmra.mxu0 %v1398
        %v2160 = vpop.f32.mrf.mxu0
        %v2161 = vadd.f32 0.0, %v2160
        %v2162 = vpop.f32.mrf.mxu0
        %v2163 = vadd.f32 0.0, %v2162
        %2164 = vmatmul.bf16.gmra.mxu0 %v1399
        %v2165 = vpop.f32.mrf.mxu0
        %v2166 = vadd.f32 0.0, %v2165
        %v2167 = vpop.f32.mrf.mxu0
        %v2168 = vadd.f32 0.0, %v2167
        %2169 = vmatmul.bf16.gmra.mxu0 %v1400
        %v2170 = vpop.f32.mrf.mxu0
        %v2171 = vadd.f32 0.0, %v2170
        %v2172 = vpop.f32.mrf.mxu0
        %v2173 = vadd.f32 0.0, %v2172
        %2174 = vdwg.mxu0
        %v2191 = vunpack.c.l.b16 %v1324
        %v2192 = vunpack.c.l.b16 %v1325
        %v2193 = vunpack.c.l.b16 %v1326
        %v2194 = vunpack.c.l.b16 %v1327
        %v2195 = vunpack.c.l.b16 %v1328
        %v2196 = vunpack.c.l.b16 %v1329
        %v2197 = vunpack.c.l.b16 %v1330
        %v2198 = vunpack.c.l.b16 %v1331
        %v2199 = vunpack.c.l.b16 %v1332
        %v2200 = vunpack.c.l.b16 %v1333
        %v2201 = vunpack.c.l.b16 %v1334
        %v2202 = vunpack.c.l.b16 %v1335
        %v2203 = vunpack.c.l.b16 %v1336
        %v2204 = vunpack.c.l.b16 %v1337
        %v2205 = vunpack.c.l.b16 %v1338
        %v2206 = vunpack.c.l.b16 %v1339
        %v2207 = vpack.c.b16 %v2192, %v2191
        %v2208 = vpack.c.b16 %v2194, %v2193
        %v2209 = vpack.c.b16 %v2196, %v2195
        %v2210 = vpack.c.b16 %v2198, %v2197
        %v2211 = vpack.c.b16 %v2200, %v2199
        %v2212 = vpack.c.b16 %v2202, %v2201
        %v2213 = vpack.c.b16 %v2204, %v2203
        %v2214 = vpack.c.b16 %v2206, %v2205
        %2223 = vmatpush.bf16.msra.mxu0 %v2214
        %2224 = vmatpush.bf16.msra.mxu0 %v2213
        %2225 = vmatpush.bf16.msra.mxu0 %v2212
        %2226 = vmatpush.bf16.msra.mxu0 %v2211
        %2227 = vmatpush.bf16.msra.mxu0 %v2210
        %2228 = vmatpush.bf16.msra.mxu0 %v2209
        %2229 = vmatpush.bf16.msra.mxu0 %v2208
        %2230 = vmatpush.bf16.msra.mxu0 %v2207
        %2231 = vmatmul.bf16.gmra.mxu0 %v1397
        %v2232 = vpop.f32.mrf.mxu0
        %v2233 = vadd.f32 0.0, %v2232
        %v2234 = vpop.f32.mrf.mxu0
        %v2235 = vadd.f32 0.0, %v2234
        %2236 = vmatmul.bf16.gmra.mxu0 %v1398
        %v2237 = vpop.f32.mrf.mxu0
        %v2238 = vadd.f32 0.0, %v2237
        %v2239 = vpop.f32.mrf.mxu0
        %v2240 = vadd.f32 0.0, %v2239
        %2241 = vmatmul.bf16.gmra.mxu0 %v1399
        %v2242 = vpop.f32.mrf.mxu0
        %v2243 = vadd.f32 0.0, %v2242
        %v2244 = vpop.f32.mrf.mxu0
        %v2245 = vadd.f32 0.0, %v2244
        %2246 = vmatmul.bf16.gmra.mxu0 %v1400
        %v2247 = vpop.f32.mrf.mxu0
        %v2248 = vadd.f32 0.0, %v2247
        %v2249 = vpop.f32.mrf.mxu0
        %v2250 = vadd.f32 0.0, %v2249
        %2251 = vdwg.mxu0
        %v2268 = vunpack.c.l.b16 %v1340
        %v2269 = vunpack.c.l.b16 %v1341
        %v2270 = vunpack.c.l.b16 %v1342
        %v2271 = vunpack.c.l.b16 %v1343
        %v2272 = vunpack.c.l.b16 %v1344
        %v2273 = vunpack.c.l.b16 %v1345
        %v2274 = vunpack.c.l.b16 %v1346
        %v2275 = vunpack.c.l.b16 %v1347
        %v2276 = vunpack.c.l.b16 %v1348
        %v2277 = vunpack.c.l.b16 %v1349
        %v2278 = vunpack.c.l.b16 %v1350
        %v2279 = vunpack.c.l.b16 %v1351
        %v2280 = vunpack.c.l.b16 %v1352
        %v2281 = vunpack.c.l.b16 %v1353
        %v2282 = vunpack.c.l.b16 %v1354
        %v2283 = vunpack.c.l.b16 %v1355
        %v2284 = vpack.c.b16 %v2269, %v2268
        %v2285 = vpack.c.b16 %v2271, %v2270
        %v2286 = vpack.c.b16 %v2273, %v2272
        %v2287 = vpack.c.b16 %v2275, %v2274
        %v2288 = vpack.c.b16 %v2277, %v2276
        %v2289 = vpack.c.b16 %v2279, %v2278
        %v2290 = vpack.c.b16 %v2281, %v2280
        %v2291 = vpack.c.b16 %v2283, %v2282
        %2300 = vmatpush.bf16.msra.mxu0 %v2291
        %2301 = vmatpush.bf16.msra.mxu0 %v2290
        %2302 = vmatpush.bf16.msra.mxu0 %v2289
        %2303 = vmatpush.bf16.msra.mxu0 %v2288
        %2304 = vmatpush.bf16.msra.mxu0 %v2287
        %2305 = vmatpush.bf16.msra.mxu0 %v2286
        %2306 = vmatpush.bf16.msra.mxu0 %v2285
        %2307 = vmatpush.bf16.msra.mxu0 %v2284
        %2308 = vmatmul.bf16.gmra.mxu0 %v1397
        %v2309 = vpop.f32.mrf.mxu0
        %v2310 = vadd.f32 0.0, %v2309
        %v2311 = vpop.f32.mrf.mxu0
        %v2312 = vadd.f32 0.0, %v2311
        %2313 = vmatmul.bf16.gmra.mxu0 %v1398
        %v2314 = vpop.f32.mrf.mxu0
        %v2315 = vadd.f32 0.0, %v2314
        %v2316 = vpop.f32.mrf.mxu0
        %v2317 = vadd.f32 0.0, %v2316
        %2318 = vmatmul.bf16.gmra.mxu0 %v1399
        %v2319 = vpop.f32.mrf.mxu0
        %v2320 = vadd.f32 0.0, %v2319
        %v2321 = vpop.f32.mrf.mxu0
        %v2322 = vadd.f32 0.0, %v2321
        %2323 = vmatmul.bf16.gmra.mxu0 %v1400
        %v2324 = vpop.f32.mrf.mxu0
        %v2325 = vadd.f32 0.0, %v2324
        %v2326 = vpop.f32.mrf.mxu0
        %v2327 = vadd.f32 0.0, %v2326
        %2328 = vdwg.mxu0
        %v2329 = vpack.c.bf16 %v1463, %v1463
        %v2330 = vpack.c.bf16 %v1465, %v1465
        %v2331 = vpack.c.bf16 %v1468, %v1468
        %v2332 = vpack.c.bf16 %v1470, %v1470
        %v2333 = vpack.c.bf16 %v1473, %v1473
        %v2334 = vpack.c.bf16 %v1475, %v1475
        %v2335 = vpack.c.bf16 %v1478, %v1478
        %v2336 = vpack.c.bf16 %v1480, %v1480
        %v2337 = vpack.c.bf16 %v1540, %v1540
        %v2338 = vpack.c.bf16 %v1542, %v1542
        %v2339 = vpack.c.bf16 %v1545, %v1545
        %v2340 = vpack.c.bf16 %v1547, %v1547
        %v2341 = vpack.c.bf16 %v1550, %v1550
        %v2342 = vpack.c.bf16 %v1552, %v1552
        %v2343 = vpack.c.bf16 %v1555, %v1555
        %v2344 = vpack.c.bf16 %v1557, %v1557
        %v2345 = vpack.c.bf16 %v1617, %v1617
        %v2346 = vpack.c.bf16 %v1619, %v1619
        %v2347 = vpack.c.bf16 %v1622, %v1622
        %v2348 = vpack.c.bf16 %v1624, %v1624
        %v2349 = vpack.c.bf16 %v1627, %v1627
        %v2350 = vpack.c.bf16 %v1629, %v1629
        %v2351 = vpack.c.bf16 %v1632, %v1632
        %v2352 = vpack.c.bf16 %v1634, %v1634
        %v2353 = vpack.c.bf16 %v1694, %v1694
        %v2354 = vpack.c.bf16 %v1696, %v1696
        %v2355 = vpack.c.bf16 %v1699, %v1699
        %v2356 = vpack.c.bf16 %v1701, %v1701
        %v2357 = vpack.c.bf16 %v1704, %v1704
        %v2358 = vpack.c.bf16 %v1706, %v1706
        %v2359 = vpack.c.bf16 %v1709, %v1709
        %v2360 = vpack.c.bf16 %v1711, %v1711
        %v2361 = vpack.c.bf16 %v1771, %v1771
        %v2362 = vpack.c.bf16 %v1773, %v1773
        %v2363 = vpack.c.bf16 %v1776, %v1776
        %v2364 = vpack.c.bf16 %v1778, %v1778
        %v2365 = vpack.c.bf16 %v1781, %v1781
        %v2366 = vpack.c.bf16 %v1783, %v1783
        %v2367 = vpack.c.bf16 %v1786, %v1786
        %v2368 = vpack.c.bf16 %v1788, %v1788
        %v2369 = vpack.c.bf16 %v1848, %v1848
        %v2370 = vpack.c.bf16 %v1850, %v1850
        %v2371 = vpack.c.bf16 %v1853, %v1853
        %v2372 = vpack.c.bf16 %v1855, %v1855
        %v2373 = vpack.c.bf16 %v1858, %v1858
        %v2374 = vpack.c.bf16 %v1860, %v1860
        %v2375 = vpack.c.bf16 %v1863, %v1863
        %v2376 = vpack.c.bf16 %v1865, %v1865
        %v2377 = vpack.c.bf16 %v1925, %v1925
        %v2378 = vpack.c.bf16 %v1927, %v1927
        %v2379 = vpack.c.bf16 %v1930, %v1930
        %v2380 = vpack.c.bf16 %v1932, %v1932
        %v2381 = vpack.c.bf16 %v1935, %v1935
        %v2382 = vpack.c.bf16 %v1937, %v1937
        %v2383 = vpack.c.bf16 %v1940, %v1940
        %v2384 = vpack.c.bf16 %v1942, %v1942
        %v2385 = vpack.c.bf16 %v2002, %v2002
        %v2386 = vpack.c.bf16 %v2004, %v2004
        %v2387 = vpack.c.bf16 %v2007, %v2007
        %v2388 = vpack.c.bf16 %v2009, %v2009
        %v2389 = vpack.c.bf16 %v2012, %v2012
        %v2390 = vpack.c.bf16 %v2014, %v2014
        %v2391 = vpack.c.bf16 %v2017, %v2017
        %v2392 = vpack.c.bf16 %v2019, %v2019
        %v2401 = vunpack.c.l.b16 %v2329
        %v2402 = vunpack.c.l.b16 %v2330
        %v2403 = vunpack.c.l.b16 %v2331
        %v2404 = vunpack.c.l.b16 %v2332
        %v2405 = vunpack.c.l.b16 %v2333
        %v2406 = vunpack.c.l.b16 %v2334
        %v2407 = vunpack.c.l.b16 %v2335
        %v2408 = vunpack.c.l.b16 %v2336
        %v2409 = vpack.c.b16 %v2402, %v2401
        %v2410 = vpack.c.b16 %v2404, %v2403
        %v2411 = vpack.c.b16 %v2406, %v2405
        %v2412 = vpack.c.b16 %v2408, %v2407
        %v2421 = vunpack.c.l.b16 %v2361
        %v2422 = vunpack.c.l.b16 %v2362
        %v2423 = vunpack.c.l.b16 %v2363
        %v2424 = vunpack.c.l.b16 %v2364
        %v2425 = vunpack.c.l.b16 %v2365
        %v2426 = vunpack.c.l.b16 %v2366
        %v2427 = vunpack.c.l.b16 %v2367
        %v2428 = vunpack.c.l.b16 %v2368
        %v2429 = vpack.c.b16 %v2422, %v2421
        %v2430 = vpack.c.b16 %v2424, %v2423
        %v2431 = vpack.c.b16 %v2426, %v2425
        %v2432 = vpack.c.b16 %v2428, %v2427
        %vm2433 = vcmask 261120
        %v2435 = vsel %vm2433, %v2409, 0
        %v2438 = vsel %vm2433, %v2410, 0
        %v2441 = vsel %vm2433, %v2411, 0
        %v2444 = vsel %vm2433, %v2412, 0
        %v2447 = vsel %vm2433, %v2429, 0
        %v2450 = vsel %vm2433, %v2430, 0
        %v2453 = vsel %vm2433, %v2431, 0
        %v2456 = vsel %vm2433, %v2432, 0
        %2458 = vmatpush.bf16.xpose.msra.mxu0 0
        %2459 = vmatpush.bf16.xpose.msra.mxu0 0
        %2460 = vmatpush.bf16.xpose.msra.mxu0 0
        %2461 = vmatpush.bf16.xpose.msra.mxu0 0
        %2462 = vmatpush.bf16.xpose.msra.mxu0 %v2456
        %2463 = vmatpush.bf16.xpose.msra.mxu0 %v2453
        %2464 = vmatpush.bf16.xpose.msra.mxu0 %v2450
        %2465 = vmatpush.bf16.xpose.msra.mxu0 %v2447
        %2466 = vmatmul.bf16.gmra.mxu0 %v2435
        %v2467 = vpop.f32.mrf.mxu0
        %v2468 = vadd.f32 0.0, %v2467
        %v2469 = vpop.f32.mrf.mxu0
        %v2470 = vadd.f32 0.0, %v2469
        %2471 = vmatmul.bf16.gmra.mxu0 %v2438
        %v2472 = vpop.f32.mrf.mxu0
        %v2473 = vadd.f32 0.0, %v2472
        %v2474 = vpop.f32.mrf.mxu0
        %v2475 = vadd.f32 0.0, %v2474
        %2476 = vmatmul.bf16.gmra.mxu0 %v2441
        %v2477 = vpop.f32.mrf.mxu0
        %v2478 = vadd.f32 0.0, %v2477
        %v2479 = vpop.f32.mrf.mxu0
        %v2480 = vadd.f32 0.0, %v2479
        %2481 = vmatmul.bf16.gmra.mxu0 %v2444
        %v2482 = vpop.f32.mrf.mxu0
        %v2483 = vadd.f32 0.0, %v2482
        %v2484 = vpop.f32.mrf.mxu0
        %v2485 = vadd.f32 0.0, %v2484
        %2486 = vdwg.mxu0
        %v2495 = vunpack.c.l.b16 %v2337
        %v2496 = vunpack.c.l.b16 %v2338
        %v2497 = vunpack.c.l.b16 %v2339
        %v2498 = vunpack.c.l.b16 %v2340
        %v2499 = vunpack.c.l.b16 %v2341
        %v2500 = vunpack.c.l.b16 %v2342
        %v2501 = vunpack.c.l.b16 %v2343
        %v2502 = vunpack.c.l.b16 %v2344
        %v2503 = vpack.c.b16 %v2496, %v2495
        %v2504 = vpack.c.b16 %v2498, %v2497
        %v2505 = vpack.c.b16 %v2500, %v2499
        %v2506 = vpack.c.b16 %v2502, %v2501
        %v2515 = vunpack.c.l.b16 %v2369
        %v2516 = vunpack.c.l.b16 %v2370
        %v2517 = vunpack.c.l.b16 %v2371
        %v2518 = vunpack.c.l.b16 %v2372
        %v2519 = vunpack.c.l.b16 %v2373
        %v2520 = vunpack.c.l.b16 %v2374
        %v2521 = vunpack.c.l.b16 %v2375
        %v2522 = vunpack.c.l.b16 %v2376
        %v2523 = vpack.c.b16 %v2516, %v2515
        %v2524 = vpack.c.b16 %v2518, %v2517
        %v2525 = vpack.c.b16 %v2520, %v2519
        %v2526 = vpack.c.b16 %v2522, %v2521
        %v2528 = vsel %vm2433, %v2503, 0
        %v2531 = vsel %vm2433, %v2504, 0
        %v2534 = vsel %vm2433, %v2505, 0
        %v2537 = vsel %vm2433, %v2506, 0
        %v2540 = vsel %vm2433, %v2523, 0
        %v2543 = vsel %vm2433, %v2524, 0
        %v2546 = vsel %vm2433, %v2525, 0
        %v2549 = vsel %vm2433, %v2526, 0
        %2551 = vmatpush.bf16.xpose.msra.mxu0 0
        %2552 = vmatpush.bf16.xpose.msra.mxu0 0
        %2553 = vmatpush.bf16.xpose.msra.mxu0 0
        %2554 = vmatpush.bf16.xpose.msra.mxu0 0
        %2555 = vmatpush.bf16.xpose.msra.mxu0 %v2549
        %2556 = vmatpush.bf16.xpose.msra.mxu0 %v2546
        %2557 = vmatpush.bf16.xpose.msra.mxu0 %v2543
        %2558 = vmatpush.bf16.xpose.msra.mxu0 %v2540
        %2559 = vmatmul.bf16.gmra.mxu0 %v2528
        %v2560 = vpop.f32.mrf.mxu0
        %v2561 = vadd.f32 0.0, %v2560
        %v2562 = vpop.f32.mrf.mxu0
        %v2563 = vadd.f32 0.0, %v2562
        %2564 = vmatmul.bf16.gmra.mxu0 %v2531
        %v2565 = vpop.f32.mrf.mxu0
        %v2566 = vadd.f32 0.0, %v2565
        %v2567 = vpop.f32.mrf.mxu0
        %v2568 = vadd.f32 0.0, %v2567
        %2569 = vmatmul.bf16.gmra.mxu0 %v2534
        %v2570 = vpop.f32.mrf.mxu0
        %v2571 = vadd.f32 0.0, %v2570
        %v2572 = vpop.f32.mrf.mxu0
        %v2573 = vadd.f32 0.0, %v2572
        %2574 = vmatmul.bf16.gmra.mxu0 %v2537
        %v2575 = vpop.f32.mrf.mxu0
        %v2576 = vadd.f32 0.0, %v2575
        %v2577 = vpop.f32.mrf.mxu0
        %v2578 = vadd.f32 0.0, %v2577
        %2579 = vdwg.mxu0
        %v2588 = vunpack.c.l.b16 %v2345
        %v2589 = vunpack.c.l.b16 %v2346
        %v2590 = vunpack.c.l.b16 %v2347
        %v2591 = vunpack.c.l.b16 %v2348
        %v2592 = vunpack.c.l.b16 %v2349
        %v2593 = vunpack.c.l.b16 %v2350
        %v2594 = vunpack.c.l.b16 %v2351
        %v2595 = vunpack.c.l.b16 %v2352
        %v2596 = vpack.c.b16 %v2589, %v2588
        %v2597 = vpack.c.b16 %v2591, %v2590
        %v2598 = vpack.c.b16 %v2593, %v2592
        %v2599 = vpack.c.b16 %v2595, %v2594
        %v2608 = vunpack.c.l.b16 %v2377
        %v2609 = vunpack.c.l.b16 %v2378
        %v2610 = vunpack.c.l.b16 %v2379
        %v2611 = vunpack.c.l.b16 %v2380
        %v2612 = vunpack.c.l.b16 %v2381
        %v2613 = vunpack.c.l.b16 %v2382
        %v2614 = vunpack.c.l.b16 %v2383
        %v2615 = vunpack.c.l.b16 %v2384
        %v2616 = vpack.c.b16 %v2609, %v2608
        %v2617 = vpack.c.b16 %v2611, %v2610
        %v2618 = vpack.c.b16 %v2613, %v2612
        %v2619 = vpack.c.b16 %v2615, %v2614
        %v2621 = vsel %vm2433, %v2596, 0
        %v2624 = vsel %vm2433, %v2597, 0
        %v2627 = vsel %vm2433, %v2598, 0
        %v2630 = vsel %vm2433, %v2599, 0
        %v2633 = vsel %vm2433, %v2616, 0
        %v2636 = vsel %vm2433, %v2617, 0
        %v2639 = vsel %vm2433, %v2618, 0
        %v2642 = vsel %vm2433, %v2619, 0
        %2644 = vmatpush.bf16.xpose.msra.mxu0 0
        %2645 = vmatpush.bf16.xpose.msra.mxu0 0
        %2646 = vmatpush.bf16.xpose.msra.mxu0 0
        %2647 = vmatpush.bf16.xpose.msra.mxu0 0
        %2648 = vmatpush.bf16.xpose.msra.mxu0 %v2642
        %2649 = vmatpush.bf16.xpose.msra.mxu0 %v2639
        %2650 = vmatpush.bf16.xpose.msra.mxu0 %v2636
        %2651 = vmatpush.bf16.xpose.msra.mxu0 %v2633
        %2652 = vmatmul.bf16.gmra.mxu0 %v2621
        %v2653 = vpop.f32.mrf.mxu0
        %v2654 = vadd.f32 0.0, %v2653
        %v2655 = vpop.f32.mrf.mxu0
        %v2656 = vadd.f32 0.0, %v2655
        %2657 = vmatmul.bf16.gmra.mxu0 %v2624
        %v2658 = vpop.f32.mrf.mxu0
        %v2659 = vadd.f32 0.0, %v2658
        %v2660 = vpop.f32.mrf.mxu0
        %v2661 = vadd.f32 0.0, %v2660
        %2662 = vmatmul.bf16.gmra.mxu0 %v2627
        %v2663 = vpop.f32.mrf.mxu0
        %v2664 = vadd.f32 0.0, %v2663
        %v2665 = vpop.f32.mrf.mxu0
        %v2666 = vadd.f32 0.0, %v2665
        %2667 = vmatmul.bf16.gmra.mxu0 %v2630
        %v2668 = vpop.f32.mrf.mxu0
        %v2669 = vadd.f32 0.0, %v2668
        %v2670 = vpop.f32.mrf.mxu0
        %v2671 = vadd.f32 0.0, %v2670
        %2672 = vdwg.mxu0
        %v2681 = vunpack.c.l.b16 %v2353
        %v2682 = vunpack.c.l.b16 %v2354
        %v2683 = vunpack.c.l.b16 %v2355
        %v2684 = vunpack.c.l.b16 %v2356
        %v2685 = vunpack.c.l.b16 %v2357
        %v2686 = vunpack.c.l.b16 %v2358
        %v2687 = vunpack.c.l.b16 %v2359
        %v2688 = vunpack.c.l.b16 %v2360
        %v2689 = vpack.c.b16 %v2682, %v2681
        %v2690 = vpack.c.b16 %v2684, %v2683
        %v2691 = vpack.c.b16 %v2686, %v2685
        %v2692 = vpack.c.b16 %v2688, %v2687
        %v2701 = vunpack.c.l.b16 %v2385
        %v2702 = vunpack.c.l.b16 %v2386
        %v2703 = vunpack.c.l.b16 %v2387
        %v2704 = vunpack.c.l.b16 %v2388
        %v2705 = vunpack.c.l.b16 %v2389
        %v2706 = vunpack.c.l.b16 %v2390
        %v2707 = vunpack.c.l.b16 %v2391
        %v2708 = vunpack.c.l.b16 %v2392
        %v2709 = vpack.c.b16 %v2702, %v2701
        %v2710 = vpack.c.b16 %v2704, %v2703
        %v2711 = vpack.c.b16 %v2706, %v2705
        %v2712 = vpack.c.b16 %v2708, %v2707
        %v2714 = vsel %vm2433, %v2689, 0
        %v2717 = vsel %vm2433, %v2690, 0
        %v2720 = vsel %vm2433, %v2691, 0
        %v2723 = vsel %vm2433, %v2692, 0
        %v2726 = vsel %vm2433, %v2709, 0
        %v2729 = vsel %vm2433, %v2710, 0
        %v2732 = vsel %vm2433, %v2711, 0
        %v2735 = vsel %vm2433, %v2712, 0
        %2737 = vmatpush.bf16.xpose.msra.mxu0 0
        %2738 = vmatpush.bf16.xpose.msra.mxu0 0
        %2739 = vmatpush.bf16.xpose.msra.mxu0 0
        %2740 = vmatpush.bf16.xpose.msra.mxu0 0
        %2741 = vmatpush.bf16.xpose.msra.mxu0 %v2735
        %2742 = vmatpush.bf16.xpose.msra.mxu0 %v2732
        %2743 = vmatpush.bf16.xpose.msra.mxu0 %v2729
        %2744 = vmatpush.bf16.xpose.msra.mxu0 %v2726
        %2745 = vmatmul.bf16.gmra.mxu0 %v2714
        %v2746 = vpop.f32.mrf.mxu0
        %v2747 = vadd.f32 0.0, %v2746
        %v2748 = vpop.f32.mrf.mxu0
        %v2749 = vadd.f32 0.0, %v2748
        %2750 = vmatmul.bf16.gmra.mxu0 %v2717
        %v2751 = vpop.f32.mrf.mxu0
        %v2752 = vadd.f32 0.0, %v2751
        %v2753 = vpop.f32.mrf.mxu0
        %v2754 = vadd.f32 0.0, %v2753
        %2755 = vmatmul.bf16.gmra.mxu0 %v2720
        %v2756 = vpop.f32.mrf.mxu0
        %v2757 = vadd.f32 0.0, %v2756
        %v2758 = vpop.f32.mrf.mxu0
        %v2759 = vadd.f32 0.0, %v2758
        %2760 = vmatmul.bf16.gmra.mxu0 %v2723
        %v2761 = vpop.f32.mrf.mxu0
        %v2762 = vadd.f32 0.0, %v2761
        %v2763 = vpop.f32.mrf.mxu0
        %v2764 = vadd.f32 0.0, %v2763
        %2765 = vdwg.mxu0
        %vm2766 = vcmask 523264
        %v2767 = vsel %vm2766, %v2468, -inf
        %2768 = vmax.xlane.f32.xlu0 %v2767
        %v2769 = vpop.xlane.xlu0 %2768
        %v2770 = vsel %vm2766, %v2470, -inf
        %2771 = vmax.xlane.f32.xlu0 %v2770
        %v2772 = vpop.xlane.xlu0 %2771
        %v2773 = vsel %vm2766, %v2473, -inf
        %2774 = vmax.xlane.f32.xlu0 %v2773
        %v2775 = vpop.xlane.xlu0 %2774
        %v2776 = vsel %vm2766, %v2475, -inf
        %2777 = vmax.xlane.f32.xlu0 %v2776
        %v2778 = vpop.xlane.xlu0 %2777
        %v2779 = vsel %vm2766, %v2478, -inf
        %2780 = vmax.xlane.f32.xlu0 %v2779
        %v2781 = vpop.xlane.xlu0 %2780
        %v2782 = vsel %vm2766, %v2480, -inf
        %2783 = vmax.xlane.f32.xlu0 %v2782
        %v2784 = vpop.xlane.xlu0 %2783
        %v2785 = vsel %vm2766, %v2483, -inf
        %2786 = vmax.xlane.f32.xlu0 %v2785
        %v2787 = vpop.xlane.xlu0 %2786
        %v2788 = vsel %vm2766, %v2485, -inf
        %2789 = vmax.xlane.f32.xlu0 %v2788
        %v2790 = vpop.xlane.xlu0 %2789
        %v2791 = vsel %vm2766, %v2561, -inf
        %2792 = vmax.xlane.f32.xlu0 %v2791
        %v2793 = vpop.xlane.xlu0 %2792
        %v2794 = vsel %vm2766, %v2563, -inf
        %2795 = vmax.xlane.f32.xlu0 %v2794
        %v2796 = vpop.xlane.xlu0 %2795
        %v2797 = vsel %vm2766, %v2566, -inf
        %2798 = vmax.xlane.f32.xlu0 %v2797
        %v2799 = vpop.xlane.xlu0 %2798
        %v2800 = vsel %vm2766, %v2568, -inf
        %2801 = vmax.xlane.f32.xlu0 %v2800
        %v2802 = vpop.xlane.xlu0 %2801
        %v2803 = vsel %vm2766, %v2571, -inf
        %2804 = vmax.xlane.f32.xlu0 %v2803
        %v2805 = vpop.xlane.xlu0 %2804
        %v2806 = vsel %vm2766, %v2573, -inf
        %2807 = vmax.xlane.f32.xlu0 %v2806
        %v2808 = vpop.xlane.xlu0 %2807
        %v2809 = vsel %vm2766, %v2576, -inf
        %2810 = vmax.xlane.f32.xlu0 %v2809
        %v2811 = vpop.xlane.xlu0 %2810
        %v2812 = vsel %vm2766, %v2578, -inf
        %2813 = vmax.xlane.f32.xlu0 %v2812
        %v2814 = vpop.xlane.xlu0 %2813
        %v2815 = vsel %vm2766, %v2654, -inf
        %2816 = vmax.xlane.f32.xlu0 %v2815
        %v2817 = vpop.xlane.xlu0 %2816
        %v2818 = vsel %vm2766, %v2656, -inf
        %2819 = vmax.xlane.f32.xlu0 %v2818
        %v2820 = vpop.xlane.xlu0 %2819
        %v2821 = vsel %vm2766, %v2659, -inf
        %2822 = vmax.xlane.f32.xlu0 %v2821
        %v2823 = vpop.xlane.xlu0 %2822
        %v2824 = vsel %vm2766, %v2661, -inf
        %2825 = vmax.xlane.f32.xlu0 %v2824
        %v2826 = vpop.xlane.xlu0 %2825
        %v2827 = vsel %vm2766, %v2664, -inf
        %2828 = vmax.xlane.f32.xlu0 %v2827
        %v2829 = vpop.xlane.xlu0 %2828
        %v2830 = vsel %vm2766, %v2666, -inf
        %2831 = vmax.xlane.f32.xlu0 %v2830
        %v2832 = vpop.xlane.xlu0 %2831
        %v2833 = vsel %vm2766, %v2669, -inf
        %2834 = vmax.xlane.f32.xlu0 %v2833
        %v2835 = vpop.xlane.xlu0 %2834
        %v2836 = vsel %vm2766, %v2671, -inf
        %2837 = vmax.xlane.f32.xlu0 %v2836
        %v2838 = vpop.xlane.xlu0 %2837
        %v2839 = vsel %vm2766, %v2747, -inf
        %2840 = vmax.xlane.f32.xlu0 %v2839
        %v2841 = vpop.xlane.xlu0 %2840
        %v2842 = vsel %vm2766, %v2749, -inf
        %2843 = vmax.xlane.f32.xlu0 %v2842
        %v2844 = vpop.xlane.xlu0 %2843
        %v2845 = vsel %vm2766, %v2752, -inf
        %2846 = vmax.xlane.f32.xlu0 %v2845
        %v2847 = vpop.xlane.xlu0 %2846
        %v2848 = vsel %vm2766, %v2754, -inf
        %2849 = vmax.xlane.f32.xlu0 %v2848
        %v2850 = vpop.xlane.xlu0 %2849
        %v2851 = vsel %vm2766, %v2757, -inf
        %2852 = vmax.xlane.f32.xlu0 %v2851
        %v2853 = vpop.xlane.xlu0 %2852
        %v2854 = vsel %vm2766, %v2759, -inf
        %2855 = vmax.xlane.f32.xlu0 %v2854
        %v2856 = vpop.xlane.xlu0 %2855
        %v2857 = vsel %vm2766, %v2762, -inf
        %2858 = vmax.xlane.f32.xlu0 %v2857
        %v2859 = vpop.xlane.xlu0 %2858
        %v2860 = vsel %vm2766, %v2764, -inf
        %2861 = vmax.xlane.f32.xlu0 %v2860
        %v2862 = vpop.xlane.xlu0 %2861
        %v2863 = vsub.f32 %v2468, %v2769
        %v2864 = vsub.f32 %v2470, %v2772
        %v2865 = vsub.f32 %v2473, %v2775
        %v2866 = vsub.f32 %v2475, %v2778
        %v2867 = vsub.f32 %v2478, %v2781
        %v2868 = vsub.f32 %v2480, %v2784
        %v2869 = vsub.f32 %v2483, %v2787
        %v2870 = vsub.f32 %v2485, %v2790
        %v2871 = vsub.f32 %v2561, %v2793
        %v2872 = vsub.f32 %v2563, %v2796
        %v2873 = vsub.f32 %v2566, %v2799
        %v2874 = vsub.f32 %v2568, %v2802
        %v2875 = vsub.f32 %v2571, %v2805
        %v2876 = vsub.f32 %v2573, %v2808
        %v2877 = vsub.f32 %v2576, %v2811
        %v2878 = vsub.f32 %v2578, %v2814
        %v2879 = vsub.f32 %v2654, %v2817
        %v2880 = vsub.f32 %v2656, %v2820
        %v2881 = vsub.f32 %v2659, %v2823
        %v2882 = vsub.f32 %v2661, %v2826
        %v2883 = vsub.f32 %v2664, %v2829
        %v2884 = vsub.f32 %v2666, %v2832
        %v2885 = vsub.f32 %v2669, %v2835
        %v2886 = vsub.f32 %v2671, %v2838
        %v2887 = vsub.f32 %v2747, %v2841
        %v2888 = vsub.f32 %v2749, %v2844
        %v2889 = vsub.f32 %v2752, %v2847
        %v2890 = vsub.f32 %v2754, %v2850
        %v2891 = vsub.f32 %v2757, %v2853
        %v2892 = vsub.f32 %v2759, %v2856
        %v2893 = vsub.f32 %v2762, %v2859
        %v2894 = vsub.f32 %v2764, %v2862
        %v2895 = vmul.f32 %v2863, 1.442695
        %v2896 = vpow.pop %v2895
        %v2897 = vmul.f32 %v2864, 1.442695
        %v2898 = vpow.pop %v2897
        %v2899 = vmul.f32 %v2865, 1.442695
        %v2900 = vpow.pop %v2899
        %v2901 = vmul.f32 %v2866, 1.442695
        %v2902 = vpow.pop %v2901
        %v2903 = vmul.f32 %v2867, 1.442695
        %v2904 = vpow.pop %v2903
        %v2905 = vmul.f32 %v2868, 1.442695
        %v2906 = vpow.pop %v2905
        %v2907 = vmul.f32 %v2869, 1.442695
        %v2908 = vpow.pop %v2907
        %v2909 = vmul.f32 %v2870, 1.442695
        %v2910 = vpow.pop %v2909
        %v2911 = vmul.f32 %v2871, 1.442695
        %v2912 = vpow.pop %v2911
        %v2913 = vmul.f32 %v2872, 1.442695
        %v2914 = vpow.pop %v2913
        %v2915 = vmul.f32 %v2873, 1.442695
        %v2916 = vpow.pop %v2915
        %v2917 = vmul.f32 %v2874, 1.442695
        %v2918 = vpow.pop %v2917
        %v2919 = vmul.f32 %v2875, 1.442695
        %v2920 = vpow.pop %v2919
        %v2921 = vmul.f32 %v2876, 1.442695
        %v2922 = vpow.pop %v2921
        %v2923 = vmul.f32 %v2877, 1.442695
        %v2924 = vpow.pop %v2923
        %v2925 = vmul.f32 %v2878, 1.442695
        %v2926 = vpow.pop %v2925
        %v2927 = vmul.f32 %v2879, 1.442695
        %v2928 = vpow.pop %v2927
        %v2929 = vmul.f32 %v2880, 1.442695
        %v2930 = vpow.pop %v2929
        %v2931 = vmul.f32 %v2881, 1.442695
        %v2932 = vpow.pop %v2931
        %v2933 = vmul.f32 %v2882, 1.442695
        %v2934 = vpow.pop %v2933
        %v2935 = vmul.f32 %v2883, 1.442695
        %v2936 = vpow.pop %v2935
        %v2937 = vmul.f32 %v2884, 1.442695
        %v2938 = vpow.pop %v2937
        %v2939 = vmul.f32 %v2885, 1.442695
        %v2940 = vpow.pop %v2939
        %v2941 = vmul.f32 %v2886, 1.442695
        %v2942 = vpow.pop %v2941
        %v2943 = vmul.f32 %v2887, 1.442695
        %v2944 = vpow.pop %v2943
        %v2945 = vmul.f32 %v2888, 1.442695
        %v2946 = vpow.pop %v2945
        %v2947 = vmul.f32 %v2889, 1.442695
        %v2948 = vpow.pop %v2947
        %v2949 = vmul.f32 %v2890, 1.442695
        %v2950 = vpow.pop %v2949
        %v2951 = vmul.f32 %v2891, 1.442695
        %v2952 = vpow.pop %v2951
        %v2953 = vmul.f32 %v2892, 1.442695
        %v2954 = vpow.pop %v2953
        %v2955 = vmul.f32 %v2893, 1.442695
        %v2956 = vpow.pop %v2955
        %v2957 = vmul.f32 %v2894, 1.442695
        %v2958 = vpow.pop %v2957
        %v2959 = vsel %vm2766, %v2896, 0.0
        %2960 = vadd.xlane.f32.xlu0 %v2959
        %v2961 = vpop.xlane.xlu0 %2960
        %v2962 = vsel %vm2766, %v2898, 0.0
        %2963 = vadd.xlane.f32.xlu0 %v2962
        %v2964 = vpop.xlane.xlu0 %2963
        %v2965 = vsel %vm2766, %v2900, 0.0
        %2966 = vadd.xlane.f32.xlu0 %v2965
        %v2967 = vpop.xlane.xlu0 %2966
        %v2968 = vsel %vm2766, %v2902, 0.0
        %2969 = vadd.xlane.f32.xlu0 %v2968
        %v2970 = vpop.xlane.xlu0 %2969
        %v2971 = vsel %vm2766, %v2904, 0.0
        %2972 = vadd.xlane.f32.xlu0 %v2971
        %v2973 = vpop.xlane.xlu0 %2972
        %v2974 = vsel %vm2766, %v2906, 0.0
        %2975 = vadd.xlane.f32.xlu0 %v2974
        %v2976 = vpop.xlane.xlu0 %2975
        %v2977 = vsel %vm2766, %v2908, 0.0
        %2978 = vadd.xlane.f32.xlu0 %v2977
        %v2979 = vpop.xlane.xlu0 %2978
        %v2980 = vsel %vm2766, %v2910, 0.0
        %2981 = vadd.xlane.f32.xlu0 %v2980
        %v2982 = vpop.xlane.xlu0 %2981
        %v2983 = vsel %vm2766, %v2912, 0.0
        %2984 = vadd.xlane.f32.xlu0 %v2983
        %v2985 = vpop.xlane.xlu0 %2984
        %v2986 = vsel %vm2766, %v2914, 0.0
        %2987 = vadd.xlane.f32.xlu0 %v2986
        %v2988 = vpop.xlane.xlu0 %2987
        %v2989 = vsel %vm2766, %v2916, 0.0
        %2990 = vadd.xlane.f32.xlu0 %v2989
        %v2991 = vpop.xlane.xlu0 %2990
        %v2992 = vsel %vm2766, %v2918, 0.0
        %2993 = vadd.xlane.f32.xlu0 %v2992
        %v2994 = vpop.xlane.xlu0 %2993
        %v2995 = vsel %vm2766, %v2920, 0.0
        %2996 = vadd.xlane.f32.xlu0 %v2995
        %v2997 = vpop.xlane.xlu0 %2996
        %v2998 = vsel %vm2766, %v2922, 0.0
        %2999 = vadd.xlane.f32.xlu0 %v2998
        %v3000 = vpop.xlane.xlu0 %2999
        %v3001 = vsel %vm2766, %v2924, 0.0
        %3002 = vadd.xlane.f32.xlu0 %v3001
        %v3003 = vpop.xlane.xlu0 %3002
        %v3004 = vsel %vm2766, %v2926, 0.0
        %3005 = vadd.xlane.f32.xlu0 %v3004
        %v3006 = vpop.xlane.xlu0 %3005
        %v3007 = vsel %vm2766, %v2928, 0.0
        %3008 = vadd.xlane.f32.xlu0 %v3007
        %v3009 = vpop.xlane.xlu0 %3008
        %v3010 = vsel %vm2766, %v2930, 0.0
        %3011 = vadd.xlane.f32.xlu0 %v3010
        %v3012 = vpop.xlane.xlu0 %3011
        %v3013 = vsel %vm2766, %v2932, 0.0
        %3014 = vadd.xlane.f32.xlu0 %v3013
        %v3015 = vpop.xlane.xlu0 %3014
        %v3016 = vsel %vm2766, %v2934, 0.0
        %3017 = vadd.xlane.f32.xlu0 %v3016
        %v3018 = vpop.xlane.xlu0 %3017
        %v3019 = vsel %vm2766, %v2936, 0.0
        %3020 = vadd.xlane.f32.xlu0 %v3019
        %v3021 = vpop.xlane.xlu0 %3020
        %v3022 = vsel %vm2766, %v2938, 0.0
        %3023 = vadd.xlane.f32.xlu0 %v3022
        %v3024 = vpop.xlane.xlu0 %3023
        %v3025 = vsel %vm2766, %v2940, 0.0
        %3026 = vadd.xlane.f32.xlu0 %v3025
        %v3027 = vpop.xlane.xlu0 %3026
        %v3028 = vsel %vm2766, %v2942, 0.0
        %3029 = vadd.xlane.f32.xlu0 %v3028
        %v3030 = vpop.xlane.xlu0 %3029
        %v3031 = vsel %vm2766, %v2944, 0.0
        %3032 = vadd.xlane.f32.xlu0 %v3031
        %v3033 = vpop.xlane.xlu0 %3032
        %v3034 = vsel %vm2766, %v2946, 0.0
        %3035 = vadd.xlane.f32.xlu0 %v3034
        %v3036 = vpop.xlane.xlu0 %3035
        %v3037 = vsel %vm2766, %v2948, 0.0
        %3038 = vadd.xlane.f32.xlu0 %v3037
        %v3039 = vpop.xlane.xlu0 %3038
        %v3040 = vsel %vm2766, %v2950, 0.0
        %3041 = vadd.xlane.f32.xlu0 %v3040
        %v3042 = vpop.xlane.xlu0 %3041
        %v3043 = vsel %vm2766, %v2952, 0.0
        %3044 = vadd.xlane.f32.xlu0 %v3043
        %v3045 = vpop.xlane.xlu0 %3044
        %v3046 = vsel %vm2766, %v2954, 0.0
        %3047 = vadd.xlane.f32.xlu0 %v3046
        %v3048 = vpop.xlane.xlu0 %3047
        %v3049 = vsel %vm2766, %v2956, 0.0
        %3050 = vadd.xlane.f32.xlu0 %v3049
        %v3051 = vpop.xlane.xlu0 %3050
        %v3052 = vsel %vm2766, %v2958, 0.0
        %3053 = vadd.xlane.f32.xlu0 %v3052
        %v3054 = vpop.xlane.xlu0 %3053
        %v3055 = vpack.c.bf16 %v2896, %v2896
        %v3056 = vpack.c.bf16 %v2898, %v2898
        %v3057 = vpack.c.bf16 %v2900, %v2900
        %v3058 = vpack.c.bf16 %v2902, %v2902
        %v3059 = vpack.c.bf16 %v2904, %v2904
        %v3060 = vpack.c.bf16 %v2906, %v2906
        %v3061 = vpack.c.bf16 %v2908, %v2908
        %v3062 = vpack.c.bf16 %v2910, %v2910
        %v3063 = vpack.c.bf16 %v2912, %v2912
        %v3064 = vpack.c.bf16 %v2914, %v2914
        %v3065 = vpack.c.bf16 %v2916, %v2916
        %v3066 = vpack.c.bf16 %v2918, %v2918
        %v3067 = vpack.c.bf16 %v2920, %v2920
        %v3068 = vpack.c.bf16 %v2922, %v2922
        %v3069 = vpack.c.bf16 %v2924, %v2924
        %v3070 = vpack.c.bf16 %v2926, %v2926
        %v3071 = vpack.c.bf16 %v2928, %v2928
        %v3072 = vpack.c.bf16 %v2930, %v2930
        %v3073 = vpack.c.bf16 %v2932, %v2932
        %v3074 = vpack.c.bf16 %v2934, %v2934
        %v3075 = vpack.c.bf16 %v2936, %v2936
        %v3076 = vpack.c.bf16 %v2938, %v2938
        %v3077 = vpack.c.bf16 %v2940, %v2940
        %v3078 = vpack.c.bf16 %v2942, %v2942
        %v3079 = vpack.c.bf16 %v2944, %v2944
        %v3080 = vpack.c.bf16 %v2946, %v2946
        %v3081 = vpack.c.bf16 %v2948, %v2948
        %v3082 = vpack.c.bf16 %v2950, %v2950
        %v3083 = vpack.c.bf16 %v2952, %v2952
        %v3084 = vpack.c.bf16 %v2954, %v2954
        %v3085 = vpack.c.bf16 %v2956, %v2956
        %v3086 = vpack.c.bf16 %v2958, %v2958
        %v3087 = vpack.c.bf16 %v2079, %v2079
        %v3088 = vpack.c.bf16 %v2081, %v2081
        %v3089 = vpack.c.bf16 %v2084, %v2084
        %v3090 = vpack.c.bf16 %v2086, %v2086
        %v3091 = vpack.c.bf16 %v2089, %v2089
        %v3092 = vpack.c.bf16 %v2091, %v2091
        %v3093 = vpack.c.bf16 %v2094, %v2094
        %v3094 = vpack.c.bf16 %v2096, %v2096
        %v3095 = vpack.c.bf16 %v2156, %v2156
        %v3096 = vpack.c.bf16 %v2158, %v2158
        %v3097 = vpack.c.bf16 %v2161, %v2161
        %v3098 = vpack.c.bf16 %v2163, %v2163
        %v3099 = vpack.c.bf16 %v2166, %v2166
        %v3100 = vpack.c.bf16 %v2168, %v2168
        %v3101 = vpack.c.bf16 %v2171, %v2171
        %v3102 = vpack.c.bf16 %v2173, %v2173
        %v3103 = vpack.c.bf16 %v2233, %v2233
        %v3104 = vpack.c.bf16 %v2235, %v2235
        %v3105 = vpack.c.bf16 %v2238, %v2238
        %v3106 = vpack.c.bf16 %v2240, %v2240
        %v3107 = vpack.c.bf16 %v2243, %v2243
        %v3108 = vpack.c.bf16 %v2245, %v2245
        %v3109 = vpack.c.bf16 %v2248, %v2248
        %v3110 = vpack.c.bf16 %v2250, %v2250
        %v3111 = vpack.c.bf16 %v2310, %v2310
        %v3112 = vpack.c.bf16 %v2312, %v2312
        %v3113 = vpack.c.bf16 %v2315, %v2315
        %v3114 = vpack.c.bf16 %v2317, %v2317
        %v3115 = vpack.c.bf16 %v2320, %v2320
        %v3116 = vpack.c.bf16 %v2322, %v2322
        %v3117 = vpack.c.bf16 %v2325, %v2325
        %v3118 = vpack.c.bf16 %v2327, %v2327
        %v3127 = vunpack.c.l.b16 %v3055
        %v3128 = vunpack.c.l.b16 %v3056
        %v3129 = vunpack.c.l.b16 %v3057
        %v3130 = vunpack.c.l.b16 %v3058
        %v3131 = vunpack.c.l.b16 %v3059
        %v3132 = vunpack.c.l.b16 %v3060
        %v3133 = vunpack.c.l.b16 %v3061
        %v3134 = vunpack.c.l.b16 %v3062
        %v3135 = vpack.c.b16 %v3128, %v3127
        %v3136 = vpack.c.b16 %v3130, %v3129
        %v3137 = vpack.c.b16 %v3132, %v3131
        %v3138 = vpack.c.b16 %v3134, %v3133
        %v3147 = vunpack.c.l.b16 %v3087
        %v3148 = vunpack.c.l.b16 %v3088
        %v3149 = vunpack.c.l.b16 %v3089
        %v3150 = vunpack.c.l.b16 %v3090
        %v3151 = vunpack.c.l.b16 %v3091
        %v3152 = vunpack.c.l.b16 %v3092
        %v3153 = vunpack.c.l.b16 %v3093
        %v3154 = vunpack.c.l.b16 %v3094
        %v3155 = vpack.c.b16 %v3148, %v3147
        %v3156 = vpack.c.b16 %v3150, %v3149
        %v3157 = vpack.c.b16 %v3152, %v3151
        %v3158 = vpack.c.b16 %v3154, %v3153
        %v3164 = vsel %vm2766, %v3135, 0
        %v3167 = vsel %vm2766, %v3136, 0
        %v3170 = vsel %vm2766, %v3137, 0
        %v3173 = vsel %vm2766, %v3138, 0
        %3175 = vmatpush.bf16.msra.mxu0 0
        %3176 = vmatpush.bf16.msra.mxu0 0
        %3177 = vmatpush.bf16.msra.mxu0 0
        %3178 = vmatpush.bf16.msra.mxu0 0
        %3179 = vmatpush.bf16.msra.mxu0 %v3158
        %3180 = vmatpush.bf16.msra.mxu0 %v3157
        %3181 = vmatpush.bf16.msra.mxu0 %v3156
        %3182 = vmatpush.bf16.msra.mxu0 %v3155
        %3183 = vmatmul.bf16.gmra.mxu0 %v3164
        %v3184 = vpop.f32.mrf.mxu0
        %v3185 = vadd.f32 0.0, %v3184
        %v3186 = vpop.f32.mrf.mxu0
        %v3187 = vadd.f32 0.0, %v3186
        %3188 = vmatmul.bf16.gmra.mxu0 %v3167
        %v3189 = vpop.f32.mrf.mxu0
        %v3190 = vadd.f32 0.0, %v3189
        %v3191 = vpop.f32.mrf.mxu0
        %v3192 = vadd.f32 0.0, %v3191
        %3193 = vmatmul.bf16.gmra.mxu0 %v3170
        %v3194 = vpop.f32.mrf.mxu0
        %v3195 = vadd.f32 0.0, %v3194
        %v3196 = vpop.f32.mrf.mxu0
        %v3197 = vadd.f32 0.0, %v3196
        %3198 = vmatmul.bf16.gmra.mxu0 %v3173
        %v3199 = vpop.f32.mrf.mxu0
        %v3200 = vadd.f32 0.0, %v3199
        %v3201 = vpop.f32.mrf.mxu0
        %v3202 = vadd.f32 0.0, %v3201
        %3203 = vdwg.mxu0
        %v3212 = vunpack.c.l.b16 %v3063
        %v3213 = vunpack.c.l.b16 %v3064
        %v3214 = vunpack.c.l.b16 %v3065
        %v3215 = vunpack.c.l.b16 %v3066
        %v3216 = vunpack.c.l.b16 %v3067
        %v3217 = vunpack.c.l.b16 %v3068
        %v3218 = vunpack.c.l.b16 %v3069
        %v3219 = vunpack.c.l.b16 %v3070
        %v3220 = vpack.c.b16 %v3213, %v3212
        %v3221 = vpack.c.b16 %v3215, %v3214
        %v3222 = vpack.c.b16 %v3217, %v3216
        %v3223 = vpack.c.b16 %v3219, %v3218
        %v3232 = vunpack.c.l.b16 %v3095
        %v3233 = vunpack.c.l.b16 %v3096
        %v3234 = vunpack.c.l.b16 %v3097
        %v3235 = vunpack.c.l.b16 %v3098
        %v3236 = vunpack.c.l.b16 %v3099
        %v3237 = vunpack.c.l.b16 %v3100
        %v3238 = vunpack.c.l.b16 %v3101
        %v3239 = vunpack.c.l.b16 %v3102
        %v3240 = vpack.c.b16 %v3233, %v3232
        %v3241 = vpack.c.b16 %v3235, %v3234
        %v3242 = vpack.c.b16 %v3237, %v3236
        %v3243 = vpack.c.b16 %v3239, %v3238
        %v3249 = vsel %vm2766, %v3220, 0
        %v3252 = vsel %vm2766, %v3221, 0
        %v3255 = vsel %vm2766, %v3222, 0
        %v3258 = vsel %vm2766, %v3223, 0
        %3260 = vmatpush.bf16.msra.mxu0 0
        %3261 = vmatpush.bf16.msra.mxu0 0
        %3262 = vmatpush.bf16.msra.mxu0 0
        %3263 = vmatpush.bf16.msra.mxu0 0
        %3264 = vmatpush.bf16.msra.mxu0 %v3243
        %3265 = vmatpush.bf16.msra.mxu0 %v3242
        %3266 = vmatpush.bf16.msra.mxu0 %v3241
        %3267 = vmatpush.bf16.msra.mxu0 %v3240
        %3268 = vmatmul.bf16.gmra.mxu0 %v3249
        %v3269 = vpop.f32.mrf.mxu0
        %v3270 = vadd.f32 0.0, %v3269
        %v3271 = vpop.f32.mrf.mxu0
        %v3272 = vadd.f32 0.0, %v3271
        %3273 = vmatmul.bf16.gmra.mxu0 %v3252
        %v3274 = vpop.f32.mrf.mxu0
        %v3275 = vadd.f32 0.0, %v3274
        %v3276 = vpop.f32.mrf.mxu0
        %v3277 = vadd.f32 0.0, %v3276
        %3278 = vmatmul.bf16.gmra.mxu0 %v3255
        %v3279 = vpop.f32.mrf.mxu0
        %v3280 = vadd.f32 0.0, %v3279
        %v3281 = vpop.f32.mrf.mxu0
        %v3282 = vadd.f32 0.0, %v3281
        %3283 = vmatmul.bf16.gmra.mxu0 %v3258
        %v3284 = vpop.f32.mrf.mxu0
        %v3285 = vadd.f32 0.0, %v3284
        %v3286 = vpop.f32.mrf.mxu0
        %v3287 = vadd.f32 0.0, %v3286
        %3288 = vdwg.mxu0
        %v3297 = vunpack.c.l.b16 %v3071
        %v3298 = vunpack.c.l.b16 %v3072
        %v3299 = vunpack.c.l.b16 %v3073
        %v3300 = vunpack.c.l.b16 %v3074
        %v3301 = vunpack.c.l.b16 %v3075
        %v3302 = vunpack.c.l.b16 %v3076
        %v3303 = vunpack.c.l.b16 %v3077
        %v3304 = vunpack.c.l.b16 %v3078
        %v3305 = vpack.c.b16 %v3298, %v3297
        %v3306 = vpack.c.b16 %v3300, %v3299
        %v3307 = vpack.c.b16 %v3302, %v3301
        %v3308 = vpack.c.b16 %v3304, %v3303
        %v3317 = vunpack.c.l.b16 %v3103
        %v3318 = vunpack.c.l.b16 %v3104
        %v3319 = vunpack.c.l.b16 %v3105
        %v3320 = vunpack.c.l.b16 %v3106
        %v3321 = vunpack.c.l.b16 %v3107
        %v3322 = vunpack.c.l.b16 %v3108
        %v3323 = vunpack.c.l.b16 %v3109
        %v3324 = vunpack.c.l.b16 %v3110
        %v3325 = vpack.c.b16 %v3318, %v3317
        %v3326 = vpack.c.b16 %v3320, %v3319
        %v3327 = vpack.c.b16 %v3322, %v3321
        %v3328 = vpack.c.b16 %v3324, %v3323
        %v3334 = vsel %vm2766, %v3305, 0
        %v3337 = vsel %vm2766, %v3306, 0
        %v3340 = vsel %vm2766, %v3307, 0
        %v3343 = vsel %vm2766, %v3308, 0
        %3345 = vmatpush.bf16.msra.mxu0 0
        %3346 = vmatpush.bf16.msra.mxu0 0
        %3347 = vmatpush.bf16.msra.mxu0 0
        %3348 = vmatpush.bf16.msra.mxu0 0
        %3349 = vmatpush.bf16.msra.mxu0 %v3328
        %3350 = vmatpush.bf16.msra.mxu0 %v3327
        %3351 = vmatpush.bf16.msra.mxu0 %v3326
        %3352 = vmatpush.bf16.msra.mxu0 %v3325
        %3353 = vmatmul.bf16.gmra.mxu0 %v3334
        %v3354 = vpop.f32.mrf.mxu0
        %v3355 = vadd.f32 0.0, %v3354
        %v3356 = vpop.f32.mrf.mxu0
        %v3357 = vadd.f32 0.0, %v3356
        %3358 = vmatmul.bf16.gmra.mxu0 %v3337
        %v3359 = vpop.f32.mrf.mxu0
        %v3360 = vadd.f32 0.0, %v3359
        %v3361 = vpop.f32.mrf.mxu0
        %v3362 = vadd.f32 0.0, %v3361
        %3363 = vmatmul.bf16.gmra.mxu0 %v3340
        %v3364 = vpop.f32.mrf.mxu0
        %v3365 = vadd.f32 0.0, %v3364
        %v3366 = vpop.f32.mrf.mxu0
        %v3367 = vadd.f32 0.0, %v3366
        %3368 = vmatmul.bf16.gmra.mxu0 %v3343
        %v3369 = vpop.f32.mrf.mxu0
        %v3370 = vadd.f32 0.0, %v3369
        %v3371 = vpop.f32.mrf.mxu0
        %v3372 = vadd.f32 0.0, %v3371
        %3373 = vdwg.mxu0
        %v3382 = vunpack.c.l.b16 %v3079
        %v3383 = vunpack.c.l.b16 %v3080
        %v3384 = vunpack.c.l.b16 %v3081
        %v3385 = vunpack.c.l.b16 %v3082
        %v3386 = vunpack.c.l.b16 %v3083
        %v3387 = vunpack.c.l.b16 %v3084
        %v3388 = vunpack.c.l.b16 %v3085
        %v3389 = vunpack.c.l.b16 %v3086
        %v3390 = vpack.c.b16 %v3383, %v3382
        %v3391 = vpack.c.b16 %v3385, %v3384
        %v3392 = vpack.c.b16 %v3387, %v3386
        %v3393 = vpack.c.b16 %v3389, %v3388
        %v3402 = vunpack.c.l.b16 %v3111
        %v3403 = vunpack.c.l.b16 %v3112
        %v3404 = vunpack.c.l.b16 %v3113
        %v3405 = vunpack.c.l.b16 %v3114
        %v3406 = vunpack.c.l.b16 %v3115
        %v3407 = vunpack.c.l.b16 %v3116
        %v3408 = vunpack.c.l.b16 %v3117
        %v3409 = vunpack.c.l.b16 %v3118
        %v3410 = vpack.c.b16 %v3403, %v3402
        %v3411 = vpack.c.b16 %v3405, %v3404
        %v3412 = vpack.c.b16 %v3407, %v3406
        %v3413 = vpack.c.b16 %v3409, %v3408
        %v3419 = vsel %vm2766, %v3390, 0
        %v3422 = vsel %vm2766, %v3391, 0
        %v3425 = vsel %vm2766, %v3392, 0
        %v3428 = vsel %vm2766, %v3393, 0
        %3430 = vmatpush.bf16.msra.mxu0 0
        %3431 = vmatpush.bf16.msra.mxu0 0
        %3432 = vmatpush.bf16.msra.mxu0 0
        %3433 = vmatpush.bf16.msra.mxu0 0
        %3434 = vmatpush.bf16.msra.mxu0 %v3413
        %3435 = vmatpush.bf16.msra.mxu0 %v3412
        %3436 = vmatpush.bf16.msra.mxu0 %v3411
        %3437 = vmatpush.bf16.msra.mxu0 %v3410
        %3438 = vmatmul.bf16.gmra.mxu0 %v3419
        %v3439 = vpop.f32.mrf.mxu0
        %v3440 = vadd.f32 0.0, %v3439
        %v3441 = vpop.f32.mrf.mxu0
        %v3442 = vadd.f32 0.0, %v3441
        %3443 = vmatmul.bf16.gmra.mxu0 %v3422
        %v3444 = vpop.f32.mrf.mxu0
        %v3445 = vadd.f32 0.0, %v3444
        %v3446 = vpop.f32.mrf.mxu0
        %v3447 = vadd.f32 0.0, %v3446
        %3448 = vmatmul.bf16.gmra.mxu0 %v3425
        %v3449 = vpop.f32.mrf.mxu0
        %v3450 = vadd.f32 0.0, %v3449
        %v3451 = vpop.f32.mrf.mxu0
        %v3452 = vadd.f32 0.0, %v3451
        %3453 = vmatmul.bf16.gmra.mxu0 %v3428
        %v3454 = vpop.f32.mrf.mxu0
        %v3455 = vadd.f32 0.0, %v3454
        %v3456 = vpop.f32.mrf.mxu0
        %v3457 = vadd.f32 0.0, %v3456
        %3458 = vdwg.mxu0
        %v3459 = vrcp.pop %v2961
        %v3460 = vrcp.pop %v2964
        %v3461 = vrcp.pop %v2967
        %v3462 = vrcp.pop %v2970
        %v3463 = vrcp.pop %v2973
        %v3464 = vrcp.pop %v2976
        %v3465 = vrcp.pop %v2979
        %v3466 = vrcp.pop %v2982
        %v3467 = vrcp.pop %v2985
        %v3468 = vrcp.pop %v2988
        %v3469 = vrcp.pop %v2991
        %v3470 = vrcp.pop %v2994
        %v3471 = vrcp.pop %v2997
        %v3472 = vrcp.pop %v3000
        %v3473 = vrcp.pop %v3003
        %v3474 = vrcp.pop %v3006
        %v3475 = vrcp.pop %v3009
        %v3476 = vrcp.pop %v3012
        %v3477 = vrcp.pop %v3015
        %v3478 = vrcp.pop %v3018
        %v3479 = vrcp.pop %v3021
        %v3480 = vrcp.pop %v3024
        %v3481 = vrcp.pop %v3027
        %v3482 = vrcp.pop %v3030
        %v3483 = vrcp.pop %v3033
        %v3484 = vrcp.pop %v3036
        %v3485 = vrcp.pop %v3039
        %v3486 = vrcp.pop %v3042
        %v3487 = vrcp.pop %v3045
        %v3488 = vrcp.pop %v3048
        %v3489 = vrcp.pop %v3051
        %v3490 = vrcp.pop %v3054
        %v3491 = vmul.f32 %v3185, %v3459
        %v3492 = vmul.f32 %v3187, %v3460
        %v3493 = vmul.f32 %v3190, %v3461
        %v3494 = vmul.f32 %v3192, %v3462
        %v3495 = vmul.f32 %v3195, %v3463
        %v3496 = vmul.f32 %v3197, %v3464
        %v3497 = vmul.f32 %v3200, %v3465
        %v3498 = vmul.f32 %v3202, %v3466
        %v3499 = vmul.f32 %v3270, %v3467
        %v3500 = vmul.f32 %v3272, %v3468
        %v3501 = vmul.f32 %v3275, %v3469
        %v3502 = vmul.f32 %v3277, %v3470
        %v3503 = vmul.f32 %v3280, %v3471
        %v3504 = vmul.f32 %v3282, %v3472
        %v3505 = vmul.f32 %v3285, %v3473
        %v3506 = vmul.f32 %v3287, %v3474
        %v3507 = vmul.f32 %v3355, %v3475
        %v3508 = vmul.f32 %v3357, %v3476
        %v3509 = vmul.f32 %v3360, %v3477
        %v3510 = vmul.f32 %v3362, %v3478
        %v3511 = vmul.f32 %v3365, %v3479
        %v3512 = vmul.f32 %v3367, %v3480
        %v3513 = vmul.f32 %v3370, %v3481
        %v3514 = vmul.f32 %v3372, %v3482
        %v3515 = vmul.f32 %v3440, %v3483
        %v3516 = vmul.f32 %v3442, %v3484
        %v3517 = vmul.f32 %v3445, %v3485
        %v3518 = vmul.f32 %v3447, %v3486
        %v3519 = vmul.f32 %v3450, %v3487
        %v3520 = vmul.f32 %v3452, %v3488
        %v3521 = vmul.f32 %v3455, %v3489
        %v3522 = vmul.f32 %v3457, %v3490
        %v3523 = vpack.c.bf16 %v3491, %v3491
        %v3524 = vpack.c.bf16 %v3492, %v3492
        %v3525 = vpack.c.bf16 %v3493, %v3493
        %v3526 = vpack.c.bf16 %v3494, %v3494
        %v3527 = vpack.c.bf16 %v3495, %v3495
        %v3528 = vpack.c.bf16 %v3496, %v3496
        %v3529 = vpack.c.bf16 %v3497, %v3497
        %v3530 = vpack.c.bf16 %v3498, %v3498
        %v3531 = vpack.c.bf16 %v3499, %v3499
        %v3532 = vpack.c.bf16 %v3500, %v3500
        %v3533 = vpack.c.bf16 %v3501, %v3501
        %v3534 = vpack.c.bf16 %v3502, %v3502
        %v3535 = vpack.c.bf16 %v3503, %v3503
        %v3536 = vpack.c.bf16 %v3504, %v3504
        %v3537 = vpack.c.bf16 %v3505, %v3505
        %v3538 = vpack.c.bf16 %v3506, %v3506
        %v3539 = vpack.c.bf16 %v3507, %v3507
        %v3540 = vpack.c.bf16 %v3508, %v3508
        %v3541 = vpack.c.bf16 %v3509, %v3509
        %v3542 = vpack.c.bf16 %v3510, %v3510
        %v3543 = vpack.c.bf16 %v3511, %v3511
        %v3544 = vpack.c.bf16 %v3512, %v3512
        %v3545 = vpack.c.bf16 %v3513, %v3513
        %v3546 = vpack.c.bf16 %v3514, %v3514
        %v3547 = vpack.c.bf16 %v3515, %v3515
        %v3548 = vpack.c.bf16 %v3516, %v3516
        %v3549 = vpack.c.bf16 %v3517, %v3517
        %v3550 = vpack.c.bf16 %v3518, %v3518
        %v3551 = vpack.c.bf16 %v3519, %v3519
        %v3552 = vpack.c.bf16 %v3520, %v3520
        %v3553 = vpack.c.bf16 %v3521, %v3521
        %v3554 = vpack.c.bf16 %v3522, %v3522
        %v3563 = vunpack.c.l.b16 %v3523
        %v3564 = vunpack.c.l.b16 %v3524
        %v3565 = vunpack.c.l.b16 %v3525
        %v3566 = vunpack.c.l.b16 %v3526
        %v3567 = vunpack.c.l.b16 %v3527
        %v3568 = vunpack.c.l.b16 %v3528
        %v3569 = vunpack.c.l.b16 %v3529
        %v3570 = vunpack.c.l.b16 %v3530
        %v3571 = vpack.c.b16 %v3564, %v3563
        %v3572 = vpack.c.b16 %v3566, %v3565
        %v3573 = vpack.c.b16 %v3568, %v3567
        %v3574 = vpack.c.b16 %v3570, %v3569
        %v3579 = vunpack.c.l.b16 %v1356
        %v3580 = vunpack.c.l.b16 %v1357
        %v3581 = vunpack.c.l.b16 %v1358
        %v3582 = vunpack.c.l.b16 %v1359
        %v3583 = vpack.c.b16 %v3580, %v3579
        %v3584 = vpack.c.b16 %v3582, %v3581
        %v3588 = vsel %vm2433, %v3571, 0
        %v3591 = vsel %vm2433, %v3572, 0
        %v3594 = vsel %vm2433, %v3573, 0
        %v3597 = vsel %vm2433, %v3574, 0
        %3599 = vmatpush.bf16.msra.mxu0 0
        %3600 = vmatpush.bf16.msra.mxu0 0
        %3601 = vmatpush.bf16.msra.mxu0 0
        %3602 = vmatpush.bf16.msra.mxu0 0
        %3603 = vmatpush.bf16.msra.mxu0 0
        %3604 = vmatpush.bf16.msra.mxu0 0
        %3605 = vmatpush.bf16.msra.mxu0 %v3584
        %3606 = vmatpush.bf16.msra.mxu0 %v3583
        %3607 = vmatmul.bf16.gmra.mxu0 %v3588
        %v3608 = vpop.f32.mrf.mxu0
        %v3609 = vadd.f32 0.0, %v3608
        %v3610 = vpop.f32.mrf.mxu0
        %v3611 = vadd.f32 0.0, %v3610
        %3612 = vmatmul.bf16.gmra.mxu0 %v3591
        %v3613 = vpop.f32.mrf.mxu0
        %v3614 = vadd.f32 0.0, %v3613
        %v3615 = vpop.f32.mrf.mxu0
        %v3616 = vadd.f32 0.0, %v3615
        %3617 = vmatmul.bf16.gmra.mxu0 %v3594
        %v3618 = vpop.f32.mrf.mxu0
        %v3619 = vadd.f32 0.0, %v3618
        %v3620 = vpop.f32.mrf.mxu0
        %v3621 = vadd.f32 0.0, %v3620
        %3622 = vmatmul.bf16.gmra.mxu0 %v3597
        %v3623 = vpop.f32.mrf.mxu0
        %v3624 = vadd.f32 0.0, %v3623
        %v3625 = vpop.f32.mrf.mxu0
        %v3626 = vadd.f32 0.0, %v3625
        %3627 = vdwg.mxu0
        %v3636 = vunpack.c.l.b16 %v3531
        %v3637 = vunpack.c.l.b16 %v3532
        %v3638 = vunpack.c.l.b16 %v3533
        %v3639 = vunpack.c.l.b16 %v3534
        %v3640 = vunpack.c.l.b16 %v3535
        %v3641 = vunpack.c.l.b16 %v3536
        %v3642 = vunpack.c.l.b16 %v3537
        %v3643 = vunpack.c.l.b16 %v3538
        %v3644 = vpack.c.b16 %v3637, %v3636
        %v3645 = vpack.c.b16 %v3639, %v3638
        %v3646 = vpack.c.b16 %v3641, %v3640
        %v3647 = vpack.c.b16 %v3643, %v3642
        %v3652 = vunpack.c.l.b16 %v1360
        %v3653 = vunpack.c.l.b16 %v1361
        %v3654 = vunpack.c.l.b16 %v1362
        %v3655 = vunpack.c.l.b16 %v1363
        %v3656 = vpack.c.b16 %v3653, %v3652
        %v3657 = vpack.c.b16 %v3655, %v3654
        %v3661 = vsel %vm2433, %v3644, 0
        %v3664 = vsel %vm2433, %v3645, 0
        %v3667 = vsel %vm2433, %v3646, 0
        %v3670 = vsel %vm2433, %v3647, 0
        %3672 = vmatpush.bf16.msra.mxu0 0
        %3673 = vmatpush.bf16.msra.mxu0 0
        %3674 = vmatpush.bf16.msra.mxu0 0
        %3675 = vmatpush.bf16.msra.mxu0 0
        %3676 = vmatpush.bf16.msra.mxu0 0
        %3677 = vmatpush.bf16.msra.mxu0 0
        %3678 = vmatpush.bf16.msra.mxu0 %v3657
        %3679 = vmatpush.bf16.msra.mxu0 %v3656
        %3680 = vmatmul.bf16.gmra.mxu0 %v3661
        %v3681 = vpop.f32.mrf.mxu0
        %v3682 = vadd.f32 0.0, %v3681
        %v3683 = vpop.f32.mrf.mxu0
        %v3684 = vadd.f32 0.0, %v3683
        %3685 = vmatmul.bf16.gmra.mxu0 %v3664
        %v3686 = vpop.f32.mrf.mxu0
        %v3687 = vadd.f32 0.0, %v3686
        %v3688 = vpop.f32.mrf.mxu0
        %v3689 = vadd.f32 0.0, %v3688
        %3690 = vmatmul.bf16.gmra.mxu0 %v3667
        %v3691 = vpop.f32.mrf.mxu0
        %v3692 = vadd.f32 0.0, %v3691
        %v3693 = vpop.f32.mrf.mxu0
        %v3694 = vadd.f32 0.0, %v3693
        %3695 = vmatmul.bf16.gmra.mxu0 %v3670
        %v3696 = vpop.f32.mrf.mxu0
        %v3697 = vadd.f32 0.0, %v3696
        %v3698 = vpop.f32.mrf.mxu0
        %v3699 = vadd.f32 0.0, %v3698
        %3700 = vdwg.mxu0
        %v3709 = vunpack.c.l.b16 %v3539
        %v3710 = vunpack.c.l.b16 %v3540
        %v3711 = vunpack.c.l.b16 %v3541
        %v3712 = vunpack.c.l.b16 %v3542
        %v3713 = vunpack.c.l.b16 %v3543
        %v3714 = vunpack.c.l.b16 %v3544
        %v3715 = vunpack.c.l.b16 %v3545
        %v3716 = vunpack.c.l.b16 %v3546
        %v3717 = vpack.c.b16 %v3710, %v3709
        %v3718 = vpack.c.b16 %v3712, %v3711
        %v3719 = vpack.c.b16 %v3714, %v3713
        %v3720 = vpack.c.b16 %v3716, %v3715
        %v3725 = vunpack.c.l.b16 %v1364
        %v3726 = vunpack.c.l.b16 %v1365
        %v3727 = vunpack.c.l.b16 %v1366
        %v3728 = vunpack.c.l.b16 %v1367
        %v3729 = vpack.c.b16 %v3726, %v3725
        %v3730 = vpack.c.b16 %v3728, %v3727
        %v3734 = vsel %vm2433, %v3717, 0
        %v3737 = vsel %vm2433, %v3718, 0
        %v3740 = vsel %vm2433, %v3719, 0
        %v3743 = vsel %vm2433, %v3720, 0
        %3745 = vmatpush.bf16.msra.mxu0 0
        %3746 = vmatpush.bf16.msra.mxu0 0
        %3747 = vmatpush.bf16.msra.mxu0 0
        %3748 = vmatpush.bf16.msra.mxu0 0
        %3749 = vmatpush.bf16.msra.mxu0 0
        %3750 = vmatpush.bf16.msra.mxu0 0
        %3751 = vmatpush.bf16.msra.mxu0 %v3730
        %3752 = vmatpush.bf16.msra.mxu0 %v3729
        %3753 = vmatmul.bf16.gmra.mxu0 %v3734
        %v3754 = vpop.f32.mrf.mxu0
        %v3755 = vadd.f32 0.0, %v3754
        %v3756 = vpop.f32.mrf.mxu0
        %v3757 = vadd.f32 0.0, %v3756
        %3758 = vmatmul.bf16.gmra.mxu0 %v3737
        %v3759 = vpop.f32.mrf.mxu0
        %v3760 = vadd.f32 0.0, %v3759
        %v3761 = vpop.f32.mrf.mxu0
        %v3762 = vadd.f32 0.0, %v3761
        %3763 = vmatmul.bf16.gmra.mxu0 %v3740
        %v3764 = vpop.f32.mrf.mxu0
        %v3765 = vadd.f32 0.0, %v3764
        %v3766 = vpop.f32.mrf.mxu0
        %v3767 = vadd.f32 0.0, %v3766
        %3768 = vmatmul.bf16.gmra.mxu0 %v3743
        %v3769 = vpop.f32.mrf.mxu0
        %v3770 = vadd.f32 0.0, %v3769
        %v3771 = vpop.f32.mrf.mxu0
        %v3772 = vadd.f32 0.0, %v3771
        %3773 = vdwg.mxu0
        %v3782 = vunpack.c.l.b16 %v3547
        %v3783 = vunpack.c.l.b16 %v3548
        %v3784 = vunpack.c.l.b16 %v3549
        %v3785 = vunpack.c.l.b16 %v3550
        %v3786 = vunpack.c.l.b16 %v3551
        %v3787 = vunpack.c.l.b16 %v3552
        %v3788 = vunpack.c.l.b16 %v3553
        %v3789 = vunpack.c.l.b16 %v3554
        %v3790 = vpack.c.b16 %v3783, %v3782
        %v3791 = vpack.c.b16 %v3785, %v3784
        %v3792 = vpack.c.b16 %v3787, %v3786
        %v3793 = vpack.c.b16 %v3789, %v3788
        %v3798 = vunpack.c.l.b16 %v1368
        %v3799 = vunpack.c.l.b16 %v1369
        %v3800 = vunpack.c.l.b16 %v1370
        %v3801 = vunpack.c.l.b16 %v1371
        %v3802 = vpack.c.b16 %v3799, %v3798
        %v3803 = vpack.c.b16 %v3801, %v3800
        %v3807 = vsel %vm2433, %v3790, 0
        %v3810 = vsel %vm2433, %v3791, 0
        %v3813 = vsel %vm2433, %v3792, 0
        %v3816 = vsel %vm2433, %v3793, 0
        %3818 = vmatpush.bf16.msra.mxu0 0
        %3819 = vmatpush.bf16.msra.mxu0 0
        %3820 = vmatpush.bf16.msra.mxu0 0
        %3821 = vmatpush.bf16.msra.mxu0 0
        %3822 = vmatpush.bf16.msra.mxu0 0
        %3823 = vmatpush.bf16.msra.mxu0 0
        %3824 = vmatpush.bf16.msra.mxu0 %v3803
        %3825 = vmatpush.bf16.msra.mxu0 %v3802
        %3826 = vmatmul.bf16.gmra.mxu0 %v3807
        %v3827 = vpop.f32.mrf.mxu0
        %v3828 = vadd.f32 0.0, %v3827
        %v3829 = vpop.f32.mrf.mxu0
        %v3830 = vadd.f32 0.0, %v3829
        %3831 = vmatmul.bf16.gmra.mxu0 %v3810
        %v3832 = vpop.f32.mrf.mxu0
        %v3833 = vadd.f32 0.0, %v3832
        %v3834 = vpop.f32.mrf.mxu0
        %v3835 = vadd.f32 0.0, %v3834
        %3836 = vmatmul.bf16.gmra.mxu0 %v3813
        %v3837 = vpop.f32.mrf.mxu0
        %v3838 = vadd.f32 0.0, %v3837
        %v3839 = vpop.f32.mrf.mxu0
        %v3840 = vadd.f32 0.0, %v3839
        %3841 = vmatmul.bf16.gmra.mxu0 %v3816
        %v3842 = vpop.f32.mrf.mxu0
        %v3843 = vadd.f32 0.0, %v3842
        %v3844 = vpop.f32.mrf.mxu0
        %v3845 = vadd.f32 0.0, %v3844
        %3846 = vdwg.mxu0
        %v3847 = vadd.f32 %v3609, %v3682
        %v3848 = vadd.f32 %v3847, %v3755
        %v3849 = vadd.f32 %v3848, %v3828
        %v3850 = vadd.f32 %v3611, %v3684
        %v3851 = vadd.f32 %v3850, %v3757
        %v3852 = vadd.f32 %v3851, %v3830
        %v3853 = vadd.f32 %v3614, %v3687
        %v3854 = vadd.f32 %v3853, %v3760
        %v3855 = vadd.f32 %v3854, %v3833
        %v3856 = vadd.f32 %v3616, %v3689
        %v3857 = vadd.f32 %v3856, %v3762
        %v3858 = vadd.f32 %v3857, %v3835
        %v3859 = vadd.f32 %v3619, %v3692
        %v3860 = vadd.f32 %v3859, %v3765
        %v3861 = vadd.f32 %v3860, %v3838
        %v3862 = vadd.f32 %v3621, %v3694
        %v3863 = vadd.f32 %v3862, %v3767
        %v3864 = vadd.f32 %v3863, %v3840
        %v3865 = vadd.f32 %v3624, %v3697
        %v3866 = vadd.f32 %v3865, %v3770
        %v3867 = vadd.f32 %v3866, %v3843
        %v3868 = vadd.f32 %v3626, %v3699
        %v3869 = vadd.f32 %v3868, %v3772
        %v3870 = vadd.f32 %v3869, %v3845
        %v3872 = vperm.slane %v1372, 0
        %v3874 = vadd.f32 %v3849, %v3872
        %v3875 = vadd.f32 %v3852, %v3872
        %v3876 = vadd.f32 %v3855, %v3872
        %v3877 = vadd.f32 %v3858, %v3872
        %v3878 = vadd.f32 %v3861, %v3872
        %v3879 = vadd.f32 %v3864, %v3872
        %v3880 = vadd.f32 %v3867, %v3872
        %v3881 = vadd.f32 %v3870, %v3872
        %v3882 = vadd.f32 %v954, %v3874
        %v3883 = vadd.f32 %v956, %v3875
        %v3884 = vadd.f32 %v959, %v3876
        %v3885 = vadd.f32 %v961, %v3877
        %v3886 = vadd.f32 %v964, %v3878
        %v3887 = vadd.f32 %v966, %v3879
        %v3888 = vadd.f32 %v969, %v3880
        %v3889 = vadd.f32 %v971, %v3881
        %v3890 = vld [vmem:[%s11] sm:$0x1]
        %v3891 = vld [vmem:[%s12] sm:$0x1]
        %3892 = vadd.xlane.f32.xlu0 %v3882
        %v3893 = vpop.xlane.xlu0 %3892
        %3894 = vadd.xlane.f32.xlu0 %v3883
        %v3895 = vpop.xlane.xlu0 %3894
        %3896 = vadd.xlane.f32.xlu0 %v3884
        %v3897 = vpop.xlane.xlu0 %3896
        %3898 = vadd.xlane.f32.xlu0 %v3885
        %v3899 = vpop.xlane.xlu0 %3898
        %3900 = vadd.xlane.f32.xlu0 %v3886
        %v3901 = vpop.xlane.xlu0 %3900
        %3902 = vadd.xlane.f32.xlu0 %v3887
        %v3903 = vpop.xlane.xlu0 %3902
        %3904 = vadd.xlane.f32.xlu0 %v3888
        %v3905 = vpop.xlane.xlu0 %3904
        %3906 = vadd.xlane.f32.xlu0 %v3889
        %v3907 = vpop.xlane.xlu0 %3906
        %v3908 = vmul.f32 %v3893, %v997
        %v3909 = vmul.f32 %v3895, %v997
        %v3910 = vmul.f32 %v3897, %v997
        %v3911 = vmul.f32 %v3899, %v997
        %v3912 = vmul.f32 %v3901, %v997
        %v3913 = vmul.f32 %v3903, %v997
        %v3914 = vmul.f32 %v3905, %v997
        %v3915 = vmul.f32 %v3907, %v997
        %v3916 = vsub.f32 %v3882, %v3908
        %v3917 = vsub.f32 %v3883, %v3909
        %v3918 = vsub.f32 %v3884, %v3910
        %v3919 = vsub.f32 %v3885, %v3911
        %v3920 = vsub.f32 %v3886, %v3912
        %v3921 = vsub.f32 %v3887, %v3913
        %v3922 = vsub.f32 %v3888, %v3914
        %v3923 = vsub.f32 %v3889, %v3915
        %v3924 = vmul.f32 %v3916, %v3916
        %v3925 = vmul.f32 %v3917, %v3917
        %v3926 = vmul.f32 %v3918, %v3918
        %v3927 = vmul.f32 %v3919, %v3919
        %v3928 = vmul.f32 %v3920, %v3920
        %v3929 = vmul.f32 %v3921, %v3921
        %v3930 = vmul.f32 %v3922, %v3922
        %v3931 = vmul.f32 %v3923, %v3923
        %3932 = vadd.xlane.f32.xlu0 %v3924
        %v3933 = vpop.xlane.xlu0 %3932
        %3934 = vadd.xlane.f32.xlu0 %v3925
        %v3935 = vpop.xlane.xlu0 %3934
        %3936 = vadd.xlane.f32.xlu0 %v3926
        %v3937 = vpop.xlane.xlu0 %3936
        %3938 = vadd.xlane.f32.xlu0 %v3927
        %v3939 = vpop.xlane.xlu0 %3938
        %3940 = vadd.xlane.f32.xlu0 %v3928
        %v3941 = vpop.xlane.xlu0 %3940
        %3942 = vadd.xlane.f32.xlu0 %v3929
        %v3943 = vpop.xlane.xlu0 %3942
        %3944 = vadd.xlane.f32.xlu0 %v3930
        %v3945 = vpop.xlane.xlu0 %3944
        %3946 = vadd.xlane.f32.xlu0 %v3931
        %v3947 = vpop.xlane.xlu0 %3946
        %v3948 = vmul.f32 %v3933, %v997
        %v3949 = vmul.f32 %v3935, %v997
        %v3950 = vmul.f32 %v3937, %v997
        %v3951 = vmul.f32 %v3939, %v997
        %v3952 = vmul.f32 %v3941, %v997
        %v3953 = vmul.f32 %v3943, %v997
        %v3954 = vmul.f32 %v3945, %v997
        %v3955 = vmul.f32 %v3947, %v997
        %v3956 = vadd.f32 %v3948, 1e-05
        %v3957 = vadd.f32 %v3949, 1e-05
        %v3958 = vadd.f32 %v3950, 1e-05
        %v3959 = vadd.f32 %v3951, 1e-05
        %v3960 = vadd.f32 %v3952, 1e-05
        %v3961 = vadd.f32 %v3953, 1e-05
        %v3962 = vadd.f32 %v3954, 1e-05
        %v3963 = vadd.f32 %v3955, 1e-05
        %v3964 = vrsqrt.pop %v3956
        %v3965 = vmul.f32 %v3964, %v3956
        %v3966 = vmul.f32 %v3965, %v3964
        %v3967 = vmul.f32 0.5, %v3966
        %v3968 = vsub.f32 1.5, %v3967
        %v3969 = vmul.f32 %v3964, %v3968
        %vm3970 = vweird.f32 %v3956
        %vm3971 = vweird.f32 %v3964
        %vm3972 = vmor %vm3970, %vm3971
        %v3973 = vsel %vm3972, %v3964, %v3969
        %v3974 = vrsqrt.pop %v3957
        %v3975 = vmul.f32 %v3974, %v3957
        %v3976 = vmul.f32 %v3975, %v3974
        %v3977 = vmul.f32 0.5, %v3976
        %v3978 = vsub.f32 1.5, %v3977
        %v3979 = vmul.f32 %v3974, %v3978
        %vm3980 = vweird.f32 %v3957
        %vm3981 = vweird.f32 %v3974
        %vm3982 = vmor %vm3980, %vm3981
        %v3983 = vsel %vm3982, %v3974, %v3979
        %v3984 = vrsqrt.pop %v3958
        %v3985 = vmul.f32 %v3984, %v3958
        %v3986 = vmul.f32 %v3985, %v3984
        %v3987 = vmul.f32 0.5, %v3986
        %v3988 = vsub.f32 1.5, %v3987
        %v3989 = vmul.f32 %v3984, %v3988
        %vm3990 = vweird.f32 %v3958
        %vm3991 = vweird.f32 %v3984
        %vm3992 = vmor %vm3990, %vm3991
        %v3993 = vsel %vm3992, %v3984, %v3989
        %v3994 = vrsqrt.pop %v3959
        %v3995 = vmul.f32 %v3994, %v3959
        %v3996 = vmul.f32 %v3995, %v3994
        %v3997 = vmul.f32 0.5, %v3996
        %v3998 = vsub.f32 1.5, %v3997
        %v3999 = vmul.f32 %v3994, %v3998
        %vm4000 = vweird.f32 %v3959
        %vm4001 = vweird.f32 %v3994
        %vm4002 = vmor %vm4000, %vm4001
        %v4003 = vsel %vm4002, %v3994, %v3999
        %v4004 = vrsqrt.pop %v3960
        %v4005 = vmul.f32 %v4004, %v3960
        %v4006 = vmul.f32 %v4005, %v4004
        %v4007 = vmul.f32 0.5, %v4006
        %v4008 = vsub.f32 1.5, %v4007
        %v4009 = vmul.f32 %v4004, %v4008
        %vm4010 = vweird.f32 %v3960
        %vm4011 = vweird.f32 %v4004
        %vm4012 = vmor %vm4010, %vm4011
        %v4013 = vsel %vm4012, %v4004, %v4009
        %v4014 = vrsqrt.pop %v3961
        %v4015 = vmul.f32 %v4014, %v3961
        %v4016 = vmul.f32 %v4015, %v4014
        %v4017 = vmul.f32 0.5, %v4016
        %v4018 = vsub.f32 1.5, %v4017
        %v4019 = vmul.f32 %v4014, %v4018
        %vm4020 = vweird.f32 %v3961
        %vm4021 = vweird.f32 %v4014
        %vm4022 = vmor %vm4020, %vm4021
        %v4023 = vsel %vm4022, %v4014, %v4019
        %v4024 = vrsqrt.pop %v3962
        %v4025 = vmul.f32 %v4024, %v3962
        %v4026 = vmul.f32 %v4025, %v4024
        %v4027 = vmul.f32 0.5, %v4026
        %v4028 = vsub.f32 1.5, %v4027
        %v4029 = vmul.f32 %v4024, %v4028
        %vm4030 = vweird.f32 %v3962
        %vm4031 = vweird.f32 %v4024
        %vm4032 = vmor %vm4030, %vm4031
        %v4033 = vsel %vm4032, %v4024, %v4029
        %v4034 = vrsqrt.pop %v3963
        %v4035 = vmul.f32 %v4034, %v3963
        %v4036 = vmul.f32 %v4035, %v4034
        %v4037 = vmul.f32 0.5, %v4036
        %v4038 = vsub.f32 1.5, %v4037
        %v4039 = vmul.f32 %v4034, %v4038
        %vm4040 = vweird.f32 %v3963
        %vm4041 = vweird.f32 %v4034
        %vm4042 = vmor %vm4040, %vm4041
        %v4043 = vsel %vm4042, %v4034, %v4039
        %v4044 = vmul.f32 %v3916, %v3973
        %v4045 = vmul.f32 %v3917, %v3983
        %v4046 = vmul.f32 %v3918, %v3993
        %v4047 = vmul.f32 %v3919, %v4003
        %v4048 = vmul.f32 %v3920, %v4013
        %v4049 = vmul.f32 %v3921, %v4023
        %v4050 = vmul.f32 %v3922, %v4033
        %v4051 = vmul.f32 %v3923, %v4043
        %v4053 = vperm.slane %v3890, 0
        %v4055 = vmul.f32 %v4044, %v4053
        %v4056 = vmul.f32 %v4045, %v4053
        %v4057 = vmul.f32 %v4046, %v4053
        %v4058 = vmul.f32 %v4047, %v4053
        %v4059 = vmul.f32 %v4048, %v4053
        %v4060 = vmul.f32 %v4049, %v4053
        %v4061 = vmul.f32 %v4050, %v4053
        %v4062 = vmul.f32 %v4051, %v4053
        %v4064 = vperm.slane %v3891, 0
        %v4066 = vadd.f32 %v4055, %v4064
        %v4067 = vadd.f32 %v4056, %v4064
        %v4068 = vadd.f32 %v4057, %v4064
        %v4069 = vadd.f32 %v4058, %v4064
        %v4070 = vadd.f32 %v4059, %v4064
        %v4071 = vadd.f32 %v4060, %v4064
        %v4072 = vadd.f32 %v4061, %v4064
        %v4073 = vadd.f32 %v4062, %v4064
        %v4074 = vld [vmem:[%s13] sm:$0xf]
        %v4075 = vld [vmem:[%s13 + $0x4] sm:$0xf]
        %v4076 = vld [vmem:[%s13 + $0x8] sm:$0xf]
        %v4077 = vld [vmem:[%s13 + $0xc] sm:$0xf]
        %v4078 = vld [vmem:[%s13 + $0x10] sm:$0xf]
        %v4079 = vld [vmem:[%s13 + $0x14] sm:$0xf]
        %v4080 = vld [vmem:[%s13 + $0x18] sm:$0xf]
        %v4081 = vld [vmem:[%s13 + $0x1c] sm:$0xf]
        %v4082 = vld [vmem:[%s13 + $0x20] sm:$0xf]
        %v4083 = vld [vmem:[%s13 + $0x24] sm:$0xf]
        %v4084 = vld [vmem:[%s13 + $0x28] sm:$0xf]
        %v4085 = vld [vmem:[%s13 + $0x2c] sm:$0xf]
        %v4086 = vld [vmem:[%s13 + $0x30] sm:$0xf]
        %v4087 = vld [vmem:[%s13 + $0x34] sm:$0xf]
        %v4088 = vld [vmem:[%s13 + $0x38] sm:$0xf]
        %v4089 = vld [vmem:[%s13 + $0x3c] sm:$0xf]
        %v4090 = vld [vmem:[%s13 + $0x40] sm:$0xf]
        %v4091 = vld [vmem:[%s13 + $0x44] sm:$0xf]
        %v4092 = vld [vmem:[%s13 + $0x48] sm:$0xf]
        %v4093 = vld [vmem:[%s13 + $0x4c] sm:$0xf]
        %v4094 = vld [vmem:[%s13 + $0x50] sm:$0xf]
        %v4095 = vld [vmem:[%s13 + $0x54] sm:$0xf]
        %v4096 = vld [vmem:[%s13 + $0x58] sm:$0xf]
        %v4097 = vld [vmem:[%s13 + $0x5c] sm:$0xf]
        %v4098 = vld [vmem:[%s13 + $0x60] sm:$0xf]
        %v4099 = vld [vmem:[%s13 + $0x64] sm:$0xf]
        %v4100 = vld [vmem:[%s13 + $0x68] sm:$0xf]
        %v4101 = vld [vmem:[%s13 + $0x6c] sm:$0xf]
        %v4102 = vld [vmem:[%s13 + $0x70] sm:$0xf]
        %v4103 = vld [vmem:[%s13 + $0x74] sm:$0xf]
        %v4104 = vld [vmem:[%s13 + $0x78] sm:$0xf]
        %v4105 = vld [vmem:[%s13 + $0x7c] sm:$0xf]
        %v4106 = vld [vmem:[%s13 + $0x80] sm:$0xf]
        %v4107 = vld [vmem:[%s13 + $0x84] sm:$0xf]
        %v4108 = vld [vmem:[%s13 + $0x88] sm:$0xf]
        %v4109 = vld [vmem:[%s13 + $0x8c] sm:$0xf]
        %v4110 = vld [vmem:[%s13 + $0x90] sm:$0xf]
        %v4111 = vld [vmem:[%s13 + $0x94] sm:$0xf]
        %v4112 = vld [vmem:[%s13 + $0x98] sm:$0xf]
        %v4113 = vld [vmem:[%s13 + $0x9c] sm:$0xf]
        %v4114 = vld [vmem:[%s13 + $0xa0] sm:$0xf]
        %v4115 = vld [vmem:[%s13 + $0xa4] sm:$0xf]
        %v4116 = vld [vmem:[%s13 + $0xa8] sm:$0xf]
        %v4117 = vld [vmem:[%s13 + $0xac] sm:$0xf]
        %v4118 = vld [vmem:[%s13 + $0xb0] sm:$0xf]
        %v4119 = vld [vmem:[%s13 + $0xb4] sm:$0xf]
        %v4120 = vld [vmem:[%s13 + $0xb8] sm:$0xf]
        %v4121 = vld [vmem:[%s13 + $0xbc] sm:$0xf]
        %v4122 = vld [vmem:[%s13 + $0xc0] sm:$0xf]
        %v4123 = vld [vmem:[%s13 + $0xc4] sm:$0xf]
        %v4124 = vld [vmem:[%s13 + $0xc8] sm:$0xf]
        %v4125 = vld [vmem:[%s13 + $0xcc] sm:$0xf]
        %v4126 = vld [vmem:[%s13 + $0xd0] sm:$0xf]
        %v4127 = vld [vmem:[%s13 + $0xd4] sm:$0xf]
        %v4128 = vld [vmem:[%s13 + $0xd8] sm:$0xf]
        %v4129 = vld [vmem:[%s13 + $0xdc] sm:$0xf]
        %v4130 = vld [vmem:[%s13 + $0xe0] sm:$0xf]
        %v4131 = vld [vmem:[%s13 + $0xe4] sm:$0xf]
        %v4132 = vld [vmem:[%s13 + $0xe8] sm:$0xf]
        %v4133 = vld [vmem:[%s13 + $0xec] sm:$0xf]
        %v4134 = vld [vmem:[%s13 + $0xf0] sm:$0xf]
        %v4135 = vld [vmem:[%s13 + $0xf4] sm:$0xf]
        %v4136 = vld [vmem:[%s13 + $0xf8] sm:$0xf]
        %v4137 = vld [vmem:[%s13 + $0xfc] sm:$0xf]
        %v4138 = vld [vmem:[%s14] sm:$0xf]
        %v4139 = vld [vmem:[%s14 + $0x4] sm:$0xf]
        %v4140 = vld [vmem:[%s14 + $0x8] sm:$0xf]
        %v4141 = vld [vmem:[%s14 + $0xc] sm:$0xf]
        %v4142 = vld [vmem:[%s14 + $0x10] sm:$0xf]
        %v4143 = vld [vmem:[%s14 + $0x14] sm:$0xf]
        %v4144 = vld [vmem:[%s14 + $0x18] sm:$0xf]
        %v4145 = vld [vmem:[%s14 + $0x1c] sm:$0xf]
        %v4146 = vld [vmem:[%s14 + $0x20] sm:$0xf]
        %v4147 = vld [vmem:[%s14 + $0x24] sm:$0xf]
        %v4148 = vld [vmem:[%s14 + $0x28] sm:$0xf]
        %v4149 = vld [vmem:[%s14 + $0x2c] sm:$0xf]
        %v4150 = vld [vmem:[%s14 + $0x30] sm:$0xf]
        %v4151 = vld [vmem:[%s14 + $0x34] sm:$0xf]
        %v4152 = vld [vmem:[%s14 + $0x38] sm:$0xf]
        %v4153 = vld [vmem:[%s14 + $0x3c] sm:$0xf]
        %v4154 = vld [vmem:[%s14 + $0x40] sm:$0xf]
        %v4155 = vld [vmem:[%s14 + $0x44] sm:$0xf]
        %v4156 = vld [vmem:[%s14 + $0x48] sm:$0xf]
        %v4157 = vld [vmem:[%s14 + $0x4c] sm:$0xf]
        %v4158 = vld [vmem:[%s14 + $0x50] sm:$0xf]
        %v4159 = vld [vmem:[%s14 + $0x54] sm:$0xf]
        %v4160 = vld [vmem:[%s14 + $0x58] sm:$0xf]
        %v4161 = vld [vmem:[%s14 + $0x5c] sm:$0xf]
        %v4162 = vld [vmem:[%s14 + $0x60] sm:$0xf]
        %v4163 = vld [vmem:[%s14 + $0x64] sm:$0xf]
        %v4164 = vld [vmem:[%s14 + $0x68] sm:$0xf]
        %v4165 = vld [vmem:[%s14 + $0x6c] sm:$0xf]
        %v4166 = vld [vmem:[%s14 + $0x70] sm:$0xf]
        %v4167 = vld [vmem:[%s14 + $0x74] sm:$0xf]
        %v4168 = vld [vmem:[%s14 + $0x78] sm:$0xf]
        %v4169 = vld [vmem:[%s14 + $0x7c] sm:$0xf]
        %v4170 = vld [vmem:[%s14 + $0x80] sm:$0xf]
        %v4171 = vld [vmem:[%s14 + $0x84] sm:$0xf]
        %v4172 = vld [vmem:[%s14 + $0x88] sm:$0xf]
        %v4173 = vld [vmem:[%s14 + $0x8c] sm:$0xf]
        %v4174 = vld [vmem:[%s14 + $0x90] sm:$0xf]
        %v4175 = vld [vmem:[%s14 + $0x94] sm:$0xf]
        %v4176 = vld [vmem:[%s14 + $0x98] sm:$0xf]
        %v4177 = vld [vmem:[%s14 + $0x9c] sm:$0xf]
        %v4178 = vld [vmem:[%s14 + $0xa0] sm:$0xf]
        %v4179 = vld [vmem:[%s14 + $0xa4] sm:$0xf]
        %v4180 = vld [vmem:[%s14 + $0xa8] sm:$0xf]
        %v4181 = vld [vmem:[%s14 + $0xac] sm:$0xf]
        %v4182 = vld [vmem:[%s14 + $0xb0] sm:$0xf]
        %v4183 = vld [vmem:[%s14 + $0xb4] sm:$0xf]
        %v4184 = vld [vmem:[%s14 + $0xb8] sm:$0xf]
        %v4185 = vld [vmem:[%s14 + $0xbc] sm:$0xf]
        %v4186 = vld [vmem:[%s14 + $0xc0] sm:$0xf]
        %v4187 = vld [vmem:[%s14 + $0xc4] sm:$0xf]
        %v4188 = vld [vmem:[%s14 + $0xc8] sm:$0xf]
        %v4189 = vld [vmem:[%s14 + $0xcc] sm:$0xf]
        %v4190 = vld [vmem:[%s14 + $0xd0] sm:$0xf]
        %v4191 = vld [vmem:[%s14 + $0xd4] sm:$0xf]
        %v4192 = vld [vmem:[%s14 + $0xd8] sm:$0xf]
        %v4193 = vld [vmem:[%s14 + $0xdc] sm:$0xf]
        %v4194 = vld [vmem:[%s14 + $0xe0] sm:$0xf]
        %v4195 = vld [vmem:[%s14 + $0xe4] sm:$0xf]
        %v4196 = vld [vmem:[%s14 + $0xe8] sm:$0xf]
        %v4197 = vld [vmem:[%s14 + $0xec] sm:$0xf]
        %v4198 = vld [vmem:[%s14 + $0xf0] sm:$0xf]
        %v4199 = vld [vmem:[%s14 + $0xf4] sm:$0xf]
        %v4200 = vld [vmem:[%s14 + $0xf8] sm:$0xf]
        %v4201 = vld [vmem:[%s14 + $0xfc] sm:$0xf]
        %v4202 = vld [vmem:[%s15] sm:$0xf]
        %v4203 = vld [vmem:[%s15 + $0x4] sm:$0xf]
        %v4204 = vld [vmem:[%s15 + $0x8] sm:$0xf]
        %v4205 = vld [vmem:[%s15 + $0xc] sm:$0xf]
        %v4206 = vld [vmem:[%s15 + $0x10] sm:$0xf]
        %v4207 = vld [vmem:[%s15 + $0x14] sm:$0xf]
        %v4208 = vld [vmem:[%s15 + $0x18] sm:$0xf]
        %v4209 = vld [vmem:[%s15 + $0x1c] sm:$0xf]
        %v4210 = vld [vmem:[%s15 + $0x20] sm:$0xf]
        %v4211 = vld [vmem:[%s15 + $0x24] sm:$0xf]
        %v4212 = vld [vmem:[%s15 + $0x28] sm:$0xf]
        %v4213 = vld [vmem:[%s15 + $0x2c] sm:$0xf]
        %v4214 = vld [vmem:[%s15 + $0x30] sm:$0xf]
        %v4215 = vld [vmem:[%s15 + $0x34] sm:$0xf]
        %v4216 = vld [vmem:[%s15 + $0x38] sm:$0xf]
        %v4217 = vld [vmem:[%s15 + $0x3c] sm:$0xf]
        %v4218 = vld [vmem:[%s15 + $0x40] sm:$0xf]
        %v4219 = vld [vmem:[%s15 + $0x44] sm:$0xf]
        %v4220 = vld [vmem:[%s15 + $0x48] sm:$0xf]
        %v4221 = vld [vmem:[%s15 + $0x4c] sm:$0xf]
        %v4222 = vld [vmem:[%s15 + $0x50] sm:$0xf]
        %v4223 = vld [vmem:[%s15 + $0x54] sm:$0xf]
        %v4224 = vld [vmem:[%s15 + $0x58] sm:$0xf]
        %v4225 = vld [vmem:[%s15 + $0x5c] sm:$0xf]
        %v4226 = vld [vmem:[%s15 + $0x60] sm:$0xf]
        %v4227 = vld [vmem:[%s15 + $0x64] sm:$0xf]
        %v4228 = vld [vmem:[%s15 + $0x68] sm:$0xf]
        %v4229 = vld [vmem:[%s15 + $0x6c] sm:$0xf]
        %v4230 = vld [vmem:[%s15 + $0x70] sm:$0xf]
        %v4231 = vld [vmem:[%s15 + $0x74] sm:$0xf]
        %v4232 = vld [vmem:[%s15 + $0x78] sm:$0xf]
        %v4233 = vld [vmem:[%s15 + $0x7c] sm:$0xf]
        %v4234 = vld [vmem:[%s15 + $0x80] sm:$0xf]
        %v4235 = vld [vmem:[%s15 + $0x84] sm:$0xf]
        %v4236 = vld [vmem:[%s15 + $0x88] sm:$0xf]
        %v4237 = vld [vmem:[%s15 + $0x8c] sm:$0xf]
        %v4238 = vld [vmem:[%s15 + $0x90] sm:$0xf]
        %v4239 = vld [vmem:[%s15 + $0x94] sm:$0xf]
        %v4240 = vld [vmem:[%s15 + $0x98] sm:$0xf]
        %v4241 = vld [vmem:[%s15 + $0x9c] sm:$0xf]
        %v4242 = vld [vmem:[%s15 + $0xa0] sm:$0xf]
        %v4243 = vld [vmem:[%s15 + $0xa4] sm:$0xf]
        %v4244 = vld [vmem:[%s15 + $0xa8] sm:$0xf]
        %v4245 = vld [vmem:[%s15 + $0xac] sm:$0xf]
        %v4246 = vld [vmem:[%s15 + $0xb0] sm:$0xf]
        %v4247 = vld [vmem:[%s15 + $0xb4] sm:$0xf]
        %v4248 = vld [vmem:[%s15 + $0xb8] sm:$0xf]
        %v4249 = vld [vmem:[%s15 + $0xbc] sm:$0xf]
        %v4250 = vld [vmem:[%s15 + $0xc0] sm:$0xf]
        %v4251 = vld [vmem:[%s15 + $0xc4] sm:$0xf]
        %v4252 = vld [vmem:[%s15 + $0xc8] sm:$0xf]
        %v4253 = vld [vmem:[%s15 + $0xcc] sm:$0xf]
        %v4254 = vld [vmem:[%s15 + $0xd0] sm:$0xf]
        %v4255 = vld [vmem:[%s15 + $0xd4] sm:$0xf]
        %v4256 = vld [vmem:[%s15 + $0xd8] sm:$0xf]
        %v4257 = vld [vmem:[%s15 + $0xdc] sm:$0xf]
        %v4258 = vld [vmem:[%s15 + $0xe0] sm:$0xf]
        %v4259 = vld [vmem:[%s15 + $0xe4] sm:$0xf]
        %v4260 = vld [vmem:[%s15 + $0xe8] sm:$0xf]
        %v4261 = vld [vmem:[%s15 + $0xec] sm:$0xf]
        %v4262 = vld [vmem:[%s15 + $0xf0] sm:$0xf]
        %v4263 = vld [vmem:[%s15 + $0xf4] sm:$0xf]
        %v4264 = vld [vmem:[%s15 + $0xf8] sm:$0xf]
        %v4265 = vld [vmem:[%s15 + $0xfc] sm:$0xf]
        %v4266 = vld [vmem:[%s16] sm:$0xf]
        %v4267 = vld [vmem:[%s16 + $0x4] sm:$0xf]
        %v4268 = vld [vmem:[%s16 + $0x8] sm:$0xf]
        %v4269 = vld [vmem:[%s16 + $0xc] sm:$0xf]
        %v4270 = vld [vmem:[%s16 + $0x10] sm:$0xf]
        %v4271 = vld [vmem:[%s16 + $0x14] sm:$0xf]
        %v4272 = vld [vmem:[%s16 + $0x18] sm:$0xf]
        %v4273 = vld [vmem:[%s16 + $0x1c] sm:$0xf]
        %v4274 = vld [vmem:[%s16 + $0x20] sm:$0xf]
        %v4275 = vld [vmem:[%s16 + $0x24] sm:$0xf]
        %v4276 = vld [vmem:[%s16 + $0x28] sm:$0xf]
        %v4277 = vld [vmem:[%s16 + $0x2c] sm:$0xf]
        %v4278 = vld [vmem:[%s16 + $0x30] sm:$0xf]
        %v4279 = vld [vmem:[%s16 + $0x34] sm:$0xf]
        %v4280 = vld [vmem:[%s16 + $0x38] sm:$0xf]
        %v4281 = vld [vmem:[%s16 + $0x3c] sm:$0xf]
        %v4282 = vld [vmem:[%s17] sm:$0x1]
        %v4283 = vpack.c.bf16 %v4066, %v4066
        %v4284 = vpack.c.bf16 %v4067, %v4067
        %v4285 = vpack.c.bf16 %v4068, %v4068
        %v4286 = vpack.c.bf16 %v4069, %v4069
        %v4287 = vpack.c.bf16 %v4070, %v4070
        %v4288 = vpack.c.bf16 %v4071, %v4071
        %v4289 = vpack.c.bf16 %v4072, %v4072
        %v4290 = vpack.c.bf16 %v4073, %v4073
        %v4299 = vunpack.c.l.b16 %v4283
        %v4300 = vunpack.c.l.b16 %v4284
        %v4301 = vunpack.c.l.b16 %v4285
        %v4302 = vunpack.c.l.b16 %v4286
        %v4303 = vunpack.c.l.b16 %v4287
        %v4304 = vunpack.c.l.b16 %v4288
        %v4305 = vunpack.c.l.b16 %v4289
        %v4306 = vunpack.c.l.b16 %v4290
        %v4307 = vpack.c.b16 %v4300, %v4299
        %v4308 = vpack.c.b16 %v4302, %v4301
        %v4309 = vpack.c.b16 %v4304, %v4303
        %v4310 = vpack.c.b16 %v4306, %v4305
        %v4331 = vunpack.c.l.b16 %v4074
        %v4332 = vunpack.c.l.b16 %v4075
        %v4333 = vunpack.c.l.b16 %v4076
        %v4334 = vunpack.c.l.b16 %v4077
        %v4335 = vunpack.c.l.b16 %v4078
        %v4336 = vunpack.c.l.b16 %v4079
        %v4337 = vunpack.c.l.b16 %v4080
        %v4338 = vunpack.c.l.b16 %v4081
        %v4339 = vunpack.c.l.b16 %v4082
        %v4340 = vunpack.c.l.b16 %v4083
        %v4341 = vunpack.c.l.b16 %v4084
        %v4342 = vunpack.c.l.b16 %v4085
        %v4343 = vunpack.c.l.b16 %v4086
        %v4344 = vunpack.c.l.b16 %v4087
        %v4345 = vunpack.c.l.b16 %v4088
        %v4346 = vunpack.c.l.b16 %v4089
        %v4347 = vpack.c.b16 %v4332, %v4331
        %v4348 = vpack.c.b16 %v4334, %v4333
        %v4349 = vpack.c.b16 %v4336, %v4335
        %v4350 = vpack.c.b16 %v4338, %v4337
        %v4351 = vpack.c.b16 %v4340, %v4339
        %v4352 = vpack.c.b16 %v4342, %v4341
        %v4353 = vpack.c.b16 %v4344, %v4343
        %v4354 = vpack.c.b16 %v4346, %v4345
        %4363 = vmatpush.bf16.msra.mxu0 %v4354
        %4364 = vmatpush.bf16.msra.mxu0 %v4353
        %4365 = vmatpush.bf16.msra.mxu0 %v4352
        %4366 = vmatpush.bf16.msra.mxu0 %v4351
        %4367 = vmatpush.bf16.msra.mxu0 %v4350
        %4368 = vmatpush.bf16.msra.mxu0 %v4349
        %4369 = vmatpush.bf16.msra.mxu0 %v4348
        %4370 = vmatpush.bf16.msra.mxu0 %v4347
        %4371 = vmatmul.bf16.gmra.mxu0 %v4307
        %v4372 = vpop.f32.mrf.mxu0
        %v4373 = vadd.f32 0.0, %v4372
        %v4374 = vpop.f32.mrf.mxu0
        %v4375 = vadd.f32 0.0, %v4374
        %4376 = vmatmul.bf16.gmra.mxu0 %v4308
        %v4377 = vpop.f32.mrf.mxu0
        %v4378 = vadd.f32 0.0, %v4377
        %v4379 = vpop.f32.mrf.mxu0
        %v4380 = vadd.f32 0.0, %v4379
        %4381 = vmatmul.bf16.gmra.mxu0 %v4309
        %v4382 = vpop.f32.mrf.mxu0
        %v4383 = vadd.f32 0.0, %v4382
        %v4384 = vpop.f32.mrf.mxu0
        %v4385 = vadd.f32 0.0, %v4384
        %4386 = vmatmul.bf16.gmra.mxu0 %v4310
        %v4387 = vpop.f32.mrf.mxu0
        %v4388 = vadd.f32 0.0, %v4387
        %v4389 = vpop.f32.mrf.mxu0
        %v4390 = vadd.f32 0.0, %v4389
        %4391 = vdwg.mxu0
        %v4408 = vunpack.c.l.b16 %v4090
        %v4409 = vunpack.c.l.b16 %v4091
        %v4410 = vunpack.c.l.b16 %v4092
        %v4411 = vunpack.c.l.b16 %v4093
        %v4412 = vunpack.c.l.b16 %v4094
        %v4413 = vunpack.c.l.b16 %v4095
        %v4414 = vunpack.c.l.b16 %v4096
        %v4415 = vunpack.c.l.b16 %v4097
        %v4416 = vunpack.c.l.b16 %v4098
        %v4417 = vunpack.c.l.b16 %v4099
        %v4418 = vunpack.c.l.b16 %v4100
        %v4419 = vunpack.c.l.b16 %v4101
        %v4420 = vunpack.c.l.b16 %v4102
        %v4421 = vunpack.c.l.b16 %v4103
        %v4422 = vunpack.c.l.b16 %v4104
        %v4423 = vunpack.c.l.b16 %v4105
        %v4424 = vpack.c.b16 %v4409, %v4408
        %v4425 = vpack.c.b16 %v4411, %v4410
        %v4426 = vpack.c.b16 %v4413, %v4412
        %v4427 = vpack.c.b16 %v4415, %v4414
        %v4428 = vpack.c.b16 %v4417, %v4416
        %v4429 = vpack.c.b16 %v4419, %v4418
        %v4430 = vpack.c.b16 %v4421, %v4420
        %v4431 = vpack.c.b16 %v4423, %v4422
        %4440 = vmatpush.bf16.msra.mxu0 %v4431
        %4441 = vmatpush.bf16.msra.mxu0 %v4430
        %4442 = vmatpush.bf16.msra.mxu0 %v4429
        %4443 = vmatpush.bf16.msra.mxu0 %v4428
        %4444 = vmatpush.bf16.msra.mxu0 %v4427
        %4445 = vmatpush.bf16.msra.mxu0 %v4426
        %4446 = vmatpush.bf16.msra.mxu0 %v4425
        %4447 = vmatpush.bf16.msra.mxu0 %v4424
        %4448 = vmatmul.bf16.gmra.mxu0 %v4307
        %v4449 = vpop.f32.mrf.mxu0
        %v4450 = vadd.f32 0.0, %v4449
        %v4451 = vpop.f32.mrf.mxu0
        %v4452 = vadd.f32 0.0, %v4451
        %4453 = vmatmul.bf16.gmra.mxu0 %v4308
        %v4454 = vpop.f32.mrf.mxu0
        %v4455 = vadd.f32 0.0, %v4454
        %v4456 = vpop.f32.mrf.mxu0
        %v4457 = vadd.f32 0.0, %v4456
        %4458 = vmatmul.bf16.gmra.mxu0 %v4309
        %v4459 = vpop.f32.mrf.mxu0
        %v4460 = vadd.f32 0.0, %v4459
        %v4461 = vpop.f32.mrf.mxu0
        %v4462 = vadd.f32 0.0, %v4461
        %4463 = vmatmul.bf16.gmra.mxu0 %v4310
        %v4464 = vpop.f32.mrf.mxu0
        %v4465 = vadd.f32 0.0, %v4464
        %v4466 = vpop.f32.mrf.mxu0
        %v4467 = vadd.f32 0.0, %v4466
        %4468 = vdwg.mxu0
        %v4485 = vunpack.c.l.b16 %v4106
        %v4486 = vunpack.c.l.b16 %v4107
        %v4487 = vunpack.c.l.b16 %v4108
        %v4488 = vunpack.c.l.b16 %v4109
        %v4489 = vunpack.c.l.b16 %v4110
        %v4490 = vunpack.c.l.b16 %v4111
        %v4491 = vunpack.c.l.b16 %v4112
        %v4492 = vunpack.c.l.b16 %v4113
        %v4493 = vunpack.c.l.b16 %v4114
        %v4494 = vunpack.c.l.b16 %v4115
        %v4495 = vunpack.c.l.b16 %v4116
        %v4496 = vunpack.c.l.b16 %v4117
        %v4497 = vunpack.c.l.b16 %v4118
        %v4498 = vunpack.c.l.b16 %v4119
        %v4499 = vunpack.c.l.b16 %v4120
        %v4500 = vunpack.c.l.b16 %v4121
        %v4501 = vpack.c.b16 %v4486, %v4485
        %v4502 = vpack.c.b16 %v4488, %v4487
        %v4503 = vpack.c.b16 %v4490, %v4489
        %v4504 = vpack.c.b16 %v4492, %v4491
        %v4505 = vpack.c.b16 %v4494, %v4493
        %v4506 = vpack.c.b16 %v4496, %v4495
        %v4507 = vpack.c.b16 %v4498, %v4497
        %v4508 = vpack.c.b16 %v4500, %v4499
        %4517 = vmatpush.bf16.msra.mxu0 %v4508
        %4518 = vmatpush.bf16.msra.mxu0 %v4507
        %4519 = vmatpush.bf16.msra.mxu0 %v4506
        %4520 = vmatpush.bf16.msra.mxu0 %v4505
        %4521 = vmatpush.bf16.msra.mxu0 %v4504
        %4522 = vmatpush.bf16.msra.mxu0 %v4503
        %4523 = vmatpush.bf16.msra.mxu0 %v4502
        %4524 = vmatpush.bf16.msra.mxu0 %v4501
        %4525 = vmatmul.bf16.gmra.mxu0 %v4307
        %v4526 = vpop.f32.mrf.mxu0
        %v4527 = vadd.f32 0.0, %v4526
        %v4528 = vpop.f32.mrf.mxu0
        %v4529 = vadd.f32 0.0, %v4528
        %4530 = vmatmul.bf16.gmra.mxu0 %v4308
        %v4531 = vpop.f32.mrf.mxu0
        %v4532 = vadd.f32 0.0, %v4531
        %v4533 = vpop.f32.mrf.mxu0
        %v4534 = vadd.f32 0.0, %v4533
        %4535 = vmatmul.bf16.gmra.mxu0 %v4309
        %v4536 = vpop.f32.mrf.mxu0
        %v4537 = vadd.f32 0.0, %v4536
        %v4538 = vpop.f32.mrf.mxu0
        %v4539 = vadd.f32 0.0, %v4538
        %4540 = vmatmul.bf16.gmra.mxu0 %v4310
        %v4541 = vpop.f32.mrf.mxu0
        %v4542 = vadd.f32 0.0, %v4541
        %v4543 = vpop.f32.mrf.mxu0
        %v4544 = vadd.f32 0.0, %v4543
        %4545 = vdwg.mxu0
        %v4562 = vunpack.c.l.b16 %v4122
        %v4563 = vunpack.c.l.b16 %v4123
        %v4564 = vunpack.c.l.b16 %v4124
        %v4565 = vunpack.c.l.b16 %v4125
        %v4566 = vunpack.c.l.b16 %v4126
        %v4567 = vunpack.c.l.b16 %v4127
        %v4568 = vunpack.c.l.b16 %v4128
        %v4569 = vunpack.c.l.b16 %v4129
        %v4570 = vunpack.c.l.b16 %v4130
        %v4571 = vunpack.c.l.b16 %v4131
        %v4572 = vunpack.c.l.b16 %v4132
        %v4573 = vunpack.c.l.b16 %v4133
        %v4574 = vunpack.c.l.b16 %v4134
        %v4575 = vunpack.c.l.b16 %v4135
        %v4576 = vunpack.c.l.b16 %v4136
        %v4577 = vunpack.c.l.b16 %v4137
        %v4578 = vpack.c.b16 %v4563, %v4562
        %v4579 = vpack.c.b16 %v4565, %v4564
        %v4580 = vpack.c.b16 %v4567, %v4566
        %v4581 = vpack.c.b16 %v4569, %v4568
        %v4582 = vpack.c.b16 %v4571, %v4570
        %v4583 = vpack.c.b16 %v4573, %v4572
        %v4584 = vpack.c.b16 %v4575, %v4574
        %v4585 = vpack.c.b16 %v4577, %v4576
        %4594 = vmatpush.bf16.msra.mxu0 %v4585
        %4595 = vmatpush.bf16.msra.mxu0 %v4584
        %4596 = vmatpush.bf16.msra.mxu0 %v4583
        %4597 = vmatpush.bf16.msra.mxu0 %v4582
        %4598 = vmatpush.bf16.msra.mxu0 %v4581
        %4599 = vmatpush.bf16.msra.mxu0 %v4580
        %4600 = vmatpush.bf16.msra.mxu0 %v4579
        %4601 = vmatpush.bf16.msra.mxu0 %v4578
        %4602 = vmatmul.bf16.gmra.mxu0 %v4307
        %v4603 = vpop.f32.mrf.mxu0
        %v4604 = vadd.f32 0.0, %v4603
        %v4605 = vpop.f32.mrf.mxu0
        %v4606 = vadd.f32 0.0, %v4605
        %4607 = vmatmul.bf16.gmra.mxu0 %v4308
        %v4608 = vpop.f32.mrf.mxu0
        %v4609 = vadd.f32 0.0, %v4608
        %v4610 = vpop.f32.mrf.mxu0
        %v4611 = vadd.f32 0.0, %v4610
        %4612 = vmatmul.bf16.gmra.mxu0 %v4309
        %v4613 = vpop.f32.mrf.mxu0
        %v4614 = vadd.f32 0.0, %v4613
        %v4615 = vpop.f32.mrf.mxu0
        %v4616 = vadd.f32 0.0, %v4615
        %4617 = vmatmul.bf16.gmra.mxu0 %v4310
        %v4618 = vpop.f32.mrf.mxu0
        %v4619 = vadd.f32 0.0, %v4618
        %v4620 = vpop.f32.mrf.mxu0
        %v4621 = vadd.f32 0.0, %v4620
        %4622 = vdwg.mxu0
        %v4639 = vunpack.c.l.b16 %v4138
        %v4640 = vunpack.c.l.b16 %v4139
        %v4641 = vunpack.c.l.b16 %v4140
        %v4642 = vunpack.c.l.b16 %v4141
        %v4643 = vunpack.c.l.b16 %v4142
        %v4644 = vunpack.c.l.b16 %v4143
        %v4645 = vunpack.c.l.b16 %v4144
        %v4646 = vunpack.c.l.b16 %v4145
        %v4647 = vunpack.c.l.b16 %v4146
        %v4648 = vunpack.c.l.b16 %v4147
        %v4649 = vunpack.c.l.b16 %v4148
        %v4650 = vunpack.c.l.b16 %v4149
        %v4651 = vunpack.c.l.b16 %v4150
        %v4652 = vunpack.c.l.b16 %v4151
        %v4653 = vunpack.c.l.b16 %v4152
        %v4654 = vunpack.c.l.b16 %v4153
        %v4655 = vpack.c.b16 %v4640, %v4639
        %v4656 = vpack.c.b16 %v4642, %v4641
        %v4657 = vpack.c.b16 %v4644, %v4643
        %v4658 = vpack.c.b16 %v4646, %v4645
        %v4659 = vpack.c.b16 %v4648, %v4647
        %v4660 = vpack.c.b16 %v4650, %v4649
        %v4661 = vpack.c.b16 %v4652, %v4651
        %v4662 = vpack.c.b16 %v4654, %v4653
        %4671 = vmatpush.bf16.msra.mxu0 %v4662
        %4672 = vmatpush.bf16.msra.mxu0 %v4661
        %4673 = vmatpush.bf16.msra.mxu0 %v4660
        %4674 = vmatpush.bf16.msra.mxu0 %v4659
        %4675 = vmatpush.bf16.msra.mxu0 %v4658
        %4676 = vmatpush.bf16.msra.mxu0 %v4657
        %4677 = vmatpush.bf16.msra.mxu0 %v4656
        %4678 = vmatpush.bf16.msra.mxu0 %v4655
        %4679 = vmatmul.bf16.gmra.mxu0 %v4307
        %v4680 = vpop.f32.mrf.mxu0
        %v4681 = vadd.f32 0.0, %v4680
        %v4682 = vpop.f32.mrf.mxu0
        %v4683 = vadd.f32 0.0, %v4682
        %4684 = vmatmul.bf16.gmra.mxu0 %v4308
        %v4685 = vpop.f32.mrf.mxu0
        %v4686 = vadd.f32 0.0, %v4685
        %v4687 = vpop.f32.mrf.mxu0
        %v4688 = vadd.f32 0.0, %v4687
        %4689 = vmatmul.bf16.gmra.mxu0 %v4309
        %v4690 = vpop.f32.mrf.mxu0
        %v4691 = vadd.f32 0.0, %v4690
        %v4692 = vpop.f32.mrf.mxu0
        %v4693 = vadd.f32 0.0, %v4692
        %4694 = vmatmul.bf16.gmra.mxu0 %v4310
        %v4695 = vpop.f32.mrf.mxu0
        %v4696 = vadd.f32 0.0, %v4695
        %v4697 = vpop.f32.mrf.mxu0
        %v4698 = vadd.f32 0.0, %v4697
        %4699 = vdwg.mxu0
        %v4716 = vunpack.c.l.b16 %v4154
        %v4717 = vunpack.c.l.b16 %v4155
        %v4718 = vunpack.c.l.b16 %v4156
        %v4719 = vunpack.c.l.b16 %v4157
        %v4720 = vunpack.c.l.b16 %v4158
        %v4721 = vunpack.c.l.b16 %v4159
        %v4722 = vunpack.c.l.b16 %v4160
        %v4723 = vunpack.c.l.b16 %v4161
        %v4724 = vunpack.c.l.b16 %v4162
        %v4725 = vunpack.c.l.b16 %v4163
        %v4726 = vunpack.c.l.b16 %v4164
        %v4727 = vunpack.c.l.b16 %v4165
        %v4728 = vunpack.c.l.b16 %v4166
        %v4729 = vunpack.c.l.b16 %v4167
        %v4730 = vunpack.c.l.b16 %v4168
        %v4731 = vunpack.c.l.b16 %v4169
        %v4732 = vpack.c.b16 %v4717, %v4716
        %v4733 = vpack.c.b16 %v4719, %v4718
        %v4734 = vpack.c.b16 %v4721, %v4720
        %v4735 = vpack.c.b16 %v4723, %v4722
        %v4736 = vpack.c.b16 %v4725, %v4724
        %v4737 = vpack.c.b16 %v4727, %v4726
        %v4738 = vpack.c.b16 %v4729, %v4728
        %v4739 = vpack.c.b16 %v4731, %v4730
        %4748 = vmatpush.bf16.msra.mxu0 %v4739
        %4749 = vmatpush.bf16.msra.mxu0 %v4738
        %4750 = vmatpush.bf16.msra.mxu0 %v4737
        %4751 = vmatpush.bf16.msra.mxu0 %v4736
        %4752 = vmatpush.bf16.msra.mxu0 %v4735
        %4753 = vmatpush.bf16.msra.mxu0 %v4734
        %4754 = vmatpush.bf16.msra.mxu0 %v4733
        %4755 = vmatpush.bf16.msra.mxu0 %v4732
        %4756 = vmatmul.bf16.gmra.mxu0 %v4307
        %v4757 = vpop.f32.mrf.mxu0
        %v4758 = vadd.f32 0.0, %v4757
        %v4759 = vpop.f32.mrf.mxu0
        %v4760 = vadd.f32 0.0, %v4759
        %4761 = vmatmul.bf16.gmra.mxu0 %v4308
        %v4762 = vpop.f32.mrf.mxu0
        %v4763 = vadd.f32 0.0, %v4762
        %v4764 = vpop.f32.mrf.mxu0
        %v4765 = vadd.f32 0.0, %v4764
        %4766 = vmatmul.bf16.gmra.mxu0 %v4309
        %v4767 = vpop.f32.mrf.mxu0
        %v4768 = vadd.f32 0.0, %v4767
        %v4769 = vpop.f32.mrf.mxu0
        %v4770 = vadd.f32 0.0, %v4769
        %4771 = vmatmul.bf16.gmra.mxu0 %v4310
        %v4772 = vpop.f32.mrf.mxu0
        %v4773 = vadd.f32 0.0, %v4772
        %v4774 = vpop.f32.mrf.mxu0
        %v4775 = vadd.f32 0.0, %v4774
        %4776 = vdwg.mxu0
        %v4793 = vunpack.c.l.b16 %v4170
        %v4794 = vunpack.c.l.b16 %v4171
        %v4795 = vunpack.c.l.b16 %v4172
        %v4796 = vunpack.c.l.b16 %v4173
        %v4797 = vunpack.c.l.b16 %v4174
        %v4798 = vunpack.c.l.b16 %v4175
        %v4799 = vunpack.c.l.b16 %v4176
        %v4800 = vunpack.c.l.b16 %v4177
        %v4801 = vunpack.c.l.b16 %v4178
        %v4802 = vunpack.c.l.b16 %v4179
        %v4803 = vunpack.c.l.b16 %v4180
        %v4804 = vunpack.c.l.b16 %v4181
        %v4805 = vunpack.c.l.b16 %v4182
        %v4806 = vunpack.c.l.b16 %v4183
        %v4807 = vunpack.c.l.b16 %v4184
        %v4808 = vunpack.c.l.b16 %v4185
        %v4809 = vpack.c.b16 %v4794, %v4793
        %v4810 = vpack.c.b16 %v4796, %v4795
        %v4811 = vpack.c.b16 %v4798, %v4797
        %v4812 = vpack.c.b16 %v4800, %v4799
        %v4813 = vpack.c.b16 %v4802, %v4801
        %v4814 = vpack.c.b16 %v4804, %v4803
        %v4815 = vpack.c.b16 %v4806, %v4805
        %v4816 = vpack.c.b16 %v4808, %v4807
        %4825 = vmatpush.bf16.msra.mxu0 %v4816
        %4826 = vmatpush.bf16.msra.mxu0 %v4815
        %4827 = vmatpush.bf16.msra.mxu0 %v4814
        %4828 = vmatpush.bf16.msra.mxu0 %v4813
        %4829 = vmatpush.bf16.msra.mxu0 %v4812
        %4830 = vmatpush.bf16.msra.mxu0 %v4811
        %4831 = vmatpush.bf16.msra.mxu0 %v4810
        %4832 = vmatpush.bf16.msra.mxu0 %v4809
        %4833 = vmatmul.bf16.gmra.mxu0 %v4307
        %v4834 = vpop.f32.mrf.mxu0
        %v4835 = vadd.f32 0.0, %v4834
        %v4836 = vpop.f32.mrf.mxu0
        %v4837 = vadd.f32 0.0, %v4836
        %4838 = vmatmul.bf16.gmra.mxu0 %v4308
        %v4839 = vpop.f32.mrf.mxu0
        %v4840 = vadd.f32 0.0, %v4839
        %v4841 = vpop.f32.mrf.mxu0
        %v4842 = vadd.f32 0.0, %v4841
        %4843 = vmatmul.bf16.gmra.mxu0 %v4309
        %v4844 = vpop.f32.mrf.mxu0
        %v4845 = vadd.f32 0.0, %v4844
        %v4846 = vpop.f32.mrf.mxu0
        %v4847 = vadd.f32 0.0, %v4846
        %4848 = vmatmul.bf16.gmra.mxu0 %v4310
        %v4849 = vpop.f32.mrf.mxu0
        %v4850 = vadd.f32 0.0, %v4849
        %v4851 = vpop.f32.mrf.mxu0
        %v4852 = vadd.f32 0.0, %v4851
        %4853 = vdwg.mxu0
        %v4870 = vunpack.c.l.b16 %v4186
        %v4871 = vunpack.c.l.b16 %v4187
        %v4872 = vunpack.c.l.b16 %v4188
        %v4873 = vunpack.c.l.b16 %v4189
        %v4874 = vunpack.c.l.b16 %v4190
        %v4875 = vunpack.c.l.b16 %v4191
        %v4876 = vunpack.c.l.b16 %v4192
        %v4877 = vunpack.c.l.b16 %v4193
        %v4878 = vunpack.c.l.b16 %v4194
        %v4879 = vunpack.c.l.b16 %v4195
        %v4880 = vunpack.c.l.b16 %v4196
        %v4881 = vunpack.c.l.b16 %v4197
        %v4882 = vunpack.c.l.b16 %v4198
        %v4883 = vunpack.c.l.b16 %v4199
        %v4884 = vunpack.c.l.b16 %v4200
        %v4885 = vunpack.c.l.b16 %v4201
        %v4886 = vpack.c.b16 %v4871, %v4870
        %v4887 = vpack.c.b16 %v4873, %v4872
        %v4888 = vpack.c.b16 %v4875, %v4874
        %v4889 = vpack.c.b16 %v4877, %v4876
        %v4890 = vpack.c.b16 %v4879, %v4878
        %v4891 = vpack.c.b16 %v4881, %v4880
        %v4892 = vpack.c.b16 %v4883, %v4882
        %v4893 = vpack.c.b16 %v4885, %v4884
        %4902 = vmatpush.bf16.msra.mxu0 %v4893
        %4903 = vmatpush.bf16.msra.mxu0 %v4892
        %4904 = vmatpush.bf16.msra.mxu0 %v4891
        %4905 = vmatpush.bf16.msra.mxu0 %v4890
        %4906 = vmatpush.bf16.msra.mxu0 %v4889
        %4907 = vmatpush.bf16.msra.mxu0 %v4888
        %4908 = vmatpush.bf16.msra.mxu0 %v4887
        %4909 = vmatpush.bf16.msra.mxu0 %v4886
        %4910 = vmatmul.bf16.gmra.mxu0 %v4307
        %v4911 = vpop.f32.mrf.mxu0
        %v4912 = vadd.f32 0.0, %v4911
        %v4913 = vpop.f32.mrf.mxu0
        %v4914 = vadd.f32 0.0, %v4913
        %4915 = vmatmul.bf16.gmra.mxu0 %v4308
        %v4916 = vpop.f32.mrf.mxu0
        %v4917 = vadd.f32 0.0, %v4916
        %v4918 = vpop.f32.mrf.mxu0
        %v4919 = vadd.f32 0.0, %v4918
        %4920 = vmatmul.bf16.gmra.mxu0 %v4309
        %v4921 = vpop.f32.mrf.mxu0
        %v4922 = vadd.f32 0.0, %v4921
        %v4923 = vpop.f32.mrf.mxu0
        %v4924 = vadd.f32 0.0, %v4923
        %4925 = vmatmul.bf16.gmra.mxu0 %v4310
        %v4926 = vpop.f32.mrf.mxu0
        %v4927 = vadd.f32 0.0, %v4926
        %v4928 = vpop.f32.mrf.mxu0
        %v4929 = vadd.f32 0.0, %v4928
        %4930 = vdwg.mxu0
        %v4947 = vunpack.c.l.b16 %v4202
        %v4948 = vunpack.c.l.b16 %v4203
        %v4949 = vunpack.c.l.b16 %v4204
        %v4950 = vunpack.c.l.b16 %v4205
        %v4951 = vunpack.c.l.b16 %v4206
        %v4952 = vunpack.c.l.b16 %v4207
        %v4953 = vunpack.c.l.b16 %v4208
        %v4954 = vunpack.c.l.b16 %v4209
        %v4955 = vunpack.c.l.b16 %v4210
        %v4956 = vunpack.c.l.b16 %v4211
        %v4957 = vunpack.c.l.b16 %v4212
        %v4958 = vunpack.c.l.b16 %v4213
        %v4959 = vunpack.c.l.b16 %v4214
        %v4960 = vunpack.c.l.b16 %v4215
        %v4961 = vunpack.c.l.b16 %v4216
        %v4962 = vunpack.c.l.b16 %v4217
        %v4963 = vpack.c.b16 %v4948, %v4947
        %v4964 = vpack.c.b16 %v4950, %v4949
        %v4965 = vpack.c.b16 %v4952, %v4951
        %v4966 = vpack.c.b16 %v4954, %v4953
        %v4967 = vpack.c.b16 %v4956, %v4955
        %v4968 = vpack.c.b16 %v4958, %v4957
        %v4969 = vpack.c.b16 %v4960, %v4959
        %v4970 = vpack.c.b16 %v4962, %v4961
        %4979 = vmatpush.bf16.msra.mxu0 %v4970
        %4980 = vmatpush.bf16.msra.mxu0 %v4969
        %4981 = vmatpush.bf16.msra.mxu0 %v4968
        %4982 = vmatpush.bf16.msra.mxu0 %v4967
        %4983 = vmatpush.bf16.msra.mxu0 %v4966
        %4984 = vmatpush.bf16.msra.mxu0 %v4965
        %4985 = vmatpush.bf16.msra.mxu0 %v4964
        %4986 = vmatpush.bf16.msra.mxu0 %v4963
        %4987 = vmatmul.bf16.gmra.mxu0 %v4307
        %v4988 = vpop.f32.mrf.mxu0
        %v4989 = vadd.f32 0.0, %v4988
        %v4990 = vpop.f32.mrf.mxu0
        %v4991 = vadd.f32 0.0, %v4990
        %4992 = vmatmul.bf16.gmra.mxu0 %v4308
        %v4993 = vpop.f32.mrf.mxu0
        %v4994 = vadd.f32 0.0, %v4993
        %v4995 = vpop.f32.mrf.mxu0
        %v4996 = vadd.f32 0.0, %v4995
        %4997 = vmatmul.bf16.gmra.mxu0 %v4309
        %v4998 = vpop.f32.mrf.mxu0
        %v4999 = vadd.f32 0.0, %v4998
        %v5000 = vpop.f32.mrf.mxu0
        %v5001 = vadd.f32 0.0, %v5000
        %5002 = vmatmul.bf16.gmra.mxu0 %v4310
        %v5003 = vpop.f32.mrf.mxu0
        %v5004 = vadd.f32 0.0, %v5003
        %v5005 = vpop.f32.mrf.mxu0
        %v5006 = vadd.f32 0.0, %v5005
        %5007 = vdwg.mxu0
        %v5024 = vunpack.c.l.b16 %v4218
        %v5025 = vunpack.c.l.b16 %v4219
        %v5026 = vunpack.c.l.b16 %v4220
        %v5027 = vunpack.c.l.b16 %v4221
        %v5028 = vunpack.c.l.b16 %v4222
        %v5029 = vunpack.c.l.b16 %v4223
        %v5030 = vunpack.c.l.b16 %v4224
        %v5031 = vunpack.c.l.b16 %v4225
        %v5032 = vunpack.c.l.b16 %v4226
        %v5033 = vunpack.c.l.b16 %v4227
        %v5034 = vunpack.c.l.b16 %v4228
        %v5035 = vunpack.c.l.b16 %v4229
        %v5036 = vunpack.c.l.b16 %v4230
        %v5037 = vunpack.c.l.b16 %v4231
        %v5038 = vunpack.c.l.b16 %v4232
        %v5039 = vunpack.c.l.b16 %v4233
        %v5040 = vpack.c.b16 %v5025, %v5024
        %v5041 = vpack.c.b16 %v5027, %v5026
        %v5042 = vpack.c.b16 %v5029, %v5028
        %v5043 = vpack.c.b16 %v5031, %v5030
        %v5044 = vpack.c.b16 %v5033, %v5032
        %v5045 = vpack.c.b16 %v5035, %v5034
        %v5046 = vpack.c.b16 %v5037, %v5036
        %v5047 = vpack.c.b16 %v5039, %v5038
        %5056 = vmatpush.bf16.msra.mxu0 %v5047
        %5057 = vmatpush.bf16.msra.mxu0 %v5046
        %5058 = vmatpush.bf16.msra.mxu0 %v5045
        %5059 = vmatpush.bf16.msra.mxu0 %v5044
        %5060 = vmatpush.bf16.msra.mxu0 %v5043
        %5061 = vmatpush.bf16.msra.mxu0 %v5042
        %5062 = vmatpush.bf16.msra.mxu0 %v5041
        %5063 = vmatpush.bf16.msra.mxu0 %v5040
        %5064 = vmatmul.bf16.gmra.mxu0 %v4307
        %v5065 = vpop.f32.mrf.mxu0
        %v5066 = vadd.f32 0.0, %v5065
        %v5067 = vpop.f32.mrf.mxu0
        %v5068 = vadd.f32 0.0, %v5067
        %5069 = vmatmul.bf16.gmra.mxu0 %v4308
        %v5070 = vpop.f32.mrf.mxu0
        %v5071 = vadd.f32 0.0, %v5070
        %v5072 = vpop.f32.mrf.mxu0
        %v5073 = vadd.f32 0.0, %v5072
        %5074 = vmatmul.bf16.gmra.mxu0 %v4309
        %v5075 = vpop.f32.mrf.mxu0
        %v5076 = vadd.f32 0.0, %v5075
        %v5077 = vpop.f32.mrf.mxu0
        %v5078 = vadd.f32 0.0, %v5077
        %5079 = vmatmul.bf16.gmra.mxu0 %v4310
        %v5080 = vpop.f32.mrf.mxu0
        %v5081 = vadd.f32 0.0, %v5080
        %v5082 = vpop.f32.mrf.mxu0
        %v5083 = vadd.f32 0.0, %v5082
        %5084 = vdwg.mxu0
        %v5101 = vunpack.c.l.b16 %v4234
        %v5102 = vunpack.c.l.b16 %v4235
        %v5103 = vunpack.c.l.b16 %v4236
        %v5104 = vunpack.c.l.b16 %v4237
        %v5105 = vunpack.c.l.b16 %v4238
        %v5106 = vunpack.c.l.b16 %v4239
        %v5107 = vunpack.c.l.b16 %v4240
        %v5108 = vunpack.c.l.b16 %v4241
        %v5109 = vunpack.c.l.b16 %v4242
        %v5110 = vunpack.c.l.b16 %v4243
        %v5111 = vunpack.c.l.b16 %v4244
        %v5112 = vunpack.c.l.b16 %v4245
        %v5113 = vunpack.c.l.b16 %v4246
        %v5114 = vunpack.c.l.b16 %v4247
        %v5115 = vunpack.c.l.b16 %v4248
        %v5116 = vunpack.c.l.b16 %v4249
        %v5117 = vpack.c.b16 %v5102, %v5101
        %v5118 = vpack.c.b16 %v5104, %v5103
        %v5119 = vpack.c.b16 %v5106, %v5105
        %v5120 = vpack.c.b16 %v5108, %v5107
        %v5121 = vpack.c.b16 %v5110, %v5109
        %v5122 = vpack.c.b16 %v5112, %v5111
        %v5123 = vpack.c.b16 %v5114, %v5113
        %v5124 = vpack.c.b16 %v5116, %v5115
        %5133 = vmatpush.bf16.msra.mxu0 %v5124
        %5134 = vmatpush.bf16.msra.mxu0 %v5123
        %5135 = vmatpush.bf16.msra.mxu0 %v5122
        %5136 = vmatpush.bf16.msra.mxu0 %v5121
        %5137 = vmatpush.bf16.msra.mxu0 %v5120
        %5138 = vmatpush.bf16.msra.mxu0 %v5119
        %5139 = vmatpush.bf16.msra.mxu0 %v5118
        %5140 = vmatpush.bf16.msra.mxu0 %v5117
        %5141 = vmatmul.bf16.gmra.mxu0 %v4307
        %v5142 = vpop.f32.mrf.mxu0
        %v5143 = vadd.f32 0.0, %v5142
        %v5144 = vpop.f32.mrf.mxu0
        %v5145 = vadd.f32 0.0, %v5144
        %5146 = vmatmul.bf16.gmra.mxu0 %v4308
        %v5147 = vpop.f32.mrf.mxu0
        %v5148 = vadd.f32 0.0, %v5147
        %v5149 = vpop.f32.mrf.mxu0
        %v5150 = vadd.f32 0.0, %v5149
        %5151 = vmatmul.bf16.gmra.mxu0 %v4309
        %v5152 = vpop.f32.mrf.mxu0
        %v5153 = vadd.f32 0.0, %v5152
        %v5154 = vpop.f32.mrf.mxu0
        %v5155 = vadd.f32 0.0, %v5154
        %5156 = vmatmul.bf16.gmra.mxu0 %v4310
        %v5157 = vpop.f32.mrf.mxu0
        %v5158 = vadd.f32 0.0, %v5157
        %v5159 = vpop.f32.mrf.mxu0
        %v5160 = vadd.f32 0.0, %v5159
        %5161 = vdwg.mxu0
        %v5178 = vunpack.c.l.b16 %v4250
        %v5179 = vunpack.c.l.b16 %v4251
        %v5180 = vunpack.c.l.b16 %v4252
        %v5181 = vunpack.c.l.b16 %v4253
        %v5182 = vunpack.c.l.b16 %v4254
        %v5183 = vunpack.c.l.b16 %v4255
        %v5184 = vunpack.c.l.b16 %v4256
        %v5185 = vunpack.c.l.b16 %v4257
        %v5186 = vunpack.c.l.b16 %v4258
        %v5187 = vunpack.c.l.b16 %v4259
        %v5188 = vunpack.c.l.b16 %v4260
        %v5189 = vunpack.c.l.b16 %v4261
        %v5190 = vunpack.c.l.b16 %v4262
        %v5191 = vunpack.c.l.b16 %v4263
        %v5192 = vunpack.c.l.b16 %v4264
        %v5193 = vunpack.c.l.b16 %v4265
        %v5194 = vpack.c.b16 %v5179, %v5178
        %v5195 = vpack.c.b16 %v5181, %v5180
        %v5196 = vpack.c.b16 %v5183, %v5182
        %v5197 = vpack.c.b16 %v5185, %v5184
        %v5198 = vpack.c.b16 %v5187, %v5186
        %v5199 = vpack.c.b16 %v5189, %v5188
        %v5200 = vpack.c.b16 %v5191, %v5190
        %v5201 = vpack.c.b16 %v5193, %v5192
        %5210 = vmatpush.bf16.msra.mxu0 %v5201
        %5211 = vmatpush.bf16.msra.mxu0 %v5200
        %5212 = vmatpush.bf16.msra.mxu0 %v5199
        %5213 = vmatpush.bf16.msra.mxu0 %v5198
        %5214 = vmatpush.bf16.msra.mxu0 %v5197
        %5215 = vmatpush.bf16.msra.mxu0 %v5196
        %5216 = vmatpush.bf16.msra.mxu0 %v5195
        %5217 = vmatpush.bf16.msra.mxu0 %v5194
        %5218 = vmatmul.bf16.gmra.mxu0 %v4307
        %v5219 = vpop.f32.mrf.mxu0
        %v5220 = vadd.f32 0.0, %v5219
        %v5221 = vpop.f32.mrf.mxu0
        %v5222 = vadd.f32 0.0, %v5221
        %5223 = vmatmul.bf16.gmra.mxu0 %v4308
        %v5224 = vpop.f32.mrf.mxu0
        %v5225 = vadd.f32 0.0, %v5224
        %v5226 = vpop.f32.mrf.mxu0
        %v5227 = vadd.f32 0.0, %v5226
        %5228 = vmatmul.bf16.gmra.mxu0 %v4309
        %v5229 = vpop.f32.mrf.mxu0
        %v5230 = vadd.f32 0.0, %v5229
        %v5231 = vpop.f32.mrf.mxu0
        %v5232 = vadd.f32 0.0, %v5231
        %5233 = vmatmul.bf16.gmra.mxu0 %v4310
        %v5234 = vpop.f32.mrf.mxu0
        %v5235 = vadd.f32 0.0, %v5234
        %v5236 = vpop.f32.mrf.mxu0
        %v5237 = vadd.f32 0.0, %v5236
        %5238 = vdwg.mxu0
        %v5239 = vpack.c.bf16 %v4373, %v4373
        %v5240 = vpack.c.bf16 %v4375, %v4375
        %v5241 = vpack.c.bf16 %v4378, %v4378
        %v5242 = vpack.c.bf16 %v4380, %v4380
        %v5243 = vpack.c.bf16 %v4383, %v4383
        %v5244 = vpack.c.bf16 %v4385, %v4385
        %v5245 = vpack.c.bf16 %v4388, %v4388
        %v5246 = vpack.c.bf16 %v4390, %v4390
        %v5247 = vpack.c.bf16 %v4450, %v4450
        %v5248 = vpack.c.bf16 %v4452, %v4452
        %v5249 = vpack.c.bf16 %v4455, %v4455
        %v5250 = vpack.c.bf16 %v4457, %v4457
        %v5251 = vpack.c.bf16 %v4460, %v4460
        %v5252 = vpack.c.bf16 %v4462, %v4462
        %v5253 = vpack.c.bf16 %v4465, %v4465
        %v5254 = vpack.c.bf16 %v4467, %v4467
        %v5255 = vpack.c.bf16 %v4527, %v4527
        %v5256 = vpack.c.bf16 %v4529, %v4529
        %v5257 = vpack.c.bf16 %v4532, %v4532
        %v5258 = vpack.c.bf16 %v4534, %v4534
        %v5259 = vpack.c.bf16 %v4537, %v4537
        %v5260 = vpack.c.bf16 %v4539, %v4539
        %v5261 = vpack.c.bf16 %v4542, %v4542
        %v5262 = vpack.c.bf16 %v4544, %v4544
        %v5263 = vpack.c.bf16 %v4604, %v4604
        %v5264 = vpack.c.bf16 %v4606, %v4606
        %v5265 = vpack.c.bf16 %v4609, %v4609
        %v5266 = vpack.c.bf16 %v4611, %v4611
        %v5267 = vpack.c.bf16 %v4614, %v4614
        %v5268 = vpack.c.bf16 %v4616, %v4616
        %v5269 = vpack.c.bf16 %v4619, %v4619
        %v5270 = vpack.c.bf16 %v4621, %v4621
        %v5271 = vpack.c.bf16 %v4681, %v4681
        %v5272 = vpack.c.bf16 %v4683, %v4683
        %v5273 = vpack.c.bf16 %v4686, %v4686
        %v5274 = vpack.c.bf16 %v4688, %v4688
        %v5275 = vpack.c.bf16 %v4691, %v4691
        %v5276 = vpack.c.bf16 %v4693, %v4693
        %v5277 = vpack.c.bf16 %v4696, %v4696
        %v5278 = vpack.c.bf16 %v4698, %v4698
        %v5279 = vpack.c.bf16 %v4758, %v4758
        %v5280 = vpack.c.bf16 %v4760, %v4760
        %v5281 = vpack.c.bf16 %v4763, %v4763
        %v5282 = vpack.c.bf16 %v4765, %v4765
        %v5283 = vpack.c.bf16 %v4768, %v4768
        %v5284 = vpack.c.bf16 %v4770, %v4770
        %v5285 = vpack.c.bf16 %v4773, %v4773
        %v5286 = vpack.c.bf16 %v4775, %v4775
        %v5287 = vpack.c.bf16 %v4835, %v4835
        %v5288 = vpack.c.bf16 %v4837, %v4837
        %v5289 = vpack.c.bf16 %v4840, %v4840
        %v5290 = vpack.c.bf16 %v4842, %v4842
        %v5291 = vpack.c.bf16 %v4845, %v4845
        %v5292 = vpack.c.bf16 %v4847, %v4847
        %v5293 = vpack.c.bf16 %v4850, %v4850
        %v5294 = vpack.c.bf16 %v4852, %v4852
        %v5295 = vpack.c.bf16 %v4912, %v4912
        %v5296 = vpack.c.bf16 %v4914, %v4914
        %v5297 = vpack.c.bf16 %v4917, %v4917
        %v5298 = vpack.c.bf16 %v4919, %v4919
        %v5299 = vpack.c.bf16 %v4922, %v4922
        %v5300 = vpack.c.bf16 %v4924, %v4924
        %v5301 = vpack.c.bf16 %v4927, %v4927
        %v5302 = vpack.c.bf16 %v4929, %v4929
        %v5311 = vunpack.c.l.b16 %v5239
        %v5312 = vunpack.c.l.b16 %v5240
        %v5313 = vunpack.c.l.b16 %v5241
        %v5314 = vunpack.c.l.b16 %v5242
        %v5315 = vunpack.c.l.b16 %v5243
        %v5316 = vunpack.c.l.b16 %v5244
        %v5317 = vunpack.c.l.b16 %v5245
        %v5318 = vunpack.c.l.b16 %v5246
        %v5319 = vpack.c.b16 %v5312, %v5311
        %v5320 = vpack.c.b16 %v5314, %v5313
        %v5321 = vpack.c.b16 %v5316, %v5315
        %v5322 = vpack.c.b16 %v5318, %v5317
        %v5331 = vunpack.c.l.b16 %v5271
        %v5332 = vunpack.c.l.b16 %v5272
        %v5333 = vunpack.c.l.b16 %v5273
        %v5334 = vunpack.c.l.b16 %v5274
        %v5335 = vunpack.c.l.b16 %v5275
        %v5336 = vunpack.c.l.b16 %v5276
        %v5337 = vunpack.c.l.b16 %v5277
        %v5338 = vunpack.c.l.b16 %v5278
        %v5339 = vpack.c.b16 %v5332, %v5331
        %v5340 = vpack.c.b16 %v5334, %v5333
        %v5341 = vpack.c.b16 %v5336, %v5335
        %v5342 = vpack.c.b16 %v5338, %v5337
        %v5344 = vsel %vm2433, %v5319, 0
        %v5347 = vsel %vm2433, %v5320, 0
        %v5350 = vsel %vm2433, %v5321, 0
        %v5353 = vsel %vm2433, %v5322, 0
        %v5356 = vsel %vm2433, %v5339, 0
        %v5359 = vsel %vm2433, %v5340, 0
        %v5362 = vsel %vm2433, %v5341, 0
        %v5365 = vsel %vm2433, %v5342, 0
        %5367 = vmatpush.bf16.xpose.msra.mxu0 0
        %5368 = vmatpush.bf16.xpose.msra.mxu0 0
        %5369 = vmatpush.bf16.xpose.msra.mxu0 0
        %5370 = vmatpush.bf16.xpose.msra.mxu0 0
        %5371 = vmatpush.bf16.xpose.msra.mxu0 %v5365
        %5372 = vmatpush.bf16.xpose.msra.mxu0 %v5362
        %5373 = vmatpush.bf16.xpose.msra.mxu0 %v5359
        %5374 = vmatpush.bf16.xpose.msra.mxu0 %v5356
        %5375 = vmatmul.bf16.gmra.mxu0 %v5344
        %v5376 = vpop.f32.mrf.mxu0
        %v5377 = vadd.f32 0.0, %v5376
        %v5378 = vpop.f32.mrf.mxu0
        %v5379 = vadd.f32 0.0, %v5378
        %5380 = vmatmul.bf16.gmra.mxu0 %v5347
        %v5381 = vpop.f32.mrf.mxu0
        %v5382 = vadd.f32 0.0, %v5381
        %v5383 = vpop.f32.mrf.mxu0
        %v5384 = vadd.f32 0.0, %v5383
        %5385 = vmatmul.bf16.gmra.mxu0 %v5350
        %v5386 = vpop.f32.mrf.mxu0
        %v5387 = vadd.f32 0.0, %v5386
        %v5388 = vpop.f32.mrf.mxu0
        %v5389 = vadd.f32 0.0, %v5388
        %5390 = vmatmul.bf16.gmra.mxu0 %v5353
        %v5391 = vpop.f32.mrf.mxu0
        %v5392 = vadd.f32 0.0, %v5391
        %v5393 = vpop.f32.mrf.mxu0
        %v5394 = vadd.f32 0.0, %v5393
        %5395 = vdwg.mxu0
        %v5404 = vunpack.c.l.b16 %v5247
        %v5405 = vunpack.c.l.b16 %v5248
        %v5406 = vunpack.c.l.b16 %v5249
        %v5407 = vunpack.c.l.b16 %v5250
        %v5408 = vunpack.c.l.b16 %v5251
        %v5409 = vunpack.c.l.b16 %v5252
        %v5410 = vunpack.c.l.b16 %v5253
        %v5411 = vunpack.c.l.b16 %v5254
        %v5412 = vpack.c.b16 %v5405, %v5404
        %v5413 = vpack.c.b16 %v5407, %v5406
        %v5414 = vpack.c.b16 %v5409, %v5408
        %v5415 = vpack.c.b16 %v5411, %v5410
        %v5424 = vunpack.c.l.b16 %v5279
        %v5425 = vunpack.c.l.b16 %v5280
        %v5426 = vunpack.c.l.b16 %v5281
        %v5427 = vunpack.c.l.b16 %v5282
        %v5428 = vunpack.c.l.b16 %v5283
        %v5429 = vunpack.c.l.b16 %v5284
        %v5430 = vunpack.c.l.b16 %v5285
        %v5431 = vunpack.c.l.b16 %v5286
        %v5432 = vpack.c.b16 %v5425, %v5424
        %v5433 = vpack.c.b16 %v5427, %v5426
        %v5434 = vpack.c.b16 %v5429, %v5428
        %v5435 = vpack.c.b16 %v5431, %v5430
        %v5437 = vsel %vm2433, %v5412, 0
        %v5440 = vsel %vm2433, %v5413, 0
        %v5443 = vsel %vm2433, %v5414, 0
        %v5446 = vsel %vm2433, %v5415, 0
        %v5449 = vsel %vm2433, %v5432, 0
        %v5452 = vsel %vm2433, %v5433, 0
        %v5455 = vsel %vm2433, %v5434, 0
        %v5458 = vsel %vm2433, %v5435, 0
        %5460 = vmatpush.bf16.xpose.msra.mxu0 0
        %5461 = vmatpush.bf16.xpose.msra.mxu0 0
        %5462 = vmatpush.bf16.xpose.msra.mxu0 0
        %5463 = vmatpush.bf16.xpose.msra.mxu0 0
        %5464 = vmatpush.bf16.xpose.msra.mxu0 %v5458
        %5465 = vmatpush.bf16.xpose.msra.mxu0 %v5455
        %5466 = vmatpush.bf16.xpose.msra.mxu0 %v5452
        %5467 = vmatpush.bf16.xpose.msra.mxu0 %v5449
        %5468 = vmatmul.bf16.gmra.mxu0 %v5437
        %v5469 = vpop.f32.mrf.mxu0
        %v5470 = vadd.f32 0.0, %v5469
        %v5471 = vpop.f32.mrf.mxu0
        %v5472 = vadd.f32 0.0, %v5471
        %5473 = vmatmul.bf16.gmra.mxu0 %v5440
        %v5474 = vpop.f32.mrf.mxu0
        %v5475 = vadd.f32 0.0, %v5474
        %v5476 = vpop.f32.mrf.mxu0
        %v5477 = vadd.f32 0.0, %v5476
        %5478 = vmatmul.bf16.gmra.mxu0 %v5443
        %v5479 = vpop.f32.mrf.mxu0
        %v5480 = vadd.f32 0.0, %v5479
        %v5481 = vpop.f32.mrf.mxu0
        %v5482 = vadd.f32 0.0, %v5481
        %5483 = vmatmul.bf16.gmra.mxu0 %v5446
        %v5484 = vpop.f32.mrf.mxu0
        %v5485 = vadd.f32 0.0, %v5484
        %v5486 = vpop.f32.mrf.mxu0
        %v5487 = vadd.f32 0.0, %v5486
        %5488 = vdwg.mxu0
        %v5497 = vunpack.c.l.b16 %v5255
        %v5498 = vunpack.c.l.b16 %v5256
        %v5499 = vunpack.c.l.b16 %v5257
        %v5500 = vunpack.c.l.b16 %v5258
        %v5501 = vunpack.c.l.b16 %v5259
        %v5502 = vunpack.c.l.b16 %v5260
        %v5503 = vunpack.c.l.b16 %v5261
        %v5504 = vunpack.c.l.b16 %v5262
        %v5505 = vpack.c.b16 %v5498, %v5497
        %v5506 = vpack.c.b16 %v5500, %v5499
        %v5507 = vpack.c.b16 %v5502, %v5501
        %v5508 = vpack.c.b16 %v5504, %v5503
        %v5517 = vunpack.c.l.b16 %v5287
        %v5518 = vunpack.c.l.b16 %v5288
        %v5519 = vunpack.c.l.b16 %v5289
        %v5520 = vunpack.c.l.b16 %v5290
        %v5521 = vunpack.c.l.b16 %v5291
        %v5522 = vunpack.c.l.b16 %v5292
        %v5523 = vunpack.c.l.b16 %v5293
        %v5524 = vunpack.c.l.b16 %v5294
        %v5525 = vpack.c.b16 %v5518, %v5517
        %v5526 = vpack.c.b16 %v5520, %v5519
        %v5527 = vpack.c.b16 %v5522, %v5521
        %v5528 = vpack.c.b16 %v5524, %v5523
        %v5530 = vsel %vm2433, %v5505, 0
        %v5533 = vsel %vm2433, %v5506, 0
        %v5536 = vsel %vm2433, %v5507, 0
        %v5539 = vsel %vm2433, %v5508, 0
        %v5542 = vsel %vm2433, %v5525, 0
        %v5545 = vsel %vm2433, %v5526, 0
        %v5548 = vsel %vm2433, %v5527, 0
        %v5551 = vsel %vm2433, %v5528, 0
        %5553 = vmatpush.bf16.xpose.msra.mxu0 0
        %5554 = vmatpush.bf16.xpose.msra.mxu0 0
        %5555 = vmatpush.bf16.xpose.msra.mxu0 0
        %5556 = vmatpush.bf16.xpose.msra.mxu0 0
        %5557 = vmatpush.bf16.xpose.msra.mxu0 %v5551
        %5558 = vmatpush.bf16.xpose.msra.mxu0 %v5548
        %5559 = vmatpush.bf16.xpose.msra.mxu0 %v5545
        %5560 = vmatpush.bf16.xpose.msra.mxu0 %v5542
        %5561 = vmatmul.bf16.gmra.mxu0 %v5530
        %v5562 = vpop.f32.mrf.mxu0
        %v5563 = vadd.f32 0.0, %v5562
        %v5564 = vpop.f32.mrf.mxu0
        %v5565 = vadd.f32 0.0, %v5564
        %5566 = vmatmul.bf16.gmra.mxu0 %v5533
        %v5567 = vpop.f32.mrf.mxu0
        %v5568 = vadd.f32 0.0, %v5567
        %v5569 = vpop.f32.mrf.mxu0
        %v5570 = vadd.f32 0.0, %v5569
        %5571 = vmatmul.bf16.gmra.mxu0 %v5536
        %v5572 = vpop.f32.mrf.mxu0
        %v5573 = vadd.f32 0.0, %v5572
        %v5574 = vpop.f32.mrf.mxu0
        %v5575 = vadd.f32 0.0, %v5574
        %5576 = vmatmul.bf16.gmra.mxu0 %v5539
        %v5577 = vpop.f32.mrf.mxu0
        %v5578 = vadd.f32 0.0, %v5577
        %v5579 = vpop.f32.mrf.mxu0
        %v5580 = vadd.f32 0.0, %v5579
        %5581 = vdwg.mxu0
        %v5590 = vunpack.c.l.b16 %v5263
        %v5591 = vunpack.c.l.b16 %v5264
        %v5592 = vunpack.c.l.b16 %v5265
        %v5593 = vunpack.c.l.b16 %v5266
        %v5594 = vunpack.c.l.b16 %v5267
        %v5595 = vunpack.c.l.b16 %v5268
        %v5596 = vunpack.c.l.b16 %v5269
        %v5597 = vunpack.c.l.b16 %v5270
        %v5598 = vpack.c.b16 %v5591, %v5590
        %v5599 = vpack.c.b16 %v5593, %v5592
        %v5600 = vpack.c.b16 %v5595, %v5594
        %v5601 = vpack.c.b16 %v5597, %v5596
        %v5610 = vunpack.c.l.b16 %v5295
        %v5611 = vunpack.c.l.b16 %v5296
        %v5612 = vunpack.c.l.b16 %v5297
        %v5613 = vunpack.c.l.b16 %v5298
        %v5614 = vunpack.c.l.b16 %v5299
        %v5615 = vunpack.c.l.b16 %v5300
        %v5616 = vunpack.c.l.b16 %v5301
        %v5617 = vunpack.c.l.b16 %v5302
        %v5618 = vpack.c.b16 %v5611, %v5610
        %v5619 = vpack.c.b16 %v5613, %v5612
        %v5620 = vpack.c.b16 %v5615, %v5614
        %v5621 = vpack.c.b16 %v5617, %v5616
        %v5623 = vsel %vm2433, %v5598, 0
        %v5626 = vsel %vm2433, %v5599, 0
        %v5629 = vsel %vm2433, %v5600, 0
        %v5632 = vsel %vm2433, %v5601, 0
        %v5635 = vsel %vm2433, %v5618, 0
        %v5638 = vsel %vm2433, %v5619, 0
        %v5641 = vsel %vm2433, %v5620, 0
        %v5644 = vsel %vm2433, %v5621, 0
        %5646 = vmatpush.bf16.xpose.msra.mxu0 0
        %5647 = vmatpush.bf16.xpose.msra.mxu0 0
        %5648 = vmatpush.bf16.xpose.msra.mxu0 0
        %5649 = vmatpush.bf16.xpose.msra.mxu0 0
        %5650 = vmatpush.bf16.xpose.msra.mxu0 %v5644
        %5651 = vmatpush.bf16.xpose.msra.mxu0 %v5641
        %5652 = vmatpush.bf16.xpose.msra.mxu0 %v5638
        %5653 = vmatpush.bf16.xpose.msra.mxu0 %v5635
        %5654 = vmatmul.bf16.gmra.mxu0 %v5623
        %v5655 = vpop.f32.mrf.mxu0
        %v5656 = vadd.f32 0.0, %v5655
        %v5657 = vpop.f32.mrf.mxu0
        %v5658 = vadd.f32 0.0, %v5657
        %5659 = vmatmul.bf16.gmra.mxu0 %v5626
        %v5660 = vpop.f32.mrf.mxu0
        %v5661 = vadd.f32 0.0, %v5660
        %v5662 = vpop.f32.mrf.mxu0
        %v5663 = vadd.f32 0.0, %v5662
        %5664 = vmatmul.bf16.gmra.mxu0 %v5629
        %v5665 = vpop.f32.mrf.mxu0
        %v5666 = vadd.f32 0.0, %v5665
        %v5667 = vpop.f32.mrf.mxu0
        %v5668 = vadd.f32 0.0, %v5667
        %5669 = vmatmul.bf16.gmra.mxu0 %v5632
        %v5670 = vpop.f32.mrf.mxu0
        %v5671 = vadd.f32 0.0, %v5670
        %v5672 = vpop.f32.mrf.mxu0
        %v5673 = vadd.f32 0.0, %v5672
        %5674 = vdwg.mxu0
        %v5675 = vsel %vm2766, %v5377, -inf
        %5676 = vmax.xlane.f32.xlu0 %v5675
        %v5677 = vpop.xlane.xlu0 %5676
        %v5678 = vsel %vm2766, %v5379, -inf
        %5679 = vmax.xlane.f32.xlu0 %v5678
        %v5680 = vpop.xlane.xlu0 %5679
        %v5681 = vsel %vm2766, %v5382, -inf
        %5682 = vmax.xlane.f32.xlu0 %v5681
        %v5683 = vpop.xlane.xlu0 %5682
        %v5684 = vsel %vm2766, %v5384, -inf
        %5685 = vmax.xlane.f32.xlu0 %v5684
        %v5686 = vpop.xlane.xlu0 %5685
        %v5687 = vsel %vm2766, %v5387, -inf
        %5688 = vmax.xlane.f32.xlu0 %v5687
        %v5689 = vpop.xlane.xlu0 %5688
        %v5690 = vsel %vm2766, %v5389, -inf
        %5691 = vmax.xlane.f32.xlu0 %v5690
        %v5692 = vpop.xlane.xlu0 %5691
        %v5693 = vsel %vm2766, %v5392, -inf
        %5694 = vmax.xlane.f32.xlu0 %v5693
        %v5695 = vpop.xlane.xlu0 %5694
        %v5696 = vsel %vm2766, %v5394, -inf
        %5697 = vmax.xlane.f32.xlu0 %v5696
        %v5698 = vpop.xlane.xlu0 %5697
        %v5699 = vsel %vm2766, %v5470, -inf
        %5700 = vmax.xlane.f32.xlu0 %v5699
        %v5701 = vpop.xlane.xlu0 %5700
        %v5702 = vsel %vm2766, %v5472, -inf
        %5703 = vmax.xlane.f32.xlu0 %v5702
        %v5704 = vpop.xlane.xlu0 %5703
        %v5705 = vsel %vm2766, %v5475, -inf
        %5706 = vmax.xlane.f32.xlu0 %v5705
        %v5707 = vpop.xlane.xlu0 %5706
        %v5708 = vsel %vm2766, %v5477, -inf
        %5709 = vmax.xlane.f32.xlu0 %v5708
        %v5710 = vpop.xlane.xlu0 %5709
        %v5711 = vsel %vm2766, %v5480, -inf
        %5712 = vmax.xlane.f32.xlu0 %v5711
        %v5713 = vpop.xlane.xlu0 %5712
        %v5714 = vsel %vm2766, %v5482, -inf
        %5715 = vmax.xlane.f32.xlu0 %v5714
        %v5716 = vpop.xlane.xlu0 %5715
        %v5717 = vsel %vm2766, %v5485, -inf
        %5718 = vmax.xlane.f32.xlu0 %v5717
        %v5719 = vpop.xlane.xlu0 %5718
        %v5720 = vsel %vm2766, %v5487, -inf
        %5721 = vmax.xlane.f32.xlu0 %v5720
        %v5722 = vpop.xlane.xlu0 %5721
        %v5723 = vsel %vm2766, %v5563, -inf
        %5724 = vmax.xlane.f32.xlu0 %v5723
        %v5725 = vpop.xlane.xlu0 %5724
        %v5726 = vsel %vm2766, %v5565, -inf
        %5727 = vmax.xlane.f32.xlu0 %v5726
        %v5728 = vpop.xlane.xlu0 %5727
        %v5729 = vsel %vm2766, %v5568, -inf
        %5730 = vmax.xlane.f32.xlu0 %v5729
        %v5731 = vpop.xlane.xlu0 %5730
        %v5732 = vsel %vm2766, %v5570, -inf
        %5733 = vmax.xlane.f32.xlu0 %v5732
        %v5734 = vpop.xlane.xlu0 %5733
        %v5735 = vsel %vm2766, %v5573, -inf
        %5736 = vmax.xlane.f32.xlu0 %v5735
        %v5737 = vpop.xlane.xlu0 %5736
        %v5738 = vsel %vm2766, %v5575, -inf
        %5739 = vmax.xlane.f32.xlu0 %v5738
        %v5740 = vpop.xlane.xlu0 %5739
        %v5741 = vsel %vm2766, %v5578, -inf
        %5742 = vmax.xlane.f32.xlu0 %v5741
        %v5743 = vpop.xlane.xlu0 %5742
        %v5744 = vsel %vm2766, %v5580, -inf
        %5745 = vmax.xlane.f32.xlu0 %v5744
        %v5746 = vpop.xlane.xlu0 %5745
        %v5747 = vsel %vm2766, %v5656, -inf
        %5748 = vmax.xlane.f32.xlu0 %v5747
        %v5749 = vpop.xlane.xlu0 %5748
        %v5750 = vsel %vm2766, %v5658, -inf
        %5751 = vmax.xlane.f32.xlu0 %v5750
        %v5752 = vpop.xlane.xlu0 %5751
        %v5753 = vsel %vm2766, %v5661, -inf
        %5754 = vmax.xlane.f32.xlu0 %v5753
        %v5755 = vpop.xlane.xlu0 %5754
        %v5756 = vsel %vm2766, %v5663, -inf
        %5757 = vmax.xlane.f32.xlu0 %v5756
        %v5758 = vpop.xlane.xlu0 %5757
        %v5759 = vsel %vm2766, %v5666, -inf
        %5760 = vmax.xlane.f32.xlu0 %v5759
        %v5761 = vpop.xlane.xlu0 %5760
        %v5762 = vsel %vm2766, %v5668, -inf
        %5763 = vmax.xlane.f32.xlu0 %v5762
        %v5764 = vpop.xlane.xlu0 %5763
        %v5765 = vsel %vm2766, %v5671, -inf
        %5766 = vmax.xlane.f32.xlu0 %v5765
        %v5767 = vpop.xlane.xlu0 %5766
        %v5768 = vsel %vm2766, %v5673, -inf
        %5769 = vmax.xlane.f32.xlu0 %v5768
        %v5770 = vpop.xlane.xlu0 %5769
        %v5771 = vsub.f32 %v5377, %v5677
        %v5772 = vsub.f32 %v5379, %v5680
        %v5773 = vsub.f32 %v5382, %v5683
        %v5774 = vsub.f32 %v5384, %v5686
        %v5775 = vsub.f32 %v5387, %v5689
        %v5776 = vsub.f32 %v5389, %v5692
        %v5777 = vsub.f32 %v5392, %v5695
        %v5778 = vsub.f32 %v5394, %v5698
        %v5779 = vsub.f32 %v5470, %v5701
        %v5780 = vsub.f32 %v5472, %v5704
        %v5781 = vsub.f32 %v5475, %v5707
        %v5782 = vsub.f32 %v5477, %v5710
        %v5783 = vsub.f32 %v5480, %v5713
        %v5784 = vsub.f32 %v5482, %v5716
        %v5785 = vsub.f32 %v5485, %v5719
        %v5786 = vsub.f32 %v5487, %v5722
        %v5787 = vsub.f32 %v5563, %v5725
        %v5788 = vsub.f32 %v5565, %v5728
        %v5789 = vsub.f32 %v5568, %v5731
        %v5790 = vsub.f32 %v5570, %v5734
        %v5791 = vsub.f32 %v5573, %v5737
        %v5792 = vsub.f32 %v5575, %v5740
        %v5793 = vsub.f32 %v5578, %v5743
        %v5794 = vsub.f32 %v5580, %v5746
        %v5795 = vsub.f32 %v5656, %v5749
        %v5796 = vsub.f32 %v5658, %v5752
        %v5797 = vsub.f32 %v5661, %v5755
        %v5798 = vsub.f32 %v5663, %v5758
        %v5799 = vsub.f32 %v5666, %v5761
        %v5800 = vsub.f32 %v5668, %v5764
        %v5801 = vsub.f32 %v5671, %v5767
        %v5802 = vsub.f32 %v5673, %v5770
        %v5803 = vmul.f32 %v5771, 1.442695
        %v5804 = vpow.pop %v5803
        %v5805 = vmul.f32 %v5772, 1.442695
        %v5806 = vpow.pop %v5805
        %v5807 = vmul.f32 %v5773, 1.442695
        %v5808 = vpow.pop %v5807
        %v5809 = vmul.f32 %v5774, 1.442695
        %v5810 = vpow.pop %v5809
        %v5811 = vmul.f32 %v5775, 1.442695
        %v5812 = vpow.pop %v5811
        %v5813 = vmul.f32 %v5776, 1.442695
        %v5814 = vpow.pop %v5813
        %v5815 = vmul.f32 %v5777, 1.442695
        %v5816 = vpow.pop %v5815
        %v5817 = vmul.f32 %v5778, 1.442695
        %v5818 = vpow.pop %v5817
        %v5819 = vmul.f32 %v5779, 1.442695
        %v5820 = vpow.pop %v5819
        %v5821 = vmul.f32 %v5780, 1.442695
        %v5822 = vpow.pop %v5821
        %v5823 = vmul.f32 %v5781, 1.442695
        %v5824 = vpow.pop %v5823
        %v5825 = vmul.f32 %v5782, 1.442695
        %v5826 = vpow.pop %v5825
        %v5827 = vmul.f32 %v5783, 1.442695
        %v5828 = vpow.pop %v5827
        %v5829 = vmul.f32 %v5784, 1.442695
        %v5830 = vpow.pop %v5829
        %v5831 = vmul.f32 %v5785, 1.442695
        %v5832 = vpow.pop %v5831
        %v5833 = vmul.f32 %v5786, 1.442695
        %v5834 = vpow.pop %v5833
        %v5835 = vmul.f32 %v5787, 1.442695
        %v5836 = vpow.pop %v5835
        %v5837 = vmul.f32 %v5788, 1.442695
        %v5838 = vpow.pop %v5837
        %v5839 = vmul.f32 %v5789, 1.442695
        %v5840 = vpow.pop %v5839
        %v5841 = vmul.f32 %v5790, 1.442695
        %v5842 = vpow.pop %v5841
        %v5843 = vmul.f32 %v5791, 1.442695
        %v5844 = vpow.pop %v5843
        %v5845 = vmul.f32 %v5792, 1.442695
        %v5846 = vpow.pop %v5845
        %v5847 = vmul.f32 %v5793, 1.442695
        %v5848 = vpow.pop %v5847
        %v5849 = vmul.f32 %v5794, 1.442695
        %v5850 = vpow.pop %v5849
        %v5851 = vmul.f32 %v5795, 1.442695
        %v5852 = vpow.pop %v5851
        %v5853 = vmul.f32 %v5796, 1.442695
        %v5854 = vpow.pop %v5853
        %v5855 = vmul.f32 %v5797, 1.442695
        %v5856 = vpow.pop %v5855
        %v5857 = vmul.f32 %v5798, 1.442695
        %v5858 = vpow.pop %v5857
        %v5859 = vmul.f32 %v5799, 1.442695
        %v5860 = vpow.pop %v5859
        %v5861 = vmul.f32 %v5800, 1.442695
        %v5862 = vpow.pop %v5861
        %v5863 = vmul.f32 %v5801, 1.442695
        %v5864 = vpow.pop %v5863
        %v5865 = vmul.f32 %v5802, 1.442695
        %v5866 = vpow.pop %v5865
        %v5867 = vsel %vm2766, %v5804, 0.0
        %5868 = vadd.xlane.f32.xlu0 %v5867
        %v5869 = vpop.xlane.xlu0 %5868
        %v5870 = vsel %vm2766, %v5806, 0.0
        %5871 = vadd.xlane.f32.xlu0 %v5870
        %v5872 = vpop.xlane.xlu0 %5871
        %v5873 = vsel %vm2766, %v5808, 0.0
        %5874 = vadd.xlane.f32.xlu0 %v5873
        %v5875 = vpop.xlane.xlu0 %5874
        %v5876 = vsel %vm2766, %v5810, 0.0
        %5877 = vadd.xlane.f32.xlu0 %v5876
        %v5878 = vpop.xlane.xlu0 %5877
        %v5879 = vsel %vm2766, %v5812, 0.0
        %5880 = vadd.xlane.f32.xlu0 %v5879
        %v5881 = vpop.xlane.xlu0 %5880
        %v5882 = vsel %vm2766, %v5814, 0.0
        %5883 = vadd.xlane.f32.xlu0 %v5882
        %v5884 = vpop.xlane.xlu0 %5883
        %v5885 = vsel %vm2766, %v5816, 0.0
        %5886 = vadd.xlane.f32.xlu0 %v5885
        %v5887 = vpop.xlane.xlu0 %5886
        %v5888 = vsel %vm2766, %v5818, 0.0
        %5889 = vadd.xlane.f32.xlu0 %v5888
        %v5890 = vpop.xlane.xlu0 %5889
        %v5891 = vsel %vm2766, %v5820, 0.0
        %5892 = vadd.xlane.f32.xlu0 %v5891
        %v5893 = vpop.xlane.xlu0 %5892
        %v5894 = vsel %vm2766, %v5822, 0.0
        %5895 = vadd.xlane.f32.xlu0 %v5894
        %v5896 = vpop.xlane.xlu0 %5895
        %v5897 = vsel %vm2766, %v5824, 0.0
        %5898 = vadd.xlane.f32.xlu0 %v5897
        %v5899 = vpop.xlane.xlu0 %5898
        %v5900 = vsel %vm2766, %v5826, 0.0
        %5901 = vadd.xlane.f32.xlu0 %v5900
        %v5902 = vpop.xlane.xlu0 %5901
        %v5903 = vsel %vm2766, %v5828, 0.0
        %5904 = vadd.xlane.f32.xlu0 %v5903
        %v5905 = vpop.xlane.xlu0 %5904
        %v5906 = vsel %vm2766, %v5830, 0.0
        %5907 = vadd.xlane.f32.xlu0 %v5906
        %v5908 = vpop.xlane.xlu0 %5907
        %v5909 = vsel %vm2766, %v5832, 0.0
        %5910 = vadd.xlane.f32.xlu0 %v5909
        %v5911 = vpop.xlane.xlu0 %5910
        %v5912 = vsel %vm2766, %v5834, 0.0
        %5913 = vadd.xlane.f32.xlu0 %v5912
        %v5914 = vpop.xlane.xlu0 %5913
        %v5915 = vsel %vm2766, %v5836, 0.0
        %5916 = vadd.xlane.f32.xlu0 %v5915
        %v5917 = vpop.xlane.xlu0 %5916
        %v5918 = vsel %vm2766, %v5838, 0.0
        %5919 = vadd.xlane.f32.xlu0 %v5918
        %v5920 = vpop.xlane.xlu0 %5919
        %v5921 = vsel %vm2766, %v5840, 0.0
        %5922 = vadd.xlane.f32.xlu0 %v5921
        %v5923 = vpop.xlane.xlu0 %5922
        %v5924 = vsel %vm2766, %v5842, 0.0
        %5925 = vadd.xlane.f32.xlu0 %v5924
        %v5926 = vpop.xlane.xlu0 %5925
        %v5927 = vsel %vm2766, %v5844, 0.0
        %5928 = vadd.xlane.f32.xlu0 %v5927
        %v5929 = vpop.xlane.xlu0 %5928
        %v5930 = vsel %vm2766, %v5846, 0.0
        %5931 = vadd.xlane.f32.xlu0 %v5930
        %v5932 = vpop.xlane.xlu0 %5931
        %v5933 = vsel %vm2766, %v5848, 0.0
        %5934 = vadd.xlane.f32.xlu0 %v5933
        %v5935 = vpop.xlane.xlu0 %5934
        %v5936 = vsel %vm2766, %v5850, 0.0
        %5937 = vadd.xlane.f32.xlu0 %v5936
        %v5938 = vpop.xlane.xlu0 %5937
        %v5939 = vsel %vm2766, %v5852, 0.0
        %5940 = vadd.xlane.f32.xlu0 %v5939
        %v5941 = vpop.xlane.xlu0 %5940
        %v5942 = vsel %vm2766, %v5854, 0.0
        %5943 = vadd.xlane.f32.xlu0 %v5942
        %v5944 = vpop.xlane.xlu0 %5943
        %v5945 = vsel %vm2766, %v5856, 0.0
        %5946 = vadd.xlane.f32.xlu0 %v5945
        %v5947 = vpop.xlane.xlu0 %5946
        %v5948 = vsel %vm2766, %v5858, 0.0
        %5949 = vadd.xlane.f32.xlu0 %v5948
        %v5950 = vpop.xlane.xlu0 %5949
        %v5951 = vsel %vm2766, %v5860, 0.0
        %5952 = vadd.xlane.f32.xlu0 %v5951
        %v5953 = vpop.xlane.xlu0 %5952
        %v5954 = vsel %vm2766, %v5862, 0.0
        %5955 = vadd.xlane.f32.xlu0 %v5954
        %v5956 = vpop.xlane.xlu0 %5955
        %v5957 = vsel %vm2766, %v5864, 0.0
        %5958 = vadd.xlane.f32.xlu0 %v5957
        %v5959 = vpop.xlane.xlu0 %5958
        %v5960 = vsel %vm2766, %v5866, 0.0
        %5961 = vadd.xlane.f32.xlu0 %v5960
        %v5962 = vpop.xlane.xlu0 %5961
        %v5963 = vpack.c.bf16 %v5804, %v5804
        %v5964 = vpack.c.bf16 %v5806, %v5806
        %v5965 = vpack.c.bf16 %v5808, %v5808
        %v5966 = vpack.c.bf16 %v5810, %v5810
        %v5967 = vpack.c.bf16 %v5812, %v5812
        %v5968 = vpack.c.bf16 %v5814, %v5814
        %v5969 = vpack.c.bf16 %v5816, %v5816
        %v5970 = vpack.c.bf16 %v5818, %v5818
        %v5971 = vpack.c.bf16 %v5820, %v5820
        %v5972 = vpack.c.bf16 %v5822, %v5822
        %v5973 = vpack.c.bf16 %v5824, %v5824
        %v5974 = vpack.c.bf16 %v5826, %v5826
        %v5975 = vpack.c.bf16 %v5828, %v5828
        %v5976 = vpack.c.bf16 %v5830, %v5830
        %v5977 = vpack.c.bf16 %v5832, %v5832
        %v5978 = vpack.c.bf16 %v5834, %v5834
        %v5979 = vpack.c.bf16 %v5836, %v5836
        %v5980 = vpack.c.bf16 %v5838, %v5838
        %v5981 = vpack.c.bf16 %v5840, %v5840
        %v5982 = vpack.c.bf16 %v5842, %v5842
        %v5983 = vpack.c.bf16 %v5844, %v5844
        %v5984 = vpack.c.bf16 %v5846, %v5846
        %v5985 = vpack.c.bf16 %v5848, %v5848
        %v5986 = vpack.c.bf16 %v5850, %v5850
        %v5987 = vpack.c.bf16 %v5852, %v5852
        %v5988 = vpack.c.bf16 %v5854, %v5854
        %v5989 = vpack.c.bf16 %v5856, %v5856
        %v5990 = vpack.c.bf16 %v5858, %v5858
        %v5991 = vpack.c.bf16 %v5860, %v5860
        %v5992 = vpack.c.bf16 %v5862, %v5862
        %v5993 = vpack.c.bf16 %v5864, %v5864
        %v5994 = vpack.c.bf16 %v5866, %v5866
        %v5995 = vpack.c.bf16 %v4989, %v4989
        %v5996 = vpack.c.bf16 %v4991, %v4991
        %v5997 = vpack.c.bf16 %v4994, %v4994
        %v5998 = vpack.c.bf16 %v4996, %v4996
        %v5999 = vpack.c.bf16 %v4999, %v4999
        %v6000 = vpack.c.bf16 %v5001, %v5001
        %v6001 = vpack.c.bf16 %v5004, %v5004
        %v6002 = vpack.c.bf16 %v5006, %v5006
        %v6003 = vpack.c.bf16 %v5066, %v5066
        %v6004 = vpack.c.bf16 %v5068, %v5068
        %v6005 = vpack.c.bf16 %v5071, %v5071
        %v6006 = vpack.c.bf16 %v5073, %v5073
        %v6007 = vpack.c.bf16 %v5076, %v5076
        %v6008 = vpack.c.bf16 %v5078, %v5078
        %v6009 = vpack.c.bf16 %v5081, %v5081
        %v6010 = vpack.c.bf16 %v5083, %v5083
        %v6011 = vpack.c.bf16 %v5143, %v5143
        %v6012 = vpack.c.bf16 %v5145, %v5145
        %v6013 = vpack.c.bf16 %v5148, %v5148
        %v6014 = vpack.c.bf16 %v5150, %v5150
        %v6015 = vpack.c.bf16 %v5153, %v5153
        %v6016 = vpack.c.bf16 %v5155, %v5155
        %v6017 = vpack.c.bf16 %v5158, %v5158
        %v6018 = vpack.c.bf16 %v5160, %v5160
        %v6019 = vpack.c.bf16 %v5220, %v5220
        %v6020 = vpack.c.bf16 %v5222, %v5222
        %v6021 = vpack.c.bf16 %v5225, %v5225
        %v6022 = vpack.c.bf16 %v5227, %v5227
        %v6023 = vpack.c.bf16 %v5230, %v5230
        %v6024 = vpack.c.bf16 %v5232, %v5232
        %v6025 = vpack.c.bf16 %v5235, %v5235
        %v6026 = vpack.c.bf16 %v5237, %v5237
        %v6035 = vunpack.c.l.b16 %v5963
        %v6036 = vunpack.c.l.b16 %v5964
        %v6037 = vunpack.c.l.b16 %v5965
        %v6038 = vunpack.c.l.b16 %v5966
        %v6039 = vunpack.c.l.b16 %v5967
        %v6040 = vunpack.c.l.b16 %v5968
        %v6041 = vunpack.c.l.b16 %v5969
        %v6042 = vunpack.c.l.b16 %v5970
        %v6043 = vpack.c.b16 %v6036, %v6035
        %v6044 = vpack.c.b16 %v6038, %v6037
        %v6045 = vpack.c.b16 %v6040, %v6039
        %v6046 = vpack.c.b16 %v6042, %v6041
        %v6055 = vunpack.c.l.b16 %v5995
        %v6056 = vunpack.c.l.b16 %v5996
        %v6057 = vunpack.c.l.b16 %v5997
        %v6058 = vunpack.c.l.b16 %v5998
        %v6059 = vunpack.c.l.b16 %v5999
        %v6060 = vunpack.c.l.b16 %v6000
        %v6061 = vunpack.c.l.b16 %v6001
        %v6062 = vunpack.c.l.b16 %v6002
        %v6063 = vpack.c.b16 %v6056, %v6055
        %v6064 = vpack.c.b16 %v6058, %v6057
        %v6065 = vpack.c.b16 %v6060, %v6059
        %v6066 = vpack.c.b16 %v6062, %v6061
        %v6072 = vsel %vm2766, %v6043, 0
        %v6075 = vsel %vm2766, %v6044, 0
        %v6078 = vsel %vm2766, %v6045, 0
        %v6081 = vsel %vm2766, %v6046, 0
        %6083 = vmatpush.bf16.msra.mxu0 0
        %6084 = vmatpush.bf16.msra.mxu0 0
        %6085 = vmatpush.bf16.msra.mxu0 0
        %6086 = vmatpush.bf16.msra.mxu0 0
        %6087 = vmatpush.bf16.msra.mxu0 %v6066
        %6088 = vmatpush.bf16.msra.mxu0 %v6065
        %6089 = vmatpush.bf16.msra.mxu0 %v6064
        %6090 = vmatpush.bf16.msra.mxu0 %v6063
        %6091 = vmatmul.bf16.gmra.mxu0 %v6072
        %v6092 = vpop.f32.mrf.mxu0
        %v6093 = vadd.f32 0.0, %v6092
        %v6094 = vpop.f32.mrf.mxu0
        %v6095 = vadd.f32 0.0, %v6094
        %6096 = vmatmul.bf16.gmra.mxu0 %v6075
        %v6097 = vpop.f32.mrf.mxu0
        %v6098 = vadd.f32 0.0, %v6097
        %v6099 = vpop.f32.mrf.mxu0
        %v6100 = vadd.f32 0.0, %v6099
        %6101 = vmatmul.bf16.gmra.mxu0 %v6078
        %v6102 = vpop.f32.mrf.mxu0
        %v6103 = vadd.f32 0.0, %v6102
        %v6104 = vpop.f32.mrf.mxu0
        %v6105 = vadd.f32 0.0, %v6104
        %6106 = vmatmul.bf16.gmra.mxu0 %v6081
        %v6107 = vpop.f32.mrf.mxu0
        %v6108 = vadd.f32 0.0, %v6107
        %v6109 = vpop.f32.mrf.mxu0
        %v6110 = vadd.f32 0.0, %v6109
        %6111 = vdwg.mxu0
        %v6120 = vunpack.c.l.b16 %v5971
        %v6121 = vunpack.c.l.b16 %v5972
        %v6122 = vunpack.c.l.b16 %v5973
        %v6123 = vunpack.c.l.b16 %v5974
        %v6124 = vunpack.c.l.b16 %v5975
        %v6125 = vunpack.c.l.b16 %v5976
        %v6126 = vunpack.c.l.b16 %v5977
        %v6127 = vunpack.c.l.b16 %v5978
        %v6128 = vpack.c.b16 %v6121, %v6120
        %v6129 = vpack.c.b16 %v6123, %v6122
        %v6130 = vpack.c.b16 %v6125, %v6124
        %v6131 = vpack.c.b16 %v6127, %v6126
        %v6140 = vunpack.c.l.b16 %v6003
        %v6141 = vunpack.c.l.b16 %v6004
        %v6142 = vunpack.c.l.b16 %v6005
        %v6143 = vunpack.c.l.b16 %v6006
        %v6144 = vunpack.c.l.b16 %v6007
        %v6145 = vunpack.c.l.b16 %v6008
        %v6146 = vunpack.c.l.b16 %v6009
        %v6147 = vunpack.c.l.b16 %v6010
        %v6148 = vpack.c.b16 %v6141, %v6140
        %v6149 = vpack.c.b16 %v6143, %v6142
        %v6150 = vpack.c.b16 %v6145, %v6144
        %v6151 = vpack.c.b16 %v6147, %v6146
        %v6157 = vsel %vm2766, %v6128, 0
        %v6160 = vsel %vm2766, %v6129, 0
        %v6163 = vsel %vm2766, %v6130, 0
        %v6166 = vsel %vm2766, %v6131, 0
        %6168 = vmatpush.bf16.msra.mxu0 0
        %6169 = vmatpush.bf16.msra.mxu0 0
        %6170 = vmatpush.bf16.msra.mxu0 0
        %6171 = vmatpush.bf16.msra.mxu0 0
        %6172 = vmatpush.bf16.msra.mxu0 %v6151
        %6173 = vmatpush.bf16.msra.mxu0 %v6150
        %6174 = vmatpush.bf16.msra.mxu0 %v6149
        %6175 = vmatpush.bf16.msra.mxu0 %v6148
        %6176 = vmatmul.bf16.gmra.mxu0 %v6157
        %v6177 = vpop.f32.mrf.mxu0
        %v6178 = vadd.f32 0.0, %v6177
        %v6179 = vpop.f32.mrf.mxu0
        %v6180 = vadd.f32 0.0, %v6179
        %6181 = vmatmul.bf16.gmra.mxu0 %v6160
        %v6182 = vpop.f32.mrf.mxu0
        %v6183 = vadd.f32 0.0, %v6182
        %v6184 = vpop.f32.mrf.mxu0
        %v6185 = vadd.f32 0.0, %v6184
        %6186 = vmatmul.bf16.gmra.mxu0 %v6163
        %v6187 = vpop.f32.mrf.mxu0
        %v6188 = vadd.f32 0.0, %v6187
        %v6189 = vpop.f32.mrf.mxu0
        %v6190 = vadd.f32 0.0, %v6189
        %6191 = vmatmul.bf16.gmra.mxu0 %v6166
        %v6192 = vpop.f32.mrf.mxu0
        %v6193 = vadd.f32 0.0, %v6192
        %v6194 = vpop.f32.mrf.mxu0
        %v6195 = vadd.f32 0.0, %v6194
        %6196 = vdwg.mxu0
        %v6205 = vunpack.c.l.b16 %v5979
        %v6206 = vunpack.c.l.b16 %v5980
        %v6207 = vunpack.c.l.b16 %v5981
        %v6208 = vunpack.c.l.b16 %v5982
        %v6209 = vunpack.c.l.b16 %v5983
        %v6210 = vunpack.c.l.b16 %v5984
        %v6211 = vunpack.c.l.b16 %v5985
        %v6212 = vunpack.c.l.b16 %v5986
        %v6213 = vpack.c.b16 %v6206, %v6205
        %v6214 = vpack.c.b16 %v6208, %v6207
        %v6215 = vpack.c.b16 %v6210, %v6209
        %v6216 = vpack.c.b16 %v6212, %v6211
        %v6225 = vunpack.c.l.b16 %v6011
        %v6226 = vunpack.c.l.b16 %v6012
        %v6227 = vunpack.c.l.b16 %v6013
        %v6228 = vunpack.c.l.b16 %v6014
        %v6229 = vunpack.c.l.b16 %v6015
        %v6230 = vunpack.c.l.b16 %v6016
        %v6231 = vunpack.c.l.b16 %v6017
        %v6232 = vunpack.c.l.b16 %v6018
        %v6233 = vpack.c.b16 %v6226, %v6225
        %v6234 = vpack.c.b16 %v6228, %v6227
        %v6235 = vpack.c.b16 %v6230, %v6229
        %v6236 = vpack.c.b16 %v6232, %v6231
        %v6242 = vsel %vm2766, %v6213, 0
        %v6245 = vsel %vm2766, %v6214, 0
        %v6248 = vsel %vm2766, %v6215, 0
        %v6251 = vsel %vm2766, %v6216, 0
        %6253 = vmatpush.bf16.msra.mxu0 0
        %6254 = vmatpush.bf16.msra.mxu0 0
        %6255 = vmatpush.bf16.msra.mxu0 0
        %6256 = vmatpush.bf16.msra.mxu0 0
        %6257 = vmatpush.bf16.msra.mxu0 %v6236
        %6258 = vmatpush.bf16.msra.mxu0 %v6235
        %6259 = vmatpush.bf16.msra.mxu0 %v6234
        %6260 = vmatpush.bf16.msra.mxu0 %v6233
        %6261 = vmatmul.bf16.gmra.mxu0 %v6242
        %v6262 = vpop.f32.mrf.mxu0
        %v6263 = vadd.f32 0.0, %v6262
        %v6264 = vpop.f32.mrf.mxu0
        %v6265 = vadd.f32 0.0, %v6264
        %6266 = vmatmul.bf16.gmra.mxu0 %v6245
        %v6267 = vpop.f32.mrf.mxu0
        %v6268 = vadd.f32 0.0, %v6267
        %v6269 = vpop.f32.mrf.mxu0
        %v6270 = vadd.f32 0.0, %v6269
        %6271 = vmatmul.bf16.gmra.mxu0 %v6248
        %v6272 = vpop.f32.mrf.mxu0
        %v6273 = vadd.f32 0.0, %v6272
        %v6274 = vpop.f32.mrf.mxu0
        %v6275 = vadd.f32 0.0, %v6274
        %6276 = vmatmul.bf16.gmra.mxu0 %v6251
        %v6277 = vpop.f32.mrf.mxu0
        %v6278 = vadd.f32 0.0, %v6277
        %v6279 = vpop.f32.mrf.mxu0
        %v6280 = vadd.f32 0.0, %v6279
        %6281 = vdwg.mxu0
        %v6290 = vunpack.c.l.b16 %v5987
        %v6291 = vunpack.c.l.b16 %v5988
        %v6292 = vunpack.c.l.b16 %v5989
        %v6293 = vunpack.c.l.b16 %v5990
        %v6294 = vunpack.c.l.b16 %v5991
        %v6295 = vunpack.c.l.b16 %v5992
        %v6296 = vunpack.c.l.b16 %v5993
        %v6297 = vunpack.c.l.b16 %v5994
        %v6298 = vpack.c.b16 %v6291, %v6290
        %v6299 = vpack.c.b16 %v6293, %v6292
        %v6300 = vpack.c.b16 %v6295, %v6294
        %v6301 = vpack.c.b16 %v6297, %v6296
        %v6310 = vunpack.c.l.b16 %v6019
        %v6311 = vunpack.c.l.b16 %v6020
        %v6312 = vunpack.c.l.b16 %v6021
        %v6313 = vunpack.c.l.b16 %v6022
        %v6314 = vunpack.c.l.b16 %v6023
        %v6315 = vunpack.c.l.b16 %v6024
        %v6316 = vunpack.c.l.b16 %v6025
        %v6317 = vunpack.c.l.b16 %v6026
        %v6318 = vpack.c.b16 %v6311, %v6310
        %v6319 = vpack.c.b16 %v6313, %v6312
        %v6320 = vpack.c.b16 %v6315, %v6314
        %v6321 = vpack.c.b16 %v6317, %v6316
        %v6327 = vsel %vm2766, %v6298, 0
        %v6330 = vsel %vm2766, %v6299, 0
        %v6333 = vsel %vm2766, %v6300, 0
        %v6336 = vsel %vm2766, %v6301, 0
        %6338 = vmatpush.bf16.msra.mxu0 0
        %6339 = vmatpush.bf16.msra.mxu0 0
        %6340 = vmatpush.bf16.msra.mxu0 0
        %6341 = vmatpush.bf16.msra.mxu0 0
        %6342 = vmatpush.bf16.msra.mxu0 %v6321
        %6343 = vmatpush.bf16.msra.mxu0 %v6320
        %6344 = vmatpush.bf16.msra.mxu0 %v6319
        %6345 = vmatpush.bf16.msra.mxu0 %v6318
        %6346 = vmatmul.bf16.gmra.mxu0 %v6327
        %v6347 = vpop.f32.mrf.mxu0
        %v6348 = vadd.f32 0.0, %v6347
        %v6349 = vpop.f32.mrf.mxu0
        %v6350 = vadd.f32 0.0, %v6349
        %6351 = vmatmul.bf16.gmra.mxu0 %v6330
        %v6352 = vpop.f32.mrf.mxu0
        %v6353 = vadd.f32 0.0, %v6352
        %v6354 = vpop.f32.mrf.mxu0
        %v6355 = vadd.f32 0.0, %v6354
        %6356 = vmatmul.bf16.gmra.mxu0 %v6333
        %v6357 = vpop.f32.mrf.mxu0
        %v6358 = vadd.f32 0.0, %v6357
        %v6359 = vpop.f32.mrf.mxu0
        %v6360 = vadd.f32 0.0, %v6359
        %6361 = vmatmul.bf16.gmra.mxu0 %v6336
        %v6362 = vpop.f32.mrf.mxu0
        %v6363 = vadd.f32 0.0, %v6362
        %v6364 = vpop.f32.mrf.mxu0
        %v6365 = vadd.f32 0.0, %v6364
        %6366 = vdwg.mxu0
        %v6367 = vrcp.pop %v5869
        %v6368 = vrcp.pop %v5872
        %v6369 = vrcp.pop %v5875
        %v6370 = vrcp.pop %v5878
        %v6371 = vrcp.pop %v5881
        %v6372 = vrcp.pop %v5884
        %v6373 = vrcp.pop %v5887
        %v6374 = vrcp.pop %v5890
        %v6375 = vrcp.pop %v5893
        %v6376 = vrcp.pop %v5896
        %v6377 = vrcp.pop %v5899
        %v6378 = vrcp.pop %v5902
        %v6379 = vrcp.pop %v5905
        %v6380 = vrcp.pop %v5908
        %v6381 = vrcp.pop %v5911
        %v6382 = vrcp.pop %v5914
        %v6383 = vrcp.pop %v5917
        %v6384 = vrcp.pop %v5920
        %v6385 = vrcp.pop %v5923
        %v6386 = vrcp.pop %v5926
        %v6387 = vrcp.pop %v5929
        %v6388 = vrcp.pop %v5932
        %v6389 = vrcp.pop %v5935
        %v6390 = vrcp.pop %v5938
        %v6391 = vrcp.pop %v5941
        %v6392 = vrcp.pop %v5944
        %v6393 = vrcp.pop %v5947
        %v6394 = vrcp.pop %v5950
        %v6395 = vrcp.pop %v5953
        %v6396 = vrcp.pop %v5956
        %v6397 = vrcp.pop %v5959
        %v6398 = vrcp.pop %v5962
        %v6399 = vmul.f32 %v6093, %v6367
        %v6400 = vmul.f32 %v6095, %v6368
        %v6401 = vmul.f32 %v6098, %v6369
        %v6402 = vmul.f32 %v6100, %v6370
        %v6403 = vmul.f32 %v6103, %v6371
        %v6404 = vmul.f32 %v6105, %v6372
        %v6405 = vmul.f32 %v6108, %v6373
        %v6406 = vmul.f32 %v6110, %v6374
        %v6407 = vmul.f32 %v6178, %v6375
        %v6408 = vmul.f32 %v6180, %v6376
        %v6409 = vmul.f32 %v6183, %v6377
        %v6410 = vmul.f32 %v6185, %v6378
        %v6411 = vmul.f32 %v6188, %v6379
        %v6412 = vmul.f32 %v6190, %v6380
        %v6413 = vmul.f32 %v6193, %v6381
        %v6414 = vmul.f32 %v6195, %v6382
        %v6415 = vmul.f32 %v6263, %v6383
        %v6416 = vmul.f32 %v6265, %v6384
        %v6417 = vmul.f32 %v6268, %v6385
        %v6418 = vmul.f32 %v6270, %v6386
        %v6419 = vmul.f32 %v6273, %v6387
        %v6420 = vmul.f32 %v6275, %v6388
        %v6421 = vmul.f32 %v6278, %v6389
        %v6422 = vmul.f32 %v6280, %v6390
        %v6423 = vmul.f32 %v6348, %v6391
        %v6424 = vmul.f32 %v6350, %v6392
        %v6425 = vmul.f32 %v6353, %v6393
        %v6426 = vmul.f32 %v6355, %v6394
        %v6427 = vmul.f32 %v6358, %v6395
        %v6428 = vmul.f32 %v6360, %v6396
        %v6429 = vmul.f32 %v6363, %v6397
        %v6430 = vmul.f32 %v6365, %v6398
        %v6431 = vpack.c.bf16 %v6399, %v6399
        %v6432 = vpack.c.bf16 %v6400, %v6400
        %v6433 = vpack.c.bf16 %v6401, %v6401
        %v6434 = vpack.c.bf16 %v6402, %v6402
        %v6435 = vpack.c.bf16 %v6403, %v6403
        %v6436 = vpack.c.bf16 %v6404, %v6404
        %v6437 = vpack.c.bf16 %v6405, %v6405
        %v6438 = vpack.c.bf16 %v6406, %v6406
        %v6439 = vpack.c.bf16 %v6407, %v6407
        %v6440 = vpack.c.bf16 %v6408, %v6408
        %v6441 = vpack.c.bf16 %v6409, %v6409
        %v6442 = vpack.c.bf16 %v6410, %v6410
        %v6443 = vpack.c.bf16 %v6411, %v6411
        %v6444 = vpack.c.bf16 %v6412, %v6412
        %v6445 = vpack.c.bf16 %v6413, %v6413
        %v6446 = vpack.c.bf16 %v6414, %v6414
        %v6447 = vpack.c.bf16 %v6415, %v6415
        %v6448 = vpack.c.bf16 %v6416, %v6416
        %v6449 = vpack.c.bf16 %v6417, %v6417
        %v6450 = vpack.c.bf16 %v6418, %v6418
        %v6451 = vpack.c.bf16 %v6419, %v6419
        %v6452 = vpack.c.bf16 %v6420, %v6420
        %v6453 = vpack.c.bf16 %v6421, %v6421
        %v6454 = vpack.c.bf16 %v6422, %v6422
        %v6455 = vpack.c.bf16 %v6423, %v6423
        %v6456 = vpack.c.bf16 %v6424, %v6424
        %v6457 = vpack.c.bf16 %v6425, %v6425
        %v6458 = vpack.c.bf16 %v6426, %v6426
        %v6459 = vpack.c.bf16 %v6427, %v6427
        %v6460 = vpack.c.bf16 %v6428, %v6428
        %v6461 = vpack.c.bf16 %v6429, %v6429
        %v6462 = vpack.c.bf16 %v6430, %v6430
        %v6471 = vunpack.c.l.b16 %v6431
        %v6472 = vunpack.c.l.b16 %v6432
        %v6473 = vunpack.c.l.b16 %v6433
        %v6474 = vunpack.c.l.b16 %v6434
        %v6475 = vunpack.c.l.b16 %v6435
        %v6476 = vunpack.c.l.b16 %v6436
        %v6477 = vunpack.c.l.b16 %v6437
        %v6478 = vunpack.c.l.b16 %v6438
        %v6479 = vpack.c.b16 %v6472, %v6471
        %v6480 = vpack.c.b16 %v6474, %v6473
        %v6481 = vpack.c.b16 %v6476, %v6475
        %v6482 = vpack.c.b16 %v6478, %v6477
        %v6487 = vunpack.c.l.b16 %v4266
        %v6488 = vunpack.c.l.b16 %v4267
        %v6489 = vunpack.c.l.b16 %v4268
        %v6490 = vunpack.c.l.b16 %v4269
        %v6491 = vpack.c.b16 %v6488, %v6487
        %v6492 = vpack.c.b16 %v6490, %v6489
        %v6496 = vsel %vm2433, %v6479, 0
        %v6499 = vsel %vm2433, %v6480, 0
        %v6502 = vsel %vm2433, %v6481, 0
        %v6505 = vsel %vm2433, %v6482, 0
        %6507 = vmatpush.bf16.msra.mxu0 0
        %6508 = vmatpush.bf16.msra.mxu0 0
        %6509 = vmatpush.bf16.msra.mxu0 0
        %6510 = vmatpush.bf16.msra.mxu0 0
        %6511 = vmatpush.bf16.msra.mxu0 0
        %6512 = vmatpush.bf16.msra.mxu0 0
        %6513 = vmatpush.bf16.msra.mxu0 %v6492
        %6514 = vmatpush.bf16.msra.mxu0 %v6491
        %6515 = vmatmul.bf16.gmra.mxu0 %v6496
        %v6516 = vpop.f32.mrf.mxu0
        %v6517 = vadd.f32 0.0, %v6516
        %v6518 = vpop.f32.mrf.mxu0
        %v6519 = vadd.f32 0.0, %v6518
        %6520 = vmatmul.bf16.gmra.mxu0 %v6499
        %v6521 = vpop.f32.mrf.mxu0
        %v6522 = vadd.f32 0.0, %v6521
        %v6523 = vpop.f32.mrf.mxu0
        %v6524 = vadd.f32 0.0, %v6523
        %6525 = vmatmul.bf16.gmra.mxu0 %v6502
        %v6526 = vpop.f32.mrf.mxu0
        %v6527 = vadd.f32 0.0, %v6526
        %v6528 = vpop.f32.mrf.mxu0
        %v6529 = vadd.f32 0.0, %v6528
        %6530 = vmatmul.bf16.gmra.mxu0 %v6505
        %v6531 = vpop.f32.mrf.mxu0
        %v6532 = vadd.f32 0.0, %v6531
        %v6533 = vpop.f32.mrf.mxu0
        %v6534 = vadd.f32 0.0, %v6533
        %6535 = vdwg.mxu0
        %v6544 = vunpack.c.l.b16 %v6439
        %v6545 = vunpack.c.l.b16 %v6440
        %v6546 = vunpack.c.l.b16 %v6441
        %v6547 = vunpack.c.l.b16 %v6442
        %v6548 = vunpack.c.l.b16 %v6443
        %v6549 = vunpack.c.l.b16 %v6444
        %v6550 = vunpack.c.l.b16 %v6445
        %v6551 = vunpack.c.l.b16 %v6446
        %v6552 = vpack.c.b16 %v6545, %v6544
        %v6553 = vpack.c.b16 %v6547, %v6546
        %v6554 = vpack.c.b16 %v6549, %v6548
        %v6555 = vpack.c.b16 %v6551, %v6550
        %v6560 = vunpack.c.l.b16 %v4270
        %v6561 = vunpack.c.l.b16 %v4271
        %v6562 = vunpack.c.l.b16 %v4272
        %v6563 = vunpack.c.l.b16 %v4273
        %v6564 = vpack.c.b16 %v6561, %v6560
        %v6565 = vpack.c.b16 %v6563, %v6562
        %v6569 = vsel %vm2433, %v6552, 0
        %v6572 = vsel %vm2433, %v6553, 0
        %v6575 = vsel %vm2433, %v6554, 0
        %v6578 = vsel %vm2433, %v6555, 0
        %6580 = vmatpush.bf16.msra.mxu0 0
        %6581 = vmatpush.bf16.msra.mxu0 0
        %6582 = vmatpush.bf16.msra.mxu0 0
        %6583 = vmatpush.bf16.msra.mxu0 0
        %6584 = vmatpush.bf16.msra.mxu0 0
        %6585 = vmatpush.bf16.msra.mxu0 0
        %6586 = vmatpush.bf16.msra.mxu0 %v6565
        %6587 = vmatpush.bf16.msra.mxu0 %v6564
        %6588 = vmatmul.bf16.gmra.mxu0 %v6569
        %v6589 = vpop.f32.mrf.mxu0
        %v6590 = vadd.f32 0.0, %v6589
        %v6591 = vpop.f32.mrf.mxu0
        %v6592 = vadd.f32 0.0, %v6591
        %6593 = vmatmul.bf16.gmra.mxu0 %v6572
        %v6594 = vpop.f32.mrf.mxu0
        %v6595 = vadd.f32 0.0, %v6594
        %v6596 = vpop.f32.mrf.mxu0
        %v6597 = vadd.f32 0.0, %v6596
        %6598 = vmatmul.bf16.gmra.mxu0 %v6575
        %v6599 = vpop.f32.mrf.mxu0
        %v6600 = vadd.f32 0.0, %v6599
        %v6601 = vpop.f32.mrf.mxu0
        %v6602 = vadd.f32 0.0, %v6601
        %6603 = vmatmul.bf16.gmra.mxu0 %v6578
        %v6604 = vpop.f32.mrf.mxu0
        %v6605 = vadd.f32 0.0, %v6604
        %v6606 = vpop.f32.mrf.mxu0
        %v6607 = vadd.f32 0.0, %v6606
        %6608 = vdwg.mxu0
        %v6617 = vunpack.c.l.b16 %v6447
        %v6618 = vunpack.c.l.b16 %v6448
        %v6619 = vunpack.c.l.b16 %v6449
        %v6620 = vunpack.c.l.b16 %v6450
        %v6621 = vunpack.c.l.b16 %v6451
        %v6622 = vunpack.c.l.b16 %v6452
        %v6623 = vunpack.c.l.b16 %v6453
        %v6624 = vunpack.c.l.b16 %v6454
        %v6625 = vpack.c.b16 %v6618, %v6617
        %v6626 = vpack.c.b16 %v6620, %v6619
        %v6627 = vpack.c.b16 %v6622, %v6621
        %v6628 = vpack.c.b16 %v6624, %v6623
        %v6633 = vunpack.c.l.b16 %v4274
        %v6634 = vunpack.c.l.b16 %v4275
        %v6635 = vunpack.c.l.b16 %v4276
        %v6636 = vunpack.c.l.b16 %v4277
        %v6637 = vpack.c.b16 %v6634, %v6633
        %v6638 = vpack.c.b16 %v6636, %v6635
        %v6642 = vsel %vm2433, %v6625, 0
        %v6645 = vsel %vm2433, %v6626, 0
        %v6648 = vsel %vm2433, %v6627, 0
        %v6651 = vsel %vm2433, %v6628, 0
        %6653 = vmatpush.bf16.msra.mxu0 0
        %6654 = vmatpush.bf16.msra.mxu0 0
        %6655 = vmatpush.bf16.msra.mxu0 0
        %6656 = vmatpush.bf16.msra.mxu0 0
        %6657 = vmatpush.bf16.msra.mxu0 0
        %6658 = vmatpush.bf16.msra.mxu0 0
        %6659 = vmatpush.bf16.msra.mxu0 %v6638
        %6660 = vmatpush.bf16.msra.mxu0 %v6637
        %6661 = vmatmul.bf16.gmra.mxu0 %v6642
        %v6662 = vpop.f32.mrf.mxu0
        %v6663 = vadd.f32 0.0, %v6662
        %v6664 = vpop.f32.mrf.mxu0
        %v6665 = vadd.f32 0.0, %v6664
        %6666 = vmatmul.bf16.gmra.mxu0 %v6645
        %v6667 = vpop.f32.mrf.mxu0
        %v6668 = vadd.f32 0.0, %v6667
        %v6669 = vpop.f32.mrf.mxu0
        %v6670 = vadd.f32 0.0, %v6669
        %6671 = vmatmul.bf16.gmra.mxu0 %v6648
        %v6672 = vpop.f32.mrf.mxu0
        %v6673 = vadd.f32 0.0, %v6672
        %v6674 = vpop.f32.mrf.mxu0
        %v6675 = vadd.f32 0.0, %v6674
        %6676 = vmatmul.bf16.gmra.mxu0 %v6651
        %v6677 = vpop.f32.mrf.mxu0
        %v6678 = vadd.f32 0.0, %v6677
        %v6679 = vpop.f32.mrf.mxu0
        %v6680 = vadd.f32 0.0, %v6679
        %6681 = vdwg.mxu0
        %v6690 = vunpack.c.l.b16 %v6455
        %v6691 = vunpack.c.l.b16 %v6456
        %v6692 = vunpack.c.l.b16 %v6457
        %v6693 = vunpack.c.l.b16 %v6458
        %v6694 = vunpack.c.l.b16 %v6459
        %v6695 = vunpack.c.l.b16 %v6460
        %v6696 = vunpack.c.l.b16 %v6461
        %v6697 = vunpack.c.l.b16 %v6462
        %v6698 = vpack.c.b16 %v6691, %v6690
        %v6699 = vpack.c.b16 %v6693, %v6692
        %v6700 = vpack.c.b16 %v6695, %v6694
        %v6701 = vpack.c.b16 %v6697, %v6696
        %v6706 = vunpack.c.l.b16 %v4278
        %v6707 = vunpack.c.l.b16 %v4279
        %v6708 = vunpack.c.l.b16 %v4280
        %v6709 = vunpack.c.l.b16 %v4281
        %v6710 = vpack.c.b16 %v6707, %v6706
        %v6711 = vpack.c.b16 %v6709, %v6708
        %v6715 = vsel %vm2433, %v6698, 0
        %v6718 = vsel %vm2433, %v6699, 0
        %v6721 = vsel %vm2433, %v6700, 0
        %v6724 = vsel %vm2433, %v6701, 0
        %6726 = vmatpush.bf16.msra.mxu0 0
        %6727 = vmatpush.bf16.msra.mxu0 0
        %6728 = vmatpush.bf16.msra.mxu0 0
        %6729 = vmatpush.bf16.msra.mxu0 0
        %6730 = vmatpush.bf16.msra.mxu0 0
        %6731 = vmatpush.bf16.msra.mxu0 0
        %6732 = vmatpush.bf16.msra.mxu0 %v6711
        %6733 = vmatpush.bf16.msra.mxu0 %v6710
        %6734 = vmatmul.bf16.gmra.mxu0 %v6715
        %v6735 = vpop.f32.mrf.mxu0
        %v6736 = vadd.f32 0.0, %v6735
        %v6737 = vpop.f32.mrf.mxu0
        %v6738 = vadd.f32 0.0, %v6737
        %6739 = vmatmul.bf16.gmra.mxu0 %v6718
        %v6740 = vpop.f32.mrf.mxu0
        %v6741 = vadd.f32 0.0, %v6740
        %v6742 = vpop.f32.mrf.mxu0
        %v6743 = vadd.f32 0.0, %v6742
        %6744 = vmatmul.bf16.gmra.mxu0 %v6721
        %v6745 = vpop.f32.mrf.mxu0
        %v6746 = vadd.f32 0.0, %v6745
        %v6747 = vpop.f32.mrf.mxu0
        %v6748 = vadd.f32 0.0, %v6747
        %6749 = vmatmul.bf16.gmra.mxu0 %v6724
        %v6750 = vpop.f32.mrf.mxu0
        %v6751 = vadd.f32 0.0, %v6750
        %v6752 = vpop.f32.mrf.mxu0
        %v6753 = vadd.f32 0.0, %v6752
        %6754 = vdwg.mxu0
        %v6755 = vadd.f32 %v6517, %v6590
        %v6756 = vadd.f32 %v6755, %v6663
        %v6757 = vadd.f32 %v6756, %v6736
        %v6758 = vadd.f32 %v6519, %v6592
        %v6759 = vadd.f32 %v6758, %v6665
        %v6760 = vadd.f32 %v6759, %v6738
        %v6761 = vadd.f32 %v6522, %v6595
        %v6762 = vadd.f32 %v6761, %v6668
        %v6763 = vadd.f32 %v6762, %v6741
        %v6764 = vadd.f32 %v6524, %v6597
        %v6765 = vadd.f32 %v6764, %v6670
        %v6766 = vadd.f32 %v6765, %v6743
        %v6767 = vadd.f32 %v6527, %v6600
        %v6768 = vadd.f32 %v6767, %v6673
        %v6769 = vadd.f32 %v6768, %v6746
        %v6770 = vadd.f32 %v6529, %v6602
        %v6771 = vadd.f32 %v6770, %v6675
        %v6772 = vadd.f32 %v6771, %v6748
        %v6773 = vadd.f32 %v6532, %v6605
        %v6774 = vadd.f32 %v6773, %v6678
        %v6775 = vadd.f32 %v6774, %v6751
        %v6776 = vadd.f32 %v6534, %v6607
        %v6777 = vadd.f32 %v6776, %v6680
        %v6778 = vadd.f32 %v6777, %v6753
        %v6780 = vperm.slane %v4282, 0
        %v6782 = vadd.f32 %v6757, %v6780
        %v6783 = vadd.f32 %v6760, %v6780
        %v6784 = vadd.f32 %v6763, %v6780
        %v6785 = vadd.f32 %v6766, %v6780
        %v6786 = vadd.f32 %v6769, %v6780
        %v6787 = vadd.f32 %v6772, %v6780
        %v6788 = vadd.f32 %v6775, %v6780
        %v6789 = vadd.f32 %v6778, %v6780
        %v6790 = vadd.f32 %v3882, %v6782
        %v6791 = vadd.f32 %v3883, %v6783
        %v6792 = vadd.f32 %v3884, %v6784
        %v6793 = vadd.f32 %v3885, %v6785
        %v6794 = vadd.f32 %v3886, %v6786
        %v6795 = vadd.f32 %v3887, %v6787
        %v6796 = vadd.f32 %v3888, %v6788
        %v6797 = vadd.f32 %v3889, %v6789
        %6798 = vadd.xlane.f32.xlu0 %v6790
        %v6799 = vpop.xlane.xlu0 %6798
        %6800 = vadd.xlane.f32.xlu0 %v6791
        %v6801 = vpop.xlane.xlu0 %6800
        %6802 = vadd.xlane.f32.xlu0 %v6792
        %v6803 = vpop.xlane.xlu0 %6802
        %6804 = vadd.xlane.f32.xlu0 %v6793
        %v6805 = vpop.xlane.xlu0 %6804
        %6806 = vadd.xlane.f32.xlu0 %v6794
        %v6807 = vpop.xlane.xlu0 %6806
        %6808 = vadd.xlane.f32.xlu0 %v6795
        %v6809 = vpop.xlane.xlu0 %6808
        %6810 = vadd.xlane.f32.xlu0 %v6796
        %v6811 = vpop.xlane.xlu0 %6810
        %6812 = vadd.xlane.f32.xlu0 %v6797
        %v6813 = vpop.xlane.xlu0 %6812
        %v6814 = vmul.f32 %v6799, %v997
        %v6815 = vmul.f32 %v6801, %v997
        %v6816 = vmul.f32 %v6803, %v997
        %v6817 = vmul.f32 %v6805, %v997
        %v6818 = vmul.f32 %v6807, %v997
        %v6819 = vmul.f32 %v6809, %v997
        %v6820 = vmul.f32 %v6811, %v997
        %v6821 = vmul.f32 %v6813, %v997
        %v6822 = vsub.f32 %v6790, %v6814
        %v6823 = vsub.f32 %v6791, %v6815
        %v6824 = vsub.f32 %v6792, %v6816
        %v6825 = vsub.f32 %v6793, %v6817
        %v6826 = vsub.f32 %v6794, %v6818
        %v6827 = vsub.f32 %v6795, %v6819
        %v6828 = vsub.f32 %v6796, %v6820
        %v6829 = vsub.f32 %v6797, %v6821
        %v6830 = vmul.f32 %v6822, %v6822
        %v6831 = vmul.f32 %v6823, %v6823
        %v6832 = vmul.f32 %v6824, %v6824
        %v6833 = vmul.f32 %v6825, %v6825
        %v6834 = vmul.f32 %v6826, %v6826
        %v6835 = vmul.f32 %v6827, %v6827
        %v6836 = vmul.f32 %v6828, %v6828
        %v6837 = vmul.f32 %v6829, %v6829
        %6838 = vadd.xlane.f32.xlu0 %v6830
        %v6839 = vpop.xlane.xlu0 %6838
        %6840 = vadd.xlane.f32.xlu0 %v6831
        %v6841 = vpop.xlane.xlu0 %6840
        %6842 = vadd.xlane.f32.xlu0 %v6832
        %v6843 = vpop.xlane.xlu0 %6842
        %6844 = vadd.xlane.f32.xlu0 %v6833
        %v6845 = vpop.xlane.xlu0 %6844
        %6846 = vadd.xlane.f32.xlu0 %v6834
        %v6847 = vpop.xlane.xlu0 %6846
        %6848 = vadd.xlane.f32.xlu0 %v6835
        %v6849 = vpop.xlane.xlu0 %6848
        %6850 = vadd.xlane.f32.xlu0 %v6836
        %v6851 = vpop.xlane.xlu0 %6850
        %6852 = vadd.xlane.f32.xlu0 %v6837
        %v6853 = vpop.xlane.xlu0 %6852
        %v6854 = vmul.f32 %v6839, %v997
        %v6855 = vmul.f32 %v6841, %v997
        %v6856 = vmul.f32 %v6843, %v997
        %v6857 = vmul.f32 %v6845, %v997
        %v6858 = vmul.f32 %v6847, %v997
        %v6859 = vmul.f32 %v6849, %v997
        %v6860 = vmul.f32 %v6851, %v997
        %v6861 = vmul.f32 %v6853, %v997
        %v6862 = vadd.f32 %v6854, 1e-05
        %v6863 = vadd.f32 %v6855, 1e-05
        %v6864 = vadd.f32 %v6856, 1e-05
        %v6865 = vadd.f32 %v6857, 1e-05
        %v6866 = vadd.f32 %v6858, 1e-05
        %v6867 = vadd.f32 %v6859, 1e-05
        %v6868 = vadd.f32 %v6860, 1e-05
        %v6869 = vadd.f32 %v6861, 1e-05
        %v6870 = vrsqrt.pop %v6862
        %v6871 = vmul.f32 %v6870, %v6862
        %v6872 = vmul.f32 %v6871, %v6870
        %v6873 = vmul.f32 0.5, %v6872
        %v6874 = vsub.f32 1.5, %v6873
        %v6875 = vmul.f32 %v6870, %v6874
        %vm6876 = vweird.f32 %v6862
        %vm6877 = vweird.f32 %v6870
        %vm6878 = vmor %vm6876, %vm6877
        %v6879 = vsel %vm6878, %v6870, %v6875
        %v6880 = vrsqrt.pop %v6863
        %v6881 = vmul.f32 %v6880, %v6863
        %v6882 = vmul.f32 %v6881, %v6880
        %v6883 = vmul.f32 0.5, %v6882
        %v6884 = vsub.f32 1.5, %v6883
        %v6885 = vmul.f32 %v6880, %v6884
        %vm6886 = vweird.f32 %v6863
        %vm6887 = vweird.f32 %v6880
        %vm6888 = vmor %vm6886, %vm6887
        %v6889 = vsel %vm6888, %v6880, %v6885
        %v6890 = vrsqrt.pop %v6864
        %v6891 = vmul.f32 %v6890, %v6864
        %v6892 = vmul.f32 %v6891, %v6890
        %v6893 = vmul.f32 0.5, %v6892
        %v6894 = vsub.f32 1.5, %v6893
        %v6895 = vmul.f32 %v6890, %v6894
        %vm6896 = vweird.f32 %v6864
        %vm6897 = vweird.f32 %v6890
        %vm6898 = vmor %vm6896, %vm6897
        %v6899 = vsel %vm6898, %v6890, %v6895
        %v6900 = vrsqrt.pop %v6865
        %v6901 = vmul.f32 %v6900, %v6865
        %v6902 = vmul.f32 %v6901, %v6900
        %v6903 = vmul.f32 0.5, %v6902
        %v6904 = vsub.f32 1.5, %v6903
        %v6905 = vmul.f32 %v6900, %v6904
        %vm6906 = vweird.f32 %v6865
        %vm6907 = vweird.f32 %v6900
        %vm6908 = vmor %vm6906, %vm6907
        %v6909 = vsel %vm6908, %v6900, %v6905
        %v6910 = vrsqrt.pop %v6866
        %v6911 = vmul.f32 %v6910, %v6866
        %v6912 = vmul.f32 %v6911, %v6910
        %v6913 = vmul.f32 0.5, %v6912
        %v6914 = vsub.f32 1.5, %v6913
        %v6915 = vmul.f32 %v6910, %v6914
        %vm6916 = vweird.f32 %v6866
        %vm6917 = vweird.f32 %v6910
        %vm6918 = vmor %vm6916, %vm6917
        %v6919 = vsel %vm6918, %v6910, %v6915
        %v6920 = vrsqrt.pop %v6867
        %v6921 = vmul.f32 %v6920, %v6867
        %v6922 = vmul.f32 %v6921, %v6920
        %v6923 = vmul.f32 0.5, %v6922
        %v6924 = vsub.f32 1.5, %v6923
        %v6925 = vmul.f32 %v6920, %v6924
        %vm6926 = vweird.f32 %v6867
        %vm6927 = vweird.f32 %v6920
        %vm6928 = vmor %vm6926, %vm6927
        %v6929 = vsel %vm6928, %v6920, %v6925
        %v6930 = vrsqrt.pop %v6868
        %v6931 = vmul.f32 %v6930, %v6868
        %v6932 = vmul.f32 %v6931, %v6930
        %v6933 = vmul.f32 0.5, %v6932
        %v6934 = vsub.f32 1.5, %v6933
        %v6935 = vmul.f32 %v6930, %v6934
        %vm6936 = vweird.f32 %v6868
        %vm6937 = vweird.f32 %v6930
        %vm6938 = vmor %vm6936, %vm6937
        %v6939 = vsel %vm6938, %v6930, %v6935
        %v6940 = vrsqrt.pop %v6869
        %v6941 = vmul.f32 %v6940, %v6869
        %v6942 = vmul.f32 %v6941, %v6940
        %v6943 = vmul.f32 0.5, %v6942
        %v6944 = vsub.f32 1.5, %v6943
        %v6945 = vmul.f32 %v6940, %v6944
        %vm6946 = vweird.f32 %v6869
        %vm6947 = vweird.f32 %v6940
        %vm6948 = vmor %vm6946, %vm6947
        %v6949 = vsel %vm6948, %v6940, %v6945
        %v6950 = vmul.f32 %v6822, %v6879
        %v6951 = vmul.f32 %v6823, %v6889
        %v6952 = vmul.f32 %v6824, %v6899
        %v6953 = vmul.f32 %v6825, %v6909
        %v6954 = vmul.f32 %v6826, %v6919
        %v6955 = vmul.f32 %v6827, %v6929
        %v6956 = vmul.f32 %v6828, %v6939
        %v6957 = vmul.f32 %v6829, %v6949
        %v6958 = vld [vmem:[%s18] sm:$0xff]
        %v6959 = vld [vmem:[%s18 + $0x8] sm:$0xff]
        %v6960 = vld [vmem:[%s18 + $0x10] sm:$0xff]
        %v6961 = vld [vmem:[%s18 + $0x18] sm:$0xff]
        %v6962 = vld [vmem:[%s18 + $0x20] sm:$0xff]
        %v6963 = vld [vmem:[%s18 + $0x28] sm:$0xff]
        %v6964 = vld [vmem:[%s18 + $0x30] sm:$0xff]
        %v6965 = vld [vmem:[%s18 + $0x38] sm:$0xff]
        %v6966 = vld [vmem:[%s18 + $0x40] sm:$0xff]
        %v6967 = vld [vmem:[%s18 + $0x48] sm:$0xff]
        %v6968 = vld [vmem:[%s18 + $0x50] sm:$0xff]
        %v6969 = vld [vmem:[%s18 + $0x58] sm:$0xff]
        %v6970 = vld [vmem:[%s18 + $0x60] sm:$0xff]
        %v6971 = vld [vmem:[%s18 + $0x68] sm:$0xff]
        %v6972 = vld [vmem:[%s18 + $0x70] sm:$0xff]
        %v6973 = vld [vmem:[%s18 + $0x78] sm:$0xff]
        %v6974 = vld [vmem:[%s18 + $0x80] sm:$0xff]
        %v6975 = vld [vmem:[%s18 + $0x88] sm:$0xff]
        %v6976 = vld [vmem:[%s18 + $0x90] sm:$0xff]
        %v6977 = vld [vmem:[%s18 + $0x98] sm:$0xff]
        %v6978 = vld [vmem:[%s18 + $0xa0] sm:$0xff]
        %v6979 = vld [vmem:[%s18 + $0xa8] sm:$0xff]
        %v6980 = vld [vmem:[%s18 + $0xb0] sm:$0xff]
        %v6981 = vld [vmem:[%s18 + $0xb8] sm:$0xff]
        %v6982 = vld [vmem:[%s18 + $0xc0] sm:$0xff]
        %v6983 = vld [vmem:[%s18 + $0xc8] sm:$0xff]
        %v6984 = vld [vmem:[%s18 + $0xd0] sm:$0xff]
        %v6985 = vld [vmem:[%s18 + $0xd8] sm:$0xff]
        %v6986 = vld [vmem:[%s18 + $0xe0] sm:$0xff]
        %v6987 = vld [vmem:[%s18 + $0xe8] sm:$0xff]
        %v6988 = vld [vmem:[%s18 + $0xf0] sm:$0xff]
        %v6989 = vld [vmem:[%s18 + $0xf8] sm:$0xff]
        %v6990 = vld [vmem:[%s18 + $0x100] sm:$0xff]
        %v6991 = vld [vmem:[%s18 + $0x108] sm:$0xff]
        %v6992 = vld [vmem:[%s18 + $0x110] sm:$0xff]
        %v6993 = vld [vmem:[%s18 + $0x118] sm:$0xff]
        %v6994 = vld [vmem:[%s18 + $0x120] sm:$0xff]
        %v6995 = vld [vmem:[%s18 + $0x128] sm:$0xff]
        %v6996 = vld [vmem:[%s18 + $0x130] sm:$0xff]
        %v6997 = vld [vmem:[%s18 + $0x138] sm:$0xff]
        %v6998 = vld [vmem:[%s18 + $0x140] sm:$0xff]
        %v6999 = vld [vmem:[%s18 + $0x148] sm:$0xff]
        %v7000 = vld [vmem:[%s18 + $0x150] sm:$0xff]
        %v7001 = vld [vmem:[%s18 + $0x158] sm:$0xff]
        %v7002 = vld [vmem:[%s18 + $0x160] sm:$0xff]
        %v7003 = vld [vmem:[%s18 + $0x168] sm:$0xff]
        %v7004 = vld [vmem:[%s18 + $0x170] sm:$0xff]
        %v7005 = vld [vmem:[%s18 + $0x178] sm:$0xff]
        %v7006 = vld [vmem:[%s18 + $0x180] sm:$0xff]
        %v7007 = vld [vmem:[%s18 + $0x188] sm:$0xff]
        %v7008 = vld [vmem:[%s18 + $0x190] sm:$0xff]
        %v7009 = vld [vmem:[%s18 + $0x198] sm:$0xff]
        %v7010 = vld [vmem:[%s18 + $0x1a0] sm:$0xff]
        %v7011 = vld [vmem:[%s18 + $0x1a8] sm:$0xff]
        %v7012 = vld [vmem:[%s18 + $0x1b0] sm:$0xff]
        %v7013 = vld [vmem:[%s18 + $0x1b8] sm:$0xff]
        %v7014 = vld [vmem:[%s18 + $0x1c0] sm:$0xff]
        %v7015 = vld [vmem:[%s18 + $0x1c8] sm:$0xff]
        %v7016 = vld [vmem:[%s18 + $0x1d0] sm:$0xff]
        %v7017 = vld [vmem:[%s18 + $0x1d8] sm:$0xff]
        %v7018 = vld [vmem:[%s18 + $0x1e0] sm:$0xff]
        %v7019 = vld [vmem:[%s18 + $0x1e8] sm:$0xff]
        %v7020 = vld [vmem:[%s18 + $0x1f0] sm:$0xff]
        %v7021 = vld [vmem:[%s18 + $0x1f8] sm:$0xff]
        %v7022 = vld [vmem:[%s19] sm:$0xff]
        %v7023 = vpack.c.bf16 %v6951, %v6950
        %v7024 = vpack.c.bf16 %v6953, %v6952
        %v7025 = vpack.c.bf16 %v6955, %v6954
        %v7026 = vpack.c.bf16 %v6957, %v6956
        %v7028 = vperm.slane %v7022, 0
        %v7029 = vperm.slane %v7022, 1
        %v7030 = vperm.slane %v7022, 2
        %v7031 = vperm.slane %v7022, 3
        %v7032 = vperm.slane %v7022, 4
        %v7033 = vperm.slane %v7022, 5
        %v7034 = vperm.slane %v7022, 6
        %v7035 = vperm.slane %v7022, 7
        %v7108 = vunpack.c.l.b16 %v6958
        %v7109 = vunpack.c.h.b16 %v6958
        %v7110 = vunpack.c.l.b16 %v6959
        %v7111 = vunpack.c.h.b16 %v6959
        %v7112 = vunpack.c.l.b16 %v6960
        %v7113 = vunpack.c.h.b16 %v6960
        %v7114 = vunpack.c.l.b16 %v6961
        %v7115 = vunpack.c.h.b16 %v6961
        %v7116 = vunpack.c.l.b16 %v6962
        %v7117 = vunpack.c.h.b16 %v6962
        %v7118 = vunpack.c.l.b16 %v6963
        %v7119 = vunpack.c.h.b16 %v6963
        %v7120 = vunpack.c.l.b16 %v6964
        %v7121 = vunpack.c.h.b16 %v6964
        %v7122 = vunpack.c.l.b16 %v6965
        %v7123 = vunpack.c.h.b16 %v6965
        %v7124 = vunpack.c.l.b16 %v6966
        %v7125 = vunpack.c.h.b16 %v6966
        %v7126 = vunpack.c.l.b16 %v6967
        %v7127 = vunpack.c.h.b16 %v6967
        %v7128 = vunpack.c.l.b16 %v6968
        %v7129 = vunpack.c.h.b16 %v6968
        %v7130 = vunpack.c.l.b16 %v6969
        %v7131 = vunpack.c.h.b16 %v6969
        %v7132 = vunpack.c.l.b16 %v6970
        %v7133 = vunpack.c.h.b16 %v6970
        %v7134 = vunpack.c.l.b16 %v6971
        %v7135 = vunpack.c.h.b16 %v6971
        %v7136 = vunpack.c.l.b16 %v6972
        %v7137 = vunpack.c.h.b16 %v6972
        %v7138 = vunpack.c.l.b16 %v6973
        %v7139 = vunpack.c.h.b16 %v6973
        %v7140 = vunpack.c.l.b16 %v6974
        %v7141 = vunpack.c.h.b16 %v6974
        %v7142 = vunpack.c.l.b16 %v6975
        %v7143 = vunpack.c.h.b16 %v6975
        %v7144 = vunpack.c.l.b16 %v6976
        %v7145 = vunpack.c.h.b16 %v6976
        %v7146 = vunpack.c.l.b16 %v6977
        %v7147 = vunpack.c.h.b16 %v6977
        %v7148 = vunpack.c.l.b16 %v6978
        %v7149 = vunpack.c.h.b16 %v6978
        %v7150 = vunpack.c.l.b16 %v6979
        %v7151 = vunpack.c.h.b16 %v6979
        %v7152 = vunpack.c.l.b16 %v6980
        %v7153 = vunpack.c.h.b16 %v6980
        %v7154 = vunpack.c.l.b16 %v6981
        %v7155 = vunpack.c.h.b16 %v6981
        %v7156 = vunpack.c.l.b16 %v6982
        %v7157 = vunpack.c.h.b16 %v6982
        %v7158 = vunpack.c.l.b16 %v6983
        %v7159 = vunpack.c.h.b16 %v6983
        %v7160 = vunpack.c.l.b16 %v6984
        %v7161 = vunpack.c.h.b16 %v6984
        %v7162 = vunpack.c.l.b16 %v6985
        %v7163 = vunpack.c.h.b16 %v6985
        %v7164 = vunpack.c.l.b16 %v6986
        %v7165 = vunpack.c.h.b16 %v6986
        %v7166 = vunpack.c.l.b16 %v6987
        %v7167 = vunpack.c.h.b16 %v6987
        %v7168 = vunpack.c.l.b16 %v6988
        %v7169 = vunpack.c.h.b16 %v6988
        %v7170 = vunpack.c.l.b16 %v6989
        %v7171 = vunpack.c.h.b16 %v6989
        %v7172 = vunpack.c.l.b16 %v6990
        %v7173 = vunpack.c.h.b16 %v6990
        %v7174 = vunpack.c.l.b16 %v6991
        %v7175 = vunpack.c.h.b16 %v6991
        %v7176 = vunpack.c.l.b16 %v6992
        %v7177 = vunpack.c.h.b16 %v6992
        %v7178 = vunpack.c.l.b16 %v6993
        %v7179 = vunpack.c.h.b16 %v6993
        %v7180 = vunpack.c.l.b16 %v6994
        %v7181 = vunpack.c.h.b16 %v6994
        %v7182 = vunpack.c.l.b16 %v6995
        %v7183 = vunpack.c.h.b16 %v6995
        %v7184 = vunpack.c.l.b16 %v6996
        %v7185 = vunpack.c.h.b16 %v6996
        %v7186 = vunpack.c.l.b16 %v6997
        %v7187 = vunpack.c.h.b16 %v6997
        %v7188 = vunpack.c.l.b16 %v6998
        %v7189 = vunpack.c.h.b16 %v6998
        %v7190 = vunpack.c.l.b16 %v6999
        %v7191 = vunpack.c.h.b16 %v6999
        %v7192 = vunpack.c.l.b16 %v7000
        %v7193 = vunpack.c.h.b16 %v7000
        %v7194 = vunpack.c.l.b16 %v7001
        %v7195 = vunpack.c.h.b16 %v7001
        %v7196 = vunpack.c.l.b16 %v7002
        %v7197 = vunpack.c.h.b16 %v7002
        %v7198 = vunpack.c.l.b16 %v7003
        %v7199 = vunpack.c.h.b16 %v7003
        %v7200 = vunpack.c.l.b16 %v7004
        %v7201 = vunpack.c.h.b16 %v7004
        %v7202 = vunpack.c.l.b16 %v7005
        %v7203 = vunpack.c.h.b16 %v7005
        %v7204 = vunpack.c.l.b16 %v7006
        %v7205 = vunpack.c.h.b16 %v7006
        %v7206 = vunpack.c.l.b16 %v7007
        %v7207 = vunpack.c.h.b16 %v7007
        %v7208 = vunpack.c.l.b16 %v7008
        %v7209 = vunpack.c.h.b16 %v7008
        %v7210 = vunpack.c.l.b16 %v7009
        %v7211 = vunpack.c.h.b16 %v7009
        %v7212 = vunpack.c.l.b16 %v7010
        %v7213 = vunpack.c.h.b16 %v7010
        %v7214 = vunpack.c.l.b16 %v7011
        %v7215 = vunpack.c.h.b16 %v7011
        %v7216 = vunpack.c.l.b16 %v7012
        %v7217 = vunpack.c.h.b16 %v7012
        %v7218 = vunpack.c.l.b16 %v7013
        %v7219 = vunpack.c.h.b16 %v7013
        %v7220 = vunpack.c.l.b16 %v7014
        %v7221 = vunpack.c.h.b16 %v7014
        %v7222 = vunpack.c.l.b16 %v7015
        %v7223 = vunpack.c.h.b16 %v7015
        %v7224 = vunpack.c.l.b16 %v7016
        %v7225 = vunpack.c.h.b16 %v7016
        %v7226 = vunpack.c.l.b16 %v7017
        %v7227 = vunpack.c.h.b16 %v7017
        %v7228 = vunpack.c.l.b16 %v7018
        %v7229 = vunpack.c.h.b16 %v7018
        %v7230 = vunpack.c.l.b16 %v7019
        %v7231 = vunpack.c.h.b16 %v7019
        %v7232 = vunpack.c.l.b16 %v7020
        %v7233 = vunpack.c.h.b16 %v7020
        %v7234 = vunpack.c.l.b16 %v7021
        %v7235 = vunpack.c.h.b16 %v7021
        %v7236 = vpack.c.b16 %v7116, %v7108
        %v7237 = vpack.c.b16 %v7117, %v7109
        %v7238 = vpack.c.b16 %v7118, %v7110
        %v7239 = vpack.c.b16 %v7119, %v7111
        %v7240 = vpack.c.b16 %v7120, %v7112
        %v7241 = vpack.c.b16 %v7121, %v7113
        %v7242 = vpack.c.b16 %v7122, %v7114
        %v7243 = vpack.c.b16 %v7123, %v7115
        %v7244 = vpack.c.b16 %v7132, %v7124
        %v7245 = vpack.c.b16 %v7133, %v7125
        %v7246 = vpack.c.b16 %v7134, %v7126
        %v7247 = vpack.c.b16 %v7135, %v7127
        %v7248 = vpack.c.b16 %v7136, %v7128
        %v7249 = vpack.c.b16 %v7137, %v7129
        %v7250 = vpack.c.b16 %v7138, %v7130
        %v7251 = vpack.c.b16 %v7139, %v7131
        %v7252 = vpack.c.b16 %v7148, %v7140
        %v7253 = vpack.c.b16 %v7149, %v7141
        %v7254 = vpack.c.b16 %v7150, %v7142
        %v7255 = vpack.c.b16 %v7151, %v7143
        %v7256 = vpack.c.b16 %v7152, %v7144
        %v7257 = vpack.c.b16 %v7153, %v7145
        %v7258 = vpack.c.b16 %v7154, %v7146
        %v7259 = vpack.c.b16 %v7155, %v7147
        %v7260 = vpack.c.b16 %v7164, %v7156
        %v7261 = vpack.c.b16 %v7165, %v7157
        %v7262 = vpack.c.b16 %v7166, %v7158
        %v7263 = vpack.c.b16 %v7167, %v7159
        %v7264 = vpack.c.b16 %v7168, %v7160
        %v7265 = vpack.c.b16 %v7169, %v7161
        %v7266 = vpack.c.b16 %v7170, %v7162
        %v7267 = vpack.c.b16 %v7171, %v7163
        %v7268 = vpack.c.b16 %v7180, %v7172
        %v7269 = vpack.c.b16 %v7181, %v7173
        %v7270 = vpack.c.b16 %v7182, %v7174
        %v7271 = vpack.c.b16 %v7183, %v7175
        %v7272 = vpack.c.b16 %v7184, %v7176
        %v7273 = vpack.c.b16 %v7185, %v7177
        %v7274 = vpack.c.b16 %v7186, %v7178
        %v7275 = vpack.c.b16 %v7187, %v7179
        %v7276 = vpack.c.b16 %v7196, %v7188
        %v7277 = vpack.c.b16 %v7197, %v7189
        %v7278 = vpack.c.b16 %v7198, %v7190
        %v7279 = vpack.c.b16 %v7199, %v7191
        %v7280 = vpack.c.b16 %v7200, %v7192
        %v7281 = vpack.c.b16 %v7201, %v7193
        %v7282 = vpack.c.b16 %v7202, %v7194
        %v7283 = vpack.c.b16 %v7203, %v7195
        %v7284 = vpack.c.b16 %v7212, %v7204
        %v7285 = vpack.c.b16 %v7213, %v7205
        %v7286 = vpack.c.b16 %v7214, %v7206
        %v7287 = vpack.c.b16 %v7215, %v7207
        %v7288 = vpack.c.b16 %v7216, %v7208
        %v7289 = vpack.c.b16 %v7217, %v7209
        %v7290 = vpack.c.b16 %v7218, %v7210
        %v7291 = vpack.c.b16 %v7219, %v7211
        %v7292 = vpack.c.b16 %v7228, %v7220
        %v7293 = vpack.c.b16 %v7229, %v7221
        %v7294 = vpack.c.b16 %v7230, %v7222
        %v7295 = vpack.c.b16 %v7231, %v7223
        %v7296 = vpack.c.b16 %v7232, %v7224
        %v7297 = vpack.c.b16 %v7233, %v7225
        %v7298 = vpack.c.b16 %v7234, %v7226
        %v7299 = vpack.c.b16 %v7235, %v7227
        %7364 = vmatpush.bf16.msra.mxu0 %v7292
        %7365 = vmatpush.bf16.msra.mxu0 %v7284
        %7366 = vmatpush.bf16.msra.mxu0 %v7276
        %7367 = vmatpush.bf16.msra.mxu0 %v7268
        %7368 = vmatpush.bf16.msra.mxu0 %v7260
        %7369 = vmatpush.bf16.msra.mxu0 %v7252
        %7370 = vmatpush.bf16.msra.mxu0 %v7244
        %7371 = vmatpush.bf16.msra.mxu0 %v7236
        %7372 = vmatmul.bf16.gmra.mxu0 %v7023
        %v7373 = vpop.f32.mrf.mxu0
        %v7374 = vadd.f32 %v7028, %v7373
        %v7375 = vpop.f32.mrf.mxu0
        %v7376 = vadd.f32 %v7028, %v7375
        %7377 = vmatmul.bf16.gmra.mxu0 %v7024
        %v7378 = vpop.f32.mrf.mxu0
        %v7379 = vadd.f32 %v7028, %v7378
        %v7380 = vpop.f32.mrf.mxu0
        %v7381 = vadd.f32 %v7028, %v7380
        %7382 = vmatmul.bf16.gmra.mxu0 %v7025
        %v7383 = vpop.f32.mrf.mxu0
        %v7384 = vadd.f32 %v7028, %v7383
        %v7385 = vpop.f32.mrf.mxu0
        %v7386 = vadd.f32 %v7028, %v7385
        %7387 = vmatmul.bf16.gmra.mxu0 %v7026
        %v7388 = vpop.f32.mrf.mxu0
        %v7389 = vadd.f32 %v7028, %v7388
        %v7390 = vpop.f32.mrf.mxu0
        %v7391 = vadd.f32 %v7028, %v7390
        %7392 = vdwg.mxu0
        %7393 = vmatpush.bf16.msra.mxu0 %v7293
        %7394 = vmatpush.bf16.msra.mxu0 %v7285
        %7395 = vmatpush.bf16.msra.mxu0 %v7277
        %7396 = vmatpush.bf16.msra.mxu0 %v7269
        %7397 = vmatpush.bf16.msra.mxu0 %v7261
        %7398 = vmatpush.bf16.msra.mxu0 %v7253
        %7399 = vmatpush.bf16.msra.mxu0 %v7245
        %7400 = vmatpush.bf16.msra.mxu0 %v7237
        %7401 = vmatmul.bf16.gmra.mxu0 %v7023
        %v7402 = vpop.f32.mrf.mxu0
        %v7403 = vadd.f32 %v7029, %v7402
        %v7404 = vpop.f32.mrf.mxu0
        %v7405 = vadd.f32 %v7029, %v7404
        %7406 = vmatmul.bf16.gmra.mxu0 %v7024
        %v7407 = vpop.f32.mrf.mxu0
        %v7408 = vadd.f32 %v7029, %v7407
        %v7409 = vpop.f32.mrf.mxu0
        %v7410 = vadd.f32 %v7029, %v7409
        %7411 = vmatmul.bf16.gmra.mxu0 %v7025
        %v7412 = vpop.f32.mrf.mxu0
        %v7413 = vadd.f32 %v7029, %v7412
        %v7414 = vpop.f32.mrf.mxu0
        %v7415 = vadd.f32 %v7029, %v7414
        %7416 = vmatmul.bf16.gmra.mxu0 %v7026
        %v7417 = vpop.f32.mrf.mxu0
        %v7418 = vadd.f32 %v7029, %v7417
        %v7419 = vpop.f32.mrf.mxu0
        %v7420 = vadd.f32 %v7029, %v7419
        %7421 = vdwg.mxu0
        %7422 = vmatpush.bf16.msra.mxu0 %v7294
        %7423 = vmatpush.bf16.msra.mxu0 %v7286
        %7424 = vmatpush.bf16.msra.mxu0 %v7278
        %7425 = vmatpush.bf16.msra.mxu0 %v7270
        %7426 = vmatpush.bf16.msra.mxu0 %v7262
        %7427 = vmatpush.bf16.msra.mxu0 %v7254
        %7428 = vmatpush.bf16.msra.mxu0 %v7246
        %7429 = vmatpush.bf16.msra.mxu0 %v7238
        %7430 = vmatmul.bf16.gmra.mxu0 %v7023
        %v7431 = vpop.f32.mrf.mxu0
        %v7432 = vadd.f32 %v7030, %v7431
        %v7433 = vpop.f32.mrf.mxu0
        %v7434 = vadd.f32 %v7030, %v7433
        %7435 = vmatmul.bf16.gmra.mxu0 %v7024
        %v7436 = vpop.f32.mrf.mxu0
        %v7437 = vadd.f32 %v7030, %v7436
        %v7438 = vpop.f32.mrf.mxu0
        %v7439 = vadd.f32 %v7030, %v7438
        %7440 = vmatmul.bf16.gmra.mxu0 %v7025
        %v7441 = vpop.f32.mrf.mxu0
        %v7442 = vadd.f32 %v7030, %v7441
        %v7443 = vpop.f32.mrf.mxu0
        %v7444 = vadd.f32 %v7030, %v7443
        %7445 = vmatmul.bf16.gmra.mxu0 %v7026
        %v7446 = vpop.f32.mrf.mxu0
        %v7447 = vadd.f32 %v7030, %v7446
        %v7448 = vpop.f32.mrf.mxu0
        %v7449 = vadd.f32 %v7030, %v7448
        %7450 = vdwg.mxu0
        %7451 = vmatpush.bf16.msra.mxu0 %v7295
        %7452 = vmatpush.bf16.msra.mxu0 %v7287
        %7453 = vmatpush.bf16.msra.mxu0 %v7279
        %7454 = vmatpush.bf16.msra.mxu0 %v7271
        %7455 = vmatpush.bf16.msra.mxu0 %v7263
        %7456 = vmatpush.bf16.msra.mxu0 %v7255
        %7457 = vmatpush.bf16.msra.mxu0 %v7247
        %7458 = vmatpush.bf16.msra.mxu0 %v7239
        %7459 = vmatmul.bf16.gmra.mxu0 %v7023
        %v7460 = vpop.f32.mrf.mxu0
        %v7461 = vadd.f32 %v7031, %v7460
        %v7462 = vpop.f32.mrf.mxu0
        %v7463 = vadd.f32 %v7031, %v7462
        %7464 = vmatmul.bf16.gmra.mxu0 %v7024
        %v7465 = vpop.f32.mrf.mxu0
        %v7466 = vadd.f32 %v7031, %v7465
        %v7467 = vpop.f32.mrf.mxu0
        %v7468 = vadd.f32 %v7031, %v7467
        %7469 = vmatmul.bf16.gmra.mxu0 %v7025
        %v7470 = vpop.f32.mrf.mxu0
        %v7471 = vadd.f32 %v7031, %v7470
        %v7472 = vpop.f32.mrf.mxu0
        %v7473 = vadd.f32 %v7031, %v7472
        %7474 = vmatmul.bf16.gmra.mxu0 %v7026
        %v7475 = vpop.f32.mrf.mxu0
        %v7476 = vadd.f32 %v7031, %v7475
        %v7477 = vpop.f32.mrf.mxu0
        %v7478 = vadd.f32 %v7031, %v7477
        %7479 = vdwg.mxu0
        %7480 = vmatpush.bf16.msra.mxu0 %v7296
        %7481 = vmatpush.bf16.msra.mxu0 %v7288
        %7482 = vmatpush.bf16.msra.mxu0 %v7280
        %7483 = vmatpush.bf16.msra.mxu0 %v7272
        %7484 = vmatpush.bf16.msra.mxu0 %v7264
        %7485 = vmatpush.bf16.msra.mxu0 %v7256
        %7486 = vmatpush.bf16.msra.mxu0 %v7248
        %7487 = vmatpush.bf16.msra.mxu0 %v7240
        %7488 = vmatmul.bf16.gmra.mxu0 %v7023
        %v7489 = vpop.f32.mrf.mxu0
        %v7490 = vadd.f32 %v7032, %v7489
        %v7491 = vpop.f32.mrf.mxu0
        %v7492 = vadd.f32 %v7032, %v7491
        %7493 = vmatmul.bf16.gmra.mxu0 %v7024
        %v7494 = vpop.f32.mrf.mxu0
        %v7495 = vadd.f32 %v7032, %v7494
        %v7496 = vpop.f32.mrf.mxu0
        %v7497 = vadd.f32 %v7032, %v7496
        %7498 = vmatmul.bf16.gmra.mxu0 %v7025
        %v7499 = vpop.f32.mrf.mxu0
        %v7500 = vadd.f32 %v7032, %v7499
        %v7501 = vpop.f32.mrf.mxu0
        %v7502 = vadd.f32 %v7032, %v7501
        %7503 = vmatmul.bf16.gmra.mxu0 %v7026
        %v7504 = vpop.f32.mrf.mxu0
        %v7505 = vadd.f32 %v7032, %v7504
        %v7506 = vpop.f32.mrf.mxu0
        %v7507 = vadd.f32 %v7032, %v7506
        %7508 = vdwg.mxu0
        %7509 = vmatpush.bf16.msra.mxu0 %v7297
        %7510 = vmatpush.bf16.msra.mxu0 %v7289
        %7511 = vmatpush.bf16.msra.mxu0 %v7281
        %7512 = vmatpush.bf16.msra.mxu0 %v7273
        %7513 = vmatpush.bf16.msra.mxu0 %v7265
        %7514 = vmatpush.bf16.msra.mxu0 %v7257
        %7515 = vmatpush.bf16.msra.mxu0 %v7249
        %7516 = vmatpush.bf16.msra.mxu0 %v7241
        %7517 = vmatmul.bf16.gmra.mxu0 %v7023
        %v7518 = vpop.f32.mrf.mxu0
        %v7519 = vadd.f32 %v7033, %v7518
        %v7520 = vpop.f32.mrf.mxu0
        %v7521 = vadd.f32 %v7033, %v7520
        %7522 = vmatmul.bf16.gmra.mxu0 %v7024
        %v7523 = vpop.f32.mrf.mxu0
        %v7524 = vadd.f32 %v7033, %v7523
        %v7525 = vpop.f32.mrf.mxu0
        %v7526 = vadd.f32 %v7033, %v7525
        %7527 = vmatmul.bf16.gmra.mxu0 %v7025
        %v7528 = vpop.f32.mrf.mxu0
        %v7529 = vadd.f32 %v7033, %v7528
        %v7530 = vpop.f32.mrf.mxu0
        %v7531 = vadd.f32 %v7033, %v7530
        %7532 = vmatmul.bf16.gmra.mxu0 %v7026
        %v7533 = vpop.f32.mrf.mxu0
        %v7534 = vadd.f32 %v7033, %v7533
        %v7535 = vpop.f32.mrf.mxu0
        %v7536 = vadd.f32 %v7033, %v7535
        %7537 = vdwg.mxu0
        %7538 = vmatpush.bf16.msra.mxu0 %v7298
        %7539 = vmatpush.bf16.msra.mxu0 %v7290
        %7540 = vmatpush.bf16.msra.mxu0 %v7282
        %7541 = vmatpush.bf16.msra.mxu0 %v7274
        %7542 = vmatpush.bf16.msra.mxu0 %v7266
        %7543 = vmatpush.bf16.msra.mxu0 %v7258
        %7544 = vmatpush.bf16.msra.mxu0 %v7250
        %7545 = vmatpush.bf16.msra.mxu0 %v7242
        %7546 = vmatmul.bf16.gmra.mxu0 %v7023
        %v7547 = vpop.f32.mrf.mxu0
        %v7548 = vadd.f32 %v7034, %v7547
        %v7549 = vpop.f32.mrf.mxu0
        %v7550 = vadd.f32 %v7034, %v7549
        %7551 = vmatmul.bf16.gmra.mxu0 %v7024
        %v7552 = vpop.f32.mrf.mxu0
        %v7553 = vadd.f32 %v7034, %v7552
        %v7554 = vpop.f32.mrf.mxu0
        %v7555 = vadd.f32 %v7034, %v7554
        %7556 = vmatmul.bf16.gmra.mxu0 %v7025
        %v7557 = vpop.f32.mrf.mxu0
        %v7558 = vadd.f32 %v7034, %v7557
        %v7559 = vpop.f32.mrf.mxu0
        %v7560 = vadd.f32 %v7034, %v7559
        %7561 = vmatmul.bf16.gmra.mxu0 %v7026
        %v7562 = vpop.f32.mrf.mxu0
        %v7563 = vadd.f32 %v7034, %v7562
        %v7564 = vpop.f32.mrf.mxu0
        %v7565 = vadd.f32 %v7034, %v7564
        %7566 = vdwg.mxu0
        %7567 = vmatpush.bf16.msra.mxu0 %v7299
        %7568 = vmatpush.bf16.msra.mxu0 %v7291
        %7569 = vmatpush.bf16.msra.mxu0 %v7283
        %7570 = vmatpush.bf16.msra.mxu0 %v7275
        %7571 = vmatpush.bf16.msra.mxu0 %v7267
        %7572 = vmatpush.bf16.msra.mxu0 %v7259
        %7573 = vmatpush.bf16.msra.mxu0 %v7251
        %7574 = vmatpush.bf16.msra.mxu0 %v7243
        %7575 = vmatmul.bf16.gmra.mxu0 %v7023
        %v7576 = vpop.f32.mrf.mxu0
        %v7577 = vadd.f32 %v7035, %v7576
        %v7578 = vpop.f32.mrf.mxu0
        %v7579 = vadd.f32 %v7035, %v7578
        %7580 = vmatmul.bf16.gmra.mxu0 %v7024
        %v7581 = vpop.f32.mrf.mxu0
        %v7582 = vadd.f32 %v7035, %v7581
        %v7583 = vpop.f32.mrf.mxu0
        %v7584 = vadd.f32 %v7035, %v7583
        %7585 = vmatmul.bf16.gmra.mxu0 %v7025
        %v7586 = vpop.f32.mrf.mxu0
        %v7587 = vadd.f32 %v7035, %v7586
        %v7588 = vpop.f32.mrf.mxu0
        %v7589 = vadd.f32 %v7035, %v7588
        %7590 = vmatmul.bf16.gmra.mxu0 %v7026
        %v7591 = vpop.f32.mrf.mxu0
        %v7592 = vadd.f32 %v7035, %v7591
        %v7593 = vpop.f32.mrf.mxu0
        %v7594 = vadd.f32 %v7035, %v7593
        %7595 = vdwg.mxu0
        %v7596 = vmul.f32 %v7490, 0.5
        %v7597 = vmul.f32 %v7519, 0.5
        %v7598 = vmul.f32 %v7548, 0.5
        %v7599 = vmul.f32 %v7577, 0.5
        %v7600 = vmul.f32 %v7492, 0.5
        %v7601 = vmul.f32 %v7521, 0.5
        %v7602 = vmul.f32 %v7550, 0.5
        %v7603 = vmul.f32 %v7579, 0.5
        %v7604 = vmul.f32 %v7495, 0.5
        %v7605 = vmul.f32 %v7524, 0.5
        %v7606 = vmul.f32 %v7553, 0.5
        %v7607 = vmul.f32 %v7582, 0.5
        %v7608 = vmul.f32 %v7497, 0.5
        %v7609 = vmul.f32 %v7526, 0.5
        %v7610 = vmul.f32 %v7555, 0.5
        %v7611 = vmul.f32 %v7584, 0.5
        %v7612 = vmul.f32 %v7500, 0.5
        %v7613 = vmul.f32 %v7529, 0.5
        %v7614 = vmul.f32 %v7558, 0.5
        %v7615 = vmul.f32 %v7587, 0.5
        %v7616 = vmul.f32 %v7502, 0.5
        %v7617 = vmul.f32 %v7531, 0.5
        %v7618 = vmul.f32 %v7560, 0.5
        %v7619 = vmul.f32 %v7589, 0.5
        %v7620 = vmul.f32 %v7505, 0.5
        %v7621 = vmul.f32 %v7534, 0.5
        %v7622 = vmul.f32 %v7563, 0.5
        %v7623 = vmul.f32 %v7592, 0.5
        %v7624 = vmul.f32 %v7507, 0.5
        %v7625 = vmul.f32 %v7536, 0.5
        %v7626 = vmul.f32 %v7565, 0.5
        %v7627 = vmul.f32 %v7594, 0.5
        %v7628 = vmul.f32 %v7490, 0.70710677
        %v7629 = vmul.f32 %v7519, 0.70710677
        %v7630 = vmul.f32 %v7548, 0.70710677
        %v7631 = vmul.f32 %v7577, 0.70710677
        %v7632 = vmul.f32 %v7492, 0.70710677
        %v7633 = vmul.f32 %v7521, 0.70710677
        %v7634 = vmul.f32 %v7550, 0.70710677
        %v7635 = vmul.f32 %v7579, 0.70710677
        %v7636 = vmul.f32 %v7495, 0.70710677
        %v7637 = vmul.f32 %v7524, 0.70710677
        %v7638 = vmul.f32 %v7553, 0.70710677
        %v7639 = vmul.f32 %v7582, 0.70710677
        %v7640 = vmul.f32 %v7497, 0.70710677
        %v7641 = vmul.f32 %v7526, 0.70710677
        %v7642 = vmul.f32 %v7555, 0.70710677
        %v7643 = vmul.f32 %v7584, 0.70710677
        %v7644 = vmul.f32 %v7500, 0.70710677
        %v7645 = vmul.f32 %v7529, 0.70710677
        %v7646 = vmul.f32 %v7558, 0.70710677
        %v7647 = vmul.f32 %v7587, 0.70710677
        %v7648 = vmul.f32 %v7502, 0.70710677
        %v7649 = vmul.f32 %v7531, 0.70710677
        %v7650 = vmul.f32 %v7560, 0.70710677
        %v7651 = vmul.f32 %v7589, 0.70710677
        %v7652 = vmul.f32 %v7505, 0.70710677
        %v7653 = vmul.f32 %v7534, 0.70710677
        %v7654 = vmul.f32 %v7563, 0.70710677
        %v7655 = vmul.f32 %v7592, 0.70710677
        %v7656 = vmul.f32 %v7507, 0.70710677
        %v7657 = vmul.f32 %v7536, 0.70710677
        %v7658 = vmul.f32 %v7565, 0.70710677
        %v7659 = vmul.f32 %v7594, 0.70710677
        %v7660 = vmul.f32 %v7628, %v7628
        %v7661 = vmin.f32 16.0, %v7660
        %v7662 = vmul.f32 %v7661, 2.1237322e-06
        %v7663 = vadd.f32 %v7662, 0.00028619796
        %v7664 = vmul.f32 %v7661, %v7663
        %v7665 = vadd.f32 %v7664, 0.0036580483
        %v7666 = vmul.f32 %v7661, %v7665
        %v7667 = vadd.f32 %v7666, 0.05243302
        %v7668 = vmul.f32 %v7661, %v7667
        %v7669 = vadd.f32 %v7668, 0.18741608
        %v7670 = vmul.f32 %v7661, %v7669
        %v7671 = vadd.f32 %v7670, 1.1283791
        %v7672 = vmul.f32 %v7628, %v7671
        %v7673 = vmul.f32 %v7661, 3.8918573e-05
        %v7674 = vadd.f32 %v7673, 0.001143296
        %v7675 = vmul.f32 %v7661, %v7674
        %v7676 = vadd.f32 %v7675, 0.014752088
        %v7677 = vmul.f32 %v7661, %v7676
        %v7678 = vadd.f32 %v7677, 0.112945676
        %v7679 = vmul.f32 %v7661, %v7678
        %v7680 = vadd.f32 %v7679, 0.4994258
        %v7681 = vmul.f32 %v7661, %v7680
        %v7682 = vadd.f32 %v7681, 1.0
        %v7683 = vrcp.pop %v7682
        %v7684 = vmul.f32 %v7682, %v7683
        %v7685 = vsub.f32 1.0, %v7684
        %v7686 = vmul.f32 %v7683, %v7685
        %v7687 = vadd.f32 %v7683, %v7686
        %vm7688 = vweird.f32 %v7682
        %vm7689 = vweird.f32 %v7683
        %vm7690 = vmor %vm7688, %vm7689
        %v7691 = vsel %vm7690, %v7683, %v7687
        %v7692 = vand.u32 2147483647, %v7682
        %vm7693 = vcmp.eq.f32.partialorder %v7692, 8.507059e+37
        %v7694 = vand.u32 %v7682, 2147483648
        %v7695 = vor.u32 1.1754944e-38, %v7694
        %v7696 = vsel %vm7693, %v7695, %v7691
        %v7697 = vmul.f32 %v7672, %v7696
        %v7698 = vmin.f32 %v7697, 1.0
        %v7699 = vmax.f32 %v7698, -1.0
        %v7700 = vmul.f32 %v7629, %v7629
        %v7701 = vmin.f32 16.0, %v7700
        %v7702 = vmul.f32 %v7701, 2.1237322e-06
        %v7703 = vadd.f32 %v7702, 0.00028619796
        %v7704 = vmul.f32 %v7701, %v7703
        %v7705 = vadd.f32 %v7704, 0.0036580483
        %v7706 = vmul.f32 %v7701, %v7705
        %v7707 = vadd.f32 %v7706, 0.05243302
        %v7708 = vmul.f32 %v7701, %v7707
        %v7709 = vadd.f32 %v7708, 0.18741608
        %v7710 = vmul.f32 %v7701, %v7709
        %v7711 = vadd.f32 %v7710, 1.1283791
        %v7712 = vmul.f32 %v7629, %v7711
        %v7713 = vmul.f32 %v7701, 3.8918573e-05
        %v7714 = vadd.f32 %v7713, 0.001143296
        %v7715 = vmul.f32 %v7701, %v7714
        %v7716 = vadd.f32 %v7715, 0.014752088
        %v7717 = vmul.f32 %v7701, %v7716
        %v7718 = vadd.f32 %v7717, 0.112945676
        %v7719 = vmul.f32 %v7701, %v7718
        %v7720 = vadd.f32 %v7719, 0.4994258
        %v7721 = vmul.f32 %v7701, %v7720
        %v7722 = vadd.f32 %v7721, 1.0
        %v7723 = vrcp.pop %v7722
        %v7724 = vmul.f32 %v7722, %v7723
        %v7725 = vsub.f32 1.0, %v7724
        %v7726 = vmul.f32 %v7723, %v7725
        %v7727 = vadd.f32 %v7723, %v7726
        %vm7728 = vweird.f32 %v7722
        %vm7729 = vweird.f32 %v7723
        %vm7730 = vmor %vm7728, %vm7729
        %v7731 = vsel %vm7730, %v7723, %v7727
        %v7732 = vand.u32 2147483647, %v7722
        %vm7733 = vcmp.eq.f32.partialorder %v7732, 8.507059e+37
        %v7734 = vand.u32 %v7722, 2147483648
        %v7735 = vor.u32 1.1754944e-38, %v7734
        %v7736 = vsel %vm7733, %v7735, %v7731
        %v7737 = vmul.f32 %v7712, %v7736
        %v7738 = vmin.f32 %v7737, 1.0
        %v7739 = vmax.f32 %v7738, -1.0
        %v7740 = vmul.f32 %v7630, %v7630
        %v7741 = vmin.f32 16.0, %v7740
        %v7742 = vmul.f32 %v7741, 2.1237322e-06
        %v7743 = vadd.f32 %v7742, 0.00028619796
        %v7744 = vmul.f32 %v7741, %v7743
        %v7745 = vadd.f32 %v7744, 0.0036580483
        %v7746 = vmul.f32 %v7741, %v7745
        %v7747 = vadd.f32 %v7746, 0.05243302
        %v7748 = vmul.f32 %v7741, %v7747
        %v7749 = vadd.f32 %v7748, 0.18741608
        %v7750 = vmul.f32 %v7741, %v7749
        %v7751 = vadd.f32 %v7750, 1.1283791
        %v7752 = vmul.f32 %v7630, %v7751
        %v7753 = vmul.f32 %v7741, 3.8918573e-05
        %v7754 = vadd.f32 %v7753, 0.001143296
        %v7755 = vmul.f32 %v7741, %v7754
        %v7756 = vadd.f32 %v7755, 0.014752088
        %v7757 = vmul.f32 %v7741, %v7756
        %v7758 = vadd.f32 %v7757, 0.112945676
        %v7759 = vmul.f32 %v7741, %v7758
        %v7760 = vadd.f32 %v7759, 0.4994258
        %v7761 = vmul.f32 %v7741, %v7760
        %v7762 = vadd.f32 %v7761, 1.0
        %v7763 = vrcp.pop %v7762
        %v7764 = vmul.f32 %v7762, %v7763
        %v7765 = vsub.f32 1.0, %v7764
        %v7766 = vmul.f32 %v7763, %v7765
        %v7767 = vadd.f32 %v7763, %v7766
        %vm7768 = vweird.f32 %v7762
        %vm7769 = vweird.f32 %v7763
        %vm7770 = vmor %vm7768, %vm7769
        %v7771 = vsel %vm7770, %v7763, %v7767
        %v7772 = vand.u32 2147483647, %v7762
        %vm7773 = vcmp.eq.f32.partialorder %v7772, 8.507059e+37
        %v7774 = vand.u32 %v7762, 2147483648
        %v7775 = vor.u32 1.1754944e-38, %v7774
        %v7776 = vsel %vm7773, %v7775, %v7771
        %v7777 = vmul.f32 %v7752, %v7776
        %v7778 = vmin.f32 %v7777, 1.0
        %v7779 = vmax.f32 %v7778, -1.0
        %v7780 = vmul.f32 %v7631, %v7631
        %v7781 = vmin.f32 16.0, %v7780
        %v7782 = vmul.f32 %v7781, 2.1237322e-06
        %v7783 = vadd.f32 %v7782, 0.00028619796
        %v7784 = vmul.f32 %v7781, %v7783
        %v7785 = vadd.f32 %v7784, 0.0036580483
        %v7786 = vmul.f32 %v7781, %v7785
        %v7787 = vadd.f32 %v7786, 0.05243302
        %v7788 = vmul.f32 %v7781, %v7787
        %v7789 = vadd.f32 %v7788, 0.18741608
        %v7790 = vmul.f32 %v7781, %v7789
        %v7791 = vadd.f32 %v7790, 1.1283791
        %v7792 = vmul.f32 %v7631, %v7791
        %v7793 = vmul.f32 %v7781, 3.8918573e-05
        %v7794 = vadd.f32 %v7793, 0.001143296
        %v7795 = vmul.f32 %v7781, %v7794
        %v7796 = vadd.f32 %v7795, 0.014752088
        %v7797 = vmul.f32 %v7781, %v7796
        %v7798 = vadd.f32 %v7797, 0.112945676
        %v7799 = vmul.f32 %v7781, %v7798
        %v7800 = vadd.f32 %v7799, 0.4994258
        %v7801 = vmul.f32 %v7781, %v7800
        %v7802 = vadd.f32 %v7801, 1.0
        %v7803 = vrcp.pop %v7802
        %v7804 = vmul.f32 %v7802, %v7803
        %v7805 = vsub.f32 1.0, %v7804
        %v7806 = vmul.f32 %v7803, %v7805
        %v7807 = vadd.f32 %v7803, %v7806
        %vm7808 = vweird.f32 %v7802
        %vm7809 = vweird.f32 %v7803
        %vm7810 = vmor %vm7808, %vm7809
        %v7811 = vsel %vm7810, %v7803, %v7807
        %v7812 = vand.u32 2147483647, %v7802
        %vm7813 = vcmp.eq.f32.partialorder %v7812, 8.507059e+37
        %v7814 = vand.u32 %v7802, 2147483648
        %v7815 = vor.u32 1.1754944e-38, %v7814
        %v7816 = vsel %vm7813, %v7815, %v7811
        %v7817 = vmul.f32 %v7792, %v7816
        %v7818 = vmin.f32 %v7817, 1.0
        %v7819 = vmax.f32 %v7818, -1.0
        %v7820 = vmul.f32 %v7632, %v7632
        %v7821 = vmin.f32 16.0, %v7820
        %v7822 = vmul.f32 %v7821, 2.1237322e-06
        %v7823 = vadd.f32 %v7822, 0.00028619796
        %v7824 = vmul.f32 %v7821, %v7823
        %v7825 = vadd.f32 %v7824, 0.0036580483
        %v7826 = vmul.f32 %v7821, %v7825
        %v7827 = vadd.f32 %v7826, 0.05243302
        %v7828 = vmul.f32 %v7821, %v7827
        %v7829 = vadd.f32 %v7828, 0.18741608
        %v7830 = vmul.f32 %v7821, %v7829
        %v7831 = vadd.f32 %v7830, 1.1283791
        %v7832 = vmul.f32 %v7632, %v7831
        %v7833 = vmul.f32 %v7821, 3.8918573e-05
        %v7834 = vadd.f32 %v7833, 0.001143296
        %v7835 = vmul.f32 %v7821, %v7834
        %v7836 = vadd.f32 %v7835, 0.014752088
        %v7837 = vmul.f32 %v7821, %v7836
        %v7838 = vadd.f32 %v7837, 0.112945676
        %v7839 = vmul.f32 %v7821, %v7838
        %v7840 = vadd.f32 %v7839, 0.4994258
        %v7841 = vmul.f32 %v7821, %v7840
        %v7842 = vadd.f32 %v7841, 1.0
        %v7843 = vrcp.pop %v7842
        %v7844 = vmul.f32 %v7842, %v7843
        %v7845 = vsub.f32 1.0, %v7844
        %v7846 = vmul.f32 %v7843, %v7845
        %v7847 = vadd.f32 %v7843, %v7846
        %vm7848 = vweird.f32 %v7842
        %vm7849 = vweird.f32 %v7843
        %vm7850 = vmor %vm7848, %vm7849
        %v7851 = vsel %vm7850, %v7843, %v7847
        %v7852 = vand.u32 2147483647, %v7842
        %vm7853 = vcmp.eq.f32.partialorder %v7852, 8.507059e+37
        %v7854 = vand.u32 %v7842, 2147483648
        %v7855 = vor.u32 1.1754944e-38, %v7854
        %v7856 = vsel %vm7853, %v7855, %v7851
        %v7857 = vmul.f32 %v7832, %v7856
        %v7858 = vmin.f32 %v7857, 1.0
        %v7859 = vmax.f32 %v7858, -1.0
        %v7860 = vmul.f32 %v7633, %v7633
        %v7861 = vmin.f32 16.0, %v7860
        %v7862 = vmul.f32 %v7861, 2.1237322e-06
        %v7863 = vadd.f32 %v7862, 0.00028619796
        %v7864 = vmul.f32 %v7861, %v7863
        %v7865 = vadd.f32 %v7864, 0.0036580483
        %v7866 = vmul.f32 %v7861, %v7865
        %v7867 = vadd.f32 %v7866, 0.05243302
        %v7868 = vmul.f32 %v7861, %v7867
        %v7869 = vadd.f32 %v7868, 0.18741608
        %v7870 = vmul.f32 %v7861, %v7869
        %v7871 = vadd.f32 %v7870, 1.1283791
        %v7872 = vmul.f32 %v7633, %v7871
        %v7873 = vmul.f32 %v7861, 3.8918573e-05
        %v7874 = vadd.f32 %v7873, 0.001143296
        %v7875 = vmul.f32 %v7861, %v7874
        %v7876 = vadd.f32 %v7875, 0.014752088
        %v7877 = vmul.f32 %v7861, %v7876
        %v7878 = vadd.f32 %v7877, 0.112945676
        %v7879 = vmul.f32 %v7861, %v7878
        %v7880 = vadd.f32 %v7879, 0.4994258
        %v7881 = vmul.f32 %v7861, %v7880
        %v7882 = vadd.f32 %v7881, 1.0
        %v7883 = vrcp.pop %v7882
        %v7884 = vmul.f32 %v7882, %v7883
        %v7885 = vsub.f32 1.0, %v7884
        %v7886 = vmul.f32 %v7883, %v7885
        %v7887 = vadd.f32 %v7883, %v7886
        %vm7888 = vweird.f32 %v7882
        %vm7889 = vweird.f32 %v7883
        %vm7890 = vmor %vm7888, %vm7889
        %v7891 = vsel %vm7890, %v7883, %v7887
        %v7892 = vand.u32 2147483647, %v7882
        %vm7893 = vcmp.eq.f32.partialorder %v7892, 8.507059e+37
        %v7894 = vand.u32 %v7882, 2147483648
        %v7895 = vor.u32 1.1754944e-38, %v7894
        %v7896 = vsel %vm7893, %v7895, %v7891
        %v7897 = vmul.f32 %v7872, %v7896
        %v7898 = vmin.f32 %v7897, 1.0
        %v7899 = vmax.f32 %v7898, -1.0
        %v7900 = vmul.f32 %v7634, %v7634
        %v7901 = vmin.f32 16.0, %v7900
        %v7902 = vmul.f32 %v7901, 2.1237322e-06
        %v7903 = vadd.f32 %v7902, 0.00028619796
        %v7904 = vmul.f32 %v7901, %v7903
        %v7905 = vadd.f32 %v7904, 0.0036580483
        %v7906 = vmul.f32 %v7901, %v7905
        %v7907 = vadd.f32 %v7906, 0.05243302
        %v7908 = vmul.f32 %v7901, %v7907
        %v7909 = vadd.f32 %v7908, 0.18741608
        %v7910 = vmul.f32 %v7901, %v7909
        %v7911 = vadd.f32 %v7910, 1.1283791
        %v7912 = vmul.f32 %v7634, %v7911
        %v7913 = vmul.f32 %v7901, 3.8918573e-05
        %v7914 = vadd.f32 %v7913, 0.001143296
        %v7915 = vmul.f32 %v7901, %v7914
        %v7916 = vadd.f32 %v7915, 0.014752088
        %v7917 = vmul.f32 %v7901, %v7916
        %v7918 = vadd.f32 %v7917, 0.112945676
        %v7919 = vmul.f32 %v7901, %v7918
        %v7920 = vadd.f32 %v7919, 0.4994258
        %v7921 = vmul.f32 %v7901, %v7920
        %v7922 = vadd.f32 %v7921, 1.0
        %v7923 = vrcp.pop %v7922
        %v7924 = vmul.f32 %v7922, %v7923
        %v7925 = vsub.f32 1.0, %v7924
        %v7926 = vmul.f32 %v7923, %v7925
        %v7927 = vadd.f32 %v7923, %v7926
        %vm7928 = vweird.f32 %v7922
        %vm7929 = vweird.f32 %v7923
        %vm7930 = vmor %vm7928, %vm7929
        %v7931 = vsel %vm7930, %v7923, %v7927
        %v7932 = vand.u32 2147483647, %v7922
        %vm7933 = vcmp.eq.f32.partialorder %v7932, 8.507059e+37
        %v7934 = vand.u32 %v7922, 2147483648
        %v7935 = vor.u32 1.1754944e-38, %v7934
        %v7936 = vsel %vm7933, %v7935, %v7931
        %v7937 = vmul.f32 %v7912, %v7936
        %v7938 = vmin.f32 %v7937, 1.0
        %v7939 = vmax.f32 %v7938, -1.0
        %v7940 = vmul.f32 %v7635, %v7635
        %v7941 = vmin.f32 16.0, %v7940
        %v7942 = vmul.f32 %v7941, 2.1237322e-06
        %v7943 = vadd.f32 %v7942, 0.00028619796
        %v7944 = vmul.f32 %v7941, %v7943
        %v7945 = vadd.f32 %v7944, 0.0036580483
        %v7946 = vmul.f32 %v7941, %v7945
        %v7947 = vadd.f32 %v7946, 0.05243302
        %v7948 = vmul.f32 %v7941, %v7947
        %v7949 = vadd.f32 %v7948, 0.18741608
        %v7950 = vmul.f32 %v7941, %v7949
        %v7951 = vadd.f32 %v7950, 1.1283791
        %v7952 = vmul.f32 %v7635, %v7951
        %v7953 = vmul.f32 %v7941, 3.8918573e-05
        %v7954 = vadd.f32 %v7953, 0.001143296
        %v7955 = vmul.f32 %v7941, %v7954
        %v7956 = vadd.f32 %v7955, 0.014752088
        %v7957 = vmul.f32 %v7941, %v7956
        %v7958 = vadd.f32 %v7957, 0.112945676
        %v7959 = vmul.f32 %v7941, %v7958
        %v7960 = vadd.f32 %v7959, 0.4994258
        %v7961 = vmul.f32 %v7941, %v7960
        %v7962 = vadd.f32 %v7961, 1.0
        %v7963 = vrcp.pop %v7962
        %v7964 = vmul.f32 %v7962, %v7963
        %v7965 = vsub.f32 1.0, %v7964
        %v7966 = vmul.f32 %v7963, %v7965
        %v7967 = vadd.f32 %v7963, %v7966
        %vm7968 = vweird.f32 %v7962
        %vm7969 = vweird.f32 %v7963
        %vm7970 = vmor %vm7968, %vm7969
        %v7971 = vsel %vm7970, %v7963, %v7967
        %v7972 = vand.u32 2147483647, %v7962
        %vm7973 = vcmp.eq.f32.partialorder %v7972, 8.507059e+37
        %v7974 = vand.u32 %v7962, 2147483648
        %v7975 = vor.u32 1.1754944e-38, %v7974
        %v7976 = vsel %vm7973, %v7975, %v7971
        %v7977 = vmul.f32 %v7952, %v7976
        %v7978 = vmin.f32 %v7977, 1.0
        %v7979 = vmax.f32 %v7978, -1.0
        %v7980 = vmul.f32 %v7636, %v7636
        %v7981 = vmin.f32 16.0, %v7980
        %v7982 = vmul.f32 %v7981, 2.1237322e-06
        %v7983 = vadd.f32 %v7982, 0.00028619796
        %v7984 = vmul.f32 %v7981, %v7983
        %v7985 = vadd.f32 %v7984, 0.0036580483
        %v7986 = vmul.f32 %v7981, %v7985
        %v7987 = vadd.f32 %v7986, 0.05243302
        %v7988 = vmul.f32 %v7981, %v7987
        %v7989 = vadd.f32 %v7988, 0.18741608
        %v7990 = vmul.f32 %v7981, %v7989
        %v7991 = vadd.f32 %v7990, 1.1283791
        %v7992 = vmul.f32 %v7636, %v7991
        %v7993 = vmul.f32 %v7981, 3.8918573e-05
        %v7994 = vadd.f32 %v7993, 0.001143296
        %v7995 = vmul.f32 %v7981, %v7994
        %v7996 = vadd.f32 %v7995, 0.014752088
        %v7997 = vmul.f32 %v7981, %v7996
        %v7998 = vadd.f32 %v7997, 0.112945676
        %v7999 = vmul.f32 %v7981, %v7998
        %v8000 = vadd.f32 %v7999, 0.4994258
        %v8001 = vmul.f32 %v7981, %v8000
        %v8002 = vadd.f32 %v8001, 1.0
        %v8003 = vrcp.pop %v8002
        %v8004 = vmul.f32 %v8002, %v8003
        %v8005 = vsub.f32 1.0, %v8004
        %v8006 = vmul.f32 %v8003, %v8005
        %v8007 = vadd.f32 %v8003, %v8006
        %vm8008 = vweird.f32 %v8002
        %vm8009 = vweird.f32 %v8003
        %vm8010 = vmor %vm8008, %vm8009
        %v8011 = vsel %vm8010, %v8003, %v8007
        %v8012 = vand.u32 2147483647, %v8002
        %vm8013 = vcmp.eq.f32.partialorder %v8012, 8.507059e+37
        %v8014 = vand.u32 %v8002, 2147483648
        %v8015 = vor.u32 1.1754944e-38, %v8014
        %v8016 = vsel %vm8013, %v8015, %v8011
        %v8017 = vmul.f32 %v7992, %v8016
        %v8018 = vmin.f32 %v8017, 1.0
        %v8019 = vmax.f32 %v8018, -1.0
        %v8020 = vmul.f32 %v7637, %v7637
        %v8021 = vmin.f32 16.0, %v8020
        %v8022 = vmul.f32 %v8021, 2.1237322e-06
        %v8023 = vadd.f32 %v8022, 0.00028619796
        %v8024 = vmul.f32 %v8021, %v8023
        %v8025 = vadd.f32 %v8024, 0.0036580483
        %v8026 = vmul.f32 %v8021, %v8025
        %v8027 = vadd.f32 %v8026, 0.05243302
        %v8028 = vmul.f32 %v8021, %v8027
        %v8029 = vadd.f32 %v8028, 0.18741608
        %v8030 = vmul.f32 %v8021, %v8029
        %v8031 = vadd.f32 %v8030, 1.1283791
        %v8032 = vmul.f32 %v7637, %v8031
        %v8033 = vmul.f32 %v8021, 3.8918573e-05
        %v8034 = vadd.f32 %v8033, 0.001143296
        %v8035 = vmul.f32 %v8021, %v8034
        %v8036 = vadd.f32 %v8035, 0.014752088
        %v8037 = vmul.f32 %v8021, %v8036
        %v8038 = vadd.f32 %v8037, 0.112945676
        %v8039 = vmul.f32 %v8021, %v8038
        %v8040 = vadd.f32 %v8039, 0.4994258
        %v8041 = vmul.f32 %v8021, %v8040
        %v8042 = vadd.f32 %v8041, 1.0
        %v8043 = vrcp.pop %v8042
        %v8044 = vmul.f32 %v8042, %v8043
        %v8045 = vsub.f32 1.0, %v8044
        %v8046 = vmul.f32 %v8043, %v8045
        %v8047 = vadd.f32 %v8043, %v8046
        %vm8048 = vweird.f32 %v8042
        %vm8049 = vweird.f32 %v8043
        %vm8050 = vmor %vm8048, %vm8049
        %v8051 = vsel %vm8050, %v8043, %v8047
        %v8052 = vand.u32 2147483647, %v8042
        %vm8053 = vcmp.eq.f32.partialorder %v8052, 8.507059e+37
        %v8054 = vand.u32 %v8042, 2147483648
        %v8055 = vor.u32 1.1754944e-38, %v8054
        %v8056 = vsel %vm8053, %v8055, %v8051
        %v8057 = vmul.f32 %v8032, %v8056
        %v8058 = vmin.f32 %v8057, 1.0
        %v8059 = vmax.f32 %v8058, -1.0
        %v8060 = vmul.f32 %v7638, %v7638
        %v8061 = vmin.f32 16.0, %v8060
        %v8062 = vmul.f32 %v8061, 2.1237322e-06
        %v8063 = vadd.f32 %v8062, 0.00028619796
        %v8064 = vmul.f32 %v8061, %v8063
        %v8065 = vadd.f32 %v8064, 0.0036580483
        %v8066 = vmul.f32 %v8061, %v8065
        %v8067 = vadd.f32 %v8066, 0.05243302
        %v8068 = vmul.f32 %v8061, %v8067
        %v8069 = vadd.f32 %v8068, 0.18741608
        %v8070 = vmul.f32 %v8061, %v8069
        %v8071 = vadd.f32 %v8070, 1.1283791
        %v8072 = vmul.f32 %v7638, %v8071
        %v8073 = vmul.f32 %v8061, 3.8918573e-05
        %v8074 = vadd.f32 %v8073, 0.001143296
        %v8075 = vmul.f32 %v8061, %v8074
        %v8076 = vadd.f32 %v8075, 0.014752088
        %v8077 = vmul.f32 %v8061, %v8076
        %v8078 = vadd.f32 %v8077, 0.112945676
        %v8079 = vmul.f32 %v8061, %v8078
        %v8080 = vadd.f32 %v8079, 0.4994258
        %v8081 = vmul.f32 %v8061, %v8080
        %v8082 = vadd.f32 %v8081, 1.0
        %v8083 = vrcp.pop %v8082
        %v8084 = vmul.f32 %v8082, %v8083
        %v8085 = vsub.f32 1.0, %v8084
        %v8086 = vmul.f32 %v8083, %v8085
        %v8087 = vadd.f32 %v8083, %v8086
        %vm8088 = vweird.f32 %v8082
        %vm8089 = vweird.f32 %v8083
        %vm8090 = vmor %vm8088, %vm8089
        %v8091 = vsel %vm8090, %v8083, %v8087
        %v8092 = vand.u32 2147483647, %v8082
        %vm8093 = vcmp.eq.f32.partialorder %v8092, 8.507059e+37
        %v8094 = vand.u32 %v8082, 2147483648
        %v8095 = vor.u32 1.1754944e-38, %v8094
        %v8096 = vsel %vm8093, %v8095, %v8091
        %v8097 = vmul.f32 %v8072, %v8096
        %v8098 = vmin.f32 %v8097, 1.0
        %v8099 = vmax.f32 %v8098, -1.0
        %v8100 = vmul.f32 %v7639, %v7639
        %v8101 = vmin.f32 16.0, %v8100
        %v8102 = vmul.f32 %v8101, 2.1237322e-06
        %v8103 = vadd.f32 %v8102, 0.00028619796
        %v8104 = vmul.f32 %v8101, %v8103
        %v8105 = vadd.f32 %v8104, 0.0036580483
        %v8106 = vmul.f32 %v8101, %v8105
        %v8107 = vadd.f32 %v8106, 0.05243302
        %v8108 = vmul.f32 %v8101, %v8107
        %v8109 = vadd.f32 %v8108, 0.18741608
        %v8110 = vmul.f32 %v8101, %v8109
        %v8111 = vadd.f32 %v8110, 1.1283791
        %v8112 = vmul.f32 %v7639, %v8111
        %v8113 = vmul.f32 %v8101, 3.8918573e-05
        %v8114 = vadd.f32 %v8113, 0.001143296
        %v8115 = vmul.f32 %v8101, %v8114
        %v8116 = vadd.f32 %v8115, 0.014752088
        %v8117 = vmul.f32 %v8101, %v8116
        %v8118 = vadd.f32 %v8117, 0.112945676
        %v8119 = vmul.f32 %v8101, %v8118
        %v8120 = vadd.f32 %v8119, 0.4994258
        %v8121 = vmul.f32 %v8101, %v8120
        %v8122 = vadd.f32 %v8121, 1.0
        %v8123 = vrcp.pop %v8122
        %v8124 = vmul.f32 %v8122, %v8123
        %v8125 = vsub.f32 1.0, %v8124
        %v8126 = vmul.f32 %v8123, %v8125
        %v8127 = vadd.f32 %v8123, %v8126
        %vm8128 = vweird.f32 %v8122
        %vm8129 = vweird.f32 %v8123
        %vm8130 = vmor %vm8128, %vm8129
        %v8131 = vsel %vm8130, %v8123, %v8127
        %v8132 = vand.u32 2147483647, %v8122
        %vm8133 = vcmp.eq.f32.partialorder %v8132, 8.507059e+37
        %v8134 = vand.u32 %v8122, 2147483648
        %v8135 = vor.u32 1.1754944e-38, %v8134
        %v8136 = vsel %vm8133, %v8135, %v8131
        %v8137 = vmul.f32 %v8112, %v8136
        %v8138 = vmin.f32 %v8137, 1.0
        %v8139 = vmax.f32 %v8138, -1.0
        %v8140 = vmul.f32 %v7640, %v7640
        %v8141 = vmin.f32 16.0, %v8140
        %v8142 = vmul.f32 %v8141, 2.1237322e-06
        %v8143 = vadd.f32 %v8142, 0.00028619796
        %v8144 = vmul.f32 %v8141, %v8143
        %v8145 = vadd.f32 %v8144, 0.0036580483
        %v8146 = vmul.f32 %v8141, %v8145
        %v8147 = vadd.f32 %v8146, 0.05243302
        %v8148 = vmul.f32 %v8141, %v8147
        %v8149 = vadd.f32 %v8148, 0.18741608
        %v8150 = vmul.f32 %v8141, %v8149
        %v8151 = vadd.f32 %v8150, 1.1283791
        %v8152 = vmul.f32 %v7640, %v8151
        %v8153 = vmul.f32 %v8141, 3.8918573e-05
        %v8154 = vadd.f32 %v8153, 0.001143296
        %v8155 = vmul.f32 %v8141, %v8154
        %v8156 = vadd.f32 %v8155, 0.014752088
        %v8157 = vmul.f32 %v8141, %v8156
        %v8158 = vadd.f32 %v8157, 0.112945676
        %v8159 = vmul.f32 %v8141, %v8158
        %v8160 = vadd.f32 %v8159, 0.4994258
        %v8161 = vmul.f32 %v8141, %v8160
        %v8162 = vadd.f32 %v8161, 1.0
        %v8163 = vrcp.pop %v8162
        %v8164 = vmul.f32 %v8162, %v8163
        %v8165 = vsub.f32 1.0, %v8164
        %v8166 = vmul.f32 %v8163, %v8165
        %v8167 = vadd.f32 %v8163, %v8166
        %vm8168 = vweird.f32 %v8162
        %vm8169 = vweird.f32 %v8163
        %vm8170 = vmor %vm8168, %vm8169
        %v8171 = vsel %vm8170, %v8163, %v8167
        %v8172 = vand.u32 2147483647, %v8162
        %vm8173 = vcmp.eq.f32.partialorder %v8172, 8.507059e+37
        %v8174 = vand.u32 %v8162, 2147483648
        %v8175 = vor.u32 1.1754944e-38, %v8174
        %v8176 = vsel %vm8173, %v8175, %v8171
        %v8177 = vmul.f32 %v8152, %v8176
        %v8178 = vmin.f32 %v8177, 1.0
        %v8179 = vmax.f32 %v8178, -1.0
        %v8180 = vmul.f32 %v7641, %v7641
        %v8181 = vmin.f32 16.0, %v8180
        %v8182 = vmul.f32 %v8181, 2.1237322e-06
        %v8183 = vadd.f32 %v8182, 0.00028619796
        %v8184 = vmul.f32 %v8181, %v8183
        %v8185 = vadd.f32 %v8184, 0.0036580483
        %v8186 = vmul.f32 %v8181, %v8185
        %v8187 = vadd.f32 %v8186, 0.05243302
        %v8188 = vmul.f32 %v8181, %v8187
        %v8189 = vadd.f32 %v8188, 0.18741608
        %v8190 = vmul.f32 %v8181, %v8189
        %v8191 = vadd.f32 %v8190, 1.1283791
        %v8192 = vmul.f32 %v7641, %v8191
        %v8193 = vmul.f32 %v8181, 3.8918573e-05
        %v8194 = vadd.f32 %v8193, 0.001143296
        %v8195 = vmul.f32 %v8181, %v8194
        %v8196 = vadd.f32 %v8195, 0.014752088
        %v8197 = vmul.f32 %v8181, %v8196
        %v8198 = vadd.f32 %v8197, 0.112945676
        %v8199 = vmul.f32 %v8181, %v8198
        %v8200 = vadd.f32 %v8199, 0.4994258
        %v8201 = vmul.f32 %v8181, %v8200
        %v8202 = vadd.f32 %v8201, 1.0
        %v8203 = vrcp.pop %v8202
        %v8204 = vmul.f32 %v8202, %v8203
        %v8205 = vsub.f32 1.0, %v8204
        %v8206 = vmul.f32 %v8203, %v8205
        %v8207 = vadd.f32 %v8203, %v8206
        %vm8208 = vweird.f32 %v8202
        %vm8209 = vweird.f32 %v8203
        %vm8210 = vmor %vm8208, %vm8209
        %v8211 = vsel %vm8210, %v8203, %v8207
        %v8212 = vand.u32 2147483647, %v8202
        %vm8213 = vcmp.eq.f32.partialorder %v8212, 8.507059e+37
        %v8214 = vand.u32 %v8202, 2147483648
        %v8215 = vor.u32 1.1754944e-38, %v8214
        %v8216 = vsel %vm8213, %v8215, %v8211
        %v8217 = vmul.f32 %v8192, %v8216
        %v8218 = vmin.f32 %v8217, 1.0
        %v8219 = vmax.f32 %v8218, -1.0
        %v8220 = vmul.f32 %v7642, %v7642
        %v8221 = vmin.f32 16.0, %v8220
        %v8222 = vmul.f32 %v8221, 2.1237322e-06
        %v8223 = vadd.f32 %v8222, 0.00028619796
        %v8224 = vmul.f32 %v8221, %v8223
        %v8225 = vadd.f32 %v8224, 0.0036580483
        %v8226 = vmul.f32 %v8221, %v8225
        %v8227 = vadd.f32 %v8226, 0.05243302
        %v8228 = vmul.f32 %v8221, %v8227
        %v8229 = vadd.f32 %v8228, 0.18741608
        %v8230 = vmul.f32 %v8221, %v8229
        %v8231 = vadd.f32 %v8230, 1.1283791
        %v8232 = vmul.f32 %v7642, %v8231
        %v8233 = vmul.f32 %v8221, 3.8918573e-05
        %v8234 = vadd.f32 %v8233, 0.001143296
        %v8235 = vmul.f32 %v8221, %v8234
        %v8236 = vadd.f32 %v8235, 0.014752088
        %v8237 = vmul.f32 %v8221, %v8236
        %v8238 = vadd.f32 %v8237, 0.112945676
        %v8239 = vmul.f32 %v8221, %v8238
        %v8240 = vadd.f32 %v8239, 0.4994258
        %v8241 = vmul.f32 %v8221, %v8240
        %v8242 = vadd.f32 %v8241, 1.0
        %v8243 = vrcp.pop %v8242
        %v8244 = vmul.f32 %v8242, %v8243
        %v8245 = vsub.f32 1.0, %v8244
        %v8246 = vmul.f32 %v8243, %v8245
        %v8247 = vadd.f32 %v8243, %v8246
        %vm8248 = vweird.f32 %v8242
        %vm8249 = vweird.f32 %v8243
        %vm8250 = vmor %vm8248, %vm8249
        %v8251 = vsel %vm8250, %v8243, %v8247
        %v8252 = vand.u32 2147483647, %v8242
        %vm8253 = vcmp.eq.f32.partialorder %v8252, 8.507059e+37
        %v8254 = vand.u32 %v8242, 2147483648
        %v8255 = vor.u32 1.1754944e-38, %v8254
        %v8256 = vsel %vm8253, %v8255, %v8251
        %v8257 = vmul.f32 %v8232, %v8256
        %v8258 = vmin.f32 %v8257, 1.0
        %v8259 = vmax.f32 %v8258, -1.0
        %v8260 = vmul.f32 %v7643, %v7643
        %v8261 = vmin.f32 16.0, %v8260
        %v8262 = vmul.f32 %v8261, 2.1237322e-06
        %v8263 = vadd.f32 %v8262, 0.00028619796
        %v8264 = vmul.f32 %v8261, %v8263
        %v8265 = vadd.f32 %v8264, 0.0036580483
        %v8266 = vmul.f32 %v8261, %v8265
        %v8267 = vadd.f32 %v8266, 0.05243302
        %v8268 = vmul.f32 %v8261, %v8267
        %v8269 = vadd.f32 %v8268, 0.18741608
        %v8270 = vmul.f32 %v8261, %v8269
        %v8271 = vadd.f32 %v8270, 1.1283791
        %v8272 = vmul.f32 %v7643, %v8271
        %v8273 = vmul.f32 %v8261, 3.8918573e-05
        %v8274 = vadd.f32 %v8273, 0.001143296
        %v8275 = vmul.f32 %v8261, %v8274
        %v8276 = vadd.f32 %v8275, 0.014752088
        %v8277 = vmul.f32 %v8261, %v8276
        %v8278 = vadd.f32 %v8277, 0.112945676
        %v8279 = vmul.f32 %v8261, %v8278
        %v8280 = vadd.f32 %v8279, 0.4994258
        %v8281 = vmul.f32 %v8261, %v8280
        %v8282 = vadd.f32 %v8281, 1.0
        %v8283 = vrcp.pop %v8282
        %v8284 = vmul.f32 %v8282, %v8283
        %v8285 = vsub.f32 1.0, %v8284
        %v8286 = vmul.f32 %v8283, %v8285
        %v8287 = vadd.f32 %v8283, %v8286
        %vm8288 = vweird.f32 %v8282
        %vm8289 = vweird.f32 %v8283
        %vm8290 = vmor %vm8288, %vm8289
        %v8291 = vsel %vm8290, %v8283, %v8287
        %v8292 = vand.u32 2147483647, %v8282
        %vm8293 = vcmp.eq.f32.partialorder %v8292, 8.507059e+37
        %v8294 = vand.u32 %v8282, 2147483648
        %v8295 = vor.u32 1.1754944e-38, %v8294
        %v8296 = vsel %vm8293, %v8295, %v8291
        %v8297 = vmul.f32 %v8272, %v8296
        %v8298 = vmin.f32 %v8297, 1.0
        %v8299 = vmax.f32 %v8298, -1.0
        %v8300 = vmul.f32 %v7644, %v7644
        %v8301 = vmin.f32 16.0, %v8300
        %v8302 = vmul.f32 %v8301, 2.1237322e-06
        %v8303 = vadd.f32 %v8302, 0.00028619796
        %v8304 = vmul.f32 %v8301, %v8303
        %v8305 = vadd.f32 %v8304, 0.0036580483
        %v8306 = vmul.f32 %v8301, %v8305
        %v8307 = vadd.f32 %v8306, 0.05243302
        %v8308 = vmul.f32 %v8301, %v8307
        %v8309 = vadd.f32 %v8308, 0.18741608
        %v8310 = vmul.f32 %v8301, %v8309
        %v8311 = vadd.f32 %v8310, 1.1283791
        %v8312 = vmul.f32 %v7644, %v8311
        %v8313 = vmul.f32 %v8301, 3.8918573e-05
        %v8314 = vadd.f32 %v8313, 0.001143296
        %v8315 = vmul.f32 %v8301, %v8314
        %v8316 = vadd.f32 %v8315, 0.014752088
        %v8317 = vmul.f32 %v8301, %v8316
        %v8318 = vadd.f32 %v8317, 0.112945676
        %v8319 = vmul.f32 %v8301, %v8318
        %v8320 = vadd.f32 %v8319, 0.4994258
        %v8321 = vmul.f32 %v8301, %v8320
        %v8322 = vadd.f32 %v8321, 1.0
        %v8323 = vrcp.pop %v8322
        %v8324 = vmul.f32 %v8322, %v8323
        %v8325 = vsub.f32 1.0, %v8324
        %v8326 = vmul.f32 %v8323, %v8325
        %v8327 = vadd.f32 %v8323, %v8326
        %vm8328 = vweird.f32 %v8322
        %vm8329 = vweird.f32 %v8323
        %vm8330 = vmor %vm8328, %vm8329
        %v8331 = vsel %vm8330, %v8323, %v8327
        %v8332 = vand.u32 2147483647, %v8322
        %vm8333 = vcmp.eq.f32.partialorder %v8332, 8.507059e+37
        %v8334 = vand.u32 %v8322, 2147483648
        %v8335 = vor.u32 1.1754944e-38, %v8334
        %v8336 = vsel %vm8333, %v8335, %v8331
        %v8337 = vmul.f32 %v8312, %v8336
        %v8338 = vmin.f32 %v8337, 1.0
        %v8339 = vmax.f32 %v8338, -1.0
        %v8340 = vmul.f32 %v7645, %v7645
        %v8341 = vmin.f32 16.0, %v8340
        %v8342 = vmul.f32 %v8341, 2.1237322e-06
        %v8343 = vadd.f32 %v8342, 0.00028619796
        %v8344 = vmul.f32 %v8341, %v8343
        %v8345 = vadd.f32 %v8344, 0.0036580483
        %v8346 = vmul.f32 %v8341, %v8345
        %v8347 = vadd.f32 %v8346, 0.05243302
        %v8348 = vmul.f32 %v8341, %v8347
        %v8349 = vadd.f32 %v8348, 0.18741608
        %v8350 = vmul.f32 %v8341, %v8349
        %v8351 = vadd.f32 %v8350, 1.1283791
        %v8352 = vmul.f32 %v7645, %v8351
        %v8353 = vmul.f32 %v8341, 3.8918573e-05
        %v8354 = vadd.f32 %v8353, 0.001143296
        %v8355 = vmul.f32 %v8341, %v8354
        %v8356 = vadd.f32 %v8355, 0.014752088
        %v8357 = vmul.f32 %v8341, %v8356
        %v8358 = vadd.f32 %v8357, 0.112945676
        %v8359 = vmul.f32 %v8341, %v8358
        %v8360 = vadd.f32 %v8359, 0.4994258
        %v8361 = vmul.f32 %v8341, %v8360
        %v8362 = vadd.f32 %v8361, 1.0
        %v8363 = vrcp.pop %v8362
        %v8364 = vmul.f32 %v8362, %v8363
        %v8365 = vsub.f32 1.0, %v8364
        %v8366 = vmul.f32 %v8363, %v8365
        %v8367 = vadd.f32 %v8363, %v8366
        %vm8368 = vweird.f32 %v8362
        %vm8369 = vweird.f32 %v8363
        %vm8370 = vmor %vm8368, %vm8369
        %v8371 = vsel %vm8370, %v8363, %v8367
        %v8372 = vand.u32 2147483647, %v8362
        %vm8373 = vcmp.eq.f32.partialorder %v8372, 8.507059e+37
        %v8374 = vand.u32 %v8362, 2147483648
        %v8375 = vor.u32 1.1754944e-38, %v8374
        %v8376 = vsel %vm8373, %v8375, %v8371
        %v8377 = vmul.f32 %v8352, %v8376
        %v8378 = vmin.f32 %v8377, 1.0
        %v8379 = vmax.f32 %v8378, -1.0
        %v8380 = vmul.f32 %v7646, %v7646
        %v8381 = vmin.f32 16.0, %v8380
        %v8382 = vmul.f32 %v8381, 2.1237322e-06
        %v8383 = vadd.f32 %v8382, 0.00028619796
        %v8384 = vmul.f32 %v8381, %v8383
        %v8385 = vadd.f32 %v8384, 0.0036580483
        %v8386 = vmul.f32 %v8381, %v8385
        %v8387 = vadd.f32 %v8386, 0.05243302
        %v8388 = vmul.f32 %v8381, %v8387
        %v8389 = vadd.f32 %v8388, 0.18741608
        %v8390 = vmul.f32 %v8381, %v8389
        %v8391 = vadd.f32 %v8390, 1.1283791
        %v8392 = vmul.f32 %v7646, %v8391
        %v8393 = vmul.f32 %v8381, 3.8918573e-05
        %v8394 = vadd.f32 %v8393, 0.001143296
        %v8395 = vmul.f32 %v8381, %v8394
        %v8396 = vadd.f32 %v8395, 0.014752088
        %v8397 = vmul.f32 %v8381, %v8396
        %v8398 = vadd.f32 %v8397, 0.112945676
        %v8399 = vmul.f32 %v8381, %v8398
        %v8400 = vadd.f32 %v8399, 0.4994258
        %v8401 = vmul.f32 %v8381, %v8400
        %v8402 = vadd.f32 %v8401, 1.0
        %v8403 = vrcp.pop %v8402
        %v8404 = vmul.f32 %v8402, %v8403
        %v8405 = vsub.f32 1.0, %v8404
        %v8406 = vmul.f32 %v8403, %v8405
        %v8407 = vadd.f32 %v8403, %v8406
        %vm8408 = vweird.f32 %v8402
        %vm8409 = vweird.f32 %v8403
        %vm8410 = vmor %vm8408, %vm8409
        %v8411 = vsel %vm8410, %v8403, %v8407
        %v8412 = vand.u32 2147483647, %v8402
        %vm8413 = vcmp.eq.f32.partialorder %v8412, 8.507059e+37
        %v8414 = vand.u32 %v8402, 2147483648
        %v8415 = vor.u32 1.1754944e-38, %v8414
        %v8416 = vsel %vm8413, %v8415, %v8411
        %v8417 = vmul.f32 %v8392, %v8416
        %v8418 = vmin.f32 %v8417, 1.0
        %v8419 = vmax.f32 %v8418, -1.0
        %v8420 = vmul.f32 %v7647, %v7647
        %v8421 = vmin.f32 16.0, %v8420
        %v8422 = vmul.f32 %v8421, 2.1237322e-06
        %v8423 = vadd.f32 %v8422, 0.00028619796
        %v8424 = vmul.f32 %v8421, %v8423
        %v8425 = vadd.f32 %v8424, 0.0036580483
        %v8426 = vmul.f32 %v8421, %v8425
        %v8427 = vadd.f32 %v8426, 0.05243302
        %v8428 = vmul.f32 %v8421, %v8427
        %v8429 = vadd.f32 %v8428, 0.18741608
        %v8430 = vmul.f32 %v8421, %v8429
        %v8431 = vadd.f32 %v8430, 1.1283791
        %v8432 = vmul.f32 %v7647, %v8431
        %v8433 = vmul.f32 %v8421, 3.8918573e-05
        %v8434 = vadd.f32 %v8433, 0.001143296
        %v8435 = vmul.f32 %v8421, %v8434
        %v8436 = vadd.f32 %v8435, 0.014752088
        %v8437 = vmul.f32 %v8421, %v8436
        %v8438 = vadd.f32 %v8437, 0.112945676
        %v8439 = vmul.f32 %v8421, %v8438
        %v8440 = vadd.f32 %v8439, 0.4994258
        %v8441 = vmul.f32 %v8421, %v8440
        %v8442 = vadd.f32 %v8441, 1.0
        %v8443 = vrcp.pop %v8442
        %v8444 = vmul.f32 %v8442, %v8443
        %v8445 = vsub.f32 1.0, %v8444
        %v8446 = vmul.f32 %v8443, %v8445
        %v8447 = vadd.f32 %v8443, %v8446
        %vm8448 = vweird.f32 %v8442
        %vm8449 = vweird.f32 %v8443
        %vm8450 = vmor %vm8448, %vm8449
        %v8451 = vsel %vm8450, %v8443, %v8447
        %v8452 = vand.u32 2147483647, %v8442
        %vm8453 = vcmp.eq.f32.partialorder %v8452, 8.507059e+37
        %v8454 = vand.u32 %v8442, 2147483648
        %v8455 = vor.u32 1.1754944e-38, %v8454
        %v8456 = vsel %vm8453, %v8455, %v8451
        %v8457 = vmul.f32 %v8432, %v8456
        %v8458 = vmin.f32 %v8457, 1.0
        %v8459 = vmax.f32 %v8458, -1.0
        %v8460 = vmul.f32 %v7648, %v7648
        %v8461 = vmin.f32 16.0, %v8460
        %v8462 = vmul.f32 %v8461, 2.1237322e-06
        %v8463 = vadd.f32 %v8462, 0.00028619796
        %v8464 = vmul.f32 %v8461, %v8463
        %v8465 = vadd.f32 %v8464, 0.0036580483
        %v8466 = vmul.f32 %v8461, %v8465
        %v8467 = vadd.f32 %v8466, 0.05243302
        %v8468 = vmul.f32 %v8461, %v8467
        %v8469 = vadd.f32 %v8468, 0.18741608
        %v8470 = vmul.f32 %v8461, %v8469
        %v8471 = vadd.f32 %v8470, 1.1283791
        %v8472 = vmul.f32 %v7648, %v8471
        %v8473 = vmul.f32 %v8461, 3.8918573e-05
        %v8474 = vadd.f32 %v8473, 0.001143296
        %v8475 = vmul.f32 %v8461, %v8474
        %v8476 = vadd.f32 %v8475, 0.014752088
        %v8477 = vmul.f32 %v8461, %v8476
        %v8478 = vadd.f32 %v8477, 0.112945676
        %v8479 = vmul.f32 %v8461, %v8478
        %v8480 = vadd.f32 %v8479, 0.4994258
        %v8481 = vmul.f32 %v8461, %v8480
        %v8482 = vadd.f32 %v8481, 1.0
        %v8483 = vrcp.pop %v8482
        %v8484 = vmul.f32 %v8482, %v8483
        %v8485 = vsub.f32 1.0, %v8484
        %v8486 = vmul.f32 %v8483, %v8485
        %v8487 = vadd.f32 %v8483, %v8486
        %vm8488 = vweird.f32 %v8482
        %vm8489 = vweird.f32 %v8483
        %vm8490 = vmor %vm8488, %vm8489
        %v8491 = vsel %vm8490, %v8483, %v8487
        %v8492 = vand.u32 2147483647, %v8482
        %vm8493 = vcmp.eq.f32.partialorder %v8492, 8.507059e+37
        %v8494 = vand.u32 %v8482, 2147483648
        %v8495 = vor.u32 1.1754944e-38, %v8494
        %v8496 = vsel %vm8493, %v8495, %v8491
        %v8497 = vmul.f32 %v8472, %v8496
        %v8498 = vmin.f32 %v8497, 1.0
        %v8499 = vmax.f32 %v8498, -1.0
        %v8500 = vmul.f32 %v7649, %v7649
        %v8501 = vmin.f32 16.0, %v8500
        %v8502 = vmul.f32 %v8501, 2.1237322e-06
        %v8503 = vadd.f32 %v8502, 0.00028619796
        %v8504 = vmul.f32 %v8501, %v8503
        %v8505 = vadd.f32 %v8504, 0.0036580483
        %v8506 = vmul.f32 %v8501, %v8505
        %v8507 = vadd.f32 %v8506, 0.05243302
        %v8508 = vmul.f32 %v8501, %v8507
        %v8509 = vadd.f32 %v8508, 0.18741608
        %v8510 = vmul.f32 %v8501, %v8509
        %v8511 = vadd.f32 %v8510, 1.1283791
        %v8512 = vmul.f32 %v7649, %v8511
        %v8513 = vmul.f32 %v8501, 3.8918573e-05
        %v8514 = vadd.f32 %v8513, 0.001143296
        %v8515 = vmul.f32 %v8501, %v8514
        %v8516 = vadd.f32 %v8515, 0.014752088
        %v8517 = vmul.f32 %v8501, %v8516
        %v8518 = vadd.f32 %v8517, 0.112945676
        %v8519 = vmul.f32 %v8501, %v8518
        %v8520 = vadd.f32 %v8519, 0.4994258
        %v8521 = vmul.f32 %v8501, %v8520
        %v8522 = vadd.f32 %v8521, 1.0
        %v8523 = vrcp.pop %v8522
        %v8524 = vmul.f32 %v8522, %v8523
        %v8525 = vsub.f32 1.0, %v8524
        %v8526 = vmul.f32 %v8523, %v8525
        %v8527 = vadd.f32 %v8523, %v8526
        %vm8528 = vweird.f32 %v8522
        %vm8529 = vweird.f32 %v8523
        %vm8530 = vmor %vm8528, %vm8529
        %v8531 = vsel %vm8530, %v8523, %v8527
        %v8532 = vand.u32 2147483647, %v8522
        %vm8533 = vcmp.eq.f32.partialorder %v8532, 8.507059e+37
        %v8534 = vand.u32 %v8522, 2147483648
        %v8535 = vor.u32 1.1754944e-38, %v8534
        %v8536 = vsel %vm8533, %v8535, %v8531
        %v8537 = vmul.f32 %v8512, %v8536
        %v8538 = vmin.f32 %v8537, 1.0
        %v8539 = vmax.f32 %v8538, -1.0
        %v8540 = vmul.f32 %v7650, %v7650
        %v8541 = vmin.f32 16.0, %v8540
        %v8542 = vmul.f32 %v8541, 2.1237322e-06
        %v8543 = vadd.f32 %v8542, 0.00028619796
        %v8544 = vmul.f32 %v8541, %v8543
        %v8545 = vadd.f32 %v8544, 0.0036580483
        %v8546 = vmul.f32 %v8541, %v8545
        %v8547 = vadd.f32 %v8546, 0.05243302
        %v8548 = vmul.f32 %v8541, %v8547
        %v8549 = vadd.f32 %v8548, 0.18741608
        %v8550 = vmul.f32 %v8541, %v8549
        %v8551 = vadd.f32 %v8550, 1.1283791
        %v8552 = vmul.f32 %v7650, %v8551
        %v8553 = vmul.f32 %v8541, 3.8918573e-05
        %v8554 = vadd.f32 %v8553, 0.001143296
        %v8555 = vmul.f32 %v8541, %v8554
        %v8556 = vadd.f32 %v8555, 0.014752088
        %v8557 = vmul.f32 %v8541, %v8556
        %v8558 = vadd.f32 %v8557, 0.112945676
        %v8559 = vmul.f32 %v8541, %v8558
        %v8560 = vadd.f32 %v8559, 0.4994258
        %v8561 = vmul.f32 %v8541, %v8560
        %v8562 = vadd.f32 %v8561, 1.0
        %v8563 = vrcp.pop %v8562
        %v8564 = vmul.f32 %v8562, %v8563
        %v8565 = vsub.f32 1.0, %v8564
        %v8566 = vmul.f32 %v8563, %v8565
        %v8567 = vadd.f32 %v8563, %v8566
        %vm8568 = vweird.f32 %v8562
        %vm8569 = vweird.f32 %v8563
        %vm8570 = vmor %vm8568, %vm8569
        %v8571 = vsel %vm8570, %v8563, %v8567
        %v8572 = vand.u32 2147483647, %v8562
        %vm8573 = vcmp.eq.f32.partialorder %v8572, 8.507059e+37
        %v8574 = vand.u32 %v8562, 2147483648
        %v8575 = vor.u32 1.1754944e-38, %v8574
        %v8576 = vsel %vm8573, %v8575, %v8571
        %v8577 = vmul.f32 %v8552, %v8576
        %v8578 = vmin.f32 %v8577, 1.0
        %v8579 = vmax.f32 %v8578, -1.0
        %v8580 = vmul.f32 %v7651, %v7651
        %v8581 = vmin.f32 16.0, %v8580
        %v8582 = vmul.f32 %v8581, 2.1237322e-06
        %v8583 = vadd.f32 %v8582, 0.00028619796
        %v8584 = vmul.f32 %v8581, %v8583
        %v8585 = vadd.f32 %v8584, 0.0036580483
        %v8586 = vmul.f32 %v8581, %v8585
        %v8587 = vadd.f32 %v8586, 0.05243302
        %v8588 = vmul.f32 %v8581, %v8587
        %v8589 = vadd.f32 %v8588, 0.18741608
        %v8590 = vmul.f32 %v8581, %v8589
        %v8591 = vadd.f32 %v8590, 1.1283791
        %v8592 = vmul.f32 %v7651, %v8591
        %v8593 = vmul.f32 %v8581, 3.8918573e-05
        %v8594 = vadd.f32 %v8593, 0.001143296
        %v8595 = vmul.f32 %v8581, %v8594
        %v8596 = vadd.f32 %v8595, 0.014752088
        %v8597 = vmul.f32 %v8581, %v8596
        %v8598 = vadd.f32 %v8597, 0.112945676
        %v8599 = vmul.f32 %v8581, %v8598
        %v8600 = vadd.f32 %v8599, 0.4994258
        %v8601 = vmul.f32 %v8581, %v8600
        %v8602 = vadd.f32 %v8601, 1.0
        %v8603 = vrcp.pop %v8602
        %v8604 = vmul.f32 %v8602, %v8603
        %v8605 = vsub.f32 1.0, %v8604
        %v8606 = vmul.f32 %v8603, %v8605
        %v8607 = vadd.f32 %v8603, %v8606
        %vm8608 = vweird.f32 %v8602
        %vm8609 = vweird.f32 %v8603
        %vm8610 = vmor %vm8608, %vm8609
        %v8611 = vsel %vm8610, %v8603, %v8607
        %v8612 = vand.u32 2147483647, %v8602
        %vm8613 = vcmp.eq.f32.partialorder %v8612, 8.507059e+37
        %v8614 = vand.u32 %v8602, 2147483648
        %v8615 = vor.u32 1.1754944e-38, %v8614
        %v8616 = vsel %vm8613, %v8615, %v8611
        %v8617 = vmul.f32 %v8592, %v8616
        %v8618 = vmin.f32 %v8617, 1.0
        %v8619 = vmax.f32 %v8618, -1.0
        %v8620 = vmul.f32 %v7652, %v7652
        %v8621 = vmin.f32 16.0, %v8620
        %v8622 = vmul.f32 %v8621, 2.1237322e-06
        %v8623 = vadd.f32 %v8622, 0.00028619796
        %v8624 = vmul.f32 %v8621, %v8623
        %v8625 = vadd.f32 %v8624, 0.0036580483
        %v8626 = vmul.f32 %v8621, %v8625
        %v8627 = vadd.f32 %v8626, 0.05243302
        %v8628 = vmul.f32 %v8621, %v8627
        %v8629 = vadd.f32 %v8628, 0.18741608
        %v8630 = vmul.f32 %v8621, %v8629
        %v8631 = vadd.f32 %v8630, 1.1283791
        %v8632 = vmul.f32 %v7652, %v8631
        %v8633 = vmul.f32 %v8621, 3.8918573e-05
        %v8634 = vadd.f32 %v8633, 0.001143296
        %v8635 = vmul.f32 %v8621, %v8634
        %v8636 = vadd.f32 %v8635, 0.014752088
        %v8637 = vmul.f32 %v8621, %v8636
        %v8638 = vadd.f32 %v8637, 0.112945676
        %v8639 = vmul.f32 %v8621, %v8638
        %v8640 = vadd.f32 %v8639, 0.4994258
        %v8641 = vmul.f32 %v8621, %v8640
        %v8642 = vadd.f32 %v8641, 1.0
        %v8643 = vrcp.pop %v8642
        %v8644 = vmul.f32 %v8642, %v8643
        %v8645 = vsub.f32 1.0, %v8644
        %v8646 = vmul.f32 %v8643, %v8645
        %v8647 = vadd.f32 %v8643, %v8646
        %vm8648 = vweird.f32 %v8642
        %vm8649 = vweird.f32 %v8643
        %vm8650 = vmor %vm8648, %vm8649
        %v8651 = vsel %vm8650, %v8643, %v8647
        %v8652 = vand.u32 2147483647, %v8642
        %vm8653 = vcmp.eq.f32.partialorder %v8652, 8.507059e+37
        %v8654 = vand.u32 %v8642, 2147483648
        %v8655 = vor.u32 1.1754944e-38, %v8654
        %v8656 = vsel %vm8653, %v8655, %v8651
        %v8657 = vmul.f32 %v8632, %v8656
        %v8658 = vmin.f32 %v8657, 1.0
        %v8659 = vmax.f32 %v8658, -1.0
        %v8660 = vmul.f32 %v7653, %v7653
        %v8661 = vmin.f32 16.0, %v8660
        %v8662 = vmul.f32 %v8661, 2.1237322e-06
        %v8663 = vadd.f32 %v8662, 0.00028619796
        %v8664 = vmul.f32 %v8661, %v8663
        %v8665 = vadd.f32 %v8664, 0.0036580483
        %v8666 = vmul.f32 %v8661, %v8665
        %v8667 = vadd.f32 %v8666, 0.05243302
        %v8668 = vmul.f32 %v8661, %v8667
        %v8669 = vadd.f32 %v8668, 0.18741608
        %v8670 = vmul.f32 %v8661, %v8669
        %v8671 = vadd.f32 %v8670, 1.1283791
        %v8672 = vmul.f32 %v7653, %v8671
        %v8673 = vmul.f32 %v8661, 3.8918573e-05
        %v8674 = vadd.f32 %v8673, 0.001143296
        %v8675 = vmul.f32 %v8661, %v8674
        %v8676 = vadd.f32 %v8675, 0.014752088
        %v8677 = vmul.f32 %v8661, %v8676
        %v8678 = vadd.f32 %v8677, 0.112945676
        %v8679 = vmul.f32 %v8661, %v8678
        %v8680 = vadd.f32 %v8679, 0.4994258
        %v8681 = vmul.f32 %v8661, %v8680
        %v8682 = vadd.f32 %v8681, 1.0
        %v8683 = vrcp.pop %v8682
        %v8684 = vmul.f32 %v8682, %v8683
        %v8685 = vsub.f32 1.0, %v8684
        %v8686 = vmul.f32 %v8683, %v8685
        %v8687 = vadd.f32 %v8683, %v8686
        %vm8688 = vweird.f32 %v8682
        %vm8689 = vweird.f32 %v8683
        %vm8690 = vmor %vm8688, %vm8689
        %v8691 = vsel %vm8690, %v8683, %v8687
        %v8692 = vand.u32 2147483647, %v8682
        %vm8693 = vcmp.eq.f32.partialorder %v8692, 8.507059e+37
        %v8694 = vand.u32 %v8682, 2147483648
        %v8695 = vor.u32 1.1754944e-38, %v8694
        %v8696 = vsel %vm8693, %v8695, %v8691
        %v8697 = vmul.f32 %v8672, %v8696
        %v8698 = vmin.f32 %v8697, 1.0
        %v8699 = vmax.f32 %v8698, -1.0
        %v8700 = vmul.f32 %v7654, %v7654
        %v8701 = vmin.f32 16.0, %v8700
        %v8702 = vmul.f32 %v8701, 2.1237322e-06
        %v8703 = vadd.f32 %v8702, 0.00028619796
        %v8704 = vmul.f32 %v8701, %v8703
        %v8705 = vadd.f32 %v8704, 0.0036580483
        %v8706 = vmul.f32 %v8701, %v8705
        %v8707 = vadd.f32 %v8706, 0.05243302
        %v8708 = vmul.f32 %v8701, %v8707
        %v8709 = vadd.f32 %v8708, 0.18741608
        %v8710 = vmul.f32 %v8701, %v8709
        %v8711 = vadd.f32 %v8710, 1.1283791
        %v8712 = vmul.f32 %v7654, %v8711
        %v8713 = vmul.f32 %v8701, 3.8918573e-05
        %v8714 = vadd.f32 %v8713, 0.001143296
        %v8715 = vmul.f32 %v8701, %v8714
        %v8716 = vadd.f32 %v8715, 0.014752088
        %v8717 = vmul.f32 %v8701, %v8716
        %v8718 = vadd.f32 %v8717, 0.112945676
        %v8719 = vmul.f32 %v8701, %v8718
        %v8720 = vadd.f32 %v8719, 0.4994258
        %v8721 = vmul.f32 %v8701, %v8720
        %v8722 = vadd.f32 %v8721, 1.0
        %v8723 = vrcp.pop %v8722
        %v8724 = vmul.f32 %v8722, %v8723
        %v8725 = vsub.f32 1.0, %v8724
        %v8726 = vmul.f32 %v8723, %v8725
        %v8727 = vadd.f32 %v8723, %v8726
        %vm8728 = vweird.f32 %v8722
        %vm8729 = vweird.f32 %v8723
        %vm8730 = vmor %vm8728, %vm8729
        %v8731 = vsel %vm8730, %v8723, %v8727
        %v8732 = vand.u32 2147483647, %v8722
        %vm8733 = vcmp.eq.f32.partialorder %v8732, 8.507059e+37
        %v8734 = vand.u32 %v8722, 2147483648
        %v8735 = vor.u32 1.1754944e-38, %v8734
        %v8736 = vsel %vm8733, %v8735, %v8731
        %v8737 = vmul.f32 %v8712, %v8736
        %v8738 = vmin.f32 %v8737, 1.0
        %v8739 = vmax.f32 %v8738, -1.0
        %v8740 = vmul.f32 %v7655, %v7655
        %v8741 = vmin.f32 16.0, %v8740
        %v8742 = vmul.f32 %v8741, 2.1237322e-06
        %v8743 = vadd.f32 %v8742, 0.00028619796
        %v8744 = vmul.f32 %v8741, %v8743
        %v8745 = vadd.f32 %v8744, 0.0036580483
        %v8746 = vmul.f32 %v8741, %v8745
        %v8747 = vadd.f32 %v8746, 0.05243302
        %v8748 = vmul.f32 %v8741, %v8747
        %v8749 = vadd.f32 %v8748, 0.18741608
        %v8750 = vmul.f32 %v8741, %v8749
        %v8751 = vadd.f32 %v8750, 1.1283791
        %v8752 = vmul.f32 %v7655, %v8751
        %v8753 = vmul.f32 %v8741, 3.8918573e-05
        %v8754 = vadd.f32 %v8753, 0.001143296
        %v8755 = vmul.f32 %v8741, %v8754
        %v8756 = vadd.f32 %v8755, 0.014752088
        %v8757 = vmul.f32 %v8741, %v8756
        %v8758 = vadd.f32 %v8757, 0.112945676
        %v8759 = vmul.f32 %v8741, %v8758
        %v8760 = vadd.f32 %v8759, 0.4994258
        %v8761 = vmul.f32 %v8741, %v8760
        %v8762 = vadd.f32 %v8761, 1.0
        %v8763 = vrcp.pop %v8762
        %v8764 = vmul.f32 %v8762, %v8763
        %v8765 = vsub.f32 1.0, %v8764
        %v8766 = vmul.f32 %v8763, %v8765
        %v8767 = vadd.f32 %v8763, %v8766
        %vm8768 = vweird.f32 %v8762
        %vm8769 = vweird.f32 %v8763
        %vm8770 = vmor %vm8768, %vm8769
        %v8771 = vsel %vm8770, %v8763, %v8767
        %v8772 = vand.u32 2147483647, %v8762
        %vm8773 = vcmp.eq.f32.partialorder %v8772, 8.507059e+37
        %v8774 = vand.u32 %v8762, 2147483648
        %v8775 = vor.u32 1.1754944e-38, %v8774
        %v8776 = vsel %vm8773, %v8775, %v8771
        %v8777 = vmul.f32 %v8752, %v8776
        %v8778 = vmin.f32 %v8777, 1.0
        %v8779 = vmax.f32 %v8778, -1.0
        %v8780 = vmul.f32 %v7656, %v7656
        %v8781 = vmin.f32 16.0, %v8780
        %v8782 = vmul.f32 %v8781, 2.1237322e-06
        %v8783 = vadd.f32 %v8782, 0.00028619796
        %v8784 = vmul.f32 %v8781, %v8783
        %v8785 = vadd.f32 %v8784, 0.0036580483
        %v8786 = vmul.f32 %v8781, %v8785
        %v8787 = vadd.f32 %v8786, 0.05243302
        %v8788 = vmul.f32 %v8781, %v8787
        %v8789 = vadd.f32 %v8788, 0.18741608
        %v8790 = vmul.f32 %v8781, %v8789
        %v8791 = vadd.f32 %v8790, 1.1283791
        %v8792 = vmul.f32 %v7656, %v8791
        %v8793 = vmul.f32 %v8781, 3.8918573e-05
        %v8794 = vadd.f32 %v8793, 0.001143296
        %v8795 = vmul.f32 %v8781, %v8794
        %v8796 = vadd.f32 %v8795, 0.014752088
        %v8797 = vmul.f32 %v8781, %v8796
        %v8798 = vadd.f32 %v8797, 0.112945676
        %v8799 = vmul.f32 %v8781, %v8798
        %v8800 = vadd.f32 %v8799, 0.4994258
        %v8801 = vmul.f32 %v8781, %v8800
        %v8802 = vadd.f32 %v8801, 1.0
        %v8803 = vrcp.pop %v8802
        %v8804 = vmul.f32 %v8802, %v8803
        %v8805 = vsub.f32 1.0, %v8804
        %v8806 = vmul.f32 %v8803, %v8805
        %v8807 = vadd.f32 %v8803, %v8806
        %vm8808 = vweird.f32 %v8802
        %vm8809 = vweird.f32 %v8803
        %vm8810 = vmor %vm8808, %vm8809
        %v8811 = vsel %vm8810, %v8803, %v8807
        %v8812 = vand.u32 2147483647, %v8802
        %vm8813 = vcmp.eq.f32.partialorder %v8812, 8.507059e+37
        %v8814 = vand.u32 %v8802, 2147483648
        %v8815 = vor.u32 1.1754944e-38, %v8814
        %v8816 = vsel %vm8813, %v8815, %v8811
        %v8817 = vmul.f32 %v8792, %v8816
        %v8818 = vmin.f32 %v8817, 1.0
        %v8819 = vmax.f32 %v8818, -1.0
        %v8820 = vmul.f32 %v7657, %v7657
        %v8821 = vmin.f32 16.0, %v8820
        %v8822 = vmul.f32 %v8821, 2.1237322e-06
        %v8823 = vadd.f32 %v8822, 0.00028619796
        %v8824 = vmul.f32 %v8821, %v8823
        %v8825 = vadd.f32 %v8824, 0.0036580483
        %v8826 = vmul.f32 %v8821, %v8825
        %v8827 = vadd.f32 %v8826, 0.05243302
        %v8828 = vmul.f32 %v8821, %v8827
        %v8829 = vadd.f32 %v8828, 0.18741608
        %v8830 = vmul.f32 %v8821, %v8829
        %v8831 = vadd.f32 %v8830, 1.1283791
        %v8832 = vmul.f32 %v7657, %v8831
        %v8833 = vmul.f32 %v8821, 3.8918573e-05
        %v8834 = vadd.f32 %v8833, 0.001143296
        %v8835 = vmul.f32 %v8821, %v8834
        %v8836 = vadd.f32 %v8835, 0.014752088
        %v8837 = vmul.f32 %v8821, %v8836
        %v8838 = vadd.f32 %v8837, 0.112945676
        %v8839 = vmul.f32 %v8821, %v8838
        %v8840 = vadd.f32 %v8839, 0.4994258
        %v8841 = vmul.f32 %v8821, %v8840
        %v8842 = vadd.f32 %v8841, 1.0
        %v8843 = vrcp.pop %v8842
        %v8844 = vmul.f32 %v8842, %v8843
        %v8845 = vsub.f32 1.0, %v8844
        %v8846 = vmul.f32 %v8843, %v8845
        %v8847 = vadd.f32 %v8843, %v8846
        %vm8848 = vweird.f32 %v8842
        %vm8849 = vweird.f32 %v8843
        %vm8850 = vmor %vm8848, %vm8849
        %v8851 = vsel %vm8850, %v8843, %v8847
        %v8852 = vand.u32 2147483647, %v8842
        %vm8853 = vcmp.eq.f32.partialorder %v8852, 8.507059e+37
        %v8854 = vand.u32 %v8842, 2147483648
        %v8855 = vor.u32 1.1754944e-38, %v8854
        %v8856 = vsel %vm8853, %v8855, %v8851
        %v8857 = vmul.f32 %v8832, %v8856
        %v8858 = vmin.f32 %v8857, 1.0
        %v8859 = vmax.f32 %v8858, -1.0
        %v8860 = vmul.f32 %v7658, %v7658
        %v8861 = vmin.f32 16.0, %v8860
        %v8862 = vmul.f32 %v8861, 2.1237322e-06
        %v8863 = vadd.f32 %v8862, 0.00028619796
        %v8864 = vmul.f32 %v8861, %v8863
        %v8865 = vadd.f32 %v8864, 0.0036580483
        %v8866 = vmul.f32 %v8861, %v8865
        %v8867 = vadd.f32 %v8866, 0.05243302
        %v8868 = vmul.f32 %v8861, %v8867
        %v8869 = vadd.f32 %v8868, 0.18741608
        %v8870 = vmul.f32 %v8861, %v8869
        %v8871 = vadd.f32 %v8870, 1.1283791
        %v8872 = vmul.f32 %v7658, %v8871
        %v8873 = vmul.f32 %v8861, 3.8918573e-05
        %v8874 = vadd.f32 %v8873, 0.001143296
        %v8875 = vmul.f32 %v8861, %v8874
        %v8876 = vadd.f32 %v8875, 0.014752088
        %v8877 = vmul.f32 %v8861, %v8876
        %v8878 = vadd.f32 %v8877, 0.112945676
        %v8879 = vmul.f32 %v8861, %v8878
        %v8880 = vadd.f32 %v8879, 0.4994258
        %v8881 = vmul.f32 %v8861, %v8880
        %v8882 = vadd.f32 %v8881, 1.0
        %v8883 = vrcp.pop %v8882
        %v8884 = vmul.f32 %v8882, %v8883
        %v8885 = vsub.f32 1.0, %v8884
        %v8886 = vmul.f32 %v8883, %v8885
        %v8887 = vadd.f32 %v8883, %v8886
        %vm8888 = vweird.f32 %v8882
        %vm8889 = vweird.f32 %v8883
        %vm8890 = vmor %vm8888, %vm8889
        %v8891 = vsel %vm8890, %v8883, %v8887
        %v8892 = vand.u32 2147483647, %v8882
        %vm8893 = vcmp.eq.f32.partialorder %v8892, 8.507059e+37
        %v8894 = vand.u32 %v8882, 2147483648
        %v8895 = vor.u32 1.1754944e-38, %v8894
        %v8896 = vsel %vm8893, %v8895, %v8891
        %v8897 = vmul.f32 %v8872, %v8896
        %v8898 = vmin.f32 %v8897, 1.0
        %v8899 = vmax.f32 %v8898, -1.0
        %v8900 = vmul.f32 %v7659, %v7659
        %v8901 = vmin.f32 16.0, %v8900
        %v8902 = vmul.f32 %v8901, 2.1237322e-06
        %v8903 = vadd.f32 %v8902, 0.00028619796
        %v8904 = vmul.f32 %v8901, %v8903
        %v8905 = vadd.f32 %v8904, 0.0036580483
        %v8906 = vmul.f32 %v8901, %v8905
        %v8907 = vadd.f32 %v8906, 0.05243302
        %v8908 = vmul.f32 %v8901, %v8907
        %v8909 = vadd.f32 %v8908, 0.18741608
        %v8910 = vmul.f32 %v8901, %v8909
        %v8911 = vadd.f32 %v8910, 1.1283791
        %v8912 = vmul.f32 %v7659, %v8911
        %v8913 = vmul.f32 %v8901, 3.8918573e-05
        %v8914 = vadd.f32 %v8913, 0.001143296
        %v8915 = vmul.f32 %v8901, %v8914
        %v8916 = vadd.f32 %v8915, 0.014752088
        %v8917 = vmul.f32 %v8901, %v8916
        %v8918 = vadd.f32 %v8917, 0.112945676
        %v8919 = vmul.f32 %v8901, %v8918
        %v8920 = vadd.f32 %v8919, 0.4994258
        %v8921 = vmul.f32 %v8901, %v8920
        %v8922 = vadd.f32 %v8921, 1.0
        %v8923 = vrcp.pop %v8922
        %v8924 = vmul.f32 %v8922, %v8923
        %v8925 = vsub.f32 1.0, %v8924
        %v8926 = vmul.f32 %v8923, %v8925
        %v8927 = vadd.f32 %v8923, %v8926
        %vm8928 = vweird.f32 %v8922
        %vm8929 = vweird.f32 %v8923
        %vm8930 = vmor %vm8928, %vm8929
        %v8931 = vsel %vm8930, %v8923, %v8927
        %v8932 = vand.u32 2147483647, %v8922
        %vm8933 = vcmp.eq.f32.partialorder %v8932, 8.507059e+37
        %v8934 = vand.u32 %v8922, 2147483648
        %v8935 = vor.u32 1.1754944e-38, %v8934
        %v8936 = vsel %vm8933, %v8935, %v8931
        %v8937 = vmul.f32 %v8912, %v8936
        %v8938 = vmin.f32 %v8937, 1.0
        %v8939 = vmax.f32 %v8938, -1.0
        %v8940 = vadd.f32 %v7699, 1.0
        %v8941 = vadd.f32 %v7739, 1.0
        %v8942 = vadd.f32 %v7779, 1.0
        %v8943 = vadd.f32 %v7819, 1.0
        %v8944 = vadd.f32 %v7859, 1.0
        %v8945 = vadd.f32 %v7899, 1.0
        %v8946 = vadd.f32 %v7939, 1.0
        %v8947 = vadd.f32 %v7979, 1.0
        %v8948 = vadd.f32 %v8019, 1.0
        %v8949 = vadd.f32 %v8059, 1.0
        %v8950 = vadd.f32 %v8099, 1.0
        %v8951 = vadd.f32 %v8139, 1.0
        %v8952 = vadd.f32 %v8179, 1.0
        %v8953 = vadd.f32 %v8219, 1.0
        %v8954 = vadd.f32 %v8259, 1.0
        %v8955 = vadd.f32 %v8299, 1.0
        %v8956 = vadd.f32 %v8339, 1.0
        %v8957 = vadd.f32 %v8379, 1.0
        %v8958 = vadd.f32 %v8419, 1.0
        %v8959 = vadd.f32 %v8459, 1.0
        %v8960 = vadd.f32 %v8499, 1.0
        %v8961 = vadd.f32 %v8539, 1.0
        %v8962 = vadd.f32 %v8579, 1.0
        %v8963 = vadd.f32 %v8619, 1.0
        %v8964 = vadd.f32 %v8659, 1.0
        %v8965 = vadd.f32 %v8699, 1.0
        %v8966 = vadd.f32 %v8739, 1.0
        %v8967 = vadd.f32 %v8779, 1.0
        %v8968 = vadd.f32 %v8819, 1.0
        %v8969 = vadd.f32 %v8859, 1.0
        %v8970 = vadd.f32 %v8899, 1.0
        %v8971 = vadd.f32 %v8939, 1.0
        %v8972 = vmul.f32 %v7596, %v8940
        %v8973 = vmul.f32 %v7597, %v8941
        %v8974 = vmul.f32 %v7598, %v8942
        %v8975 = vmul.f32 %v7599, %v8943
        %v8976 = vmul.f32 %v7600, %v8944
        %v8977 = vmul.f32 %v7601, %v8945
        %v8978 = vmul.f32 %v7602, %v8946
        %v8979 = vmul.f32 %v7603, %v8947
        %v8980 = vmul.f32 %v7604, %v8948
        %v8981 = vmul.f32 %v7605, %v8949
        %v8982 = vmul.f32 %v7606, %v8950
        %v8983 = vmul.f32 %v7607, %v8951
        %v8984 = vmul.f32 %v7608, %v8952
        %v8985 = vmul.f32 %v7609, %v8953
        %v8986 = vmul.f32 %v7610, %v8954
        %v8987 = vmul.f32 %v7611, %v8955
        %v8988 = vmul.f32 %v7612, %v8956
        %v8989 = vmul.f32 %v7613, %v8957
        %v8990 = vmul.f32 %v7614, %v8958
        %v8991 = vmul.f32 %v7615, %v8959
        %v8992 = vmul.f32 %v7616, %v8960
        %v8993 = vmul.f32 %v7617, %v8961
        %v8994 = vmul.f32 %v7618, %v8962
        %v8995 = vmul.f32 %v7619, %v8963
        %v8996 = vmul.f32 %v7620, %v8964
        %v8997 = vmul.f32 %v7621, %v8965
        %v8998 = vmul.f32 %v7622, %v8966
        %v8999 = vmul.f32 %v7623, %v8967
        %v9000 = vmul.f32 %v7624, %v8968
        %v9001 = vmul.f32 %v7625, %v8969
        %v9002 = vmul.f32 %v7626, %v8970
        %v9003 = vmul.f32 %v7627, %v8971
        %v9004 = vmul.f32 %v7374, %v8972
        %v9005 = vmul.f32 %v7403, %v8973
        %v9006 = vmul.f32 %v7432, %v8974
        %v9007 = vmul.f32 %v7461, %v8975
        %v9008 = vmul.f32 %v7376, %v8976
        %v9009 = vmul.f32 %v7405, %v8977
        %v9010 = vmul.f32 %v7434, %v8978
        %v9011 = vmul.f32 %v7463, %v8979
        %v9012 = vmul.f32 %v7379, %v8980
        %v9013 = vmul.f32 %v7408, %v8981
        %v9014 = vmul.f32 %v7437, %v8982
        %v9015 = vmul.f32 %v7466, %v8983
        %v9016 = vmul.f32 %v7381, %v8984
        %v9017 = vmul.f32 %v7410, %v8985
        %v9018 = vmul.f32 %v7439, %v8986
        %v9019 = vmul.f32 %v7468, %v8987
        %v9020 = vmul.f32 %v7384, %v8988
        %v9021 = vmul.f32 %v7413, %v8989
        %v9022 = vmul.f32 %v7442, %v8990
        %v9023 = vmul.f32 %v7471, %v8991
        %v9024 = vmul.f32 %v7386, %v8992
        %v9025 = vmul.f32 %v7415, %v8993
        %v9026 = vmul.f32 %v7444, %v8994
        %v9027 = vmul.f32 %v7473, %v8995
        %v9028 = vmul.f32 %v7389, %v8996
        %v9029 = vmul.f32 %v7418, %v8997
        %v9030 = vmul.f32 %v7447, %v8998
        %v9031 = vmul.f32 %v7476, %v8999
        %v9032 = vmul.f32 %v7391, %v9000
        %v9033 = vmul.f32 %v7420, %v9001
        %v9034 = vmul.f32 %v7449, %v9002
        %v9035 = vmul.f32 %v7478, %v9003
        %v9036 = vld [vmem:[%s20] sm:$0xf]
        %v9037 = vld [vmem:[%s20 + $0x4] sm:$0xf]
        %v9038 = vld [vmem:[%s20 + $0x8] sm:$0xf]
        %v9039 = vld [vmem:[%s20 + $0xc] sm:$0xf]
        %v9040 = vld [vmem:[%s20 + $0x10] sm:$0xf]
        %v9041 = vld [vmem:[%s20 + $0x14] sm:$0xf]
        %v9042 = vld [vmem:[%s20 + $0x18] sm:$0xf]
        %v9043 = vld [vmem:[%s20 + $0x1c] sm:$0xf]
        %v9044 = vld [vmem:[%s20 + $0x20] sm:$0xf]
        %v9045 = vld [vmem:[%s20 + $0x24] sm:$0xf]
        %v9046 = vld [vmem:[%s20 + $0x28] sm:$0xf]
        %v9047 = vld [vmem:[%s20 + $0x2c] sm:$0xf]
        %v9048 = vld [vmem:[%s20 + $0x30] sm:$0xf]
        %v9049 = vld [vmem:[%s20 + $0x34] sm:$0xf]
        %v9050 = vld [vmem:[%s20 + $0x38] sm:$0xf]
        %v9051 = vld [vmem:[%s20 + $0x3c] sm:$0xf]
        %v9052 = vld [vmem:[%s20 + $0x40] sm:$0xf]
        %v9053 = vld [vmem:[%s20 + $0x44] sm:$0xf]
        %v9054 = vld [vmem:[%s20 + $0x48] sm:$0xf]
        %v9055 = vld [vmem:[%s20 + $0x4c] sm:$0xf]
        %v9056 = vld [vmem:[%s20 + $0x50] sm:$0xf]
        %v9057 = vld [vmem:[%s20 + $0x54] sm:$0xf]
        %v9058 = vld [vmem:[%s20 + $0x58] sm:$0xf]
        %v9059 = vld [vmem:[%s20 + $0x5c] sm:$0xf]
        %v9060 = vld [vmem:[%s20 + $0x60] sm:$0xf]
        %v9061 = vld [vmem:[%s20 + $0x64] sm:$0xf]
        %v9062 = vld [vmem:[%s20 + $0x68] sm:$0xf]
        %v9063 = vld [vmem:[%s20 + $0x6c] sm:$0xf]
        %v9064 = vld [vmem:[%s20 + $0x70] sm:$0xf]
        %v9065 = vld [vmem:[%s20 + $0x74] sm:$0xf]
        %v9066 = vld [vmem:[%s20 + $0x78] sm:$0xf]
        %v9067 = vld [vmem:[%s20 + $0x7c] sm:$0xf]
        %v9068 = vld [vmem:[%s20 + $0x80] sm:$0xf]
        %v9069 = vld [vmem:[%s20 + $0x84] sm:$0xf]
        %v9070 = vld [vmem:[%s20 + $0x88] sm:$0xf]
        %v9071 = vld [vmem:[%s20 + $0x8c] sm:$0xf]
        %v9072 = vld [vmem:[%s20 + $0x90] sm:$0xf]
        %v9073 = vld [vmem:[%s20 + $0x94] sm:$0xf]
        %v9074 = vld [vmem:[%s20 + $0x98] sm:$0xf]
        %v9075 = vld [vmem:[%s20 + $0x9c] sm:$0xf]
        %v9076 = vld [vmem:[%s20 + $0xa0] sm:$0xf]
        %v9077 = vld [vmem:[%s20 + $0xa4] sm:$0xf]
        %v9078 = vld [vmem:[%s20 + $0xa8] sm:$0xf]
        %v9079 = vld [vmem:[%s20 + $0xac] sm:$0xf]
        %v9080 = vld [vmem:[%s20 + $0xb0] sm:$0xf]
        %v9081 = vld [vmem:[%s20 + $0xb4] sm:$0xf]
        %v9082 = vld [vmem:[%s20 + $0xb8] sm:$0xf]
        %v9083 = vld [vmem:[%s20 + $0xbc] sm:$0xf]
        %v9084 = vld [vmem:[%s20 + $0xc0] sm:$0xf]
        %v9085 = vld [vmem:[%s20 + $0xc4] sm:$0xf]
        %v9086 = vld [vmem:[%s20 + $0xc8] sm:$0xf]
        %v9087 = vld [vmem:[%s20 + $0xcc] sm:$0xf]
        %v9088 = vld [vmem:[%s20 + $0xd0] sm:$0xf]
        %v9089 = vld [vmem:[%s20 + $0xd4] sm:$0xf]
        %v9090 = vld [vmem:[%s20 + $0xd8] sm:$0xf]
        %v9091 = vld [vmem:[%s20 + $0xdc] sm:$0xf]
        %v9092 = vld [vmem:[%s20 + $0xe0] sm:$0xf]
        %v9093 = vld [vmem:[%s20 + $0xe4] sm:$0xf]
        %v9094 = vld [vmem:[%s20 + $0xe8] sm:$0xf]
        %v9095 = vld [vmem:[%s20 + $0xec] sm:$0xf]
        %v9096 = vld [vmem:[%s20 + $0xf0] sm:$0xf]
        %v9097 = vld [vmem:[%s20 + $0xf4] sm:$0xf]
        %v9098 = vld [vmem:[%s20 + $0xf8] sm:$0xf]
        %v9099 = vld [vmem:[%s20 + $0xfc] sm:$0xf]
        %v9100 = vld [vmem:[%s21] sm:$0x1]
        %v9101 = vpack.c.bf16 %v9008, %v9004
        %v9102 = vpack.c.bf16 %v9009, %v9005
        %v9103 = vpack.c.bf16 %v9010, %v9006
        %v9104 = vpack.c.bf16 %v9011, %v9007
        %v9105 = vpack.c.bf16 %v9016, %v9012
        %v9106 = vpack.c.bf16 %v9017, %v9013
        %v9107 = vpack.c.bf16 %v9018, %v9014
        %v9108 = vpack.c.bf16 %v9019, %v9015
        %v9109 = vpack.c.bf16 %v9024, %v9020
        %v9110 = vpack.c.bf16 %v9025, %v9021
        %v9111 = vpack.c.bf16 %v9026, %v9022
        %v9112 = vpack.c.bf16 %v9027, %v9023
        %v9113 = vpack.c.bf16 %v9032, %v9028
        %v9114 = vpack.c.bf16 %v9033, %v9029
        %v9115 = vpack.c.bf16 %v9034, %v9030
        %v9116 = vpack.c.bf16 %v9035, %v9031
        %v9118 = vperm.slane %v9100, 0
        %v9184 = vunpack.c.l.b16 %v9036
        %v9185 = vunpack.c.l.b16 %v9037
        %v9186 = vunpack.c.l.b16 %v9038
        %v9187 = vunpack.c.l.b16 %v9039
        %v9188 = vunpack.c.l.b16 %v9040
        %v9189 = vunpack.c.l.b16 %v9041
        %v9190 = vunpack.c.l.b16 %v9042
        %v9191 = vunpack.c.l.b16 %v9043
        %v9192 = vunpack.c.l.b16 %v9044
        %v9193 = vunpack.c.l.b16 %v9045
        %v9194 = vunpack.c.l.b16 %v9046
        %v9195 = vunpack.c.l.b16 %v9047
        %v9196 = vunpack.c.l.b16 %v9048
        %v9197 = vunpack.c.l.b16 %v9049
        %v9198 = vunpack.c.l.b16 %v9050
        %v9199 = vunpack.c.l.b16 %v9051
        %v9200 = vunpack.c.l.b16 %v9052
        %v9201 = vunpack.c.l.b16 %v9053
        %v9202 = vunpack.c.l.b16 %v9054
        %v9203 = vunpack.c.l.b16 %v9055
        %v9204 = vunpack.c.l.b16 %v9056
        %v9205 = vunpack.c.l.b16 %v9057
        %v9206 = vunpack.c.l.b16 %v9058
        %v9207 = vunpack.c.l.b16 %v9059
        %v9208 = vunpack.c.l.b16 %v9060
        %v9209 = vunpack.c.l.b16 %v9061
        %v9210 = vunpack.c.l.b16 %v9062
        %v9211 = vunpack.c.l.b16 %v9063
        %v9212 = vunpack.c.l.b16 %v9064
        %v9213 = vunpack.c.l.b16 %v9065
        %v9214 = vunpack.c.l.b16 %v9066
        %v9215 = vunpack.c.l.b16 %v9067
        %v9216 = vunpack.c.l.b16 %v9068
        %v9217 = vunpack.c.l.b16 %v9069
        %v9218 = vunpack.c.l.b16 %v9070
        %v9219 = vunpack.c.l.b16 %v9071
        %v9220 = vunpack.c.l.b16 %v9072
        %v9221 = vunpack.c.l.b16 %v9073
        %v9222 = vunpack.c.l.b16 %v9074
        %v9223 = vunpack.c.l.b16 %v9075
        %v9224 = vunpack.c.l.b16 %v9076
        %v9225 = vunpack.c.l.b16 %v9077
        %v9226 = vunpack.c.l.b16 %v9078
        %v9227 = vunpack.c.l.b16 %v9079
        %v9228 = vunpack.c.l.b16 %v9080
        %v9229 = vunpack.c.l.b16 %v9081
        %v9230 = vunpack.c.l.b16 %v9082
        %v9231 = vunpack.c.l.b16 %v9083
        %v9232 = vunpack.c.l.b16 %v9084
        %v9233 = vunpack.c.l.b16 %v9085
        %v9234 = vunpack.c.l.b16 %v9086
        %v9235 = vunpack.c.l.b16 %v9087
        %v9236 = vunpack.c.l.b16 %v9088
        %v9237 = vunpack.c.l.b16 %v9089
        %v9238 = vunpack.c.l.b16 %v9090
        %v9239 = vunpack.c.l.b16 %v9091
        %v9240 = vunpack.c.l.b16 %v9092
        %v9241 = vunpack.c.l.b16 %v9093
        %v9242 = vunpack.c.l.b16 %v9094
        %v9243 = vunpack.c.l.b16 %v9095
        %v9244 = vunpack.c.l.b16 %v9096
        %v9245 = vunpack.c.l.b16 %v9097
        %v9246 = vunpack.c.l.b16 %v9098
        %v9247 = vunpack.c.l.b16 %v9099
        %v9248 = vpack.c.b16 %v9185, %v9184
        %v9249 = vpack.c.b16 %v9187, %v9186
        %v9250 = vpack.c.b16 %v9189, %v9188
        %v9251 = vpack.c.b16 %v9191, %v9190
        %v9252 = vpack.c.b16 %v9193, %v9192
        %v9253 = vpack.c.b16 %v9195, %v9194
        %v9254 = vpack.c.b16 %v9197, %v9196
        %v9255 = vpack.c.b16 %v9199, %v9198
        %v9256 = vpack.c.b16 %v9201, %v9200
        %v9257 = vpack.c.b16 %v9203, %v9202
        %v9258 = vpack.c.b16 %v9205, %v9204
        %v9259 = vpack.c.b16 %v9207, %v9206
        %v9260 = vpack.c.b16 %v9209, %v9208
        %v9261 = vpack.c.b16 %v9211, %v9210
        %v9262 = vpack.c.b16 %v9213, %v9212
        %v9263 = vpack.c.b16 %v9215, %v9214
        %v9264 = vpack.c.b16 %v9217, %v9216
        %v9265 = vpack.c.b16 %v9219, %v9218
        %v9266 = vpack.c.b16 %v9221, %v9220
        %v9267 = vpack.c.b16 %v9223, %v9222
        %v9268 = vpack.c.b16 %v9225, %v9224
        %v9269 = vpack.c.b16 %v9227, %v9226
        %v9270 = vpack.c.b16 %v9229, %v9228
        %v9271 = vpack.c.b16 %v9231, %v9230
        %v9272 = vpack.c.b16 %v9233, %v9232
        %v9273 = vpack.c.b16 %v9235, %v9234
        %v9274 = vpack.c.b16 %v9237, %v9236
        %v9275 = vpack.c.b16 %v9239, %v9238
        %v9276 = vpack.c.b16 %v9241, %v9240
        %v9277 = vpack.c.b16 %v9243, %v9242
        %v9278 = vpack.c.b16 %v9245, %v9244
        %v9279 = vpack.c.b16 %v9247, %v9246
        %9312 = vmatpush.bf16.msra.mxu0 %v9255
        %9313 = vmatpush.bf16.msra.mxu0 %v9254
        %9314 = vmatpush.bf16.msra.mxu0 %v9253
        %9315 = vmatpush.bf16.msra.mxu0 %v9252
        %9316 = vmatpush.bf16.msra.mxu0 %v9251
        %9317 = vmatpush.bf16.msra.mxu0 %v9250
        %9318 = vmatpush.bf16.msra.mxu0 %v9249
        %9319 = vmatpush.bf16.msra.mxu0 %v9248
        %9320 = vmatmul.bf16.gmra.mxu0 %v9101
        %v9321 = vpop.f32.mrf.mxu0
        %v9322 = vadd.f32 %v9118, %v9321
        %v9323 = vpop.f32.mrf.mxu0
        %v9324 = vadd.f32 %v9118, %v9323
        %9325 = vmatmul.bf16.gmra.mxu0 %v9105
        %v9326 = vpop.f32.mrf.mxu0
        %v9327 = vadd.f32 %v9118, %v9326
        %v9328 = vpop.f32.mrf.mxu0
        %v9329 = vadd.f32 %v9118, %v9328
        %9330 = vmatmul.bf16.gmra.mxu0 %v9109
        %v9331 = vpop.f32.mrf.mxu0
        %v9332 = vadd.f32 %v9118, %v9331
        %v9333 = vpop.f32.mrf.mxu0
        %v9334 = vadd.f32 %v9118, %v9333
        %9335 = vmatmul.bf16.gmra.mxu0 %v9113
        %v9336 = vpop.f32.mrf.mxu0
        %v9337 = vadd.f32 %v9118, %v9336
        %v9338 = vpop.f32.mrf.mxu0
        %v9339 = vadd.f32 %v9118, %v9338
        %9340 = vdwg.mxu0
        %9341 = vmatpush.bf16.msra.mxu0 %v9263
        %9342 = vmatpush.bf16.msra.mxu0 %v9262
        %9343 = vmatpush.bf16.msra.mxu0 %v9261
        %9344 = vmatpush.bf16.msra.mxu0 %v9260
        %9345 = vmatpush.bf16.msra.mxu0 %v9259
        %9346 = vmatpush.bf16.msra.mxu0 %v9258
        %9347 = vmatpush.bf16.msra.mxu0 %v9257
        %9348 = vmatpush.bf16.msra.mxu0 %v9256
        %9349 = vmatmul.bf16.gmra.mxu0 %v9102
        %v9350 = vpop.f32.mrf.mxu0
        %v9351 = vadd.f32 %v9322, %v9350
        %v9352 = vpop.f32.mrf.mxu0
        %v9353 = vadd.f32 %v9324, %v9352
        %9354 = vmatmul.bf16.gmra.mxu0 %v9106
        %v9355 = vpop.f32.mrf.mxu0
        %v9356 = vadd.f32 %v9327, %v9355
        %v9357 = vpop.f32.mrf.mxu0
        %v9358 = vadd.f32 %v9329, %v9357
        %9359 = vmatmul.bf16.gmra.mxu0 %v9110
        %v9360 = vpop.f32.mrf.mxu0
        %v9361 = vadd.f32 %v9332, %v9360
        %v9362 = vpop.f32.mrf.mxu0
        %v9363 = vadd.f32 %v9334, %v9362
        %9364 = vmatmul.bf16.gmra.mxu0 %v9114
        %v9365 = vpop.f32.mrf.mxu0
        %v9366 = vadd.f32 %v9337, %v9365
        %v9367 = vpop.f32.mrf.mxu0
        %v9368 = vadd.f32 %v9339, %v9367
        %9369 = vdwg.mxu0
        %9370 = vmatpush.bf16.msra.mxu0 %v9271
        %9371 = vmatpush.bf16.msra.mxu0 %v9270
        %9372 = vmatpush.bf16.msra.mxu0 %v9269
        %9373 = vmatpush.bf16.msra.mxu0 %v9268
        %9374 = vmatpush.bf16.msra.mxu0 %v9267
        %9375 = vmatpush.bf16.msra.mxu0 %v9266
        %9376 = vmatpush.bf16.msra.mxu0 %v9265
        %9377 = vmatpush.bf16.msra.mxu0 %v9264
        %9378 = vmatmul.bf16.gmra.mxu0 %v9103
        %v9379 = vpop.f32.mrf.mxu0
        %v9380 = vadd.f32 %v9351, %v9379
        %v9381 = vpop.f32.mrf.mxu0
        %v9382 = vadd.f32 %v9353, %v9381
        %9383 = vmatmul.bf16.gmra.mxu0 %v9107
        %v9384 = vpop.f32.mrf.mxu0
        %v9385 = vadd.f32 %v9356, %v9384
        %v9386 = vpop.f32.mrf.mxu0
        %v9387 = vadd.f32 %v9358, %v9386
        %9388 = vmatmul.bf16.gmra.mxu0 %v9111
        %v9389 = vpop.f32.mrf.mxu0
        %v9390 = vadd.f32 %v9361, %v9389
        %v9391 = vpop.f32.mrf.mxu0
        %v9392 = vadd.f32 %v9363, %v9391
        %9393 = vmatmul.bf16.gmra.mxu0 %v9115
        %v9394 = vpop.f32.mrf.mxu0
        %v9395 = vadd.f32 %v9366, %v9394
        %v9396 = vpop.f32.mrf.mxu0
        %v9397 = vadd.f32 %v9368, %v9396
        %9398 = vdwg.mxu0
        %9399 = vmatpush.bf16.msra.mxu0 %v9279
        %9400 = vmatpush.bf16.msra.mxu0 %v9278
        %9401 = vmatpush.bf16.msra.mxu0 %v9277
        %9402 = vmatpush.bf16.msra.mxu0 %v9276
        %9403 = vmatpush.bf16.msra.mxu0 %v9275
        %9404 = vmatpush.bf16.msra.mxu0 %v9274
        %9405 = vmatpush.bf16.msra.mxu0 %v9273
        %9406 = vmatpush.bf16.msra.mxu0 %v9272
        %9407 = vmatmul.bf16.gmra.mxu0 %v9104
        %v9408 = vpop.f32.mrf.mxu0
        %v9409 = vadd.f32 %v9380, %v9408
        %v9410 = vpop.f32.mrf.mxu0
        %v9411 = vadd.f32 %v9382, %v9410
        %9412 = vmatmul.bf16.gmra.mxu0 %v9108
        %v9413 = vpop.f32.mrf.mxu0
        %v9414 = vadd.f32 %v9385, %v9413
        %v9415 = vpop.f32.mrf.mxu0
        %v9416 = vadd.f32 %v9387, %v9415
        %9417 = vmatmul.bf16.gmra.mxu0 %v9112
        %v9418 = vpop.f32.mrf.mxu0
        %v9419 = vadd.f32 %v9390, %v9418
        %v9420 = vpop.f32.mrf.mxu0
        %v9421 = vadd.f32 %v9392, %v9420
        %9422 = vmatmul.bf16.gmra.mxu0 %v9116
        %v9423 = vpop.f32.mrf.mxu0
        %v9424 = vadd.f32 %v9395, %v9423
        %v9425 = vpop.f32.mrf.mxu0
        %v9426 = vadd.f32 %v9397, %v9425
        %9427 = vdwg.mxu0
        %v9428 = vadd.f32 %v6790, %v9409
        %v9429 = vadd.f32 %v6791, %v9411
        %v9430 = vadd.f32 %v6792, %v9414
        %v9431 = vadd.f32 %v6793, %v9416
        %v9432 = vadd.f32 %v6794, %v9419
        %v9433 = vadd.f32 %v6795, %v9421
        %v9434 = vadd.f32 %v6796, %v9424
        %v9435 = vadd.f32 %v6797, %v9426
        %v9436 = vld [vmem:[%s22] sm:$0xf]
        %v9437 = vld [vmem:[%s22 + $0x4] sm:$0xf]
        %v9438 = vld [vmem:[%s22 + $0x8] sm:$0xf]
        %v9439 = vld [vmem:[%s22 + $0xc] sm:$0xf]
        %v9440 = vld [vmem:[%s22 + $0x10] sm:$0xf]
        %v9441 = vld [vmem:[%s22 + $0x14] sm:$0xf]
        %v9442 = vld [vmem:[%s22 + $0x18] sm:$0xf]
        %v9443 = vld [vmem:[%s22 + $0x1c] sm:$0xf]
        %v9444 = vld [vmem:[%s22 + $0x20] sm:$0xf]
        %v9445 = vld [vmem:[%s22 + $0x24] sm:$0xf]
        %v9446 = vld [vmem:[%s22 + $0x28] sm:$0xf]
        %v9447 = vld [vmem:[%s22 + $0x2c] sm:$0xf]
        %v9448 = vld [vmem:[%s22 + $0x30] sm:$0xf]
        %v9449 = vld [vmem:[%s22 + $0x34] sm:$0xf]
        %v9450 = vld [vmem:[%s22 + $0x38] sm:$0xf]
        %v9451 = vld [vmem:[%s22 + $0x3c] sm:$0xf]
        %v9452 = vld [vmem:[%s23] sm:$0x1]
        %v9453 = vpack.c.bf16 %v9429, %v9428
        %v9454 = vpack.c.bf16 %v9431, %v9430
        %v9455 = vpack.c.bf16 %v9433, %v9432
        %v9456 = vpack.c.bf16 %v9435, %v9434
        %v9458 = vperm.slane %v9452, 0
        %v9476 = vunpack.c.l.b16 %v9436
        %v9477 = vunpack.c.l.b16 %v9437
        %v9478 = vunpack.c.l.b16 %v9438
        %v9479 = vunpack.c.l.b16 %v9439
        %v9480 = vunpack.c.l.b16 %v9440
        %v9481 = vunpack.c.l.b16 %v9441
        %v9482 = vunpack.c.l.b16 %v9442
        %v9483 = vunpack.c.l.b16 %v9443
        %v9484 = vunpack.c.l.b16 %v9444
        %v9485 = vunpack.c.l.b16 %v9445
        %v9486 = vunpack.c.l.b16 %v9446
        %v9487 = vunpack.c.l.b16 %v9447
        %v9488 = vunpack.c.l.b16 %v9448
        %v9489 = vunpack.c.l.b16 %v9449
        %v9490 = vunpack.c.l.b16 %v9450
        %v9491 = vunpack.c.l.b16 %v9451
        %v9492 = vpack.c.b16 %v9477, %v9476
        %v9493 = vpack.c.b16 %v9479, %v9478
        %v9494 = vpack.c.b16 %v9481, %v9480
        %v9495 = vpack.c.b16 %v9483, %v9482
        %v9496 = vpack.c.b16 %v9485, %v9484
        %v9497 = vpack.c.b16 %v9487, %v9486
        %v9498 = vpack.c.b16 %v9489, %v9488
        %v9499 = vpack.c.b16 %v9491, %v9490
        %9508 = vmatpush.bf16.msra.mxu0 %v9499
        %9509 = vmatpush.bf16.msra.mxu0 %v9498
        %9510 = vmatpush.bf16.msra.mxu0 %v9497
        %9511 = vmatpush.bf16.msra.mxu0 %v9496
        %9512 = vmatpush.bf16.msra.mxu0 %v9495
        %9513 = vmatpush.bf16.msra.mxu0 %v9494
        %9514 = vmatpush.bf16.msra.mxu0 %v9493
        %9515 = vmatpush.bf16.msra.mxu0 %v9492
        %9516 = vmatmul.bf16.gmra.mxu0 %v9453
        %v9517 = vpop.f32.mrf.mxu0
        %v9518 = vadd.f32 %v9458, %v9517
        %v9519 = vpop.f32.mrf.mxu0
        %v9520 = vadd.f32 %v9458, %v9519
        %9521 = vmatmul.bf16.gmra.mxu0 %v9454
        %v9522 = vpop.f32.mrf.mxu0
        %v9523 = vadd.f32 %v9458, %v9522
        %v9524 = vpop.f32.mrf.mxu0
        %v9525 = vadd.f32 %v9458, %v9524
        %9526 = vmatmul.bf16.gmra.mxu0 %v9455
        %v9527 = vpop.f32.mrf.mxu0
        %v9528 = vadd.f32 %v9458, %v9527
        %v9529 = vpop.f32.mrf.mxu0
        %v9530 = vadd.f32 %v9458, %v9529
        %9531 = vmatmul.bf16.gmra.mxu0 %v9456
        %v9532 = vpop.f32.mrf.mxu0
        %v9533 = vadd.f32 %v9458, %v9532
        %v9534 = vpop.f32.mrf.mxu0
        %v9535 = vadd.f32 %v9458, %v9534
        %9536 = vdwg.mxu0
        %v9537 = vadd.f32 %v9518, %v737
        %v9538 = vadd.f32 %v9520, %v738
        %v9539 = vadd.f32 %v9523, %v739
        %v9540 = vadd.f32 %v9525, %v740
        %v9541 = vadd.f32 %v9528, %v741
        %v9542 = vadd.f32 %v9530, %v742
        %v9543 = vadd.f32 %v9533, %v743
        %v9544 = vadd.f32 %v9535, %v744
        %9545 = vst [vmem:[%s730] sm:$0xff] %v9537
        %9546 = vst [vmem:[%s730 + $0x8] sm:$0xff] %v9538
        %9547 = vst [vmem:[%s730 + $0x10] sm:$0xff] %v9539
        %9548 = vst [vmem:[%s730 + $0x18] sm:$0xff] %v9540
        %9549 = vst [vmem:[%s730 + $0x20] sm:$0xff] %v9541
        %9550 = vst [vmem:[%s730 + $0x28] sm:$0xff] %v9542
        %9551 = vst [vmem:[%s730 + $0x30] sm:$0xff] %v9543
        %9552 = vst [vmem:[%s730 + $0x38] sm:$0xff] %v9544
        %s9553 = sand.u32 %s555, 1
        %s9554 = scalar_lea.sflag [#allocation3], %s9553
        %s9555 = sand.u32 %s555, 1
        %s9556 = smul.addr %s9555, 64
        %s9557 = scalar_lea.vmem [#allocation2], %s9556
        // Predicated region
        $region117: #{tpu_custom_call.1} parent=115 // pred_check
          %p9558 = pneg %p565
        $region118: #{tpu_custom_call.1} parent=115 // pred_check_branch
          %9560 = sbr.rel (%p9558) target = $region120
        $region119: #{tpu_custom_call.1} parent=115 // pred_region
          %9562 = vsyncadd %s9554, 0
          %s9563 = smul.addr %s38, 8
          %s9564 = smul.addr %s9563, 8
          %s9565 = scalar_lea.hbm %s24, %s9564
          %s9566 = sshll.u32 %s9557, 4
          %s9567 = int_to_ptr.vmem [resolvable:$true] %s9566
          %s9568 = sshll.u32 %s9565, 4
          %s9569 = int_to_ptr.hbm [resolvable:$true] %s9568
          %9574 = dma.vmem_to_hbm [thread:$0]  %s9567, 1024, %s9569, %s9554, 128, 128, 8
        $region120: #{tpu_custom_call.1} parent=115 // pred_fallthru
          _
      $region116: #{tpu_custom_call.1} parent=5 // pred_fallthru
        _
      %p9575 = scmp.le.s32.totalorder 2, %s33
      // Predicated region
      $region121: #{tpu_custom_call.1} parent=5 // pred_check
        %p9576 = pneg %p9575
      $region122: #{tpu_custom_call.1} parent=5 // pred_check_branch
        %9578 = sbr.rel (%p9576) target = $region124
      $region123: #{tpu_custom_call.1} parent=5 // pred_region
        %s9579 = ssub.s32 %s33, 2
        // Predicated region
        $region125: #{tpu_custom_call.1} parent=123 // pred_check
          %p9580 = pneg %p571
        $region126: #{tpu_custom_call.1} parent=123 // pred_check_branch
          %9582 = sbr.rel (%p9580) target = $region128
        $region127: #{tpu_custom_call.1} parent=123 // pred_region
          %s9583 = sand.u32 %s556, 1
          %s9584 = scalar_lea.sflag [#allocation3], %s9583
          %s9585 = sand.u32 %s556, 1
          %s9586 = smul.addr %s9585, 64
          %s9587 = scalar_lea.vmem [#allocation2], %s9586
          %9589 = dma.done %s9584, 1024
        $region128: #{tpu_custom_call.1} parent=123 // pred_fallthru
          _
      $region124: #{tpu_custom_call.1} parent=5 // pred_fallthru
        _
    $region6: #{tpu_custom_call.1} parent=1 // loop_footer
      %s37 = sadd.s32 1, %s33
    $region7: #{tpu_custom_call.1} parent=1 // loop_footer_branch
      %32 = sbr.rel target = $region3
    $region8: #{tpu_custom_call.1} parent=1 // loop_exit
      _
    %9590 = vsyncpa [#allocation3], 1
    %s9591 = scalar_lea.sflag [#allocation3], 1
    %9592 = vsyncpa %s9591, 1

</llo_original>
